<compile_context>
chip_gen: v7x
topology: tpu7x:2x2x1
jax: 0.10.0
libtpu: 0.0.40
codegen_flags: <defaults>
</compile_context>

<pallas_src>
import jax
import jax.numpy as jnp
from jax.experimental import pallas as pl
from jax.experimental.pallas import tpu as pltpu

# ----------------------------- model config ---------------------------------
VOCAB = 64
SEQ = 16               # tokenized (query, doc) pair length
HIDDEN = 128           # hidden size (lane aligned)
NUM_HEADS = 2
HEAD_DIM = HIDDEN // NUM_HEADS
FFN = 256
NUM_LAYERS = 2
NUM_LABELS = 2
LOGIT_PAD = 128        # classifier logits padded to one lane width; first 2 used
BATCH = 2
PAIRS_PER_BLOCK = 16   # target pairs per grid step -> M = 256 rows per dot
MIN_PAIRS_PER_BLOCK = 8  # floor: M = 128 rows (fills a v5e MXU pass)

# order must match the kernel argument order
WEIGHT_NAMES = [
    "wq", "bq", "wk", "bk", "wv", "bv", "wo", "bo", "ln1g", "ln1b",
    "w1", "b1", "w2", "b2", "ln2g", "ln2b",
    "wp", "bp", "wc", "bc",
]
# matmul weights are fed to the MXU in bf16; biases / layernorm params stay f32
BF16_WEIGHTS = {"wq", "wk", "wv", "wo", "w1", "w2", "wp", "wc"}


def _layernorm(x, g, b, eps=1e-12):
    mu = jnp.mean(x, axis=-1, keepdims=True)
    var = jnp.mean(jnp.square(x - mu), axis=-1, keepdims=True)
    return (x - mu) * jax.lax.rsqrt(var + eps) * g + b


def _bf16(x):
    return x.astype(jnp.bfloat16)


# ------------------------------- kernel --------------------------------------
def make_encoder_kernel(P):
    """Build the encoder kernel for a block of P (query, doc) pairs."""
    S, H = SEQ, HIDDEN
    NH, Dh = NUM_HEADS, HEAD_DIM
    M = P * S

    def encoder_kernel(ids_ref, mask_ref, tok_emb_ref, pos_emb_ref,
                       wq_ref, bq_ref, wk_ref, bk_ref, wv_ref, bv_ref,
                       wo_ref, bo_ref, ln1g_ref, ln1b_ref,
                       w1_ref, b1_ref, w2_ref, b2_ref, ln2g_ref, ln2b_ref,
                       wp_ref, bp_ref, wc_ref, bc_ref,
                       logits_ref):
        ids = ids_ref[...]                            # (P, S) int32 token ids
        mask = mask_ref[...]                          # (P, S) 1.0 real, 0.0 pad

        # ---- fused embedding lookup: bf16 one-hot(ids) @ bf16 tok_emb -------
        iota = jax.lax.broadcasted_iota(jnp.int32, (P, S, VOCAB), 2)
        onehot = (ids[:, :, None] == iota).astype(jnp.bfloat16).reshape(M, VOCAB)
        tok = jnp.dot(onehot, tok_emb_ref[...],
                      preferred_element_type=jnp.float32)          # (M, H) f32
        x = (tok.reshape(P, S, H) + pos_emb_ref[...][None, :, :]).reshape(M, H)

        # additive key mask, tiled over the head-batched dimension
        kb = ((1.0 - mask) * (-1e9))[:, None, :]                    # (P, 1, S)
        key_bias = jnp.concatenate([kb] * NH, axis=0)               # (NH*P, 1, S)
        scale = 1.0 / (Dh ** 0.5)

        for l in range(NUM_LAYERS):
            # ---- QKV projections batched over the whole block (M rows) ------
            xb = _bf16(x)
            q = jnp.dot(xb, wq_ref[l], preferred_element_type=jnp.float32) + bq_ref[l]
            k = jnp.dot(xb, wk_ref[l], preferred_element_type=jnp.float32) + bk_ref[l]
            v = jnp.dot(xb, wv_ref[l], preferred_element_type=jnp.float32) + bv_ref[l]
            q3 = q.reshape(P, S, H)
            k3 = k.reshape(P, S, H)
            v3 = v.reshape(P, S, H)

            # ---- heads stacked into the batch dim: one scores einsum,
            #      one softmax chain, one context einsum for both heads -------
            def split_heads(t3):
                return jnp.concatenate(
                    [_bf16(t3[:, :, h * Dh:(h + 1) * Dh]) for h in range(NH)],
                    axis=0)                                         # (NH*P, S, Dh)

            qh, kh, vh = split_heads(q3), split_heads(k3), split_heads(v3)

            sc = jnp.einsum("bqd,bkd->bqk", qh, kh,
                            preferred_element_type=jnp.float32) * scale
            sc = sc + key_bias
            sc = sc - jnp.max(sc, axis=-1, keepdims=True)
            p_att = jnp.exp(sc)
            denom = jnp.sum(p_att, axis=-1, keepdims=True)
            p_att = p_att * pl.reciprocal(denom, approx=True)
            ctx_b = jnp.einsum("bqk,bkd->bqd", _bf16(p_att), vh,
                               preferred_element_type=jnp.float32)  # (NH*P, S, Dh)

            # merge heads back onto the lane axis, then one full-K output proj
            ctx = jnp.concatenate(
                [ctx_b[h * P:(h + 1) * P] for h in range(NH)],
                axis=-1).reshape(M, H)
            attn = jnp.dot(_bf16(ctx), wo_ref[l],
                           preferred_element_type=jnp.float32) + bo_ref[l]
            x = _layernorm(x + attn, ln1g_ref[l], ln1b_ref[l])

            # ---- feed-forward -----------------------------------------------
            h1 = jnp.dot(_bf16(x), w1_ref[l],
                         preferred_element_type=jnp.float32) + b1_ref[l]
            h1 = jax.nn.gelu(h1)
            h2 = jnp.dot(_bf16(h1), w2_ref[l],
                         preferred_element_type=jnp.float32) + b2_ref[l]
            x = _layernorm(x + h2, ln2g_ref[l], ln2b_ref[l])

        # ---- [CLS] pooler + classification head, for every pair in the block
        cls = x.reshape(P, S, H)[:, 0:1, :].reshape(P, H)            # (P, H)
        pooled = jnp.tanh(
            jnp.dot(_bf16(cls), wp_ref[...],
                    preferred_element_type=jnp.float32) + bp_ref[...])
        logits_ref[...] = jnp.dot(_bf16(pooled), wc_ref[...],
                                  preferred_element_type=jnp.float32) + bc_ref[...]

    return encoder_kernel


# ------------------------------ wrappers --------------------------------------
def _const_spec(arr):
    nd = arr.ndim
    return pl.BlockSpec(arr.shape, lambda g, _nd=nd: (0,) * _nd)


def encode_pairs(token_ids, attn_mask, params, pairs_per_block=None):
    """Run the sequence-classification backbone; returns (N, 2) logits."""
    N, S = token_ids.shape
    if pairs_per_block is None:
        # Pick P so each dot has at least 128 rows (M = P*SEQ), without padding
        # tiny batches past the next multiple of MIN_PAIRS_PER_BLOCK pairs.
        P = min(PAIRS_PER_BLOCK,
                max(MIN_PAIRS_PER_BLOCK,
                    ((N + MIN_PAIRS_PER_BLOCK - 1) // MIN_PAIRS_PER_BLOCK)
                    * MIN_PAIRS_PER_BLOCK))
    else:
        P = pairs_per_block

    padded = ((N + P - 1) // P) * P
    if padded != N:
        pad = padded - N
        token_ids = jnp.concatenate(
            [token_ids, jnp.zeros((pad, S), token_ids.dtype)], axis=0)
        attn_mask = jnp.concatenate(
            [attn_mask, jnp.zeros((pad, S), attn_mask.dtype)], axis=0)
    G = padded // P

    ids = token_ids.astype(jnp.int32)                  # (padded, S)
    mask = attn_mask.astype(jnp.float32)               # (padded, S)
    tok_emb = params["tok_emb"].astype(jnp.bfloat16)   # bf16 MXU operand
    pos_emb = params["pos_emb"].astype(jnp.float32)
    weights = [params[n].astype(jnp.bfloat16) if n in BF16_WEIGHTS else params[n]
               for n in WEIGHT_NAMES]

    in_specs = [
        pl.BlockSpec((P, S), lambda g: (g, 0)),        # token ids
        pl.BlockSpec((P, S), lambda g: (g, 0)),        # attention mask
        _const_spec(tok_emb),
        _const_spec(pos_emb),
    ] + [_const_spec(w) for w in weights]
    # TODO(synk): constant weights could be single-buffered (pipeline_mode);
    # left default-buffered — total weight footprint is ~1 MiB, far under VMEM.

    out = pl.pallas_call(
        make_encoder_kernel(P),
        out_shape=jax.ShapeDtypeStruct((padded, LOGIT_PAD), jnp.float32),
        grid_spec=pltpu.PrefetchScalarGridSpec(
            num_scalar_prefetch=0,
            grid=(G,),
            in_specs=in_specs,
            # flat, sublane/lane-dense (P, 128) output block per grid step
            out_specs=pl.BlockSpec((P, LOGIT_PAD), lambda g: (g, 0)),
        ),
        compiler_params=pltpu.CompilerParams(
            dimension_semantics=("parallel",)),        # megacore when G >= 2
    )(ids, mask, tok_emb, pos_emb, *weights)
    return out[:N, :NUM_LABELS]                        # (N, 2)


def score_pairs(token_ids, attn_mask, params):
    """Score of a (query, doc) pair = positive-class logit (index 0)."""
    return encode_pairs(token_ids, attn_mask, params)[:, 0]


def cross_encoder_forward(pos_ids, pos_mask, neg_ids, neg_mask, params):
    """Mirrors CrossEncoder.forward: returns (loss, pos_scores, neg_scores)."""
    B = pos_ids.shape[0]
    # single fused pallas_call over pos + neg pairs
    ids = jnp.concatenate([pos_ids, neg_ids], axis=0)
    mask = jnp.concatenate([pos_mask, neg_mask], axis=0)
    all_scores = encode_pairs(ids, mask, params)[:, 0]
    pos_scores, neg_scores = all_scores[:B], all_scores[B:]
    scores = jnp.stack([pos_scores, neg_scores], axis=1)          # (B, 2)
    # labels are all 0 -> CE loss = mean(logsumexp(scores) - scores[:, 0])
    loss = jnp.mean(jax.nn.logsumexp(scores, axis=1) - scores[:, 0])
    return loss, pos_scores, neg_scores


# --------------------------- parameter init -----------------------------------
def init_params(key):
    keys = iter(jax.random.split(key, 40))

    def nrm(shape, scale=0.02):
        return scale * jax.random.normal(next(keys), shape, dtype=jnp.float32)

    L, H, F = NUM_LAYERS, HIDDEN, FFN
    p = {
        "tok_emb": nrm((VOCAB, H)),
        "pos_emb": nrm((SEQ, H)),
        "wq": nrm((L, H, H)), "bq": jnp.zeros((L, 1, H), jnp.float32),
        "wk": nrm((L, H, H)), "bk": jnp.zeros((L, 1, H), jnp.float32),
        "wv": nrm((L, H, H)), "bv": jnp.zeros((L, 1, H), jnp.float32),
        "wo": nrm((L, H, H)), "bo": jnp.zeros((L, 1, H), jnp.float32),
        "ln1g": jnp.ones((L, 1, H), jnp.float32),
        "ln1b": jnp.zeros((L, 1, H), jnp.float32),
        "w1": nrm((L, H, F)), "b1": jnp.zeros((L, 1, F), jnp.float32),
        "w2": nrm((L, F, H)), "b2": jnp.zeros((L, 1, H), jnp.float32),
        "ln2g": jnp.ones((L, 1, H), jnp.float32),
        "ln2b": jnp.zeros((L, 1, H), jnp.float32),
        "wp": nrm((H, H)), "bp": jnp.zeros((1, H), jnp.float32),
    }
    # classifier to 2 labels, zero-padded to one lane width (128)
    wc = jnp.zeros((H, LOGIT_PAD), jnp.float32)
    wc = wc.at[:, :NUM_LABELS].set(nrm((H, NUM_LABELS)))
    p["wc"] = wc
    p["bc"] = jnp.zeros((1, LOGIT_PAD), jnp.float32)
    return p
# TODO(synk): HF tokenizer + pretrained checkpoint loading have no Pallas
# equivalent; weights are deterministic synthetic tensors of matching roles.


# --------------------------------- main ----------------------------------------
if __name__ == "__main__":
    key = jax.random.PRNGKey(0)
    pkey, dkey = jax.random.split(key)
    params = init_params(pkey)

    k1, k2 = jax.random.split(dkey)
    pos_ids = jax.random.randint(k1, (BATCH, SEQ), 0, VOCAB)
    neg_ids = jax.random.randint(k2, (BATCH, SEQ), 0, VOCAB)
    idx = jnp.arange(SEQ)[None, :]
    pos_mask = (idx < jnp.array([[SEQ], [SEQ - 3]])).astype(jnp.int32)   # some padding
    neg_mask = (idx < jnp.array([[SEQ - 2], [SEQ]])).astype(jnp.int32)

    forward = jax.jit(cross_encoder_forward)
    loss, pos_scores, neg_scores = forward(
        pos_ids, pos_mask, neg_ids, neg_mask, params)
    jax.block_until_ready((loss, pos_scores, neg_scores))
    assert loss.shape == () and pos_scores.shape == (BATCH,) and neg_scores.shape == (BATCH,)
    assert bool(jnp.isfinite(loss))
    print("KERNEL_OK")
</pallas_src>

<mosaic_0001>
module attributes {stable_mosaic.version = 11 : i64} {
  func.func @encoder_kernel(%arg0: i32, %arg1: memref<8x16xi32, #tpu.memory_space<vmem>>, %arg2: memref<8x16xf32, #tpu.memory_space<vmem>>, %arg3: memref<64x128xbf16, #tpu.memory_space<vmem>>, %arg4: memref<16x128xf32, #tpu.memory_space<vmem>>, %arg5: memref<2x128x128xbf16, #tpu.memory_space<vmem>>, %arg6: memref<2x1x128xf32, #tpu.memory_space<vmem>>, %arg7: memref<2x128x128xbf16, #tpu.memory_space<vmem>>, %arg8: memref<2x1x128xf32, #tpu.memory_space<vmem>>, %arg9: memref<2x128x128xbf16, #tpu.memory_space<vmem>>, %arg10: memref<2x1x128xf32, #tpu.memory_space<vmem>>, %arg11: memref<2x128x128xbf16, #tpu.memory_space<vmem>>, %arg12: memref<2x1x128xf32, #tpu.memory_space<vmem>>, %arg13: memref<2x1x128xf32, #tpu.memory_space<vmem>>, %arg14: memref<2x1x128xf32, #tpu.memory_space<vmem>>, %arg15: memref<2x128x256xbf16, #tpu.memory_space<vmem>>, %arg16: memref<2x1x256xf32, #tpu.memory_space<vmem>>, %arg17: memref<2x256x128xbf16, #tpu.memory_space<vmem>>, %arg18: memref<2x1x128xf32, #tpu.memory_space<vmem>>, %arg19: memref<2x1x128xf32, #tpu.memory_space<vmem>>, %arg20: memref<2x1x128xf32, #tpu.memory_space<vmem>>, %arg21: memref<128x128xbf16, #tpu.memory_space<vmem>>, %arg22: memref<1x128xf32, #tpu.memory_space<vmem>>, %arg23: memref<128x128xbf16, #tpu.memory_space<vmem>>, %arg24: memref<1x128xf32, #tpu.memory_space<vmem>>, %arg25: memref<8x128xf32, #tpu.memory_space<vmem>>) attributes {dimension_semantics = [#tpu.dimension_semantics<parallel>], iteration_bounds = array<i64: 1>, scalar_prefetch = 0 : i64, scratch_operands = 0 : i64, tpu.core_type = #tpu.core_type<tc>, window_params = [{transform_indices = @transform_0, window_bounds = array<i64: 8, 16>}, {transform_indices = @transform_1, window_bounds = array<i64: 8, 16>}, {pipeline_mode = #tpu.pipeline_mode<synchronous>, transform_indices = @transform_2, window_bounds = array<i64: 64, 128>}, {pipeline_mode = #tpu.pipeline_mode<synchronous>, transform_indices = @transform_3, window_bounds = array<i64: 16, 128>}, {pipeline_mode = #tpu.pipeline_mode<synchronous>, transform_indices = @transform_4, window_bounds = array<i64: 2, 128, 128>}, {pipeline_mode = #tpu.pipeline_mode<synchronous>, transform_indices = @transform_5, window_bounds = array<i64: 2, 1, 128>}, {pipeline_mode = #tpu.pipeline_mode<synchronous>, transform_indices = @transform_6, window_bounds = array<i64: 2, 128, 128>}, {pipeline_mode = #tpu.pipeline_mode<synchronous>, transform_indices = @transform_7, window_bounds = array<i64: 2, 1, 128>}, {pipeline_mode = #tpu.pipeline_mode<synchronous>, transform_indices = @transform_8, window_bounds = array<i64: 2, 128, 128>}, {pipeline_mode = #tpu.pipeline_mode<synchronous>, transform_indices = @transform_9, window_bounds = array<i64: 2, 1, 128>}, {pipeline_mode = #tpu.pipeline_mode<synchronous>, transform_indices = @transform_10, window_bounds = array<i64: 2, 128, 128>}, {pipeline_mode = #tpu.pipeline_mode<synchronous>, transform_indices = @transform_11, window_bounds = array<i64: 2, 1, 128>}, {pipeline_mode = #tpu.pipeline_mode<synchronous>, transform_indices = @transform_12, window_bounds = array<i64: 2, 1, 128>}, {pipeline_mode = #tpu.pipeline_mode<synchronous>, transform_indices = @transform_13, window_bounds = array<i64: 2, 1, 128>}, {pipeline_mode = #tpu.pipeline_mode<synchronous>, transform_indices = @transform_14, window_bounds = array<i64: 2, 128, 256>}, {pipeline_mode = #tpu.pipeline_mode<synchronous>, transform_indices = @transform_15, window_bounds = array<i64: 2, 1, 256>}, {pipeline_mode = #tpu.pipeline_mode<synchronous>, transform_indices = @transform_16, window_bounds = array<i64: 2, 256, 128>}, {pipeline_mode = #tpu.pipeline_mode<synchronous>, transform_indices = @transform_17, window_bounds = array<i64: 2, 1, 128>}, {pipeline_mode = #tpu.pipeline_mode<synchronous>, transform_indices = @transform_18, window_bounds = array<i64: 2, 1, 128>}, {pipeline_mode = #tpu.pipeline_mode<synchronous>, transform_indices = @transform_19, window_bounds = array<i64: 2, 1, 128>}, {pipeline_mode = #tpu.pipeline_mode<synchronous>, transform_indices = @transform_20, window_bounds = array<i64: 128, 128>}, {pipeline_mode = #tpu.pipeline_mode<synchronous>, transform_indices = @transform_21, window_bounds = array<i64: 1, 128>}, {pipeline_mode = #tpu.pipeline_mode<synchronous>, transform_indices = @transform_22, window_bounds = array<i64: 128, 128>}, {pipeline_mode = #tpu.pipeline_mode<synchronous>, transform_indices = @transform_23, window_bounds = array<i64: 1, 128>}, {transform_indices = @transform_24, window_bounds = array<i64: 8, 128>}]} {
    %c0 = arith.constant 0 : index
    %c0_0 = arith.constant 0 : index
    %0 = vector.load %arg1[%c0, %c0_0] : memref<8x16xi32, #tpu.memory_space<vmem>>, vector<8x16xi32>
    %c0_1 = arith.constant 0 : index
    %c0_2 = arith.constant 0 : index
    %1 = vector.load %arg2[%c0_1, %c0_2] : memref<8x16xf32, #tpu.memory_space<vmem>>, vector<8x16xf32>
    %2 = tpu.iota {dimensions = array<i32: 2>} : vector<8x16x64xi32>
    %3 = vector.shape_cast %0 : vector<8x16xi32> to vector<8x16x1xi32>
    %4 = vector.broadcast %3 : vector<8x16x1xi32> to vector<8x16x64xi32>
    %5 = arith.cmpi eq, %4, %2 : vector<8x16x64xi32>
    %6 = arith.extui %5 : vector<8x16x64xi1> to vector<8x16x64xi32>
    %7 = arith.sitofp %6 : vector<8x16x64xi32> to vector<8x16x64xf32>
    %8 = arith.truncf %7 : vector<8x16x64xf32> to vector<8x16x64xbf16>
    %9 = vector.shape_cast %8 : vector<8x16x64xbf16> to vector<128x64xbf16>
    %c0_3 = arith.constant 0 : index
    %c0_4 = arith.constant 0 : index
    %10 = vector.load %arg3[%c0_3, %c0_4] : memref<64x128xbf16, #tpu.memory_space<vmem>>, vector<64x128xbf16>
    %cst = arith.constant dense<0.000000e+00> : vector<128x128xf32>
    %11 = tpu.matmul %9, %10, %cst {dimension_numbers = #tpu.dot_dimension_numbers<[1], [0], [0], [1], [0, 0, 1, 1], [], []>} : vector<128x64xbf16>, vector<64x128xbf16>, vector<128x128xf32> -> vector<128x128xf32>
    %12 = vector.shape_cast %11 : vector<128x128xf32> to vector<8x16x128xf32>
    %c0_5 = arith.constant 0 : index
    %c0_6 = arith.constant 0 : index
    %13 = vector.load %arg4[%c0_5, %c0_6] : memref<16x128xf32, #tpu.memory_space<vmem>>, vector<16x128xf32>
    %14 = vector.shape_cast %13 : vector<16x128xf32> to vector<1x16x128xf32>
    %15 = vector.broadcast %14 : vector<1x16x128xf32> to vector<8x16x128xf32>
    %16 = arith.addf %12, %15 : vector<8x16x128xf32>
    %17 = vector.shape_cast %16 : vector<8x16x128xf32> to vector<128x128xf32>
    %cst_7 = arith.constant 1.000000e+00 : f32
    %18 = vector.broadcast %cst_7 : f32 to vector<8x16xf32>
    %19 = arith.subf %18, %1 : vector<8x16xf32>
    %cst_8 = arith.constant -1.000000e+09 : f32
    %20 = vector.broadcast %cst_8 : f32 to vector<8x16xf32>
    %21 = arith.mulf %19, %20 : vector<8x16xf32>
    %22 = vector.shape_cast %21 : vector<8x16xf32> to vector<8x1x16xf32>
    %23 = tpu.concatenate %22, %22 in 0 : vector<8x1x16xf32>, vector<8x1x16xf32> -> vector<16x1x16xf32>
    %24 = arith.truncf %17 : vector<128x128xf32> to vector<128x128xbf16>
    %c0_9 = arith.constant 0 : index
    %c0_10 = arith.constant 0 : index
    %c0_11 = arith.constant 0 : index
    %25 = vector.load %arg5[%c0_9, %c0_10, %c0_11] : memref<2x128x128xbf16, #tpu.memory_space<vmem>>, vector<1x128x128xbf16>
    %26 = vector.shape_cast %25 : vector<1x128x128xbf16> to vector<128x128xbf16>
    %cst_12 = arith.constant dense<0.000000e+00> : vector<128x128xf32>
    %27 = tpu.matmul %24, %26, %cst_12 {dimension_numbers = #tpu.dot_dimension_numbers<[1], [0], [0], [1], [0, 0, 1, 1], [], []>} : vector<128x128xbf16>, vector<128x128xbf16>, vector<128x128xf32> -> vector<128x128xf32>
    %c0_13 = arith.constant 0 : index
    %c0_14 = arith.constant 0 : index
    %c0_15 = arith.constant 0 : index
    %28 = vector.load %arg6[%c0_13, %c0_14, %c0_15] : memref<2x1x128xf32, #tpu.memory_space<vmem>>, vector<1x1x128xf32>
    %29 = vector.shape_cast %28 : vector<1x1x128xf32> to vector<1x128xf32>
    %30 = vector.broadcast %29 : vector<1x128xf32> to vector<128x128xf32>
    %31 = arith.addf %27, %30 : vector<128x128xf32>
    %c0_16 = arith.constant 0 : index
    %c0_17 = arith.constant 0 : index
    %c0_18 = arith.constant 0 : index
    %32 = vector.load %arg7[%c0_16, %c0_17, %c0_18] : memref<2x128x128xbf16, #tpu.memory_space<vmem>>, vector<1x128x128xbf16>
    %33 = vector.shape_cast %32 : vector<1x128x128xbf16> to vector<128x128xbf16>
    %cst_19 = arith.constant dense<0.000000e+00> : vector<128x128xf32>
    %34 = tpu.matmul %24, %33, %cst_19 {dimension_numbers = #tpu.dot_dimension_numbers<[1], [0], [0], [1], [0, 0, 1, 1], [], []>} : vector<128x128xbf16>, vector<128x128xbf16>, vector<128x128xf32> -> vector<128x128xf32>
    %c0_20 = arith.constant 0 : index
    %c0_21 = arith.constant 0 : index
    %c0_22 = arith.constant 0 : index
    %35 = vector.load %arg8[%c0_20, %c0_21, %c0_22] : memref<2x1x128xf32, #tpu.memory_space<vmem>>, vector<1x1x128xf32>
    %36 = vector.shape_cast %35 : vector<1x1x128xf32> to vector<1x128xf32>
    %37 = vector.broadcast %36 : vector<1x128xf32> to vector<128x128xf32>
    %38 = arith.addf %34, %37 : vector<128x128xf32>
    %c0_23 = arith.constant 0 : index
    %c0_24 = arith.constant 0 : index
    %c0_25 = arith.constant 0 : index
    %39 = vector.load %arg9[%c0_23, %c0_24, %c0_25] : memref<2x128x128xbf16, #tpu.memory_space<vmem>>, vector<1x128x128xbf16>
    %40 = vector.shape_cast %39 : vector<1x128x128xbf16> to vector<128x128xbf16>
    %cst_26 = arith.constant dense<0.000000e+00> : vector<128x128xf32>
    %41 = tpu.matmul %24, %40, %cst_26 {dimension_numbers = #tpu.dot_dimension_numbers<[1], [0], [0], [1], [0, 0, 1, 1], [], []>} : vector<128x128xbf16>, vector<128x128xbf16>, vector<128x128xf32> -> vector<128x128xf32>
    %c0_27 = arith.constant 0 : index
    %c0_28 = arith.constant 0 : index
    %c0_29 = arith.constant 0 : index
    %42 = vector.load %arg10[%c0_27, %c0_28, %c0_29] : memref<2x1x128xf32, #tpu.memory_space<vmem>>, vector<1x1x128xf32>
    %43 = vector.shape_cast %42 : vector<1x1x128xf32> to vector<1x128xf32>
    %44 = vector.broadcast %43 : vector<1x128xf32> to vector<128x128xf32>
    %45 = arith.addf %41, %44 : vector<128x128xf32>
    %46 = vector.shape_cast %31 : vector<128x128xf32> to vector<8x16x128xf32>
    %47 = vector.shape_cast %38 : vector<128x128xf32> to vector<8x16x128xf32>
    %48 = vector.shape_cast %45 : vector<128x128xf32> to vector<8x16x128xf32>
    %49 = vector.extract_strided_slice %46 {offsets = [0, 0, 0], sizes = [8, 16, 64], strides = [1, 1, 1]} : vector<8x16x128xf32> to vector<8x16x64xf32>
    %50 = arith.truncf %49 : vector<8x16x64xf32> to vector<8x16x64xbf16>
    %51 = vector.extract_strided_slice %46 {offsets = [0, 0, 64], sizes = [8, 16, 64], strides = [1, 1, 1]} : vector<8x16x128xf32> to vector<8x16x64xf32>
    %52 = arith.truncf %51 : vector<8x16x64xf32> to vector<8x16x64xbf16>
    %53 = tpu.concatenate %50, %52 in 0 : vector<8x16x64xbf16>, vector<8x16x64xbf16> -> vector<16x16x64xbf16>
    %54 = vector.extract_strided_slice %47 {offsets = [0, 0, 0], sizes = [8, 16, 64], strides = [1, 1, 1]} : vector<8x16x128xf32> to vector<8x16x64xf32>
    %55 = arith.truncf %54 : vector<8x16x64xf32> to vector<8x16x64xbf16>
    %56 = vector.extract_strided_slice %47 {offsets = [0, 0, 64], sizes = [8, 16, 64], strides = [1, 1, 1]} : vector<8x16x128xf32> to vector<8x16x64xf32>
    %57 = arith.truncf %56 : vector<8x16x64xf32> to vector<8x16x64xbf16>
    %58 = tpu.concatenate %55, %57 in 0 : vector<8x16x64xbf16>, vector<8x16x64xbf16> -> vector<16x16x64xbf16>
    %59 = vector.extract_strided_slice %48 {offsets = [0, 0, 0], sizes = [8, 16, 64], strides = [1, 1, 1]} : vector<8x16x128xf32> to vector<8x16x64xf32>
    %60 = arith.truncf %59 : vector<8x16x64xf32> to vector<8x16x64xbf16>
    %61 = vector.extract_strided_slice %48 {offsets = [0, 0, 64], sizes = [8, 16, 64], strides = [1, 1, 1]} : vector<8x16x128xf32> to vector<8x16x64xf32>
    %62 = arith.truncf %61 : vector<8x16x64xf32> to vector<8x16x64xbf16>
    %63 = tpu.concatenate %60, %62 in 0 : vector<8x16x64xbf16>, vector<8x16x64xbf16> -> vector<16x16x64xbf16>
    "tpu.trace_start"() <{level = 10 : i32, message = "bqd,bkd->bqk"}> : () -> ()
    %cst_30 = arith.constant dense<0.000000e+00> : vector<16x16x16xf32>
    %64 = tpu.matmul %53, %58, %cst_30 {dimension_numbers = #tpu.dot_dimension_numbers<[2], [2], [1], [1], [0, 0, 0, 1, 1, 1], [0], [0]>} : vector<16x16x64xbf16>, vector<16x16x64xbf16>, vector<16x16x16xf32> -> vector<16x16x16xf32>
    "tpu.trace_stop"() : () -> ()
    %cst_31 = arith.constant 1.250000e-01 : f32
    %65 = vector.broadcast %cst_31 : f32 to vector<16x16x16xf32>
    %66 = arith.mulf %64, %65 : vector<16x16x16xf32>
    %67 = vector.broadcast %23 : vector<16x1x16xf32> to vector<16x16x16xf32>
    %68 = arith.addf %66, %67 : vector<16x16x16xf32>
    %cst_32 = arith.constant dense<0xFF800000> : vector<16x16xf32>
    %69 = vector.multi_reduction <maximumf>, %68, %cst_32 [2] : vector<16x16x16xf32> to vector<16x16xf32>
    %70 = vector.shape_cast %69 : vector<16x16xf32> to vector<16x16x1xf32>
    %71 = vector.broadcast %70 : vector<16x16x1xf32> to vector<16x16x16xf32>
    %72 = arith.subf %68, %71 : vector<16x16x16xf32>
    %73 = math.exp %72 : vector<16x16x16xf32>
    %cst_33 = arith.constant dense<0.000000e+00> : vector<16x16xf32>
    %74 = vector.multi_reduction <add>, %73, %cst_33 [2] : vector<16x16x16xf32> to vector<16x16xf32>
    %75 = vector.shape_cast %74 : vector<16x16xf32> to vector<16x16x1xf32>
    %76 = tpu.reciprocal %75 {approx = true} : vector<16x16x1xf32> -> vector<16x16x1xf32>
    %77 = vector.broadcast %76 : vector<16x16x1xf32> to vector<16x16x16xf32>
    %78 = arith.mulf %73, %77 : vector<16x16x16xf32>
    %79 = arith.truncf %78 : vector<16x16x16xf32> to vector<16x16x16xbf16>
    "tpu.trace_start"() <{level = 10 : i32, message = "bqk,bkd->bqd"}> : () -> ()
    %cst_34 = arith.constant dense<0.000000e+00> : vector<16x16x64xf32>
    %80 = tpu.matmul %79, %63, %cst_34 {dimension_numbers = #tpu.dot_dimension_numbers<[2], [1], [1], [2], [0, 0, 0, 1, 1, 2], [0], [0]>} : vector<16x16x16xbf16>, vector<16x16x64xbf16>, vector<16x16x64xf32> -> vector<16x16x64xf32>
    "tpu.trace_stop"() : () -> ()
    %81 = vector.extract_strided_slice %80 {offsets = [0, 0, 0], sizes = [8, 16, 64], strides = [1, 1, 1]} : vector<16x16x64xf32> to vector<8x16x64xf32>
    %82 = vector.extract_strided_slice %80 {offsets = [8, 0, 0], sizes = [8, 16, 64], strides = [1, 1, 1]} : vector<16x16x64xf32> to vector<8x16x64xf32>
    %83 = tpu.concatenate %81, %82 in 2 : vector<8x16x64xf32>, vector<8x16x64xf32> -> vector<8x16x128xf32>
    %84 = vector.shape_cast %83 : vector<8x16x128xf32> to vector<128x128xf32>
    %85 = arith.truncf %84 : vector<128x128xf32> to vector<128x128xbf16>
    %c0_35 = arith.constant 0 : index
    %c0_36 = arith.constant 0 : index
    %c0_37 = arith.constant 0 : index
    %86 = vector.load %arg11[%c0_35, %c0_36, %c0_37] : memref<2x128x128xbf16, #tpu.memory_space<vmem>>, vector<1x128x128xbf16>
    %87 = vector.shape_cast %86 : vector<1x128x128xbf16> to vector<128x128xbf16>
    %cst_38 = arith.constant dense<0.000000e+00> : vector<128x128xf32>
    %88 = tpu.matmul %85, %87, %cst_38 {dimension_numbers = #tpu.dot_dimension_numbers<[1], [0], [0], [1], [0, 0, 1, 1], [], []>} : vector<128x128xbf16>, vector<128x128xbf16>, vector<128x128xf32> -> vector<128x128xf32>
    %c0_39 = arith.constant 0 : index
    %c0_40 = arith.constant 0 : index
    %c0_41 = arith.constant 0 : index
    %89 = vector.load %arg12[%c0_39, %c0_40, %c0_41] : memref<2x1x128xf32, #tpu.memory_space<vmem>>, vector<1x1x128xf32>
    %90 = vector.shape_cast %89 : vector<1x1x128xf32> to vector<1x128xf32>
    %91 = vector.broadcast %90 : vector<1x128xf32> to vector<128x128xf32>
    %92 = arith.addf %88, %91 : vector<128x128xf32>
    %93 = arith.addf %17, %92 : vector<128x128xf32>
    %c0_42 = arith.constant 0 : index
    %c0_43 = arith.constant 0 : index
    %c0_44 = arith.constant 0 : index
    %94 = vector.load %arg13[%c0_42, %c0_43, %c0_44] : memref<2x1x128xf32, #tpu.memory_space<vmem>>, vector<1x1x128xf32>
    %95 = vector.shape_cast %94 : vector<1x1x128xf32> to vector<1x128xf32>
    %c0_45 = arith.constant 0 : index
    %c0_46 = arith.constant 0 : index
    %c0_47 = arith.constant 0 : index
    %96 = vector.load %arg14[%c0_45, %c0_46, %c0_47] : memref<2x1x128xf32, #tpu.memory_space<vmem>>, vector<1x1x128xf32>
    %97 = vector.shape_cast %96 : vector<1x1x128xf32> to vector<1x128xf32>
    %cst_48 = arith.constant dense<0.000000e+00> : vector<128xf32>
    %98 = vector.multi_reduction <add>, %93, %cst_48 [1] : vector<128x128xf32> to vector<128xf32>
    %99 = vector.shape_cast %98 : vector<128xf32> to vector<128x1xf32>
    %cst_49 = arith.constant 1.280000e+02 : f32
    %100 = vector.broadcast %cst_49 : f32 to vector<128x1xf32>
    %101 = arith.divf %99, %100 : vector<128x1xf32>
    %102 = vector.broadcast %101 : vector<128x1xf32> to vector<128x128xf32>
    %103 = arith.subf %93, %102 : vector<128x128xf32>
    %104 = arith.mulf %103, %103 : vector<128x128xf32>
    %cst_50 = arith.constant dense<0.000000e+00> : vector<128xf32>
    %105 = vector.multi_reduction <add>, %104, %cst_50 [1] : vector<128x128xf32> to vector<128xf32>
    %106 = vector.shape_cast %105 : vector<128xf32> to vector<128x1xf32>
    %cst_51 = arith.constant 1.280000e+02 : f32
    %107 = vector.broadcast %cst_51 : f32 to vector<128x1xf32>
    %108 = arith.divf %106, %107 : vector<128x1xf32>
    %109 = vector.broadcast %101 : vector<128x1xf32> to vector<128x128xf32>
    %110 = arith.subf %93, %109 : vector<128x128xf32>
    %cst_52 = arith.constant 9.99999996E-13 : f32
    %111 = vector.broadcast %cst_52 : f32 to vector<128x1xf32>
    %112 = arith.addf %108, %111 : vector<128x1xf32>
    %113 = math.rsqrt %112 : vector<128x1xf32>
    %114 = vector.broadcast %113 : vector<128x1xf32> to vector<128x128xf32>
    %115 = arith.mulf %110, %114 : vector<128x128xf32>
    %116 = vector.broadcast %95 : vector<1x128xf32> to vector<128x128xf32>
    %117 = arith.mulf %115, %116 : vector<128x128xf32>
    %118 = vector.broadcast %97 : vector<1x128xf32> to vector<128x128xf32>
    %119 = arith.addf %117, %118 : vector<128x128xf32>
    %120 = arith.truncf %119 : vector<128x128xf32> to vector<128x128xbf16>
    %c0_53 = arith.constant 0 : index
    %c0_54 = arith.constant 0 : index
    %c0_55 = arith.constant 0 : index
    %121 = vector.load %arg15[%c0_53, %c0_54, %c0_55] : memref<2x128x256xbf16, #tpu.memory_space<vmem>>, vector<1x128x256xbf16>
    %122 = vector.shape_cast %121 : vector<1x128x256xbf16> to vector<128x256xbf16>
    %cst_56 = arith.constant dense<0.000000e+00> : vector<128x256xf32>
    %123 = tpu.matmul %120, %122, %cst_56 {dimension_numbers = #tpu.dot_dimension_numbers<[1], [0], [0], [1], [0, 0, 1, 1], [], []>} : vector<128x128xbf16>, vector<128x256xbf16>, vector<128x256xf32> -> vector<128x256xf32>
    %c0_57 = arith.constant 0 : index
    %c0_58 = arith.constant 0 : index
    %c0_59 = arith.constant 0 : index
    %124 = vector.load %arg16[%c0_57, %c0_58, %c0_59] : memref<2x1x256xf32, #tpu.memory_space<vmem>>, vector<1x1x256xf32>
    %125 = vector.shape_cast %124 : vector<1x1x256xf32> to vector<1x256xf32>
    %126 = vector.broadcast %125 : vector<1x256xf32> to vector<128x256xf32>
    %127 = arith.addf %123, %126 : vector<128x256xf32>
    %128 = arith.mulf %127, %127 : vector<128x256xf32>
    %129 = arith.mulf %127, %128 : vector<128x256xf32>
    %cst_60 = arith.constant 4.471500e-02 : f32
    %130 = vector.broadcast %cst_60 : f32 to vector<128x256xf32>
    %131 = arith.mulf %130, %129 : vector<128x256xf32>
    %132 = arith.addf %127, %131 : vector<128x256xf32>
    %cst_61 = arith.constant 0.797884583 : f32
    %133 = vector.broadcast %cst_61 : f32 to vector<128x256xf32>
    %134 = arith.mulf %133, %132 : vector<128x256xf32>
    %135 = math.tanh %134 : vector<128x256xf32>
    %cst_62 = arith.constant 1.000000e+00 : f32
    %136 = vector.broadcast %cst_62 : f32 to vector<128x256xf32>
    %137 = arith.addf %136, %135 : vector<128x256xf32>
    %cst_63 = arith.constant 5.000000e-01 : f32
    %138 = vector.broadcast %cst_63 : f32 to vector<128x256xf32>
    %139 = arith.mulf %138, %137 : vector<128x256xf32>
    %140 = arith.mulf %127, %139 : vector<128x256xf32>
    %141 = arith.truncf %140 : vector<128x256xf32> to vector<128x256xbf16>
    %c0_64 = arith.constant 0 : index
    %c0_65 = arith.constant 0 : index
    %c0_66 = arith.constant 0 : index
    %142 = vector.load %arg17[%c0_64, %c0_65, %c0_66] : memref<2x256x128xbf16, #tpu.memory_space<vmem>>, vector<1x256x128xbf16>
    %143 = vector.shape_cast %142 : vector<1x256x128xbf16> to vector<256x128xbf16>
    %cst_67 = arith.constant dense<0.000000e+00> : vector<128x128xf32>
    %144 = tpu.matmul %141, %143, %cst_67 {dimension_numbers = #tpu.dot_dimension_numbers<[1], [0], [0], [1], [0, 0, 1, 1], [], []>} : vector<128x256xbf16>, vector<256x128xbf16>, vector<128x128xf32> -> vector<128x128xf32>
    %c0_68 = arith.constant 0 : index
    %c0_69 = arith.constant 0 : index
    %c0_70 = arith.constant 0 : index
    %145 = vector.load %arg18[%c0_68, %c0_69, %c0_70] : memref<2x1x128xf32, #tpu.memory_space<vmem>>, vector<1x1x128xf32>
    %146 = vector.shape_cast %145 : vector<1x1x128xf32> to vector<1x128xf32>
    %147 = vector.broadcast %146 : vector<1x128xf32> to vector<128x128xf32>
    %148 = arith.addf %144, %147 : vector<128x128xf32>
    %149 = arith.addf %119, %148 : vector<128x128xf32>
    %c0_71 = arith.constant 0 : index
    %c0_72 = arith.constant 0 : index
    %c0_73 = arith.constant 0 : index
    %150 = vector.load %arg19[%c0_71, %c0_72, %c0_73] : memref<2x1x128xf32, #tpu.memory_space<vmem>>, vector<1x1x128xf32>
    %151 = vector.shape_cast %150 : vector<1x1x128xf32> to vector<1x128xf32>
    %c0_74 = arith.constant 0 : index
    %c0_75 = arith.constant 0 : index
    %c0_76 = arith.constant 0 : index
    %152 = vector.load %arg20[%c0_74, %c0_75, %c0_76] : memref<2x1x128xf32, #tpu.memory_space<vmem>>, vector<1x1x128xf32>
    %153 = vector.shape_cast %152 : vector<1x1x128xf32> to vector<1x128xf32>
    %cst_77 = arith.constant dense<0.000000e+00> : vector<128xf32>
    %154 = vector.multi_reduction <add>, %149, %cst_77 [1] : vector<128x128xf32> to vector<128xf32>
    %155 = vector.shape_cast %154 : vector<128xf32> to vector<128x1xf32>
    %cst_78 = arith.constant 1.280000e+02 : f32
    %156 = vector.broadcast %cst_78 : f32 to vector<128x1xf32>
    %157 = arith.divf %155, %156 : vector<128x1xf32>
    %158 = vector.broadcast %157 : vector<128x1xf32> to vector<128x128xf32>
    %159 = arith.subf %149, %158 : vector<128x128xf32>
    %160 = arith.mulf %159, %159 : vector<128x128xf32>
    %cst_79 = arith.constant dense<0.000000e+00> : vector<128xf32>
    %161 = vector.multi_reduction <add>, %160, %cst_79 [1] : vector<128x128xf32> to vector<128xf32>
    %162 = vector.shape_cast %161 : vector<128xf32> to vector<128x1xf32>
    %cst_80 = arith.constant 1.280000e+02 : f32
    %163 = vector.broadcast %cst_80 : f32 to vector<128x1xf32>
    %164 = arith.divf %162, %163 : vector<128x1xf32>
    %165 = vector.broadcast %157 : vector<128x1xf32> to vector<128x128xf32>
    %166 = arith.subf %149, %165 : vector<128x128xf32>
    %cst_81 = arith.constant 9.99999996E-13 : f32
    %167 = vector.broadcast %cst_81 : f32 to vector<128x1xf32>
    %168 = arith.addf %164, %167 : vector<128x1xf32>
    %169 = math.rsqrt %168 : vector<128x1xf32>
    %170 = vector.broadcast %169 : vector<128x1xf32> to vector<128x128xf32>
    %171 = arith.mulf %166, %170 : vector<128x128xf32>
    %172 = vector.broadcast %151 : vector<1x128xf32> to vector<128x128xf32>
    %173 = arith.mulf %171, %172 : vector<128x128xf32>
    %174 = vector.broadcast %153 : vector<1x128xf32> to vector<128x128xf32>
    %175 = arith.addf %173, %174 : vector<128x128xf32>
    %176 = arith.truncf %175 : vector<128x128xf32> to vector<128x128xbf16>
    %c1 = arith.constant 1 : index
    %c0_82 = arith.constant 0 : index
    %c0_83 = arith.constant 0 : index
    %177 = vector.load %arg5[%c1, %c0_82, %c0_83] : memref<2x128x128xbf16, #tpu.memory_space<vmem>>, vector<1x128x128xbf16>
    %178 = vector.shape_cast %177 : vector<1x128x128xbf16> to vector<128x128xbf16>
    %cst_84 = arith.constant dense<0.000000e+00> : vector<128x128xf32>
    %179 = tpu.matmul %176, %178, %cst_84 {dimension_numbers = #tpu.dot_dimension_numbers<[1], [0], [0], [1], [0, 0, 1, 1], [], []>} : vector<128x128xbf16>, vector<128x128xbf16>, vector<128x128xf32> -> vector<128x128xf32>
    %c1_85 = arith.constant 1 : index
    %c0_86 = arith.constant 0 : index
    %c0_87 = arith.constant 0 : index
    %180 = vector.load %arg6[%c1_85, %c0_86, %c0_87] : memref<2x1x128xf32, #tpu.memory_space<vmem>>, vector<1x1x128xf32>
    %181 = vector.shape_cast %180 : vector<1x1x128xf32> to vector<1x128xf32>
    %182 = vector.broadcast %181 : vector<1x128xf32> to vector<128x128xf32>
    %183 = arith.addf %179, %182 : vector<128x128xf32>
    %c1_88 = arith.constant 1 : index
    %c0_89 = arith.constant 0 : index
    %c0_90 = arith.constant 0 : index
    %184 = vector.load %arg7[%c1_88, %c0_89, %c0_90] : memref<2x128x128xbf16, #tpu.memory_space<vmem>>, vector<1x128x128xbf16>
    %185 = vector.shape_cast %184 : vector<1x128x128xbf16> to vector<128x128xbf16>
    %cst_91 = arith.constant dense<0.000000e+00> : vector<128x128xf32>
    %186 = tpu.matmul %176, %185, %cst_91 {dimension_numbers = #tpu.dot_dimension_numbers<[1], [0], [0], [1], [0, 0, 1, 1], [], []>} : vector<128x128xbf16>, vector<128x128xbf16>, vector<128x128xf32> -> vector<128x128xf32>
    %c1_92 = arith.constant 1 : index
    %c0_93 = arith.constant 0 : index
    %c0_94 = arith.constant 0 : index
    %187 = vector.load %arg8[%c1_92, %c0_93, %c0_94] : memref<2x1x128xf32, #tpu.memory_space<vmem>>, vector<1x1x128xf32>
    %188 = vector.shape_cast %187 : vector<1x1x128xf32> to vector<1x128xf32>
    %189 = vector.broadcast %188 : vector<1x128xf32> to vector<128x128xf32>
    %190 = arith.addf %186, %189 : vector<128x128xf32>
    %c1_95 = arith.constant 1 : index
    %c0_96 = arith.constant 0 : index
    %c0_97 = arith.constant 0 : index
    %191 = vector.load %arg9[%c1_95, %c0_96, %c0_97] : memref<2x128x128xbf16, #tpu.memory_space<vmem>>, vector<1x128x128xbf16>
    %192 = vector.shape_cast %191 : vector<1x128x128xbf16> to vector<128x128xbf16>
    %cst_98 = arith.constant dense<0.000000e+00> : vector<128x128xf32>
    %193 = tpu.matmul %176, %192, %cst_98 {dimension_numbers = #tpu.dot_dimension_numbers<[1], [0], [0], [1], [0, 0, 1, 1], [], []>} : vector<128x128xbf16>, vector<128x128xbf16>, vector<128x128xf32> -> vector<128x128xf32>
    %c1_99 = arith.constant 1 : index
    %c0_100 = arith.constant 0 : index
    %c0_101 = arith.constant 0 : index
    %194 = vector.load %arg10[%c1_99, %c0_100, %c0_101] : memref<2x1x128xf32, #tpu.memory_space<vmem>>, vector<1x1x128xf32>
    %195 = vector.shape_cast %194 : vector<1x1x128xf32> to vector<1x128xf32>
    %196 = vector.broadcast %195 : vector<1x128xf32> to vector<128x128xf32>
    %197 = arith.addf %193, %196 : vector<128x128xf32>
    %198 = vector.shape_cast %183 : vector<128x128xf32> to vector<8x16x128xf32>
    %199 = vector.shape_cast %190 : vector<128x128xf32> to vector<8x16x128xf32>
    %200 = vector.shape_cast %197 : vector<128x128xf32> to vector<8x16x128xf32>
    %201 = vector.extract_strided_slice %198 {offsets = [0, 0, 0], sizes = [8, 16, 64], strides = [1, 1, 1]} : vector<8x16x128xf32> to vector<8x16x64xf32>
    %202 = arith.truncf %201 : vector<8x16x64xf32> to vector<8x16x64xbf16>
    %203 = vector.extract_strided_slice %198 {offsets = [0, 0, 64], sizes = [8, 16, 64], strides = [1, 1, 1]} : vector<8x16x128xf32> to vector<8x16x64xf32>
    %204 = arith.truncf %203 : vector<8x16x64xf32> to vector<8x16x64xbf16>
    %205 = tpu.concatenate %202, %204 in 0 : vector<8x16x64xbf16>, vector<8x16x64xbf16> -> vector<16x16x64xbf16>
    %206 = vector.extract_strided_slice %199 {offsets = [0, 0, 0], sizes = [8, 16, 64], strides = [1, 1, 1]} : vector<8x16x128xf32> to vector<8x16x64xf32>
    %207 = arith.truncf %206 : vector<8x16x64xf32> to vector<8x16x64xbf16>
    %208 = vector.extract_strided_slice %199 {offsets = [0, 0, 64], sizes = [8, 16, 64], strides = [1, 1, 1]} : vector<8x16x128xf32> to vector<8x16x64xf32>
    %209 = arith.truncf %208 : vector<8x16x64xf32> to vector<8x16x64xbf16>
    %210 = tpu.concatenate %207, %209 in 0 : vector<8x16x64xbf16>, vector<8x16x64xbf16> -> vector<16x16x64xbf16>
    %211 = vector.extract_strided_slice %200 {offsets = [0, 0, 0], sizes = [8, 16, 64], strides = [1, 1, 1]} : vector<8x16x128xf32> to vector<8x16x64xf32>
    %212 = arith.truncf %211 : vector<8x16x64xf32> to vector<8x16x64xbf16>
    %213 = vector.extract_strided_slice %200 {offsets = [0, 0, 64], sizes = [8, 16, 64], strides = [1, 1, 1]} : vector<8x16x128xf32> to vector<8x16x64xf32>
    %214 = arith.truncf %213 : vector<8x16x64xf32> to vector<8x16x64xbf16>
    %215 = tpu.concatenate %212, %214 in 0 : vector<8x16x64xbf16>, vector<8x16x64xbf16> -> vector<16x16x64xbf16>
    "tpu.trace_start"() <{level = 10 : i32, message = "bqd,bkd->bqk"}> : () -> ()
    %cst_102 = arith.constant dense<0.000000e+00> : vector<16x16x16xf32>
    %216 = tpu.matmul %205, %210, %cst_102 {dimension_numbers = #tpu.dot_dimension_numbers<[2], [2], [1], [1], [0, 0, 0, 1, 1, 1], [0], [0]>} : vector<16x16x64xbf16>, vector<16x16x64xbf16>, vector<16x16x16xf32> -> vector<16x16x16xf32>
    "tpu.trace_stop"() : () -> ()
    %cst_103 = arith.constant 1.250000e-01 : f32
    %217 = vector.broadcast %cst_103 : f32 to vector<16x16x16xf32>
    %218 = arith.mulf %216, %217 : vector<16x16x16xf32>
    %219 = vector.broadcast %23 : vector<16x1x16xf32> to vector<16x16x16xf32>
    %220 = arith.addf %218, %219 : vector<16x16x16xf32>
    %cst_104 = arith.constant dense<0xFF800000> : vector<16x16xf32>
    %221 = vector.multi_reduction <maximumf>, %220, %cst_104 [2] : vector<16x16x16xf32> to vector<16x16xf32>
    %222 = vector.shape_cast %221 : vector<16x16xf32> to vector<16x16x1xf32>
    %223 = vector.broadcast %222 : vector<16x16x1xf32> to vector<16x16x16xf32>
    %224 = arith.subf %220, %223 : vector<16x16x16xf32>
    %225 = math.exp %224 : vector<16x16x16xf32>
    %cst_105 = arith.constant dense<0.000000e+00> : vector<16x16xf32>
    %226 = vector.multi_reduction <add>, %225, %cst_105 [2] : vector<16x16x16xf32> to vector<16x16xf32>
    %227 = vector.shape_cast %226 : vector<16x16xf32> to vector<16x16x1xf32>
    %228 = tpu.reciprocal %227 {approx = true} : vector<16x16x1xf32> -> vector<16x16x1xf32>
    %229 = vector.broadcast %228 : vector<16x16x1xf32> to vector<16x16x16xf32>
    %230 = arith.mulf %225, %229 : vector<16x16x16xf32>
    %231 = arith.truncf %230 : vector<16x16x16xf32> to vector<16x16x16xbf16>
    "tpu.trace_start"() <{level = 10 : i32, message = "bqk,bkd->bqd"}> : () -> ()
    %cst_106 = arith.constant dense<0.000000e+00> : vector<16x16x64xf32>
    %232 = tpu.matmul %231, %215, %cst_106 {dimension_numbers = #tpu.dot_dimension_numbers<[2], [1], [1], [2], [0, 0, 0, 1, 1, 2], [0], [0]>} : vector<16x16x16xbf16>, vector<16x16x64xbf16>, vector<16x16x64xf32> -> vector<16x16x64xf32>
    "tpu.trace_stop"() : () -> ()
    %233 = vector.extract_strided_slice %232 {offsets = [0, 0, 0], sizes = [8, 16, 64], strides = [1, 1, 1]} : vector<16x16x64xf32> to vector<8x16x64xf32>
    %234 = vector.extract_strided_slice %232 {offsets = [8, 0, 0], sizes = [8, 16, 64], strides = [1, 1, 1]} : vector<16x16x64xf32> to vector<8x16x64xf32>
    %235 = tpu.concatenate %233, %234 in 2 : vector<8x16x64xf32>, vector<8x16x64xf32> -> vector<8x16x128xf32>
    %236 = vector.shape_cast %235 : vector<8x16x128xf32> to vector<128x128xf32>
    %237 = arith.truncf %236 : vector<128x128xf32> to vector<128x128xbf16>
    %c1_107 = arith.constant 1 : index
    %c0_108 = arith.constant 0 : index
    %c0_109 = arith.constant 0 : index
    %238 = vector.load %arg11[%c1_107, %c0_108, %c0_109] : memref<2x128x128xbf16, #tpu.memory_space<vmem>>, vector<1x128x128xbf16>
    %239 = vector.shape_cast %238 : vector<1x128x128xbf16> to vector<128x128xbf16>
    %cst_110 = arith.constant dense<0.000000e+00> : vector<128x128xf32>
    %240 = tpu.matmul %237, %239, %cst_110 {dimension_numbers = #tpu.dot_dimension_numbers<[1], [0], [0], [1], [0, 0, 1, 1], [], []>} : vector<128x128xbf16>, vector<128x128xbf16>, vector<128x128xf32> -> vector<128x128xf32>
    %c1_111 = arith.constant 1 : index
    %c0_112 = arith.constant 0 : index
    %c0_113 = arith.constant 0 : index
    %241 = vector.load %arg12[%c1_111, %c0_112, %c0_113] : memref<2x1x128xf32, #tpu.memory_space<vmem>>, vector<1x1x128xf32>
    %242 = vector.shape_cast %241 : vector<1x1x128xf32> to vector<1x128xf32>
    %243 = vector.broadcast %242 : vector<1x128xf32> to vector<128x128xf32>
    %244 = arith.addf %240, %243 : vector<128x128xf32>
    %245 = arith.addf %175, %244 : vector<128x128xf32>
    %c1_114 = arith.constant 1 : index
    %c0_115 = arith.constant 0 : index
    %c0_116 = arith.constant 0 : index
    %246 = vector.load %arg13[%c1_114, %c0_115, %c0_116] : memref<2x1x128xf32, #tpu.memory_space<vmem>>, vector<1x1x128xf32>
    %247 = vector.shape_cast %246 : vector<1x1x128xf32> to vector<1x128xf32>
    %c1_117 = arith.constant 1 : index
    %c0_118 = arith.constant 0 : index
    %c0_119 = arith.constant 0 : index
    %248 = vector.load %arg14[%c1_117, %c0_118, %c0_119] : memref<2x1x128xf32, #tpu.memory_space<vmem>>, vector<1x1x128xf32>
    %249 = vector.shape_cast %248 : vector<1x1x128xf32> to vector<1x128xf32>
    %cst_120 = arith.constant dense<0.000000e+00> : vector<128xf32>
    %250 = vector.multi_reduction <add>, %245, %cst_120 [1] : vector<128x128xf32> to vector<128xf32>
    %251 = vector.shape_cast %250 : vector<128xf32> to vector<128x1xf32>
    %cst_121 = arith.constant 1.280000e+02 : f32
    %252 = vector.broadcast %cst_121 : f32 to vector<128x1xf32>
    %253 = arith.divf %251, %252 : vector<128x1xf32>
    %254 = vector.broadcast %253 : vector<128x1xf32> to vector<128x128xf32>
    %255 = arith.subf %245, %254 : vector<128x128xf32>
    %256 = arith.mulf %255, %255 : vector<128x128xf32>
    %cst_122 = arith.constant dense<0.000000e+00> : vector<128xf32>
    %257 = vector.multi_reduction <add>, %256, %cst_122 [1] : vector<128x128xf32> to vector<128xf32>
    %258 = vector.shape_cast %257 : vector<128xf32> to vector<128x1xf32>
    %cst_123 = arith.constant 1.280000e+02 : f32
    %259 = vector.broadcast %cst_123 : f32 to vector<128x1xf32>
    %260 = arith.divf %258, %259 : vector<128x1xf32>
    %261 = vector.broadcast %253 : vector<128x1xf32> to vector<128x128xf32>
    %262 = arith.subf %245, %261 : vector<128x128xf32>
    %cst_124 = arith.constant 9.99999996E-13 : f32
    %263 = vector.broadcast %cst_124 : f32 to vector<128x1xf32>
    %264 = arith.addf %260, %263 : vector<128x1xf32>
    %265 = math.rsqrt %264 : vector<128x1xf32>
    %266 = vector.broadcast %265 : vector<128x1xf32> to vector<128x128xf32>
    %267 = arith.mulf %262, %266 : vector<128x128xf32>
    %268 = vector.broadcast %247 : vector<1x128xf32> to vector<128x128xf32>
    %269 = arith.mulf %267, %268 : vector<128x128xf32>
    %270 = vector.broadcast %249 : vector<1x128xf32> to vector<128x128xf32>
    %271 = arith.addf %269, %270 : vector<128x128xf32>
    %272 = arith.truncf %271 : vector<128x128xf32> to vector<128x128xbf16>
    %c1_125 = arith.constant 1 : index
    %c0_126 = arith.constant 0 : index
    %c0_127 = arith.constant 0 : index
    %273 = vector.load %arg15[%c1_125, %c0_126, %c0_127] : memref<2x128x256xbf16, #tpu.memory_space<vmem>>, vector<1x128x256xbf16>
    %274 = vector.shape_cast %273 : vector<1x128x256xbf16> to vector<128x256xbf16>
    %cst_128 = arith.constant dense<0.000000e+00> : vector<128x256xf32>
    %275 = tpu.matmul %272, %274, %cst_128 {dimension_numbers = #tpu.dot_dimension_numbers<[1], [0], [0], [1], [0, 0, 1, 1], [], []>} : vector<128x128xbf16>, vector<128x256xbf16>, vector<128x256xf32> -> vector<128x256xf32>
    %c1_129 = arith.constant 1 : index
    %c0_130 = arith.constant 0 : index
    %c0_131 = arith.constant 0 : index
    %276 = vector.load %arg16[%c1_129, %c0_130, %c0_131] : memref<2x1x256xf32, #tpu.memory_space<vmem>>, vector<1x1x256xf32>
    %277 = vector.shape_cast %276 : vector<1x1x256xf32> to vector<1x256xf32>
    %278 = vector.broadcast %277 : vector<1x256xf32> to vector<128x256xf32>
    %279 = arith.addf %275, %278 : vector<128x256xf32>
    %280 = arith.mulf %279, %279 : vector<128x256xf32>
    %281 = arith.mulf %279, %280 : vector<128x256xf32>
    %cst_132 = arith.constant 4.471500e-02 : f32
    %282 = vector.broadcast %cst_132 : f32 to vector<128x256xf32>
    %283 = arith.mulf %282, %281 : vector<128x256xf32>
    %284 = arith.addf %279, %283 : vector<128x256xf32>
    %cst_133 = arith.constant 0.797884583 : f32
    %285 = vector.broadcast %cst_133 : f32 to vector<128x256xf32>
    %286 = arith.mulf %285, %284 : vector<128x256xf32>
    %287 = math.tanh %286 : vector<128x256xf32>
    %cst_134 = arith.constant 1.000000e+00 : f32
    %288 = vector.broadcast %cst_134 : f32 to vector<128x256xf32>
    %289 = arith.addf %288, %287 : vector<128x256xf32>
    %cst_135 = arith.constant 5.000000e-01 : f32
    %290 = vector.broadcast %cst_135 : f32 to vector<128x256xf32>
    %291 = arith.mulf %290, %289 : vector<128x256xf32>
    %292 = arith.mulf %279, %291 : vector<128x256xf32>
    %293 = arith.truncf %292 : vector<128x256xf32> to vector<128x256xbf16>
    %c1_136 = arith.constant 1 : index
    %c0_137 = arith.constant 0 : index
    %c0_138 = arith.constant 0 : index
    %294 = vector.load %arg17[%c1_136, %c0_137, %c0_138] : memref<2x256x128xbf16, #tpu.memory_space<vmem>>, vector<1x256x128xbf16>
    %295 = vector.shape_cast %294 : vector<1x256x128xbf16> to vector<256x128xbf16>
    %cst_139 = arith.constant dense<0.000000e+00> : vector<128x128xf32>
    %296 = tpu.matmul %293, %295, %cst_139 {dimension_numbers = #tpu.dot_dimension_numbers<[1], [0], [0], [1], [0, 0, 1, 1], [], []>} : vector<128x256xbf16>, vector<256x128xbf16>, vector<128x128xf32> -> vector<128x128xf32>
    %c1_140 = arith.constant 1 : index
    %c0_141 = arith.constant 0 : index
    %c0_142 = arith.constant 0 : index
    %297 = vector.load %arg18[%c1_140, %c0_141, %c0_142] : memref<2x1x128xf32, #tpu.memory_space<vmem>>, vector<1x1x128xf32>
    %298 = vector.shape_cast %297 : vector<1x1x128xf32> to vector<1x128xf32>
    %299 = vector.broadcast %298 : vector<1x128xf32> to vector<128x128xf32>
    %300 = arith.addf %296, %299 : vector<128x128xf32>
    %301 = arith.addf %271, %300 : vector<128x128xf32>
    %c1_143 = arith.constant 1 : index
    %c0_144 = arith.constant 0 : index
    %c0_145 = arith.constant 0 : index
    %302 = vector.load %arg19[%c1_143, %c0_144, %c0_145] : memref<2x1x128xf32, #tpu.memory_space<vmem>>, vector<1x1x128xf32>
    %303 = vector.shape_cast %302 : vector<1x1x128xf32> to vector<1x128xf32>
    %c1_146 = arith.constant 1 : index
    %c0_147 = arith.constant 0 : index
    %c0_148 = arith.constant 0 : index
    %304 = vector.load %arg20[%c1_146, %c0_147, %c0_148] : memref<2x1x128xf32, #tpu.memory_space<vmem>>, vector<1x1x128xf32>
    %305 = vector.shape_cast %304 : vector<1x1x128xf32> to vector<1x128xf32>
    %cst_149 = arith.constant dense<0.000000e+00> : vector<128xf32>
    %306 = vector.multi_reduction <add>, %301, %cst_149 [1] : vector<128x128xf32> to vector<128xf32>
    %307 = vector.shape_cast %306 : vector<128xf32> to vector<128x1xf32>
    %cst_150 = arith.constant 1.280000e+02 : f32
    %308 = vector.broadcast %cst_150 : f32 to vector<128x1xf32>
    %309 = arith.divf %307, %308 : vector<128x1xf32>
    %310 = vector.broadcast %309 : vector<128x1xf32> to vector<128x128xf32>
    %311 = arith.subf %301, %310 : vector<128x128xf32>
    %312 = arith.mulf %311, %311 : vector<128x128xf32>
    %cst_151 = arith.constant dense<0.000000e+00> : vector<128xf32>
    %313 = vector.multi_reduction <add>, %312, %cst_151 [1] : vector<128x128xf32> to vector<128xf32>
    %314 = vector.shape_cast %313 : vector<128xf32> to vector<128x1xf32>
    %cst_152 = arith.constant 1.280000e+02 : f32
    %315 = vector.broadcast %cst_152 : f32 to vector<128x1xf32>
    %316 = arith.divf %314, %315 : vector<128x1xf32>
    %317 = vector.broadcast %309 : vector<128x1xf32> to vector<128x128xf32>
    %318 = arith.subf %301, %317 : vector<128x128xf32>
    %cst_153 = arith.constant 9.99999996E-13 : f32
    %319 = vector.broadcast %cst_153 : f32 to vector<128x1xf32>
    %320 = arith.addf %316, %319 : vector<128x1xf32>
    %321 = math.rsqrt %320 : vector<128x1xf32>
    %322 = vector.broadcast %321 : vector<128x1xf32> to vector<128x128xf32>
    %323 = arith.mulf %318, %322 : vector<128x128xf32>
    %324 = vector.broadcast %303 : vector<1x128xf32> to vector<128x128xf32>
    %325 = arith.mulf %323, %324 : vector<128x128xf32>
    %326 = vector.broadcast %305 : vector<1x128xf32> to vector<128x128xf32>
    %327 = arith.addf %325, %326 : vector<128x128xf32>
    %328 = vector.shape_cast %327 : vector<128x128xf32> to vector<8x16x128xf32>
    %329 = vector.extract_strided_slice %328 {offsets = [0, 0, 0], sizes = [8, 1, 128], strides = [1, 1, 1]} : vector<8x16x128xf32> to vector<8x1x128xf32>
    %330 = vector.shape_cast %329 : vector<8x1x128xf32> to vector<8x128xf32>
    %331 = arith.truncf %330 : vector<8x128xf32> to vector<8x128xbf16>
    %c0_154 = arith.constant 0 : index
    %c0_155 = arith.constant 0 : index
    %332 = vector.load %arg21[%c0_154, %c0_155] : memref<128x128xbf16, #tpu.memory_space<vmem>>, vector<128x128xbf16>
    %cst_156 = arith.constant dense<0.000000e+00> : vector<8x128xf32>
    %333 = tpu.matmul %331, %332, %cst_156 {dimension_numbers = #tpu.dot_dimension_numbers<[1], [0], [0], [1], [0, 0, 1, 1], [], []>} : vector<8x128xbf16>, vector<128x128xbf16>, vector<8x128xf32> -> vector<8x128xf32>
    %c0_157 = arith.constant 0 : index
    %c0_158 = arith.constant 0 : index
    %334 = vector.load %arg22[%c0_157, %c0_158] : memref<1x128xf32, #tpu.memory_space<vmem>>, vector<1x128xf32>
    %335 = vector.broadcast %334 : vector<1x128xf32> to vector<8x128xf32>
    %336 = arith.addf %333, %335 : vector<8x128xf32>
    %337 = math.tanh %336 : vector<8x128xf32>
    %338 = arith.truncf %337 : vector<8x128xf32> to vector<8x128xbf16>
    %c0_159 = arith.constant 0 : index
    %c0_160 = arith.constant 0 : index
    %339 = vector.load %arg23[%c0_159, %c0_160] : memref<128x128xbf16, #tpu.memory_space<vmem>>, vector<128x128xbf16>
    %cst_161 = arith.constant dense<0.000000e+00> : vector<8x128xf32>
    %340 = tpu.matmul %338, %339, %cst_161 {dimension_numbers = #tpu.dot_dimension_numbers<[1], [0], [0], [1], [0, 0, 1, 1], [], []>} : vector<8x128xbf16>, vector<128x128xbf16>, vector<8x128xf32> -> vector<8x128xf32>
    %c0_162 = arith.constant 0 : index
    %c0_163 = arith.constant 0 : index
    %341 = vector.load %arg24[%c0_162, %c0_163] : memref<1x128xf32, #tpu.memory_space<vmem>>, vector<1x128xf32>
    %342 = vector.broadcast %341 : vector<1x128xf32> to vector<8x128xf32>
    %343 = arith.addf %340, %342 : vector<8x128xf32>
    %c0_164 = arith.constant 0 : index
    %c0_165 = arith.constant 0 : index
    %344 = vector.load %arg25[%c0_164, %c0_165] : memref<8x128xf32, #tpu.memory_space<vmem>>, vector<8x128xf32>
    tpu.vector_store %arg25[%c0_164, %c0_165], %343 {strides = array<i32>} : memref<8x128xf32, #tpu.memory_space<vmem>>, vector<8x128xf32>,
    return
  }
  func.func @transform_0(%arg0: i32) -> (i32, i32) {
    %c0_i32 = arith.constant 0 : i32
    %c0_i32_0 = arith.constant 0 : i32
    return %arg0, %c0_i32 : i32, i32
  }
  func.func @transform_1(%arg0: i32) -> (i32, i32) {
    %c0_i32 = arith.constant 0 : i32
    %c0_i32_0 = arith.constant 0 : i32
    return %arg0, %c0_i32 : i32, i32
  }
  func.func @transform_2(%arg0: i32) -> (i32, i32) {
    %c0_i32 = arith.constant 0 : i32
    %c0_i32_0 = arith.constant 0 : i32
    %c0_i32_1 = arith.constant 0 : i32
    return %c0_i32, %c0_i32_0 : i32, i32
  }
  func.func @transform_3(%arg0: i32) -> (i32, i32) {
    %c0_i32 = arith.constant 0 : i32
    %c0_i32_0 = arith.constant 0 : i32
    %c0_i32_1 = arith.constant 0 : i32
    return %c0_i32, %c0_i32_0 : i32, i32
  }
  func.func @transform_4(%arg0: i32) -> (i32, i32, i32) {
    %c0_i32 = arith.constant 0 : i32
    %c0_i32_0 = arith.constant 0 : i32
    %c0_i32_1 = arith.constant 0 : i32
    %c0_i32_2 = arith.constant 0 : i32
    return %c0_i32, %c0_i32_0, %c0_i32_1 : i32, i32, i32
  }
  func.func @transform_5(%arg0: i32) -> (i32, i32, i32) {
    %c0_i32 = arith.constant 0 : i32
    %c0_i32_0 = arith.constant 0 : i32
    %c0_i32_1 = arith.constant 0 : i32
    %c0_i32_2 = arith.constant 0 : i32
    return %c0_i32, %c0_i32_0, %c0_i32_1 : i32, i32, i32
  }
  func.func @transform_6(%arg0: i32) -> (i32, i32, i32) {
    %c0_i32 = arith.constant 0 : i32
    %c0_i32_0 = arith.constant 0 : i32
    %c0_i32_1 = arith.constant 0 : i32
    %c0_i32_2 = arith.constant 0 : i32
    return %c0_i32, %c0_i32_0, %c0_i32_1 : i32, i32, i32
  }
  func.func @transform_7(%arg0: i32) -> (i32, i32, i32) {
    %c0_i32 = arith.constant 0 : i32
    %c0_i32_0 = arith.constant 0 : i32
    %c0_i32_1 = arith.constant 0 : i32
    %c0_i32_2 = arith.constant 0 : i32
    return %c0_i32, %c0_i32_0, %c0_i32_1 : i32, i32, i32
  }
  func.func @transform_8(%arg0: i32) -> (i32, i32, i32) {
    %c0_i32 = arith.constant 0 : i32
    %c0_i32_0 = arith.constant 0 : i32
    %c0_i32_1 = arith.constant 0 : i32
    %c0_i32_2 = arith.constant 0 : i32
    return %c0_i32, %c0_i32_0, %c0_i32_1 : i32, i32, i32
  }
  func.func @transform_9(%arg0: i32) -> (i32, i32, i32) {
    %c0_i32 = arith.constant 0 : i32
    %c0_i32_0 = arith.constant 0 : i32
    %c0_i32_1 = arith.constant 0 : i32
    %c0_i32_2 = arith.constant 0 : i32
    return %c0_i32, %c0_i32_0, %c0_i32_1 : i32, i32, i32
  }
  func.func @transform_10(%arg0: i32) -> (i32, i32, i32) {
    %c0_i32 = arith.constant 0 : i32
    %c0_i32_0 = arith.constant 0 : i32
    %c0_i32_1 = arith.constant 0 : i32
    %c0_i32_2 = arith.constant 0 : i32
    return %c0_i32, %c0_i32_0, %c0_i32_1 : i32, i32, i32
  }
  func.func @transform_11(%arg0: i32) -> (i32, i32, i32) {
    %c0_i32 = arith.constant 0 : i32
    %c0_i32_0 = arith.constant 0 : i32
    %c0_i32_1 = arith.constant 0 : i32
    %c0_i32_2 = arith.constant 0 : i32
    return %c0_i32, %c0_i32_0, %c0_i32_1 : i32, i32, i32
  }
  func.func @transform_12(%arg0: i32) -> (i32, i32, i32) {
    %c0_i32 = arith.constant 0 : i32
    %c0_i32_0 = arith.constant 0 : i32
    %c0_i32_1 = arith.constant 0 : i32
    %c0_i32_2 = arith.constant 0 : i32
    return %c0_i32, %c0_i32_0, %c0_i32_1 : i32, i32, i32
  }
  func.func @transform_13(%arg0: i32) -> (i32, i32, i32) {
    %c0_i32 = arith.constant 0 : i32
    %c0_i32_0 = arith.constant 0 : i32
    %c0_i32_1 = arith.constant 0 : i32
    %c0_i32_2 = arith.constant 0 : i32
    return %c0_i32, %c0_i32_0, %c0_i32_1 : i32, i32, i32
  }
  func.func @transform_14(%arg0: i32) -> (i32, i32, i32) {
    %c0_i32 = arith.constant 0 : i32
    %c0_i32_0 = arith.constant 0 : i32
    %c0_i32_1 = arith.constant 0 : i32
    %c0_i32_2 = arith.constant 0 : i32
    return %c0_i32, %c0_i32_0, %c0_i32_1 : i32, i32, i32
  }
  func.func @transform_15(%arg0: i32) -> (i32, i32, i32) {
    %c0_i32 = arith.constant 0 : i32
    %c0_i32_0 = arith.constant 0 : i32
    %c0_i32_1 = arith.constant 0 : i32
    %c0_i32_2 = arith.constant 0 : i32
    return %c0_i32, %c0_i32_0, %c0_i32_1 : i32, i32, i32
  }
  func.func @transform_16(%arg0: i32) -> (i32, i32, i32) {
    %c0_i32 = arith.constant 0 : i32
    %c0_i32_0 = arith.constant 0 : i32
    %c0_i32_1 = arith.constant 0 : i32
    %c0_i32_2 = arith.constant 0 : i32
    return %c0_i32, %c0_i32_0, %c0_i32_1 : i32, i32, i32
  }
  func.func @transform_17(%arg0: i32) -> (i32, i32, i32) {
    %c0_i32 = arith.constant 0 : i32
    %c0_i32_0 = arith.constant 0 : i32
    %c0_i32_1 = arith.constant 0 : i32
    %c0_i32_2 = arith.constant 0 : i32
    return %c0_i32, %c0_i32_0, %c0_i32_1 : i32, i32, i32
  }
  func.func @transform_18(%arg0: i32) -> (i32, i32, i32) {
    %c0_i32 = arith.constant 0 : i32
    %c0_i32_0 = arith.constant 0 : i32
    %c0_i32_1 = arith.constant 0 : i32
    %c0_i32_2 = arith.constant 0 : i32
    return %c0_i32, %c0_i32_0, %c0_i32_1 : i32, i32, i32
  }
  func.func @transform_19(%arg0: i32) -> (i32, i32, i32) {
    %c0_i32 = arith.constant 0 : i32
    %c0_i32_0 = arith.constant 0 : i32
    %c0_i32_1 = arith.constant 0 : i32
    %c0_i32_2 = arith.constant 0 : i32
    return %c0_i32, %c0_i32_0, %c0_i32_1 : i32, i32, i32
  }
  func.func @transform_20(%arg0: i32) -> (i32, i32) {
    %c0_i32 = arith.constant 0 : i32
    %c0_i32_0 = arith.constant 0 : i32
    %c0_i32_1 = arith.constant 0 : i32
    return %c0_i32, %c0_i32_0 : i32, i32
  }
  func.func @transform_21(%arg0: i32) -> (i32, i32) {
    %c0_i32 = arith.constant 0 : i32
    %c0_i32_0 = arith.constant 0 : i32
    %c0_i32_1 = arith.constant 0 : i32
    return %c0_i32, %c0_i32_0 : i32, i32
  }
  func.func @transform_22(%arg0: i32) -> (i32, i32) {
    %c0_i32 = arith.constant 0 : i32
    %c0_i32_0 = arith.constant 0 : i32
    %c0_i32_1 = arith.constant 0 : i32
    return %c0_i32, %c0_i32_0 : i32, i32
  }
  func.func @transform_23(%arg0: i32) -> (i32, i32) {
    %c0_i32 = arith.constant 0 : i32
    %c0_i32_0 = arith.constant 0 : i32
    %c0_i32_1 = arith.constant 0 : i32
    return %c0_i32, %c0_i32_0 : i32, i32
  }
  func.func @transform_24(%arg0: i32) -> (i32, i32) {
    %c0_i32 = arith.constant 0 : i32
    %c0_i32_0 = arith.constant 0 : i32
    return %arg0, %c0_i32 : i32, i32
  }
}

</mosaic_0001>

<llo_original>
// kernel: cross_encoder_forward.1
$region0: #{cross_encoder_forward.1}
  #allocation0 [shape = 'u32[]', space=smem, size = 0x4, offset = 0x4, fixed_abs, tag = 'smem constant byte address 0x4 - core index']
  #allocation1 [shape = 'u32[144,128]{1,0:T(1,128)}', space=vmem, size = 0x12000, scoped, tag = 'internal scratch']
  %s0 = inlined_call_operand.vmem [shape: s32[8,16], index: 0, kind: input, shape index: {}]
  %s1 = inlined_call_operand.vmem [shape: f32[8,16], index: 1, kind: input, shape index: {}]
  %s2 = inlined_call_operand.vmem [shape: bf16[64,128], index: 2, kind: input, shape index: {}]
  %s3 = inlined_call_operand.vmem [shape: f32[16,128], index: 3, kind: input, shape index: {}]
  %s4 = inlined_call_operand.vmem [shape: bf16[2,128,128], index: 4, kind: input, shape index: {}]
  %s5 = inlined_call_operand.vmem [shape: f32[2,1,128], index: 5, kind: input, shape index: {}]
  %s6 = inlined_call_operand.vmem [shape: bf16[2,128,128], index: 6, kind: input, shape index: {}]
  %s7 = inlined_call_operand.vmem [shape: f32[2,1,128], index: 7, kind: input, shape index: {}]
  %s8 = inlined_call_operand.vmem [shape: bf16[2,128,128], index: 8, kind: input, shape index: {}]
  %s9 = inlined_call_operand.vmem [shape: f32[2,1,128], index: 9, kind: input, shape index: {}]
  %s10 = inlined_call_operand.vmem [shape: bf16[2,128,128], index: 10, kind: input, shape index: {}]
  %s11 = inlined_call_operand.vmem [shape: f32[2,1,128], index: 11, kind: input, shape index: {}]
  %s12 = inlined_call_operand.vmem [shape: f32[2,1,128], index: 12, kind: input, shape index: {}]
  %s13 = inlined_call_operand.vmem [shape: f32[2,1,128], index: 13, kind: input, shape index: {}]
  %s14 = inlined_call_operand.vmem [shape: bf16[2,128,256], index: 14, kind: input, shape index: {}]
  %s15 = inlined_call_operand.vmem [shape: f32[2,1,256], index: 15, kind: input, shape index: {}]
  %s16 = inlined_call_operand.vmem [shape: bf16[2,256,128], index: 16, kind: input, shape index: {}]
  %s17 = inlined_call_operand.vmem [shape: f32[2,1,128], index: 17, kind: input, shape index: {}]
  %s18 = inlined_call_operand.vmem [shape: f32[2,1,128], index: 18, kind: input, shape index: {}]
  %s19 = inlined_call_operand.vmem [shape: f32[2,1,128], index: 19, kind: input, shape index: {}]
  %s20 = inlined_call_operand.vmem [shape: bf16[128,128], index: 20, kind: input, shape index: {}]
  %s21 = inlined_call_operand.vmem [shape: f32[1,128], index: 21, kind: input, shape index: {}]
  %s22 = inlined_call_operand.vmem [shape: bf16[128,128], index: 22, kind: input, shape index: {}]
  %s23 = inlined_call_operand.vmem [shape: f32[1,128], index: 23, kind: input, shape index: {}]
  %s24 = inlined_call_operand.vmem [shape: f32[8,128], index: 24, kind: output, shape index: {}]
  %s25 = sld [smem:[#allocation0]]
  $region106: #{cross_encoder_forward.1} parent=0
    _
  %s27 = ssub.s32 1, %s25
  %s28 = scalar_select 0, %s27, %s25
  // Predicated region
  $region2: #{cross_encoder_forward.1} parent=0 // pred_check
    _
  $region3: #{cross_encoder_forward.1} parent=0 // pred_check_branch
    %30 = sbr.rel (0) target = $region5
  $region4: #{cross_encoder_forward.1} parent=0 // pred_region
    _
  $region5: #{cross_encoder_forward.1} parent=0 // pred_fallthru
    _
  // Predicated region
  $region6: #{cross_encoder_forward.1} parent=0 // pred_check
    _
  $region7: #{cross_encoder_forward.1} parent=0 // pred_check_branch
    %32 = sbr.rel (0) target = $region9
  $region8: #{cross_encoder_forward.1} parent=0 // pred_region
    _
  $region9: #{cross_encoder_forward.1} parent=0 // pred_fallthru
    _
  // Predicated region
  $region10: #{cross_encoder_forward.1} parent=0 // pred_check
    _
  $region11: #{cross_encoder_forward.1} parent=0 // pred_check_branch
    %34 = sbr.rel (0) target = $region13
  $region12: #{cross_encoder_forward.1} parent=0 // pred_region
    _
  $region13: #{cross_encoder_forward.1} parent=0 // pred_fallthru
    _
  // Predicated region
  $region14: #{cross_encoder_forward.1} parent=0 // pred_check
    _
  $region15: #{cross_encoder_forward.1} parent=0 // pred_check_branch
    %36 = sbr.rel (0) target = $region17
  $region16: #{cross_encoder_forward.1} parent=0 // pred_region
    _
  $region17: #{cross_encoder_forward.1} parent=0 // pred_fallthru
    _
  // Predicated region
  $region18: #{cross_encoder_forward.1} parent=0 // pred_check
    _
  $region19: #{cross_encoder_forward.1} parent=0 // pred_check_branch
    %38 = sbr.rel (0) target = $region21
  $region20: #{cross_encoder_forward.1} parent=0 // pred_region
    _
  $region21: #{cross_encoder_forward.1} parent=0 // pred_fallthru
    _
  // Predicated region
  $region22: #{cross_encoder_forward.1} parent=0 // pred_check
    _
  $region23: #{cross_encoder_forward.1} parent=0 // pred_check_branch
    %40 = sbr.rel (0) target = $region25
  $region24: #{cross_encoder_forward.1} parent=0 // pred_region
    _
  $region25: #{cross_encoder_forward.1} parent=0 // pred_fallthru
    _
  // Predicated region
  $region26: #{cross_encoder_forward.1} parent=0 // pred_check
    _
  $region27: #{cross_encoder_forward.1} parent=0 // pred_check_branch
    %42 = sbr.rel (0) target = $region29
  $region28: #{cross_encoder_forward.1} parent=0 // pred_region
    _
  $region29: #{cross_encoder_forward.1} parent=0 // pred_fallthru
    _
  // Predicated region
  $region30: #{cross_encoder_forward.1} parent=0 // pred_check
    _
  $region31: #{cross_encoder_forward.1} parent=0 // pred_check_branch
    %44 = sbr.rel (0) target = $region33
  $region32: #{cross_encoder_forward.1} parent=0 // pred_region
    _
  $region33: #{cross_encoder_forward.1} parent=0 // pred_fallthru
    _
  // Predicated region
  $region34: #{cross_encoder_forward.1} parent=0 // pred_check
    _
  $region35: #{cross_encoder_forward.1} parent=0 // pred_check_branch
    %46 = sbr.rel (0) target = $region37
  $region36: #{cross_encoder_forward.1} parent=0 // pred_region
    _
  $region37: #{cross_encoder_forward.1} parent=0 // pred_fallthru
    _
  // Predicated region
  $region38: #{cross_encoder_forward.1} parent=0 // pred_check
    _
  $region39: #{cross_encoder_forward.1} parent=0 // pred_check_branch
    %48 = sbr.rel (0) target = $region41
  $region40: #{cross_encoder_forward.1} parent=0 // pred_region
    _
  $region41: #{cross_encoder_forward.1} parent=0 // pred_fallthru
    _
  // Predicated region
  $region42: #{cross_encoder_forward.1} parent=0 // pred_check
    _
  $region43: #{cross_encoder_forward.1} parent=0 // pred_check_branch
    %50 = sbr.rel (0) target = $region45
  $region44: #{cross_encoder_forward.1} parent=0 // pred_region
    _
  $region45: #{cross_encoder_forward.1} parent=0 // pred_fallthru
    _
  // Predicated region
  $region46: #{cross_encoder_forward.1} parent=0 // pred_check
    _
  $region47: #{cross_encoder_forward.1} parent=0 // pred_check_branch
    %52 = sbr.rel (0) target = $region49
  $region48: #{cross_encoder_forward.1} parent=0 // pred_region
    _
  $region49: #{cross_encoder_forward.1} parent=0 // pred_fallthru
    _
  // Predicated region
  $region50: #{cross_encoder_forward.1} parent=0 // pred_check
    _
  $region51: #{cross_encoder_forward.1} parent=0 // pred_check_branch
    %54 = sbr.rel (0) target = $region53
  $region52: #{cross_encoder_forward.1} parent=0 // pred_region
    _
  $region53: #{cross_encoder_forward.1} parent=0 // pred_fallthru
    _
  // Predicated region
  $region54: #{cross_encoder_forward.1} parent=0 // pred_check
    _
  $region55: #{cross_encoder_forward.1} parent=0 // pred_check_branch
    %56 = sbr.rel (0) target = $region57
  $region56: #{cross_encoder_forward.1} parent=0 // pred_region
    _
  $region57: #{cross_encoder_forward.1} parent=0 // pred_fallthru
    _
  // Predicated region
  $region58: #{cross_encoder_forward.1} parent=0 // pred_check
    _
  $region59: #{cross_encoder_forward.1} parent=0 // pred_check_branch
    %58 = sbr.rel (0) target = $region61
  $region60: #{cross_encoder_forward.1} parent=0 // pred_region
    _
  $region61: #{cross_encoder_forward.1} parent=0 // pred_fallthru
    _
  // Predicated region
  $region62: #{cross_encoder_forward.1} parent=0 // pred_check
    _
  $region63: #{cross_encoder_forward.1} parent=0 // pred_check_branch
    %60 = sbr.rel (0) target = $region65
  $region64: #{cross_encoder_forward.1} parent=0 // pred_region
    _
  $region65: #{cross_encoder_forward.1} parent=0 // pred_fallthru
    _
  // Predicated region
  $region66: #{cross_encoder_forward.1} parent=0 // pred_check
    _
  $region67: #{cross_encoder_forward.1} parent=0 // pred_check_branch
    %62 = sbr.rel (0) target = $region69
  $region68: #{cross_encoder_forward.1} parent=0 // pred_region
    _
  $region69: #{cross_encoder_forward.1} parent=0 // pred_fallthru
    _
  // Predicated region
  $region70: #{cross_encoder_forward.1} parent=0 // pred_check
    _
  $region71: #{cross_encoder_forward.1} parent=0 // pred_check_branch
    %64 = sbr.rel (0) target = $region73
  $region72: #{cross_encoder_forward.1} parent=0 // pred_region
    _
  $region73: #{cross_encoder_forward.1} parent=0 // pred_fallthru
    _
  // Predicated region
  $region74: #{cross_encoder_forward.1} parent=0 // pred_check
    _
  $region75: #{cross_encoder_forward.1} parent=0 // pred_check_branch
    %66 = sbr.rel (0) target = $region77
  $region76: #{cross_encoder_forward.1} parent=0 // pred_region
    _
  $region77: #{cross_encoder_forward.1} parent=0 // pred_fallthru
    _
  // Predicated region
  $region78: #{cross_encoder_forward.1} parent=0 // pred_check
    _
  $region79: #{cross_encoder_forward.1} parent=0 // pred_check_branch
    %68 = sbr.rel (0) target = $region81
  $region80: #{cross_encoder_forward.1} parent=0 // pred_region
    _
  $region81: #{cross_encoder_forward.1} parent=0 // pred_fallthru
    _
  // Predicated region
  $region82: #{cross_encoder_forward.1} parent=0 // pred_check
    _
  $region83: #{cross_encoder_forward.1} parent=0 // pred_check_branch
    %70 = sbr.rel (0) target = $region85
  $region84: #{cross_encoder_forward.1} parent=0 // pred_region
    _
  $region85: #{cross_encoder_forward.1} parent=0 // pred_fallthru
    _
  // Predicated region
  $region86: #{cross_encoder_forward.1} parent=0 // pred_check
    _
  $region87: #{cross_encoder_forward.1} parent=0 // pred_check_branch
    %72 = sbr.rel (0) target = $region89
  $region88: #{cross_encoder_forward.1} parent=0 // pred_region
    _
  $region89: #{cross_encoder_forward.1} parent=0 // pred_fallthru
    _
  // Predicated region
  $region90: #{cross_encoder_forward.1} parent=0 // pred_check
    _
  $region91: #{cross_encoder_forward.1} parent=0 // pred_check_branch
    %74 = sbr.rel (0) target = $region93
  $region92: #{cross_encoder_forward.1} parent=0 // pred_region
    _
  $region93: #{cross_encoder_forward.1} parent=0 // pred_fallthru
    _
  // Predicated region
  $region94: #{cross_encoder_forward.1} parent=0 // pred_check
    _
  $region95: #{cross_encoder_forward.1} parent=0 // pred_check_branch
    %76 = sbr.rel (0) target = $region97
  $region96: #{cross_encoder_forward.1} parent=0 // pred_region
    _
  $region97: #{cross_encoder_forward.1} parent=0 // pred_fallthru
    _
  %v78 = vld [vmem:[%s0] sm:$0xff]
  %v79 = vld [vmem:[%s1] sm:$0xff]
  %v80 = vlaneseq
  %v81 = vand.u32 %v80, 127
  %v82 = vlaneseq
  %v83 = vshrl.u32 %v82, 7
  %v84 = vsub.s32 0, %v83
  %v85 = vrot.slane %v78, %v84
  %87 = vbcast.lane.b32.xlu0 %v85, 256
  %v88 = vpop.permute.xlu0 %87
  %s90 = sor.u32 256, 8
  %91 = vbcast.lane.b32.xlu0 %v85, %s90
  %v92 = vpop.permute.xlu0 %91
  %v93 = vlaneseq
  %v94 = vshrl.u32 %v93, 7
  %v95 = vsub.s32 1, %v94
  %v96 = vrot.slane %v78, %v95
  %98 = vbcast.lane.b32.xlu0 %v96, 256
  %v99 = vpop.permute.xlu0 %98
  %s101 = sor.u32 256, 8
  %102 = vbcast.lane.b32.xlu0 %v96, %s101
  %v103 = vpop.permute.xlu0 %102
  %v104 = vlaneseq
  %v105 = vshrl.u32 %v104, 7
  %v106 = vsub.s32 2, %v105
  %v107 = vrot.slane %v78, %v106
  %109 = vbcast.lane.b32.xlu0 %v107, 256
  %v110 = vpop.permute.xlu0 %109
  %s112 = sor.u32 256, 8
  %113 = vbcast.lane.b32.xlu0 %v107, %s112
  %v114 = vpop.permute.xlu0 %113
  %v115 = vlaneseq
  %v116 = vshrl.u32 %v115, 7
  %v117 = vsub.s32 3, %v116
  %v118 = vrot.slane %v78, %v117
  %120 = vbcast.lane.b32.xlu0 %v118, 256
  %v121 = vpop.permute.xlu0 %120
  %s123 = sor.u32 256, 8
  %124 = vbcast.lane.b32.xlu0 %v118, %s123
  %v125 = vpop.permute.xlu0 %124
  %v126 = vlaneseq
  %v127 = vshrl.u32 %v126, 7
  %v128 = vsub.s32 4, %v127
  %v129 = vrot.slane %v78, %v128
  %131 = vbcast.lane.b32.xlu0 %v129, 256
  %v132 = vpop.permute.xlu0 %131
  %s134 = sor.u32 256, 8
  %135 = vbcast.lane.b32.xlu0 %v129, %s134
  %v136 = vpop.permute.xlu0 %135
  %v137 = vlaneseq
  %v138 = vshrl.u32 %v137, 7
  %v139 = vsub.s32 5, %v138
  %v140 = vrot.slane %v78, %v139
  %142 = vbcast.lane.b32.xlu0 %v140, 256
  %v143 = vpop.permute.xlu0 %142
  %s145 = sor.u32 256, 8
  %146 = vbcast.lane.b32.xlu0 %v140, %s145
  %v147 = vpop.permute.xlu0 %146
  %v148 = vlaneseq
  %v149 = vshrl.u32 %v148, 7
  %v150 = vsub.s32 6, %v149
  %v151 = vrot.slane %v78, %v150
  %153 = vbcast.lane.b32.xlu0 %v151, 256
  %v154 = vpop.permute.xlu0 %153
  %s156 = sor.u32 256, 8
  %157 = vbcast.lane.b32.xlu0 %v151, %s156
  %v158 = vpop.permute.xlu0 %157
  %v159 = vlaneseq
  %v160 = vshrl.u32 %v159, 7
  %v161 = vsub.s32 7, %v160
  %v162 = vrot.slane %v78, %v161
  %164 = vbcast.lane.b32.xlu0 %v162, 256
  %v165 = vpop.permute.xlu0 %164
  %s167 = sor.u32 256, 8
  %168 = vbcast.lane.b32.xlu0 %v162, %s167
  %v169 = vpop.permute.xlu0 %168
  %vm170 = vcmp.eq.s32.totalorder %v88, %v81
  %vm171 = vcmp.eq.s32.totalorder %v92, %v81
  %vm172 = vcmp.eq.s32.totalorder %v99, %v81
  %vm173 = vcmp.eq.s32.totalorder %v103, %v81
  %vm174 = vcmp.eq.s32.totalorder %v110, %v81
  %vm175 = vcmp.eq.s32.totalorder %v114, %v81
  %vm176 = vcmp.eq.s32.totalorder %v121, %v81
  %vm177 = vcmp.eq.s32.totalorder %v125, %v81
  %vm178 = vcmp.eq.s32.totalorder %v132, %v81
  %vm179 = vcmp.eq.s32.totalorder %v136, %v81
  %vm180 = vcmp.eq.s32.totalorder %v143, %v81
  %vm181 = vcmp.eq.s32.totalorder %v147, %v81
  %vm182 = vcmp.eq.s32.totalorder %v154, %v81
  %vm183 = vcmp.eq.s32.totalorder %v158, %v81
  %vm184 = vcmp.eq.s32.totalorder %v165, %v81
  %vm185 = vcmp.eq.s32.totalorder %v169, %v81
  %v186 = vsel %vm170, 1, 0
  %v187 = vsel %vm171, 1, 0
  %v188 = vsel %vm172, 1, 0
  %v189 = vsel %vm173, 1, 0
  %v190 = vsel %vm174, 1, 0
  %v191 = vsel %vm175, 1, 0
  %v192 = vsel %vm176, 1, 0
  %v193 = vsel %vm177, 1, 0
  %v194 = vsel %vm178, 1, 0
  %v195 = vsel %vm179, 1, 0
  %v196 = vsel %vm180, 1, 0
  %v197 = vsel %vm181, 1, 0
  %v198 = vsel %vm182, 1, 0
  %v199 = vsel %vm183, 1, 0
  %v200 = vsel %vm184, 1, 0
  %v201 = vsel %vm185, 1, 0
  %v202 = vcvt.s32.f32 %v186
  %v203 = vcvt.s32.f32 %v187
  %v204 = vcvt.s32.f32 %v188
  %v205 = vcvt.s32.f32 %v189
  %v206 = vcvt.s32.f32 %v190
  %v207 = vcvt.s32.f32 %v191
  %v208 = vcvt.s32.f32 %v192
  %v209 = vcvt.s32.f32 %v193
  %v210 = vcvt.s32.f32 %v194
  %v211 = vcvt.s32.f32 %v195
  %v212 = vcvt.s32.f32 %v196
  %v213 = vcvt.s32.f32 %v197
  %v214 = vcvt.s32.f32 %v198
  %v215 = vcvt.s32.f32 %v199
  %v216 = vcvt.s32.f32 %v200
  %v217 = vcvt.s32.f32 %v201
  %v218 = vpack.c.bf16 %v203, %v202
  %v219 = vpack.c.bf16 %v205, %v204
  %v220 = vpack.c.bf16 %v207, %v206
  %v221 = vpack.c.bf16 %v209, %v208
  %v222 = vpack.c.bf16 %v211, %v210
  %v223 = vpack.c.bf16 %v213, %v212
  %v224 = vpack.c.bf16 %v215, %v214
  %v225 = vpack.c.bf16 %v217, %v216
  %v226 = vld [vmem:[%s2] sm:$0xf]
  %v227 = vld [vmem:[%s2 + $0x4] sm:$0xf]
  %v228 = vld [vmem:[%s2 + $0x8] sm:$0xf]
  %v229 = vld [vmem:[%s2 + $0xc] sm:$0xf]
  %v230 = vld [vmem:[%s2 + $0x10] sm:$0xf]
  %v231 = vld [vmem:[%s2 + $0x14] sm:$0xf]
  %v232 = vld [vmem:[%s2 + $0x18] sm:$0xf]
  %v233 = vld [vmem:[%s2 + $0x1c] sm:$0xf]
  %v242 = vunpack.c.l.b16 %v226
  %v243 = vunpack.c.l.b16 %v227
  %v244 = vunpack.c.l.b16 %v228
  %v245 = vunpack.c.l.b16 %v229
  %v246 = vunpack.c.l.b16 %v230
  %v247 = vunpack.c.l.b16 %v231
  %v248 = vunpack.c.l.b16 %v232
  %v249 = vunpack.c.l.b16 %v233
  %v250 = vpack.c.b16 %v243, %v242
  %v251 = vpack.c.b16 %v245, %v244
  %v252 = vpack.c.b16 %v247, %v246
  %v253 = vpack.c.b16 %v249, %v248
  %vm258 = vcmask 523264
  %v260 = vsel %vm258, %v218, 0
  %v263 = vsel %vm258, %v219, 0
  %v266 = vsel %vm258, %v220, 0
  %v269 = vsel %vm258, %v221, 0
  %v272 = vsel %vm258, %v222, 0
  %v275 = vsel %vm258, %v223, 0
  %v278 = vsel %vm258, %v224, 0
  %v281 = vsel %vm258, %v225, 0
  %283 = vmatprep.subr.bf16.mxu0 0
  %284 = vmatpush1.bf16.msra.mxu0 %v250
  %285 = vmatprep.subr.bf16.mxu0 0
  %286 = vmatpush1.bf16.msra.mxu0 %v251
  %287 = vmatprep.subr.bf16.mxu0 0
  %288 = vmatpush1.bf16.msra.mxu0 %v252
  %289 = vmatprep.subr.bf16.mxu0 0
  %290 = vmatpush1.bf16.msra.mxu0 %v253
  %291 = vmatprep.subr.bf16.mxu0 0
  %292 = vmatpush1.bf16.msra.mxu0 0
  %293 = vmatprep.subr.bf16.mxu0 0
  %294 = vmatpush1.bf16.msra.mxu0 0
  %295 = vmatprep.subr.bf16.mxu0 0
  %296 = vmatpush1.bf16.msra.mxu0 0
  %297 = vmatprep.subr.bf16.mxu0 0
  %298 = vmatpush1.bf16.msra.mxu0 0
  %299 = vmatprep.subr.bf16.mxu0 0
  %300 = vmatpush1.bf16.msra.mxu0 0
  %301 = vmatprep.subr.bf16.mxu0 0
  %302 = vmatpush1.bf16.msra.mxu0 0
  %303 = vmatprep.subr.bf16.mxu0 0
  %304 = vmatpush1.bf16.msra.mxu0 0
  %305 = vmatprep.subr.bf16.mxu0 0
  %306 = vmatpush1.bf16.msra.mxu0 0
  %307 = vmatprep.subr.bf16.mxu0 0
  %308 = vmatpush1.bf16.msra.mxu0 0
  %309 = vmatprep.subr.bf16.mxu0 0
  %310 = vmatpush1.bf16.msra.mxu0 0
  %311 = vmatprep.subr.bf16.mxu0 0
  %312 = vmatpush1.bf16.msra.mxu0 0
  %313 = vmatprep.subr.bf16.mxu0 0
  %314 = vmatpush1.bf16.msra.mxu0 0
  %315 = vmatprep.mubr.bf16.mxu0 0
  %316 = vmatmul.mubr.bf16.gmra.mrb[0].mxu0 %v260
  %v317 = vpop.f32.mrb[0].mxu0
  %v318 = vadd.f32 0.0, %v317
  %v319 = vpop.f32.mrb[0].mxu0
  %v320 = vpop.f32.mrb[0].mxu0
  %v321 = vadd.f32 0.0, %v320
  %v322 = vpop.f32.mrb[0].mxu0
  %323 = vmatprep.mubr.bf16.mxu0 0
  %324 = vmatmul.mubr.bf16.gmra.mrb[0].mxu0 %v263
  %v325 = vpop.f32.mrb[0].mxu0
  %v326 = vadd.f32 0.0, %v325
  %v327 = vpop.f32.mrb[0].mxu0
  %v328 = vpop.f32.mrb[0].mxu0
  %v329 = vadd.f32 0.0, %v328
  %v330 = vpop.f32.mrb[0].mxu0
  %331 = vmatprep.mubr.bf16.mxu0 0
  %332 = vmatmul.mubr.bf16.gmra.mrb[0].mxu0 %v266
  %v333 = vpop.f32.mrb[0].mxu0
  %v334 = vadd.f32 0.0, %v333
  %v335 = vpop.f32.mrb[0].mxu0
  %v336 = vpop.f32.mrb[0].mxu0
  %v337 = vadd.f32 0.0, %v336
  %v338 = vpop.f32.mrb[0].mxu0
  %339 = vmatprep.mubr.bf16.mxu0 0
  %340 = vmatmul.mubr.bf16.gmra.mrb[0].mxu0 %v269
  %v341 = vpop.f32.mrb[0].mxu0
  %v342 = vadd.f32 0.0, %v341
  %v343 = vpop.f32.mrb[0].mxu0
  %v344 = vpop.f32.mrb[0].mxu0
  %v345 = vadd.f32 0.0, %v344
  %v346 = vpop.f32.mrb[0].mxu0
  %347 = vmatprep.mubr.bf16.mxu0 0
  %348 = vmatmul.mubr.bf16.gmra.mrb[0].mxu0 %v272
  %v349 = vpop.f32.mrb[0].mxu0
  %v350 = vadd.f32 0.0, %v349
  %v351 = vpop.f32.mrb[0].mxu0
  %v352 = vpop.f32.mrb[0].mxu0
  %v353 = vadd.f32 0.0, %v352
  %v354 = vpop.f32.mrb[0].mxu0
  %355 = vmatprep.mubr.bf16.mxu0 0
  %356 = vmatmul.mubr.bf16.gmra.mrb[0].mxu0 %v275
  %v357 = vpop.f32.mrb[0].mxu0
  %v358 = vadd.f32 0.0, %v357
  %v359 = vpop.f32.mrb[0].mxu0
  %v360 = vpop.f32.mrb[0].mxu0
  %v361 = vadd.f32 0.0, %v360
  %v362 = vpop.f32.mrb[0].mxu0
  %363 = vmatprep.mubr.bf16.mxu0 0
  %364 = vmatmul.mubr.bf16.gmra.mrb[0].mxu0 %v278
  %v365 = vpop.f32.mrb[0].mxu0
  %v366 = vadd.f32 0.0, %v365
  %v367 = vpop.f32.mrb[0].mxu0
  %v368 = vpop.f32.mrb[0].mxu0
  %v369 = vadd.f32 0.0, %v368
  %v370 = vpop.f32.mrb[0].mxu0
  %371 = vmatprep.mubr.bf16.mxu0 0
  %372 = vmatmul.mubr.bf16.gmra.mrb[0].mxu0 %v281
  %v373 = vpop.f32.mrb[0].mxu0
  %v374 = vadd.f32 0.0, %v373
  %v375 = vpop.f32.mrb[0].mxu0
  %v376 = vpop.f32.mrb[0].mxu0
  %v377 = vadd.f32 0.0, %v376
  %v378 = vpop.f32.mrb[0].mxu0
  %379 = vdwg.mxu0
  %v380 = vld [vmem:[%s3] sm:$0xff]
  %v381 = vld [vmem:[%s3 + $0x8] sm:$0xff]
  %v382 = vadd.f32 %v318, %v380
  %v383 = vadd.f32 %v321, %v381
  %v384 = vadd.f32 %v326, %v380
  %v385 = vadd.f32 %v329, %v381
  %v386 = vadd.f32 %v334, %v380
  %v387 = vadd.f32 %v337, %v381
  %v388 = vadd.f32 %v342, %v380
  %v389 = vadd.f32 %v345, %v381
  %v390 = vadd.f32 %v350, %v380
  %v391 = vadd.f32 %v353, %v381
  %v392 = vadd.f32 %v358, %v380
  %v393 = vadd.f32 %v361, %v381
  %v394 = vadd.f32 %v366, %v380
  %v395 = vadd.f32 %v369, %v381
  %v396 = vadd.f32 %v374, %v380
  %v397 = vadd.f32 %v377, %v381
  %v398 = vsub.f32 1.0, %v79
  %v399 = vmul.f32 %v398, -1e+09
  %v401 = vcombine.high %v399, %v399
  %v403 = vunpack.c.l.s4 1966171168
  %v404 = vunpack.c.0.s8 %v403
  %v405 = vlaneseq
  %v406 = vshrl.u32 %v405, 7
  %v407 = vsub.s32 %v404, %v406
  %v408 = vrot.slane %v399, %v407
  %v410 = vunpack.c.l.s4 1966171168
  %v411 = vunpack.c.0.s8 %v410
  %v412 = vlaneseq
  %v413 = vshrl.u32 %v412, 7
  %v414 = vsub.s32 %v411, %v413
  %v415 = vrot.slane %v401, %v414
  %v416 = vcombine.high %v408, %v408
  %v417 = vcombine.high %v415, %v415
  %v419 = vunpack.c.l.s4 1966171168
  %v420 = vunpack.c.0.s8 %v419
  %v421 = vlaneseq
  %v422 = vshrl.u32 %v421, 7
  %v423 = vsub.s32 %v420, %v422
  %v424 = vrot.slane %v408, %v423
  %v426 = vunpack.c.l.s4 1966171168
  %v427 = vunpack.c.0.s8 %v426
  %v428 = vlaneseq
  %v429 = vshrl.u32 %v428, 7
  %v430 = vsub.s32 %v427, %v429
  %v431 = vrot.slane %v415, %v430
  %v433 = vunpack.c.l.s4 1966171168
  %v434 = vunpack.c.0.s8 %v433
  %v435 = vlaneseq
  %v436 = vshrl.u32 %v435, 7
  %v437 = vsub.s32 %v434, %v436
  %v438 = vrot.slane %v416, %v437
  %v440 = vunpack.c.l.s4 1966171168
  %v441 = vunpack.c.0.s8 %v440
  %v442 = vlaneseq
  %v443 = vshrl.u32 %v442, 7
  %v444 = vsub.s32 %v441, %v443
  %v445 = vrot.slane %v417, %v444
  %v446 = vcombine.high %v424, %v424
  %v447 = vcombine.high %v431, %v431
  %v448 = vcombine.high %v438, %v438
  %v449 = vcombine.high %v445, %v445
  %v450 = vpack.c.bf16 %v383, %v382
  %v451 = vpack.c.bf16 %v385, %v384
  %v452 = vpack.c.bf16 %v387, %v386
  %v453 = vpack.c.bf16 %v389, %v388
  %v454 = vpack.c.bf16 %v391, %v390
  %v455 = vpack.c.bf16 %v393, %v392
  %v456 = vpack.c.bf16 %v395, %v394
  %v457 = vpack.c.bf16 %v397, %v396
  %v458 = vld [vmem:[%s4] sm:$0xf]
  %v459 = vld [vmem:[%s4 + $0x4] sm:$0xf]
  %v460 = vld [vmem:[%s4 + $0x8] sm:$0xf]
  %v461 = vld [vmem:[%s4 + $0xc] sm:$0xf]
  %v462 = vld [vmem:[%s4 + $0x10] sm:$0xf]
  %v463 = vld [vmem:[%s4 + $0x14] sm:$0xf]
  %v464 = vld [vmem:[%s4 + $0x18] sm:$0xf]
  %v465 = vld [vmem:[%s4 + $0x1c] sm:$0xf]
  %v466 = vld [vmem:[%s4 + $0x20] sm:$0xf]
  %v467 = vld [vmem:[%s4 + $0x24] sm:$0xf]
  %v468 = vld [vmem:[%s4 + $0x28] sm:$0xf]
  %v469 = vld [vmem:[%s4 + $0x2c] sm:$0xf]
  %v470 = vld [vmem:[%s4 + $0x30] sm:$0xf]
  %v471 = vld [vmem:[%s4 + $0x34] sm:$0xf]
  %v472 = vld [vmem:[%s4 + $0x38] sm:$0xf]
  %v473 = vld [vmem:[%s4 + $0x3c] sm:$0xf]
  %v474 = vld [vmem:[%s5] sm:$0x1]
  %v476 = vlaneseq
  %v477 = vshrl.u32 %v476, 7
  %v478 = vsub.s32 0, %v477
  %v479 = vrot.slane %v474, %v478
  %v497 = vunpack.c.l.b16 %v458
  %v498 = vunpack.c.l.b16 %v459
  %v499 = vunpack.c.l.b16 %v460
  %v500 = vunpack.c.l.b16 %v461
  %v501 = vunpack.c.l.b16 %v462
  %v502 = vunpack.c.l.b16 %v463
  %v503 = vunpack.c.l.b16 %v464
  %v504 = vunpack.c.l.b16 %v465
  %v505 = vunpack.c.l.b16 %v466
  %v506 = vunpack.c.l.b16 %v467
  %v507 = vunpack.c.l.b16 %v468
  %v508 = vunpack.c.l.b16 %v469
  %v509 = vunpack.c.l.b16 %v470
  %v510 = vunpack.c.l.b16 %v471
  %v511 = vunpack.c.l.b16 %v472
  %v512 = vunpack.c.l.b16 %v473
  %v513 = vpack.c.b16 %v498, %v497
  %v514 = vpack.c.b16 %v500, %v499
  %v515 = vpack.c.b16 %v502, %v501
  %v516 = vpack.c.b16 %v504, %v503
  %v517 = vpack.c.b16 %v506, %v505
  %v518 = vpack.c.b16 %v508, %v507
  %v519 = vpack.c.b16 %v510, %v509
  %v520 = vpack.c.b16 %v512, %v511
  %529 = vmatprep.subr.bf16.mxu0 0
  %530 = vmatpush1.bf16.msra.mxu0 %v513
  %531 = vmatprep.subr.bf16.mxu0 0
  %532 = vmatpush1.bf16.msra.mxu0 %v514
  %533 = vmatprep.subr.bf16.mxu0 0
  %534 = vmatpush1.bf16.msra.mxu0 %v515
  %535 = vmatprep.subr.bf16.mxu0 0
  %536 = vmatpush1.bf16.msra.mxu0 %v516
  %537 = vmatprep.subr.bf16.mxu0 0
  %538 = vmatpush1.bf16.msra.mxu0 %v517
  %539 = vmatprep.subr.bf16.mxu0 0
  %540 = vmatpush1.bf16.msra.mxu0 %v518
  %541 = vmatprep.subr.bf16.mxu0 0
  %542 = vmatpush1.bf16.msra.mxu0 %v519
  %543 = vmatprep.subr.bf16.mxu0 0
  %544 = vmatpush1.bf16.msra.mxu0 %v520
  %545 = vmatprep.subr.bf16.mxu0 0
  %546 = vmatpush1.bf16.msra.mxu0 0
  %547 = vmatprep.subr.bf16.mxu0 0
  %548 = vmatpush1.bf16.msra.mxu0 0
  %549 = vmatprep.subr.bf16.mxu0 0
  %550 = vmatpush1.bf16.msra.mxu0 0
  %551 = vmatprep.subr.bf16.mxu0 0
  %552 = vmatpush1.bf16.msra.mxu0 0
  %553 = vmatprep.subr.bf16.mxu0 0
  %554 = vmatpush1.bf16.msra.mxu0 0
  %555 = vmatprep.subr.bf16.mxu0 0
  %556 = vmatpush1.bf16.msra.mxu0 0
  %557 = vmatprep.subr.bf16.mxu0 0
  %558 = vmatpush1.bf16.msra.mxu0 0
  %559 = vmatprep.subr.bf16.mxu0 0
  %560 = vmatpush1.bf16.msra.mxu0 0
  %561 = vmatprep.mubr.bf16.mxu0 0
  %562 = vmatmul.mubr.bf16.gmra.mrb[0].mxu0 %v450
  %v563 = vpop.f32.mrb[0].mxu0
  %v564 = vadd.f32 %v479, %v563
  %v565 = vpop.f32.mrb[0].mxu0
  %v566 = vpop.f32.mrb[0].mxu0
  %v567 = vadd.f32 %v479, %v566
  %v568 = vpop.f32.mrb[0].mxu0
  %569 = vmatprep.mubr.bf16.mxu0 0
  %570 = vmatmul.mubr.bf16.gmra.mrb[0].mxu0 %v451
  %v571 = vpop.f32.mrb[0].mxu0
  %v572 = vadd.f32 %v479, %v571
  %v573 = vpop.f32.mrb[0].mxu0
  %v574 = vpop.f32.mrb[0].mxu0
  %v575 = vadd.f32 %v479, %v574
  %v576 = vpop.f32.mrb[0].mxu0
  %577 = vmatprep.mubr.bf16.mxu0 0
  %578 = vmatmul.mubr.bf16.gmra.mrb[0].mxu0 %v452
  %v579 = vpop.f32.mrb[0].mxu0
  %v580 = vadd.f32 %v479, %v579
  %v581 = vpop.f32.mrb[0].mxu0
  %v582 = vpop.f32.mrb[0].mxu0
  %v583 = vadd.f32 %v479, %v582
  %v584 = vpop.f32.mrb[0].mxu0
  %585 = vmatprep.mubr.bf16.mxu0 0
  %586 = vmatmul.mubr.bf16.gmra.mrb[0].mxu0 %v453
  %v587 = vpop.f32.mrb[0].mxu0
  %v588 = vadd.f32 %v479, %v587
  %v589 = vpop.f32.mrb[0].mxu0
  %v590 = vpop.f32.mrb[0].mxu0
  %v591 = vadd.f32 %v479, %v590
  %v592 = vpop.f32.mrb[0].mxu0
  %593 = vmatprep.mubr.bf16.mxu0 0
  %594 = vmatmul.mubr.bf16.gmra.mrb[0].mxu0 %v454
  %v595 = vpop.f32.mrb[0].mxu0
  %v596 = vadd.f32 %v479, %v595
  %v597 = vpop.f32.mrb[0].mxu0
  %v598 = vpop.f32.mrb[0].mxu0
  %v599 = vadd.f32 %v479, %v598
  %v600 = vpop.f32.mrb[0].mxu0
  %601 = vmatprep.mubr.bf16.mxu0 0
  %602 = vmatmul.mubr.bf16.gmra.mrb[0].mxu0 %v455
  %v603 = vpop.f32.mrb[0].mxu0
  %v604 = vadd.f32 %v479, %v603
  %v605 = vpop.f32.mrb[0].mxu0
  %v606 = vpop.f32.mrb[0].mxu0
  %v607 = vadd.f32 %v479, %v606
  %v608 = vpop.f32.mrb[0].mxu0
  %609 = vmatprep.mubr.bf16.mxu0 0
  %610 = vmatmul.mubr.bf16.gmra.mrb[0].mxu0 %v456
  %v611 = vpop.f32.mrb[0].mxu0
  %v612 = vadd.f32 %v479, %v611
  %v613 = vpop.f32.mrb[0].mxu0
  %v614 = vpop.f32.mrb[0].mxu0
  %v615 = vadd.f32 %v479, %v614
  %v616 = vpop.f32.mrb[0].mxu0
  %617 = vmatprep.mubr.bf16.mxu0 0
  %618 = vmatmul.mubr.bf16.gmra.mrb[0].mxu0 %v457
  %v619 = vpop.f32.mrb[0].mxu0
  %v620 = vadd.f32 %v479, %v619
  %v621 = vpop.f32.mrb[0].mxu0
  %v622 = vpop.f32.mrb[0].mxu0
  %v623 = vadd.f32 %v479, %v622
  %v624 = vpop.f32.mrb[0].mxu0
  %625 = vdwg.mxu0
  %v626 = vld [vmem:[%s6] sm:$0xf]
  %v627 = vld [vmem:[%s6 + $0x4] sm:$0xf]
  %v628 = vld [vmem:[%s6 + $0x8] sm:$0xf]
  %v629 = vld [vmem:[%s6 + $0xc] sm:$0xf]
  %v630 = vld [vmem:[%s6 + $0x10] sm:$0xf]
  %v631 = vld [vmem:[%s6 + $0x14] sm:$0xf]
  %v632 = vld [vmem:[%s6 + $0x18] sm:$0xf]
  %v633 = vld [vmem:[%s6 + $0x1c] sm:$0xf]
  %v634 = vld [vmem:[%s6 + $0x20] sm:$0xf]
  %v635 = vld [vmem:[%s6 + $0x24] sm:$0xf]
  %v636 = vld [vmem:[%s6 + $0x28] sm:$0xf]
  %v637 = vld [vmem:[%s6 + $0x2c] sm:$0xf]
  %v638 = vld [vmem:[%s6 + $0x30] sm:$0xf]
  %v639 = vld [vmem:[%s6 + $0x34] sm:$0xf]
  %v640 = vld [vmem:[%s6 + $0x38] sm:$0xf]
  %v641 = vld [vmem:[%s6 + $0x3c] sm:$0xf]
  %v642 = vld [vmem:[%s7] sm:$0x1]
  %v644 = vlaneseq
  %v645 = vshrl.u32 %v644, 7
  %v646 = vsub.s32 0, %v645
  %v647 = vrot.slane %v642, %v646
  %v665 = vunpack.c.l.b16 %v626
  %v666 = vunpack.c.l.b16 %v627
  %v667 = vunpack.c.l.b16 %v628
  %v668 = vunpack.c.l.b16 %v629
  %v669 = vunpack.c.l.b16 %v630
  %v670 = vunpack.c.l.b16 %v631
  %v671 = vunpack.c.l.b16 %v632
  %v672 = vunpack.c.l.b16 %v633
  %v673 = vunpack.c.l.b16 %v634
  %v674 = vunpack.c.l.b16 %v635
  %v675 = vunpack.c.l.b16 %v636
  %v676 = vunpack.c.l.b16 %v637
  %v677 = vunpack.c.l.b16 %v638
  %v678 = vunpack.c.l.b16 %v639
  %v679 = vunpack.c.l.b16 %v640
  %v680 = vunpack.c.l.b16 %v641
  %v681 = vpack.c.b16 %v666, %v665
  %v682 = vpack.c.b16 %v668, %v667
  %v683 = vpack.c.b16 %v670, %v669
  %v684 = vpack.c.b16 %v672, %v671
  %v685 = vpack.c.b16 %v674, %v673
  %v686 = vpack.c.b16 %v676, %v675
  %v687 = vpack.c.b16 %v678, %v677
  %v688 = vpack.c.b16 %v680, %v679
  %697 = vmatprep.subr.bf16.mxu0 0
  %698 = vmatpush1.bf16.msra.mxu0 %v681
  %699 = vmatprep.subr.bf16.mxu0 0
  %700 = vmatpush1.bf16.msra.mxu0 %v682
  %701 = vmatprep.subr.bf16.mxu0 0
  %702 = vmatpush1.bf16.msra.mxu0 %v683
  %703 = vmatprep.subr.bf16.mxu0 0
  %704 = vmatpush1.bf16.msra.mxu0 %v684
  %705 = vmatprep.subr.bf16.mxu0 0
  %706 = vmatpush1.bf16.msra.mxu0 %v685
  %707 = vmatprep.subr.bf16.mxu0 0
  %708 = vmatpush1.bf16.msra.mxu0 %v686
  %709 = vmatprep.subr.bf16.mxu0 0
  %710 = vmatpush1.bf16.msra.mxu0 %v687
  %711 = vmatprep.subr.bf16.mxu0 0
  %712 = vmatpush1.bf16.msra.mxu0 %v688
  %713 = vmatprep.subr.bf16.mxu0 0
  %714 = vmatpush1.bf16.msra.mxu0 0
  %715 = vmatprep.subr.bf16.mxu0 0
  %716 = vmatpush1.bf16.msra.mxu0 0
  %717 = vmatprep.subr.bf16.mxu0 0
  %718 = vmatpush1.bf16.msra.mxu0 0
  %719 = vmatprep.subr.bf16.mxu0 0
  %720 = vmatpush1.bf16.msra.mxu0 0
  %721 = vmatprep.subr.bf16.mxu0 0
  %722 = vmatpush1.bf16.msra.mxu0 0
  %723 = vmatprep.subr.bf16.mxu0 0
  %724 = vmatpush1.bf16.msra.mxu0 0
  %725 = vmatprep.subr.bf16.mxu0 0
  %726 = vmatpush1.bf16.msra.mxu0 0
  %727 = vmatprep.subr.bf16.mxu0 0
  %728 = vmatpush1.bf16.msra.mxu0 0
  %729 = vmatprep.mubr.bf16.mxu0 0
  %730 = vmatmul.mubr.bf16.gmra.mrb[0].mxu0 %v450
  %v731 = vpop.f32.mrb[0].mxu0
  %v732 = vadd.f32 %v647, %v731
  %v733 = vpop.f32.mrb[0].mxu0
  %v734 = vpop.f32.mrb[0].mxu0
  %v735 = vadd.f32 %v647, %v734
  %v736 = vpop.f32.mrb[0].mxu0
  %737 = vmatprep.mubr.bf16.mxu0 0
  %738 = vmatmul.mubr.bf16.gmra.mrb[0].mxu0 %v451
  %v739 = vpop.f32.mrb[0].mxu0
  %v740 = vadd.f32 %v647, %v739
  %v741 = vpop.f32.mrb[0].mxu0
  %v742 = vpop.f32.mrb[0].mxu0
  %v743 = vadd.f32 %v647, %v742
  %v744 = vpop.f32.mrb[0].mxu0
  %745 = vmatprep.mubr.bf16.mxu0 0
  %746 = vmatmul.mubr.bf16.gmra.mrb[0].mxu0 %v452
  %v747 = vpop.f32.mrb[0].mxu0
  %v748 = vadd.f32 %v647, %v747
  %v749 = vpop.f32.mrb[0].mxu0
  %v750 = vpop.f32.mrb[0].mxu0
  %v751 = vadd.f32 %v647, %v750
  %v752 = vpop.f32.mrb[0].mxu0
  %753 = vmatprep.mubr.bf16.mxu0 0
  %754 = vmatmul.mubr.bf16.gmra.mrb[0].mxu0 %v453
  %v755 = vpop.f32.mrb[0].mxu0
  %v756 = vadd.f32 %v647, %v755
  %v757 = vpop.f32.mrb[0].mxu0
  %v758 = vpop.f32.mrb[0].mxu0
  %v759 = vadd.f32 %v647, %v758
  %v760 = vpop.f32.mrb[0].mxu0
  %761 = vmatprep.mubr.bf16.mxu0 0
  %762 = vmatmul.mubr.bf16.gmra.mrb[0].mxu0 %v454
  %v763 = vpop.f32.mrb[0].mxu0
  %v764 = vadd.f32 %v647, %v763
  %v765 = vpop.f32.mrb[0].mxu0
  %v766 = vpop.f32.mrb[0].mxu0
  %v767 = vadd.f32 %v647, %v766
  %v768 = vpop.f32.mrb[0].mxu0
  %769 = vmatprep.mubr.bf16.mxu0 0
  %770 = vmatmul.mubr.bf16.gmra.mrb[0].mxu0 %v455
  %v771 = vpop.f32.mrb[0].mxu0
  %v772 = vadd.f32 %v647, %v771
  %v773 = vpop.f32.mrb[0].mxu0
  %v774 = vpop.f32.mrb[0].mxu0
  %v775 = vadd.f32 %v647, %v774
  %v776 = vpop.f32.mrb[0].mxu0
  %777 = vmatprep.mubr.bf16.mxu0 0
  %778 = vmatmul.mubr.bf16.gmra.mrb[0].mxu0 %v456
  %v779 = vpop.f32.mrb[0].mxu0
  %v780 = vadd.f32 %v647, %v779
  %v781 = vpop.f32.mrb[0].mxu0
  %v782 = vpop.f32.mrb[0].mxu0
  %v783 = vadd.f32 %v647, %v782
  %v784 = vpop.f32.mrb[0].mxu0
  %785 = vmatprep.mubr.bf16.mxu0 0
  %786 = vmatmul.mubr.bf16.gmra.mrb[0].mxu0 %v457
  %v787 = vpop.f32.mrb[0].mxu0
  %v788 = vadd.f32 %v647, %v787
  %v789 = vpop.f32.mrb[0].mxu0
  %v790 = vpop.f32.mrb[0].mxu0
  %v791 = vadd.f32 %v647, %v790
  %v792 = vpop.f32.mrb[0].mxu0
  %793 = vdwg.mxu0
  %v794 = vld [vmem:[%s8] sm:$0xf]
  %v795 = vld [vmem:[%s8 + $0x4] sm:$0xf]
  %v796 = vld [vmem:[%s8 + $0x8] sm:$0xf]
  %v797 = vld [vmem:[%s8 + $0xc] sm:$0xf]
  %v798 = vld [vmem:[%s8 + $0x10] sm:$0xf]
  %v799 = vld [vmem:[%s8 + $0x14] sm:$0xf]
  %v800 = vld [vmem:[%s8 + $0x18] sm:$0xf]
  %v801 = vld [vmem:[%s8 + $0x1c] sm:$0xf]
  %v802 = vld [vmem:[%s8 + $0x20] sm:$0xf]
  %v803 = vld [vmem:[%s8 + $0x24] sm:$0xf]
  %v804 = vld [vmem:[%s8 + $0x28] sm:$0xf]
  %v805 = vld [vmem:[%s8 + $0x2c] sm:$0xf]
  %v806 = vld [vmem:[%s8 + $0x30] sm:$0xf]
  %v807 = vld [vmem:[%s8 + $0x34] sm:$0xf]
  %v808 = vld [vmem:[%s8 + $0x38] sm:$0xf]
  %v809 = vld [vmem:[%s8 + $0x3c] sm:$0xf]
  %v810 = vld [vmem:[%s9] sm:$0x1]
  %v812 = vlaneseq
  %v813 = vshrl.u32 %v812, 7
  %v814 = vsub.s32 0, %v813
  %v815 = vrot.slane %v810, %v814
  %v833 = vunpack.c.l.b16 %v794
  %v834 = vunpack.c.l.b16 %v795
  %v835 = vunpack.c.l.b16 %v796
  %v836 = vunpack.c.l.b16 %v797
  %v837 = vunpack.c.l.b16 %v798
  %v838 = vunpack.c.l.b16 %v799
  %v839 = vunpack.c.l.b16 %v800
  %v840 = vunpack.c.l.b16 %v801
  %v841 = vunpack.c.l.b16 %v802
  %v842 = vunpack.c.l.b16 %v803
  %v843 = vunpack.c.l.b16 %v804
  %v844 = vunpack.c.l.b16 %v805
  %v845 = vunpack.c.l.b16 %v806
  %v846 = vunpack.c.l.b16 %v807
  %v847 = vunpack.c.l.b16 %v808
  %v848 = vunpack.c.l.b16 %v809
  %v849 = vpack.c.b16 %v834, %v833
  %v850 = vpack.c.b16 %v836, %v835
  %v851 = vpack.c.b16 %v838, %v837
  %v852 = vpack.c.b16 %v840, %v839
  %v853 = vpack.c.b16 %v842, %v841
  %v854 = vpack.c.b16 %v844, %v843
  %v855 = vpack.c.b16 %v846, %v845
  %v856 = vpack.c.b16 %v848, %v847
  %865 = vmatprep.subr.bf16.mxu0 0
  %866 = vmatpush1.bf16.msra.mxu0 %v849
  %867 = vmatprep.subr.bf16.mxu0 0
  %868 = vmatpush1.bf16.msra.mxu0 %v850
  %869 = vmatprep.subr.bf16.mxu0 0
  %870 = vmatpush1.bf16.msra.mxu0 %v851
  %871 = vmatprep.subr.bf16.mxu0 0
  %872 = vmatpush1.bf16.msra.mxu0 %v852
  %873 = vmatprep.subr.bf16.mxu0 0
  %874 = vmatpush1.bf16.msra.mxu0 %v853
  %875 = vmatprep.subr.bf16.mxu0 0
  %876 = vmatpush1.bf16.msra.mxu0 %v854
  %877 = vmatprep.subr.bf16.mxu0 0
  %878 = vmatpush1.bf16.msra.mxu0 %v855
  %879 = vmatprep.subr.bf16.mxu0 0
  %880 = vmatpush1.bf16.msra.mxu0 %v856
  %881 = vmatprep.subr.bf16.mxu0 0
  %882 = vmatpush1.bf16.msra.mxu0 0
  %883 = vmatprep.subr.bf16.mxu0 0
  %884 = vmatpush1.bf16.msra.mxu0 0
  %885 = vmatprep.subr.bf16.mxu0 0
  %886 = vmatpush1.bf16.msra.mxu0 0
  %887 = vmatprep.subr.bf16.mxu0 0
  %888 = vmatpush1.bf16.msra.mxu0 0
  %889 = vmatprep.subr.bf16.mxu0 0
  %890 = vmatpush1.bf16.msra.mxu0 0
  %891 = vmatprep.subr.bf16.mxu0 0
  %892 = vmatpush1.bf16.msra.mxu0 0
  %893 = vmatprep.subr.bf16.mxu0 0
  %894 = vmatpush1.bf16.msra.mxu0 0
  %895 = vmatprep.subr.bf16.mxu0 0
  %896 = vmatpush1.bf16.msra.mxu0 0
  %897 = vmatprep.mubr.bf16.mxu0 0
  %898 = vmatmul.mubr.bf16.gmra.mrb[0].mxu0 %v450
  %v899 = vpop.f32.mrb[0].mxu0
  %v900 = vadd.f32 %v815, %v899
  %v901 = vpop.f32.mrb[0].mxu0
  %v902 = vpop.f32.mrb[0].mxu0
  %v903 = vadd.f32 %v815, %v902
  %v904 = vpop.f32.mrb[0].mxu0
  %905 = vmatprep.mubr.bf16.mxu0 0
  %906 = vmatmul.mubr.bf16.gmra.mrb[0].mxu0 %v451
  %v907 = vpop.f32.mrb[0].mxu0
  %v908 = vadd.f32 %v815, %v907
  %v909 = vpop.f32.mrb[0].mxu0
  %v910 = vpop.f32.mrb[0].mxu0
  %v911 = vadd.f32 %v815, %v910
  %v912 = vpop.f32.mrb[0].mxu0
  %913 = vmatprep.mubr.bf16.mxu0 0
  %914 = vmatmul.mubr.bf16.gmra.mrb[0].mxu0 %v452
  %v915 = vpop.f32.mrb[0].mxu0
  %v916 = vadd.f32 %v815, %v915
  %v917 = vpop.f32.mrb[0].mxu0
  %v918 = vpop.f32.mrb[0].mxu0
  %v919 = vadd.f32 %v815, %v918
  %v920 = vpop.f32.mrb[0].mxu0
  %921 = vmatprep.mubr.bf16.mxu0 0
  %922 = vmatmul.mubr.bf16.gmra.mrb[0].mxu0 %v453
  %v923 = vpop.f32.mrb[0].mxu0
  %v924 = vadd.f32 %v815, %v923
  %v925 = vpop.f32.mrb[0].mxu0
  %v926 = vpop.f32.mrb[0].mxu0
  %v927 = vadd.f32 %v815, %v926
  %v928 = vpop.f32.mrb[0].mxu0
  %929 = vmatprep.mubr.bf16.mxu0 0
  %930 = vmatmul.mubr.bf16.gmra.mrb[0].mxu0 %v454
  %v931 = vpop.f32.mrb[0].mxu0
  %v932 = vadd.f32 %v815, %v931
  %v933 = vpop.f32.mrb[0].mxu0
  %v934 = vpop.f32.mrb[0].mxu0
  %v935 = vadd.f32 %v815, %v934
  %v936 = vpop.f32.mrb[0].mxu0
  %937 = vmatprep.mubr.bf16.mxu0 0
  %938 = vmatmul.mubr.bf16.gmra.mrb[0].mxu0 %v455
  %v939 = vpop.f32.mrb[0].mxu0
  %v940 = vadd.f32 %v815, %v939
  %v941 = vpop.f32.mrb[0].mxu0
  %v942 = vpop.f32.mrb[0].mxu0
  %v943 = vadd.f32 %v815, %v942
  %v944 = vpop.f32.mrb[0].mxu0
  %945 = vmatprep.mubr.bf16.mxu0 0
  %946 = vmatmul.mubr.bf16.gmra.mrb[0].mxu0 %v456
  %v947 = vpop.f32.mrb[0].mxu0
  %v948 = vadd.f32 %v815, %v947
  %v949 = vpop.f32.mrb[0].mxu0
  %v950 = vpop.f32.mrb[0].mxu0
  %v951 = vadd.f32 %v815, %v950
  %v952 = vpop.f32.mrb[0].mxu0
  %953 = vmatprep.mubr.bf16.mxu0 0
  %954 = vmatmul.mubr.bf16.gmra.mrb[0].mxu0 %v457
  %v955 = vpop.f32.mrb[0].mxu0
  %v956 = vadd.f32 %v815, %v955
  %v957 = vpop.f32.mrb[0].mxu0
  %v958 = vpop.f32.mrb[0].mxu0
  %v959 = vadd.f32 %v815, %v958
  %v960 = vpop.f32.mrb[0].mxu0
  %961 = vdwg.mxu0
  %v962 = vpack.c.bf16 %v567, %v564
  %v963 = vpack.c.bf16 %v575, %v572
  %v964 = vpack.c.bf16 %v583, %v580
  %v965 = vpack.c.bf16 %v591, %v588
  %v966 = vpack.c.bf16 %v599, %v596
  %v967 = vpack.c.bf16 %v607, %v604
  %v968 = vpack.c.bf16 %v615, %v612
  %v969 = vpack.c.bf16 %v623, %v620
  %978 = vrot.lane.b32.xlu0 %v962, 64
  %v979 = vpop.permute.xlu0 %978
  %980 = vrot.lane.b32.xlu0 %v963, 64
  %v981 = vpop.permute.xlu0 %980
  %982 = vrot.lane.b32.xlu0 %v964, 64
  %v983 = vpop.permute.xlu0 %982
  %984 = vrot.lane.b32.xlu0 %v965, 64
  %v985 = vpop.permute.xlu0 %984
  %986 = vrot.lane.b32.xlu0 %v966, 64
  %v987 = vpop.permute.xlu0 %986
  %988 = vrot.lane.b32.xlu0 %v967, 64
  %v989 = vpop.permute.xlu0 %988
  %990 = vrot.lane.b32.xlu0 %v968, 64
  %v991 = vpop.permute.xlu0 %990
  %992 = vrot.lane.b32.xlu0 %v969, 64
  %v993 = vpop.permute.xlu0 %992
  %v994 = vpack.c.bf16 %v735, %v732
  %v995 = vpack.c.bf16 %v743, %v740
  %v996 = vpack.c.bf16 %v751, %v748
  %v997 = vpack.c.bf16 %v759, %v756
  %v998 = vpack.c.bf16 %v767, %v764
  %v999 = vpack.c.bf16 %v775, %v772
  %v1000 = vpack.c.bf16 %v783, %v780
  %v1001 = vpack.c.bf16 %v791, %v788
  %1010 = vrot.lane.b32.xlu0 %v994, 64
  %v1011 = vpop.permute.xlu0 %1010
  %1012 = vrot.lane.b32.xlu0 %v995, 64
  %v1013 = vpop.permute.xlu0 %1012
  %1014 = vrot.lane.b32.xlu0 %v996, 64
  %v1015 = vpop.permute.xlu0 %1014
  %1016 = vrot.lane.b32.xlu0 %v997, 64
  %v1017 = vpop.permute.xlu0 %1016
  %1018 = vrot.lane.b32.xlu0 %v998, 64
  %v1019 = vpop.permute.xlu0 %1018
  %1020 = vrot.lane.b32.xlu0 %v999, 64
  %v1021 = vpop.permute.xlu0 %1020
  %1022 = vrot.lane.b32.xlu0 %v1000, 64
  %v1023 = vpop.permute.xlu0 %1022
  %1024 = vrot.lane.b32.xlu0 %v1001, 64
  %v1025 = vpop.permute.xlu0 %1024
  %v1026 = vpack.c.bf16 %v903, %v900
  %v1027 = vpack.c.bf16 %v911, %v908
  %v1028 = vpack.c.bf16 %v919, %v916
  %v1029 = vpack.c.bf16 %v927, %v924
  %v1030 = vpack.c.bf16 %v935, %v932
  %v1031 = vpack.c.bf16 %v943, %v940
  %v1032 = vpack.c.bf16 %v951, %v948
  %v1033 = vpack.c.bf16 %v959, %v956
  %1042 = vrot.lane.b32.xlu0 %v1026, 64
  %v1043 = vpop.permute.xlu0 %1042
  %1044 = vrot.lane.b32.xlu0 %v1027, 64
  %v1045 = vpop.permute.xlu0 %1044
  %1046 = vrot.lane.b32.xlu0 %v1028, 64
  %v1047 = vpop.permute.xlu0 %1046
  %1048 = vrot.lane.b32.xlu0 %v1029, 64
  %v1049 = vpop.permute.xlu0 %1048
  %1050 = vrot.lane.b32.xlu0 %v1030, 64
  %v1051 = vpop.permute.xlu0 %1050
  %1052 = vrot.lane.b32.xlu0 %v1031, 64
  %v1053 = vpop.permute.xlu0 %1052
  %1054 = vrot.lane.b32.xlu0 %v1032, 64
  %v1055 = vpop.permute.xlu0 %1054
  %1056 = vrot.lane.b32.xlu0 %v1033, 64
  %v1057 = vpop.permute.xlu0 %1056
  %v1067 = vsel %vm258, %v962, 0
  %v1070 = vsel %vm258, %v994, 0
  %1072 = vmatprep.subr.bf16.mxu0 0
  %1073 = vmatpush1.bf16.xpose.msra.mxu0 %v1070
  %1074 = vmatprep.subr.bf16.mxu0 0
  %1075 = vmatpush1.bf16.xpose.msra.mxu0 0
  %1076 = vmatprep.subr.bf16.mxu0 0
  %1077 = vmatpush1.bf16.xpose.msra.mxu0 0
  %1078 = vmatprep.subr.bf16.mxu0 0
  %1079 = vmatpush1.bf16.xpose.msra.mxu0 0
  %1080 = vmatprep.subr.bf16.mxu0 0
  %1081 = vmatpush1.bf16.xpose.msra.mxu0 0
  %1082 = vmatprep.subr.bf16.mxu0 0
  %1083 = vmatpush1.bf16.xpose.msra.mxu0 0
  %1084 = vmatprep.subr.bf16.mxu0 0
  %1085 = vmatpush1.bf16.xpose.msra.mxu0 0
  %1086 = vmatprep.subr.bf16.mxu0 0
  %1087 = vmatpush1.bf16.xpose.msra.mxu0 0
  %1088 = vmatprep.subr.bf16.mxu0 0
  %1089 = vmatpush1.bf16.xpose.msra.mxu0 0
  %1090 = vmatprep.subr.bf16.mxu0 0
  %1091 = vmatpush1.bf16.xpose.msra.mxu0 0
  %1092 = vmatprep.subr.bf16.mxu0 0
  %1093 = vmatpush1.bf16.xpose.msra.mxu0 0
  %1094 = vmatprep.subr.bf16.mxu0 0
  %1095 = vmatpush1.bf16.xpose.msra.mxu0 0
  %1096 = vmatprep.subr.bf16.mxu0 0
  %1097 = vmatpush1.bf16.xpose.msra.mxu0 0
  %1098 = vmatprep.subr.bf16.mxu0 0
  %1099 = vmatpush1.bf16.xpose.msra.mxu0 0
  %1100 = vmatprep.subr.bf16.mxu0 0
  %1101 = vmatpush1.bf16.xpose.msra.mxu0 0
  %1102 = vmatprep.subr.bf16.mxu0 0
  %1103 = vmatpush1.bf16.xpose.msra.mxu0 0
  %1104 = vmatprep.mubr.bf16.mxu0 0
  %1105 = vmatmul.mubr.bf16.gmra.mrb[0].mxu0 %v1067
  %v1106 = vpop.f32.mrb[0].mxu0
  %v1107 = vadd.f32 0.0, %v1106
  %v1108 = vpop.f32.mrb[0].mxu0
  %v1109 = vpop.f32.mrb[0].mxu0
  %v1110 = vadd.f32 0.0, %v1109
  %v1111 = vpop.f32.mrb[0].mxu0
  %1112 = vdwg.mxu0
  %v1114 = vsel %vm258, %v963, 0
  %v1117 = vsel %vm258, %v995, 0
  %1119 = vmatprep.subr.bf16.mxu0 0
  %1120 = vmatpush1.bf16.xpose.msra.mxu0 %v1117
  %1121 = vmatprep.subr.bf16.mxu0 0
  %1122 = vmatpush1.bf16.xpose.msra.mxu0 0
  %1123 = vmatprep.subr.bf16.mxu0 0
  %1124 = vmatpush1.bf16.xpose.msra.mxu0 0
  %1125 = vmatprep.subr.bf16.mxu0 0
  %1126 = vmatpush1.bf16.xpose.msra.mxu0 0
  %1127 = vmatprep.subr.bf16.mxu0 0
  %1128 = vmatpush1.bf16.xpose.msra.mxu0 0
  %1129 = vmatprep.subr.bf16.mxu0 0
  %1130 = vmatpush1.bf16.xpose.msra.mxu0 0
  %1131 = vmatprep.subr.bf16.mxu0 0
  %1132 = vmatpush1.bf16.xpose.msra.mxu0 0
  %1133 = vmatprep.subr.bf16.mxu0 0
  %1134 = vmatpush1.bf16.xpose.msra.mxu0 0
  %1135 = vmatprep.subr.bf16.mxu0 0
  %1136 = vmatpush1.bf16.xpose.msra.mxu0 0
  %1137 = vmatprep.subr.bf16.mxu0 0
  %1138 = vmatpush1.bf16.xpose.msra.mxu0 0
  %1139 = vmatprep.subr.bf16.mxu0 0
  %1140 = vmatpush1.bf16.xpose.msra.mxu0 0
  %1141 = vmatprep.subr.bf16.mxu0 0
  %1142 = vmatpush1.bf16.xpose.msra.mxu0 0
  %1143 = vmatprep.subr.bf16.mxu0 0
  %1144 = vmatpush1.bf16.xpose.msra.mxu0 0
  %1145 = vmatprep.subr.bf16.mxu0 0
  %1146 = vmatpush1.bf16.xpose.msra.mxu0 0
  %1147 = vmatprep.subr.bf16.mxu0 0
  %1148 = vmatpush1.bf16.xpose.msra.mxu0 0
  %1149 = vmatprep.subr.bf16.mxu0 0
  %1150 = vmatpush1.bf16.xpose.msra.mxu0 0
  %1151 = vmatprep.mubr.bf16.mxu0 0
  %1152 = vmatmul.mubr.bf16.gmra.mrb[0].mxu0 %v1114
  %v1153 = vpop.f32.mrb[0].mxu0
  %v1154 = vadd.f32 0.0, %v1153
  %v1155 = vpop.f32.mrb[0].mxu0
  %v1156 = vpop.f32.mrb[0].mxu0
  %v1157 = vadd.f32 0.0, %v1156
  %v1158 = vpop.f32.mrb[0].mxu0
  %1159 = vdwg.mxu0
  %v1161 = vsel %vm258, %v964, 0
  %v1164 = vsel %vm258, %v996, 0
  %1166 = vmatprep.subr.bf16.mxu0 0
  %1167 = vmatpush1.bf16.xpose.msra.mxu0 %v1164
  %1168 = vmatprep.subr.bf16.mxu0 0
  %1169 = vmatpush1.bf16.xpose.msra.mxu0 0
  %1170 = vmatprep.subr.bf16.mxu0 0
  %1171 = vmatpush1.bf16.xpose.msra.mxu0 0
  %1172 = vmatprep.subr.bf16.mxu0 0
  %1173 = vmatpush1.bf16.xpose.msra.mxu0 0
  %1174 = vmatprep.subr.bf16.mxu0 0
  %1175 = vmatpush1.bf16.xpose.msra.mxu0 0
  %1176 = vmatprep.subr.bf16.mxu0 0
  %1177 = vmatpush1.bf16.xpose.msra.mxu0 0
  %1178 = vmatprep.subr.bf16.mxu0 0
  %1179 = vmatpush1.bf16.xpose.msra.mxu0 0
  %1180 = vmatprep.subr.bf16.mxu0 0
  %1181 = vmatpush1.bf16.xpose.msra.mxu0 0
  %1182 = vmatprep.subr.bf16.mxu0 0
  %1183 = vmatpush1.bf16.xpose.msra.mxu0 0
  %1184 = vmatprep.subr.bf16.mxu0 0
  %1185 = vmatpush1.bf16.xpose.msra.mxu0 0
  %1186 = vmatprep.subr.bf16.mxu0 0
  %1187 = vmatpush1.bf16.xpose.msra.mxu0 0
  %1188 = vmatprep.subr.bf16.mxu0 0
  %1189 = vmatpush1.bf16.xpose.msra.mxu0 0
  %1190 = vmatprep.subr.bf16.mxu0 0
  %1191 = vmatpush1.bf16.xpose.msra.mxu0 0
  %1192 = vmatprep.subr.bf16.mxu0 0
  %1193 = vmatpush1.bf16.xpose.msra.mxu0 0
  %1194 = vmatprep.subr.bf16.mxu0 0
  %1195 = vmatpush1.bf16.xpose.msra.mxu0 0
  %1196 = vmatprep.subr.bf16.mxu0 0
  %1197 = vmatpush1.bf16.xpose.msra.mxu0 0
  %1198 = vmatprep.mubr.bf16.mxu0 0
  %1199 = vmatmul.mubr.bf16.gmra.mrb[0].mxu0 %v1161
  %v1200 = vpop.f32.mrb[0].mxu0
  %v1201 = vadd.f32 0.0, %v1200
  %v1202 = vpop.f32.mrb[0].mxu0
  %v1203 = vpop.f32.mrb[0].mxu0
  %v1204 = vadd.f32 0.0, %v1203
  %v1205 = vpop.f32.mrb[0].mxu0
  %1206 = vdwg.mxu0
  %v1208 = vsel %vm258, %v965, 0
  %v1211 = vsel %vm258, %v997, 0
  %1213 = vmatprep.subr.bf16.mxu0 0
  %1214 = vmatpush1.bf16.xpose.msra.mxu0 %v1211
  %1215 = vmatprep.subr.bf16.mxu0 0
  %1216 = vmatpush1.bf16.xpose.msra.mxu0 0
  %1217 = vmatprep.subr.bf16.mxu0 0
  %1218 = vmatpush1.bf16.xpose.msra.mxu0 0
  %1219 = vmatprep.subr.bf16.mxu0 0
  %1220 = vmatpush1.bf16.xpose.msra.mxu0 0
  %1221 = vmatprep.subr.bf16.mxu0 0
  %1222 = vmatpush1.bf16.xpose.msra.mxu0 0
  %1223 = vmatprep.subr.bf16.mxu0 0
  %1224 = vmatpush1.bf16.xpose.msra.mxu0 0
  %1225 = vmatprep.subr.bf16.mxu0 0
  %1226 = vmatpush1.bf16.xpose.msra.mxu0 0
  %1227 = vmatprep.subr.bf16.mxu0 0
  %1228 = vmatpush1.bf16.xpose.msra.mxu0 0
  %1229 = vmatprep.subr.bf16.mxu0 0
  %1230 = vmatpush1.bf16.xpose.msra.mxu0 0
  %1231 = vmatprep.subr.bf16.mxu0 0
  %1232 = vmatpush1.bf16.xpose.msra.mxu0 0
  %1233 = vmatprep.subr.bf16.mxu0 0
  %1234 = vmatpush1.bf16.xpose.msra.mxu0 0
  %1235 = vmatprep.subr.bf16.mxu0 0
  %1236 = vmatpush1.bf16.xpose.msra.mxu0 0
  %1237 = vmatprep.subr.bf16.mxu0 0
  %1238 = vmatpush1.bf16.xpose.msra.mxu0 0
  %1239 = vmatprep.subr.bf16.mxu0 0
  %1240 = vmatpush1.bf16.xpose.msra.mxu0 0
  %1241 = vmatprep.subr.bf16.mxu0 0
  %1242 = vmatpush1.bf16.xpose.msra.mxu0 0
  %1243 = vmatprep.subr.bf16.mxu0 0
  %1244 = vmatpush1.bf16.xpose.msra.mxu0 0
  %1245 = vmatprep.mubr.bf16.mxu0 0
  %1246 = vmatmul.mubr.bf16.gmra.mrb[0].mxu0 %v1208
  %v1247 = vpop.f32.mrb[0].mxu0
  %v1248 = vadd.f32 0.0, %v1247
  %v1249 = vpop.f32.mrb[0].mxu0
  %v1250 = vpop.f32.mrb[0].mxu0
  %v1251 = vadd.f32 0.0, %v1250
  %v1252 = vpop.f32.mrb[0].mxu0
  %1253 = vdwg.mxu0
  %v1255 = vsel %vm258, %v966, 0
  %v1258 = vsel %vm258, %v998, 0
  %1260 = vmatprep.subr.bf16.mxu0 0
  %1261 = vmatpush1.bf16.xpose.msra.mxu0 %v1258
  %1262 = vmatprep.subr.bf16.mxu0 0
  %1263 = vmatpush1.bf16.xpose.msra.mxu0 0
  %1264 = vmatprep.subr.bf16.mxu0 0
  %1265 = vmatpush1.bf16.xpose.msra.mxu0 0
  %1266 = vmatprep.subr.bf16.mxu0 0
  %1267 = vmatpush1.bf16.xpose.msra.mxu0 0
  %1268 = vmatprep.subr.bf16.mxu0 0
  %1269 = vmatpush1.bf16.xpose.msra.mxu0 0
  %1270 = vmatprep.subr.bf16.mxu0 0
  %1271 = vmatpush1.bf16.xpose.msra.mxu0 0
  %1272 = vmatprep.subr.bf16.mxu0 0
  %1273 = vmatpush1.bf16.xpose.msra.mxu0 0
  %1274 = vmatprep.subr.bf16.mxu0 0
  %1275 = vmatpush1.bf16.xpose.msra.mxu0 0
  %1276 = vmatprep.subr.bf16.mxu0 0
  %1277 = vmatpush1.bf16.xpose.msra.mxu0 0
  %1278 = vmatprep.subr.bf16.mxu0 0
  %1279 = vmatpush1.bf16.xpose.msra.mxu0 0
  %1280 = vmatprep.subr.bf16.mxu0 0
  %1281 = vmatpush1.bf16.xpose.msra.mxu0 0
  %1282 = vmatprep.subr.bf16.mxu0 0
  %1283 = vmatpush1.bf16.xpose.msra.mxu0 0
  %1284 = vmatprep.subr.bf16.mxu0 0
  %1285 = vmatpush1.bf16.xpose.msra.mxu0 0
  %1286 = vmatprep.subr.bf16.mxu0 0
  %1287 = vmatpush1.bf16.xpose.msra.mxu0 0
  %1288 = vmatprep.subr.bf16.mxu0 0
  %1289 = vmatpush1.bf16.xpose.msra.mxu0 0
  %1290 = vmatprep.subr.bf16.mxu0 0
  %1291 = vmatpush1.bf16.xpose.msra.mxu0 0
  %1292 = vmatprep.mubr.bf16.mxu0 0
  %1293 = vmatmul.mubr.bf16.gmra.mrb[0].mxu0 %v1255
  %v1294 = vpop.f32.mrb[0].mxu0
  %v1295 = vadd.f32 0.0, %v1294
  %v1296 = vpop.f32.mrb[0].mxu0
  %v1297 = vpop.f32.mrb[0].mxu0
  %v1298 = vadd.f32 0.0, %v1297
  %v1299 = vpop.f32.mrb[0].mxu0
  %1300 = vdwg.mxu0
  %v1302 = vsel %vm258, %v967, 0
  %v1305 = vsel %vm258, %v999, 0
  %1307 = vmatprep.subr.bf16.mxu0 0
  %1308 = vmatpush1.bf16.xpose.msra.mxu0 %v1305
  %1309 = vmatprep.subr.bf16.mxu0 0
  %1310 = vmatpush1.bf16.xpose.msra.mxu0 0
  %1311 = vmatprep.subr.bf16.mxu0 0
  %1312 = vmatpush1.bf16.xpose.msra.mxu0 0
  %1313 = vmatprep.subr.bf16.mxu0 0
  %1314 = vmatpush1.bf16.xpose.msra.mxu0 0
  %1315 = vmatprep.subr.bf16.mxu0 0
  %1316 = vmatpush1.bf16.xpose.msra.mxu0 0
  %1317 = vmatprep.subr.bf16.mxu0 0
  %1318 = vmatpush1.bf16.xpose.msra.mxu0 0
  %1319 = vmatprep.subr.bf16.mxu0 0
  %1320 = vmatpush1.bf16.xpose.msra.mxu0 0
  %1321 = vmatprep.subr.bf16.mxu0 0
  %1322 = vmatpush1.bf16.xpose.msra.mxu0 0
  %1323 = vmatprep.subr.bf16.mxu0 0
  %1324 = vmatpush1.bf16.xpose.msra.mxu0 0
  %1325 = vmatprep.subr.bf16.mxu0 0
  %1326 = vmatpush1.bf16.xpose.msra.mxu0 0
  %1327 = vmatprep.subr.bf16.mxu0 0
  %1328 = vmatpush1.bf16.xpose.msra.mxu0 0
  %1329 = vmatprep.subr.bf16.mxu0 0
  %1330 = vmatpush1.bf16.xpose.msra.mxu0 0
  %1331 = vmatprep.subr.bf16.mxu0 0
  %1332 = vmatpush1.bf16.xpose.msra.mxu0 0
  %1333 = vmatprep.subr.bf16.mxu0 0
  %1334 = vmatpush1.bf16.xpose.msra.mxu0 0
  %1335 = vmatprep.subr.bf16.mxu0 0
  %1336 = vmatpush1.bf16.xpose.msra.mxu0 0
  %1337 = vmatprep.subr.bf16.mxu0 0
  %1338 = vmatpush1.bf16.xpose.msra.mxu0 0
  %1339 = vmatprep.mubr.bf16.mxu0 0
  %1340 = vmatmul.mubr.bf16.gmra.mrb[0].mxu0 %v1302
  %v1341 = vpop.f32.mrb[0].mxu0
  %v1342 = vadd.f32 0.0, %v1341
  %v1343 = vpop.f32.mrb[0].mxu0
  %v1344 = vpop.f32.mrb[0].mxu0
  %v1345 = vadd.f32 0.0, %v1344
  %v1346 = vpop.f32.mrb[0].mxu0
  %1347 = vdwg.mxu0
  %v1349 = vsel %vm258, %v968, 0
  %v1352 = vsel %vm258, %v1000, 0
  %1354 = vmatprep.subr.bf16.mxu0 0
  %1355 = vmatpush1.bf16.xpose.msra.mxu0 %v1352
  %1356 = vmatprep.subr.bf16.mxu0 0
  %1357 = vmatpush1.bf16.xpose.msra.mxu0 0
  %1358 = vmatprep.subr.bf16.mxu0 0
  %1359 = vmatpush1.bf16.xpose.msra.mxu0 0
  %1360 = vmatprep.subr.bf16.mxu0 0
  %1361 = vmatpush1.bf16.xpose.msra.mxu0 0
  %1362 = vmatprep.subr.bf16.mxu0 0
  %1363 = vmatpush1.bf16.xpose.msra.mxu0 0
  %1364 = vmatprep.subr.bf16.mxu0 0
  %1365 = vmatpush1.bf16.xpose.msra.mxu0 0
  %1366 = vmatprep.subr.bf16.mxu0 0
  %1367 = vmatpush1.bf16.xpose.msra.mxu0 0
  %1368 = vmatprep.subr.bf16.mxu0 0
  %1369 = vmatpush1.bf16.xpose.msra.mxu0 0
  %1370 = vmatprep.subr.bf16.mxu0 0
  %1371 = vmatpush1.bf16.xpose.msra.mxu0 0
  %1372 = vmatprep.subr.bf16.mxu0 0
  %1373 = vmatpush1.bf16.xpose.msra.mxu0 0
  %1374 = vmatprep.subr.bf16.mxu0 0
  %1375 = vmatpush1.bf16.xpose.msra.mxu0 0
  %1376 = vmatprep.subr.bf16.mxu0 0
  %1377 = vmatpush1.bf16.xpose.msra.mxu0 0
  %1378 = vmatprep.subr.bf16.mxu0 0
  %1379 = vmatpush1.bf16.xpose.msra.mxu0 0
  %1380 = vmatprep.subr.bf16.mxu0 0
  %1381 = vmatpush1.bf16.xpose.msra.mxu0 0
  %1382 = vmatprep.subr.bf16.mxu0 0
  %1383 = vmatpush1.bf16.xpose.msra.mxu0 0
  %1384 = vmatprep.subr.bf16.mxu0 0
  %1385 = vmatpush1.bf16.xpose.msra.mxu0 0
  %1386 = vmatprep.mubr.bf16.mxu0 0
  %1387 = vmatmul.mubr.bf16.gmra.mrb[0].mxu0 %v1349
  %v1388 = vpop.f32.mrb[0].mxu0
  %v1389 = vadd.f32 0.0, %v1388
  %v1390 = vpop.f32.mrb[0].mxu0
  %v1391 = vpop.f32.mrb[0].mxu0
  %v1392 = vadd.f32 0.0, %v1391
  %v1393 = vpop.f32.mrb[0].mxu0
  %1394 = vdwg.mxu0
  %v1396 = vsel %vm258, %v969, 0
  %v1399 = vsel %vm258, %v1001, 0
  %1401 = vmatprep.subr.bf16.mxu0 0
  %1402 = vmatpush1.bf16.xpose.msra.mxu0 %v1399
  %1403 = vmatprep.subr.bf16.mxu0 0
  %1404 = vmatpush1.bf16.xpose.msra.mxu0 0
  %1405 = vmatprep.subr.bf16.mxu0 0
  %1406 = vmatpush1.bf16.xpose.msra.mxu0 0
  %1407 = vmatprep.subr.bf16.mxu0 0
  %1408 = vmatpush1.bf16.xpose.msra.mxu0 0
  %1409 = vmatprep.subr.bf16.mxu0 0
  %1410 = vmatpush1.bf16.xpose.msra.mxu0 0
  %1411 = vmatprep.subr.bf16.mxu0 0
  %1412 = vmatpush1.bf16.xpose.msra.mxu0 0
  %1413 = vmatprep.subr.bf16.mxu0 0
  %1414 = vmatpush1.bf16.xpose.msra.mxu0 0
  %1415 = vmatprep.subr.bf16.mxu0 0
  %1416 = vmatpush1.bf16.xpose.msra.mxu0 0
  %1417 = vmatprep.subr.bf16.mxu0 0
  %1418 = vmatpush1.bf16.xpose.msra.mxu0 0
  %1419 = vmatprep.subr.bf16.mxu0 0
  %1420 = vmatpush1.bf16.xpose.msra.mxu0 0
  %1421 = vmatprep.subr.bf16.mxu0 0
  %1422 = vmatpush1.bf16.xpose.msra.mxu0 0
  %1423 = vmatprep.subr.bf16.mxu0 0
  %1424 = vmatpush1.bf16.xpose.msra.mxu0 0
  %1425 = vmatprep.subr.bf16.mxu0 0
  %1426 = vmatpush1.bf16.xpose.msra.mxu0 0
  %1427 = vmatprep.subr.bf16.mxu0 0
  %1428 = vmatpush1.bf16.xpose.msra.mxu0 0
  %1429 = vmatprep.subr.bf16.mxu0 0
  %1430 = vmatpush1.bf16.xpose.msra.mxu0 0
  %1431 = vmatprep.subr.bf16.mxu0 0
  %1432 = vmatpush1.bf16.xpose.msra.mxu0 0
  %1433 = vmatprep.mubr.bf16.mxu0 0
  %1434 = vmatmul.mubr.bf16.gmra.mrb[0].mxu0 %v1396
  %v1435 = vpop.f32.mrb[0].mxu0
  %v1436 = vadd.f32 0.0, %v1435
  %v1437 = vpop.f32.mrb[0].mxu0
  %v1438 = vpop.f32.mrb[0].mxu0
  %v1439 = vadd.f32 0.0, %v1438
  %v1440 = vpop.f32.mrb[0].mxu0
  %1441 = vdwg.mxu0
  %v1443 = vsel %vm258, %v979, 0
  %v1446 = vsel %vm258, %v1011, 0
  %1448 = vmatprep.subr.bf16.mxu0 0
  %1449 = vmatpush1.bf16.xpose.msra.mxu0 %v1446
  %1450 = vmatprep.subr.bf16.mxu0 0
  %1451 = vmatpush1.bf16.xpose.msra.mxu0 0
  %1452 = vmatprep.subr.bf16.mxu0 0
  %1453 = vmatpush1.bf16.xpose.msra.mxu0 0
  %1454 = vmatprep.subr.bf16.mxu0 0
  %1455 = vmatpush1.bf16.xpose.msra.mxu0 0
  %1456 = vmatprep.subr.bf16.mxu0 0
  %1457 = vmatpush1.bf16.xpose.msra.mxu0 0
  %1458 = vmatprep.subr.bf16.mxu0 0
  %1459 = vmatpush1.bf16.xpose.msra.mxu0 0
  %1460 = vmatprep.subr.bf16.mxu0 0
  %1461 = vmatpush1.bf16.xpose.msra.mxu0 0
  %1462 = vmatprep.subr.bf16.mxu0 0
  %1463 = vmatpush1.bf16.xpose.msra.mxu0 0
  %1464 = vmatprep.subr.bf16.mxu0 0
  %1465 = vmatpush1.bf16.xpose.msra.mxu0 0
  %1466 = vmatprep.subr.bf16.mxu0 0
  %1467 = vmatpush1.bf16.xpose.msra.mxu0 0
  %1468 = vmatprep.subr.bf16.mxu0 0
  %1469 = vmatpush1.bf16.xpose.msra.mxu0 0
  %1470 = vmatprep.subr.bf16.mxu0 0
  %1471 = vmatpush1.bf16.xpose.msra.mxu0 0
  %1472 = vmatprep.subr.bf16.mxu0 0
  %1473 = vmatpush1.bf16.xpose.msra.mxu0 0
  %1474 = vmatprep.subr.bf16.mxu0 0
  %1475 = vmatpush1.bf16.xpose.msra.mxu0 0
  %1476 = vmatprep.subr.bf16.mxu0 0
  %1477 = vmatpush1.bf16.xpose.msra.mxu0 0
  %1478 = vmatprep.subr.bf16.mxu0 0
  %1479 = vmatpush1.bf16.xpose.msra.mxu0 0
  %1480 = vmatprep.mubr.bf16.mxu0 0
  %1481 = vmatmul.mubr.bf16.gmra.mrb[0].mxu0 %v1443
  %v1482 = vpop.f32.mrb[0].mxu0
  %v1483 = vadd.f32 0.0, %v1482
  %v1484 = vpop.f32.mrb[0].mxu0
  %v1485 = vpop.f32.mrb[0].mxu0
  %v1486 = vadd.f32 0.0, %v1485
  %v1487 = vpop.f32.mrb[0].mxu0
  %1488 = vdwg.mxu0
  %v1490 = vsel %vm258, %v981, 0
  %v1493 = vsel %vm258, %v1013, 0
  %1495 = vmatprep.subr.bf16.mxu0 0
  %1496 = vmatpush1.bf16.xpose.msra.mxu0 %v1493
  %1497 = vmatprep.subr.bf16.mxu0 0
  %1498 = vmatpush1.bf16.xpose.msra.mxu0 0
  %1499 = vmatprep.subr.bf16.mxu0 0
  %1500 = vmatpush1.bf16.xpose.msra.mxu0 0
  %1501 = vmatprep.subr.bf16.mxu0 0
  %1502 = vmatpush1.bf16.xpose.msra.mxu0 0
  %1503 = vmatprep.subr.bf16.mxu0 0
  %1504 = vmatpush1.bf16.xpose.msra.mxu0 0
  %1505 = vmatprep.subr.bf16.mxu0 0
  %1506 = vmatpush1.bf16.xpose.msra.mxu0 0
  %1507 = vmatprep.subr.bf16.mxu0 0
  %1508 = vmatpush1.bf16.xpose.msra.mxu0 0
  %1509 = vmatprep.subr.bf16.mxu0 0
  %1510 = vmatpush1.bf16.xpose.msra.mxu0 0
  %1511 = vmatprep.subr.bf16.mxu0 0
  %1512 = vmatpush1.bf16.xpose.msra.mxu0 0
  %1513 = vmatprep.subr.bf16.mxu0 0
  %1514 = vmatpush1.bf16.xpose.msra.mxu0 0
  %1515 = vmatprep.subr.bf16.mxu0 0
  %1516 = vmatpush1.bf16.xpose.msra.mxu0 0
  %1517 = vmatprep.subr.bf16.mxu0 0
  %1518 = vmatpush1.bf16.xpose.msra.mxu0 0
  %1519 = vmatprep.subr.bf16.mxu0 0
  %1520 = vmatpush1.bf16.xpose.msra.mxu0 0
  %1521 = vmatprep.subr.bf16.mxu0 0
  %1522 = vmatpush1.bf16.xpose.msra.mxu0 0
  %1523 = vmatprep.subr.bf16.mxu0 0
  %1524 = vmatpush1.bf16.xpose.msra.mxu0 0
  %1525 = vmatprep.subr.bf16.mxu0 0
  %1526 = vmatpush1.bf16.xpose.msra.mxu0 0
  %1527 = vmatprep.mubr.bf16.mxu0 0
  %1528 = vmatmul.mubr.bf16.gmra.mrb[0].mxu0 %v1490
  %v1529 = vpop.f32.mrb[0].mxu0
  %v1530 = vadd.f32 0.0, %v1529
  %v1531 = vpop.f32.mrb[0].mxu0
  %v1532 = vpop.f32.mrb[0].mxu0
  %v1533 = vadd.f32 0.0, %v1532
  %v1534 = vpop.f32.mrb[0].mxu0
  %1535 = vdwg.mxu0
  %v1537 = vsel %vm258, %v983, 0
  %v1540 = vsel %vm258, %v1015, 0
  %1542 = vmatprep.subr.bf16.mxu0 0
  %1543 = vmatpush1.bf16.xpose.msra.mxu0 %v1540
  %1544 = vmatprep.subr.bf16.mxu0 0
  %1545 = vmatpush1.bf16.xpose.msra.mxu0 0
  %1546 = vmatprep.subr.bf16.mxu0 0
  %1547 = vmatpush1.bf16.xpose.msra.mxu0 0
  %1548 = vmatprep.subr.bf16.mxu0 0
  %1549 = vmatpush1.bf16.xpose.msra.mxu0 0
  %1550 = vmatprep.subr.bf16.mxu0 0
  %1551 = vmatpush1.bf16.xpose.msra.mxu0 0
  %1552 = vmatprep.subr.bf16.mxu0 0
  %1553 = vmatpush1.bf16.xpose.msra.mxu0 0
  %1554 = vmatprep.subr.bf16.mxu0 0
  %1555 = vmatpush1.bf16.xpose.msra.mxu0 0
  %1556 = vmatprep.subr.bf16.mxu0 0
  %1557 = vmatpush1.bf16.xpose.msra.mxu0 0
  %1558 = vmatprep.subr.bf16.mxu0 0
  %1559 = vmatpush1.bf16.xpose.msra.mxu0 0
  %1560 = vmatprep.subr.bf16.mxu0 0
  %1561 = vmatpush1.bf16.xpose.msra.mxu0 0
  %1562 = vmatprep.subr.bf16.mxu0 0
  %1563 = vmatpush1.bf16.xpose.msra.mxu0 0
  %1564 = vmatprep.subr.bf16.mxu0 0
  %1565 = vmatpush1.bf16.xpose.msra.mxu0 0
  %1566 = vmatprep.subr.bf16.mxu0 0
  %1567 = vmatpush1.bf16.xpose.msra.mxu0 0
  %1568 = vmatprep.subr.bf16.mxu0 0
  %1569 = vmatpush1.bf16.xpose.msra.mxu0 0
  %1570 = vmatprep.subr.bf16.mxu0 0
  %1571 = vmatpush1.bf16.xpose.msra.mxu0 0
  %1572 = vmatprep.subr.bf16.mxu0 0
  %1573 = vmatpush1.bf16.xpose.msra.mxu0 0
  %1574 = vmatprep.mubr.bf16.mxu0 0
  %1575 = vmatmul.mubr.bf16.gmra.mrb[0].mxu0 %v1537
  %v1576 = vpop.f32.mrb[0].mxu0
  %v1577 = vadd.f32 0.0, %v1576
  %v1578 = vpop.f32.mrb[0].mxu0
  %v1579 = vpop.f32.mrb[0].mxu0
  %v1580 = vadd.f32 0.0, %v1579
  %v1581 = vpop.f32.mrb[0].mxu0
  %1582 = vdwg.mxu0
  %v1584 = vsel %vm258, %v985, 0
  %v1587 = vsel %vm258, %v1017, 0
  %1589 = vmatprep.subr.bf16.mxu0 0
  %1590 = vmatpush1.bf16.xpose.msra.mxu0 %v1587
  %1591 = vmatprep.subr.bf16.mxu0 0
  %1592 = vmatpush1.bf16.xpose.msra.mxu0 0
  %1593 = vmatprep.subr.bf16.mxu0 0
  %1594 = vmatpush1.bf16.xpose.msra.mxu0 0
  %1595 = vmatprep.subr.bf16.mxu0 0
  %1596 = vmatpush1.bf16.xpose.msra.mxu0 0
  %1597 = vmatprep.subr.bf16.mxu0 0
  %1598 = vmatpush1.bf16.xpose.msra.mxu0 0
  %1599 = vmatprep.subr.bf16.mxu0 0
  %1600 = vmatpush1.bf16.xpose.msra.mxu0 0
  %1601 = vmatprep.subr.bf16.mxu0 0
  %1602 = vmatpush1.bf16.xpose.msra.mxu0 0
  %1603 = vmatprep.subr.bf16.mxu0 0
  %1604 = vmatpush1.bf16.xpose.msra.mxu0 0
  %1605 = vmatprep.subr.bf16.mxu0 0
  %1606 = vmatpush1.bf16.xpose.msra.mxu0 0
  %1607 = vmatprep.subr.bf16.mxu0 0
  %1608 = vmatpush1.bf16.xpose.msra.mxu0 0
  %1609 = vmatprep.subr.bf16.mxu0 0
  %1610 = vmatpush1.bf16.xpose.msra.mxu0 0
  %1611 = vmatprep.subr.bf16.mxu0 0
  %1612 = vmatpush1.bf16.xpose.msra.mxu0 0
  %1613 = vmatprep.subr.bf16.mxu0 0
  %1614 = vmatpush1.bf16.xpose.msra.mxu0 0
  %1615 = vmatprep.subr.bf16.mxu0 0
  %1616 = vmatpush1.bf16.xpose.msra.mxu0 0
  %1617 = vmatprep.subr.bf16.mxu0 0
  %1618 = vmatpush1.bf16.xpose.msra.mxu0 0
  %1619 = vmatprep.subr.bf16.mxu0 0
  %1620 = vmatpush1.bf16.xpose.msra.mxu0 0
  %1621 = vmatprep.mubr.bf16.mxu0 0
  %1622 = vmatmul.mubr.bf16.gmra.mrb[0].mxu0 %v1584
  %v1623 = vpop.f32.mrb[0].mxu0
  %v1624 = vadd.f32 0.0, %v1623
  %v1625 = vpop.f32.mrb[0].mxu0
  %v1626 = vpop.f32.mrb[0].mxu0
  %v1627 = vadd.f32 0.0, %v1626
  %v1628 = vpop.f32.mrb[0].mxu0
  %1629 = vdwg.mxu0
  %v1631 = vsel %vm258, %v987, 0
  %v1634 = vsel %vm258, %v1019, 0
  %1636 = vmatprep.subr.bf16.mxu0 0
  %1637 = vmatpush1.bf16.xpose.msra.mxu0 %v1634
  %1638 = vmatprep.subr.bf16.mxu0 0
  %1639 = vmatpush1.bf16.xpose.msra.mxu0 0
  %1640 = vmatprep.subr.bf16.mxu0 0
  %1641 = vmatpush1.bf16.xpose.msra.mxu0 0
  %1642 = vmatprep.subr.bf16.mxu0 0
  %1643 = vmatpush1.bf16.xpose.msra.mxu0 0
  %1644 = vmatprep.subr.bf16.mxu0 0
  %1645 = vmatpush1.bf16.xpose.msra.mxu0 0
  %1646 = vmatprep.subr.bf16.mxu0 0
  %1647 = vmatpush1.bf16.xpose.msra.mxu0 0
  %1648 = vmatprep.subr.bf16.mxu0 0
  %1649 = vmatpush1.bf16.xpose.msra.mxu0 0
  %1650 = vmatprep.subr.bf16.mxu0 0
  %1651 = vmatpush1.bf16.xpose.msra.mxu0 0
  %1652 = vmatprep.subr.bf16.mxu0 0
  %1653 = vmatpush1.bf16.xpose.msra.mxu0 0
  %1654 = vmatprep.subr.bf16.mxu0 0
  %1655 = vmatpush1.bf16.xpose.msra.mxu0 0
  %1656 = vmatprep.subr.bf16.mxu0 0
  %1657 = vmatpush1.bf16.xpose.msra.mxu0 0
  %1658 = vmatprep.subr.bf16.mxu0 0
  %1659 = vmatpush1.bf16.xpose.msra.mxu0 0
  %1660 = vmatprep.subr.bf16.mxu0 0
  %1661 = vmatpush1.bf16.xpose.msra.mxu0 0
  %1662 = vmatprep.subr.bf16.mxu0 0
  %1663 = vmatpush1.bf16.xpose.msra.mxu0 0
  %1664 = vmatprep.subr.bf16.mxu0 0
  %1665 = vmatpush1.bf16.xpose.msra.mxu0 0
  %1666 = vmatprep.subr.bf16.mxu0 0
  %1667 = vmatpush1.bf16.xpose.msra.mxu0 0
  %1668 = vmatprep.mubr.bf16.mxu0 0
  %1669 = vmatmul.mubr.bf16.gmra.mrb[0].mxu0 %v1631
  %v1670 = vpop.f32.mrb[0].mxu0
  %v1671 = vadd.f32 0.0, %v1670
  %v1672 = vpop.f32.mrb[0].mxu0
  %v1673 = vpop.f32.mrb[0].mxu0
  %v1674 = vadd.f32 0.0, %v1673
  %v1675 = vpop.f32.mrb[0].mxu0
  %1676 = vdwg.mxu0
  %v1678 = vsel %vm258, %v989, 0
  %v1681 = vsel %vm258, %v1021, 0
  %1683 = vmatprep.subr.bf16.mxu0 0
  %1684 = vmatpush1.bf16.xpose.msra.mxu0 %v1681
  %1685 = vmatprep.subr.bf16.mxu0 0
  %1686 = vmatpush1.bf16.xpose.msra.mxu0 0
  %1687 = vmatprep.subr.bf16.mxu0 0
  %1688 = vmatpush1.bf16.xpose.msra.mxu0 0
  %1689 = vmatprep.subr.bf16.mxu0 0
  %1690 = vmatpush1.bf16.xpose.msra.mxu0 0
  %1691 = vmatprep.subr.bf16.mxu0 0
  %1692 = vmatpush1.bf16.xpose.msra.mxu0 0
  %1693 = vmatprep.subr.bf16.mxu0 0
  %1694 = vmatpush1.bf16.xpose.msra.mxu0 0
  %1695 = vmatprep.subr.bf16.mxu0 0
  %1696 = vmatpush1.bf16.xpose.msra.mxu0 0
  %1697 = vmatprep.subr.bf16.mxu0 0
  %1698 = vmatpush1.bf16.xpose.msra.mxu0 0
  %1699 = vmatprep.subr.bf16.mxu0 0
  %1700 = vmatpush1.bf16.xpose.msra.mxu0 0
  %1701 = vmatprep.subr.bf16.mxu0 0
  %1702 = vmatpush1.bf16.xpose.msra.mxu0 0
  %1703 = vmatprep.subr.bf16.mxu0 0
  %1704 = vmatpush1.bf16.xpose.msra.mxu0 0
  %1705 = vmatprep.subr.bf16.mxu0 0
  %1706 = vmatpush1.bf16.xpose.msra.mxu0 0
  %1707 = vmatprep.subr.bf16.mxu0 0
  %1708 = vmatpush1.bf16.xpose.msra.mxu0 0
  %1709 = vmatprep.subr.bf16.mxu0 0
  %1710 = vmatpush1.bf16.xpose.msra.mxu0 0
  %1711 = vmatprep.subr.bf16.mxu0 0
  %1712 = vmatpush1.bf16.xpose.msra.mxu0 0
  %1713 = vmatprep.subr.bf16.mxu0 0
  %1714 = vmatpush1.bf16.xpose.msra.mxu0 0
  %1715 = vmatprep.mubr.bf16.mxu0 0
  %1716 = vmatmul.mubr.bf16.gmra.mrb[0].mxu0 %v1678
  %v1717 = vpop.f32.mrb[0].mxu0
  %v1718 = vadd.f32 0.0, %v1717
  %v1719 = vpop.f32.mrb[0].mxu0
  %v1720 = vpop.f32.mrb[0].mxu0
  %v1721 = vadd.f32 0.0, %v1720
  %v1722 = vpop.f32.mrb[0].mxu0
  %1723 = vdwg.mxu0
  %v1725 = vsel %vm258, %v991, 0
  %v1728 = vsel %vm258, %v1023, 0
  %1730 = vmatprep.subr.bf16.mxu0 0
  %1731 = vmatpush1.bf16.xpose.msra.mxu0 %v1728
  %1732 = vmatprep.subr.bf16.mxu0 0
  %1733 = vmatpush1.bf16.xpose.msra.mxu0 0
  %1734 = vmatprep.subr.bf16.mxu0 0
  %1735 = vmatpush1.bf16.xpose.msra.mxu0 0
  %1736 = vmatprep.subr.bf16.mxu0 0
  %1737 = vmatpush1.bf16.xpose.msra.mxu0 0
  %1738 = vmatprep.subr.bf16.mxu0 0
  %1739 = vmatpush1.bf16.xpose.msra.mxu0 0
  %1740 = vmatprep.subr.bf16.mxu0 0
  %1741 = vmatpush1.bf16.xpose.msra.mxu0 0
  %1742 = vmatprep.subr.bf16.mxu0 0
  %1743 = vmatpush1.bf16.xpose.msra.mxu0 0
  %1744 = vmatprep.subr.bf16.mxu0 0
  %1745 = vmatpush1.bf16.xpose.msra.mxu0 0
  %1746 = vmatprep.subr.bf16.mxu0 0
  %1747 = vmatpush1.bf16.xpose.msra.mxu0 0
  %1748 = vmatprep.subr.bf16.mxu0 0
  %1749 = vmatpush1.bf16.xpose.msra.mxu0 0
  %1750 = vmatprep.subr.bf16.mxu0 0
  %1751 = vmatpush1.bf16.xpose.msra.mxu0 0
  %1752 = vmatprep.subr.bf16.mxu0 0
  %1753 = vmatpush1.bf16.xpose.msra.mxu0 0
  %1754 = vmatprep.subr.bf16.mxu0 0
  %1755 = vmatpush1.bf16.xpose.msra.mxu0 0
  %1756 = vmatprep.subr.bf16.mxu0 0
  %1757 = vmatpush1.bf16.xpose.msra.mxu0 0
  %1758 = vmatprep.subr.bf16.mxu0 0
  %1759 = vmatpush1.bf16.xpose.msra.mxu0 0
  %1760 = vmatprep.subr.bf16.mxu0 0
  %1761 = vmatpush1.bf16.xpose.msra.mxu0 0
  %1762 = vmatprep.mubr.bf16.mxu0 0
  %1763 = vmatmul.mubr.bf16.gmra.mrb[0].mxu0 %v1725
  %v1764 = vpop.f32.mrb[0].mxu0
  %v1765 = vadd.f32 0.0, %v1764
  %v1766 = vpop.f32.mrb[0].mxu0
  %v1767 = vpop.f32.mrb[0].mxu0
  %v1768 = vadd.f32 0.0, %v1767
  %v1769 = vpop.f32.mrb[0].mxu0
  %1770 = vdwg.mxu0
  %v1772 = vsel %vm258, %v993, 0
  %v1775 = vsel %vm258, %v1025, 0
  %1777 = vmatprep.subr.bf16.mxu0 0
  %1778 = vmatpush1.bf16.xpose.msra.mxu0 %v1775
  %1779 = vmatprep.subr.bf16.mxu0 0
  %1780 = vmatpush1.bf16.xpose.msra.mxu0 0
  %1781 = vmatprep.subr.bf16.mxu0 0
  %1782 = vmatpush1.bf16.xpose.msra.mxu0 0
  %1783 = vmatprep.subr.bf16.mxu0 0
  %1784 = vmatpush1.bf16.xpose.msra.mxu0 0
  %1785 = vmatprep.subr.bf16.mxu0 0
  %1786 = vmatpush1.bf16.xpose.msra.mxu0 0
  %1787 = vmatprep.subr.bf16.mxu0 0
  %1788 = vmatpush1.bf16.xpose.msra.mxu0 0
  %1789 = vmatprep.subr.bf16.mxu0 0
  %1790 = vmatpush1.bf16.xpose.msra.mxu0 0
  %1791 = vmatprep.subr.bf16.mxu0 0
  %1792 = vmatpush1.bf16.xpose.msra.mxu0 0
  %1793 = vmatprep.subr.bf16.mxu0 0
  %1794 = vmatpush1.bf16.xpose.msra.mxu0 0
  %1795 = vmatprep.subr.bf16.mxu0 0
  %1796 = vmatpush1.bf16.xpose.msra.mxu0 0
  %1797 = vmatprep.subr.bf16.mxu0 0
  %1798 = vmatpush1.bf16.xpose.msra.mxu0 0
  %1799 = vmatprep.subr.bf16.mxu0 0
  %1800 = vmatpush1.bf16.xpose.msra.mxu0 0
  %1801 = vmatprep.subr.bf16.mxu0 0
  %1802 = vmatpush1.bf16.xpose.msra.mxu0 0
  %1803 = vmatprep.subr.bf16.mxu0 0
  %1804 = vmatpush1.bf16.xpose.msra.mxu0 0
  %1805 = vmatprep.subr.bf16.mxu0 0
  %1806 = vmatpush1.bf16.xpose.msra.mxu0 0
  %1807 = vmatprep.subr.bf16.mxu0 0
  %1808 = vmatpush1.bf16.xpose.msra.mxu0 0
  %1809 = vmatprep.mubr.bf16.mxu0 0
  %1810 = vmatmul.mubr.bf16.gmra.mrb[0].mxu0 %v1772
  %v1811 = vpop.f32.mrb[0].mxu0
  %v1812 = vadd.f32 0.0, %v1811
  %v1813 = vpop.f32.mrb[0].mxu0
  %v1814 = vpop.f32.mrb[0].mxu0
  %v1815 = vadd.f32 0.0, %v1814
  %v1816 = vpop.f32.mrb[0].mxu0
  %1817 = vdwg.mxu0
  %v1818 = vmul.f32 %v1107, 0.125
  %v1819 = vmul.f32 %v1110, 0.125
  %v1820 = vmul.f32 %v1154, 0.125
  %v1821 = vmul.f32 %v1157, 0.125
  %v1822 = vmul.f32 %v1201, 0.125
  %v1823 = vmul.f32 %v1204, 0.125
  %v1824 = vmul.f32 %v1248, 0.125
  %v1825 = vmul.f32 %v1251, 0.125
  %v1826 = vmul.f32 %v1295, 0.125
  %v1827 = vmul.f32 %v1298, 0.125
  %v1828 = vmul.f32 %v1342, 0.125
  %v1829 = vmul.f32 %v1345, 0.125
  %v1830 = vmul.f32 %v1389, 0.125
  %v1831 = vmul.f32 %v1392, 0.125
  %v1832 = vmul.f32 %v1436, 0.125
  %v1833 = vmul.f32 %v1439, 0.125
  %v1834 = vmul.f32 %v1483, 0.125
  %v1835 = vmul.f32 %v1486, 0.125
  %v1836 = vmul.f32 %v1530, 0.125
  %v1837 = vmul.f32 %v1533, 0.125
  %v1838 = vmul.f32 %v1577, 0.125
  %v1839 = vmul.f32 %v1580, 0.125
  %v1840 = vmul.f32 %v1624, 0.125
  %v1841 = vmul.f32 %v1627, 0.125
  %v1842 = vmul.f32 %v1671, 0.125
  %v1843 = vmul.f32 %v1674, 0.125
  %v1844 = vmul.f32 %v1718, 0.125
  %v1845 = vmul.f32 %v1721, 0.125
  %v1846 = vmul.f32 %v1765, 0.125
  %v1847 = vmul.f32 %v1768, 0.125
  %v1848 = vmul.f32 %v1812, 0.125
  %v1849 = vmul.f32 %v1815, 0.125
  %v1850 = vlaneseq
  %v1851 = vshrl.u32 %v1850, 7
  %v1852 = vsub.s32 0, %v1851
  %v1853 = vrot.slane %v424, %v1852
  %v1854 = vlaneseq
  %v1855 = vshrl.u32 %v1854, 7
  %v1856 = vsub.s32 0, %v1855
  %v1857 = vrot.slane %v438, %v1856
  %v1858 = vlaneseq
  %v1859 = vshrl.u32 %v1858, 7
  %v1860 = vsub.s32 0, %v1859
  %v1861 = vrot.slane %v446, %v1860
  %v1862 = vlaneseq
  %v1863 = vshrl.u32 %v1862, 7
  %v1864 = vsub.s32 0, %v1863
  %v1865 = vrot.slane %v448, %v1864
  %v1866 = vlaneseq
  %v1867 = vshrl.u32 %v1866, 7
  %v1868 = vsub.s32 0, %v1867
  %v1869 = vrot.slane %v431, %v1868
  %v1870 = vlaneseq
  %v1871 = vshrl.u32 %v1870, 7
  %v1872 = vsub.s32 0, %v1871
  %v1873 = vrot.slane %v445, %v1872
  %v1874 = vlaneseq
  %v1875 = vshrl.u32 %v1874, 7
  %v1876 = vsub.s32 0, %v1875
  %v1877 = vrot.slane %v447, %v1876
  %v1878 = vlaneseq
  %v1879 = vshrl.u32 %v1878, 7
  %v1880 = vsub.s32 0, %v1879
  %v1881 = vrot.slane %v449, %v1880
  %v1890 = vadd.f32 %v1818, %v1853
  %v1891 = vadd.f32 %v1819, %v1853
  %v1892 = vadd.f32 %v1820, %v1857
  %v1893 = vadd.f32 %v1821, %v1857
  %v1894 = vadd.f32 %v1822, %v1861
  %v1895 = vadd.f32 %v1823, %v1861
  %v1896 = vadd.f32 %v1824, %v1865
  %v1897 = vadd.f32 %v1825, %v1865
  %v1898 = vadd.f32 %v1826, %v1869
  %v1899 = vadd.f32 %v1827, %v1869
  %v1900 = vadd.f32 %v1828, %v1873
  %v1901 = vadd.f32 %v1829, %v1873
  %v1902 = vadd.f32 %v1830, %v1877
  %v1903 = vadd.f32 %v1831, %v1877
  %v1904 = vadd.f32 %v1832, %v1881
  %v1905 = vadd.f32 %v1833, %v1881
  %v1906 = vadd.f32 %v1834, %v1853
  %v1907 = vadd.f32 %v1835, %v1853
  %v1908 = vadd.f32 %v1836, %v1857
  %v1909 = vadd.f32 %v1837, %v1857
  %v1910 = vadd.f32 %v1838, %v1861
  %v1911 = vadd.f32 %v1839, %v1861
  %v1912 = vadd.f32 %v1840, %v1865
  %v1913 = vadd.f32 %v1841, %v1865
  %v1914 = vadd.f32 %v1842, %v1869
  %v1915 = vadd.f32 %v1843, %v1869
  %v1916 = vadd.f32 %v1844, %v1873
  %v1917 = vadd.f32 %v1845, %v1873
  %v1918 = vadd.f32 %v1846, %v1877
  %v1919 = vadd.f32 %v1847, %v1877
  %v1920 = vadd.f32 %v1848, %v1881
  %v1921 = vadd.f32 %v1849, %v1881
  %vm1922 = vcmask 130048
  %v1923 = vsel %vm1922, %v1890, -inf
  %1924 = vmax.xlane.f32.xlu0 %v1923
  %v1925 = vpop.xlane.xlu0 %1924
  %v1926 = vsel %vm1922, %v1891, -inf
  %1927 = vmax.xlane.f32.xlu0 %v1926
  %v1928 = vpop.xlane.xlu0 %1927
  %v1929 = vsel %vm1922, %v1892, -inf
  %1930 = vmax.xlane.f32.xlu0 %v1929
  %v1931 = vpop.xlane.xlu0 %1930
  %v1932 = vsel %vm1922, %v1893, -inf
  %1933 = vmax.xlane.f32.xlu0 %v1932
  %v1934 = vpop.xlane.xlu0 %1933
  %v1935 = vsel %vm1922, %v1894, -inf
  %1936 = vmax.xlane.f32.xlu0 %v1935
  %v1937 = vpop.xlane.xlu0 %1936
  %v1938 = vsel %vm1922, %v1895, -inf
  %1939 = vmax.xlane.f32.xlu0 %v1938
  %v1940 = vpop.xlane.xlu0 %1939
  %v1941 = vsel %vm1922, %v1896, -inf
  %1942 = vmax.xlane.f32.xlu0 %v1941
  %v1943 = vpop.xlane.xlu0 %1942
  %v1944 = vsel %vm1922, %v1897, -inf
  %1945 = vmax.xlane.f32.xlu0 %v1944
  %v1946 = vpop.xlane.xlu0 %1945
  %v1947 = vsel %vm1922, %v1898, -inf
  %1948 = vmax.xlane.f32.xlu0 %v1947
  %v1949 = vpop.xlane.xlu0 %1948
  %v1950 = vsel %vm1922, %v1899, -inf
  %1951 = vmax.xlane.f32.xlu0 %v1950
  %v1952 = vpop.xlane.xlu0 %1951
  %v1953 = vsel %vm1922, %v1900, -inf
  %1954 = vmax.xlane.f32.xlu0 %v1953
  %v1955 = vpop.xlane.xlu0 %1954
  %v1956 = vsel %vm1922, %v1901, -inf
  %1957 = vmax.xlane.f32.xlu0 %v1956
  %v1958 = vpop.xlane.xlu0 %1957
  %v1959 = vsel %vm1922, %v1902, -inf
  %1960 = vmax.xlane.f32.xlu0 %v1959
  %v1961 = vpop.xlane.xlu0 %1960
  %v1962 = vsel %vm1922, %v1903, -inf
  %1963 = vmax.xlane.f32.xlu0 %v1962
  %v1964 = vpop.xlane.xlu0 %1963
  %v1965 = vsel %vm1922, %v1904, -inf
  %1966 = vmax.xlane.f32.xlu0 %v1965
  %v1967 = vpop.xlane.xlu0 %1966
  %v1968 = vsel %vm1922, %v1905, -inf
  %1969 = vmax.xlane.f32.xlu0 %v1968
  %v1970 = vpop.xlane.xlu0 %1969
  %v1971 = vsel %vm1922, %v1906, -inf
  %1972 = vmax.xlane.f32.xlu0 %v1971
  %v1973 = vpop.xlane.xlu0 %1972
  %v1974 = vsel %vm1922, %v1907, -inf
  %1975 = vmax.xlane.f32.xlu0 %v1974
  %v1976 = vpop.xlane.xlu0 %1975
  %v1977 = vsel %vm1922, %v1908, -inf
  %1978 = vmax.xlane.f32.xlu0 %v1977
  %v1979 = vpop.xlane.xlu0 %1978
  %v1980 = vsel %vm1922, %v1909, -inf
  %1981 = vmax.xlane.f32.xlu0 %v1980
  %v1982 = vpop.xlane.xlu0 %1981
  %v1983 = vsel %vm1922, %v1910, -inf
  %1984 = vmax.xlane.f32.xlu0 %v1983
  %v1985 = vpop.xlane.xlu0 %1984
  %v1986 = vsel %vm1922, %v1911, -inf
  %1987 = vmax.xlane.f32.xlu0 %v1986
  %v1988 = vpop.xlane.xlu0 %1987
  %v1989 = vsel %vm1922, %v1912, -inf
  %1990 = vmax.xlane.f32.xlu0 %v1989
  %v1991 = vpop.xlane.xlu0 %1990
  %v1992 = vsel %vm1922, %v1913, -inf
  %1993 = vmax.xlane.f32.xlu0 %v1992
  %v1994 = vpop.xlane.xlu0 %1993
  %v1995 = vsel %vm1922, %v1914, -inf
  %1996 = vmax.xlane.f32.xlu0 %v1995
  %v1997 = vpop.xlane.xlu0 %1996
  %v1998 = vsel %vm1922, %v1915, -inf
  %1999 = vmax.xlane.f32.xlu0 %v1998
  %v2000 = vpop.xlane.xlu0 %1999
  %v2001 = vsel %vm1922, %v1916, -inf
  %2002 = vmax.xlane.f32.xlu0 %v2001
  %v2003 = vpop.xlane.xlu0 %2002
  %v2004 = vsel %vm1922, %v1917, -inf
  %2005 = vmax.xlane.f32.xlu0 %v2004
  %v2006 = vpop.xlane.xlu0 %2005
  %v2007 = vsel %vm1922, %v1918, -inf
  %2008 = vmax.xlane.f32.xlu0 %v2007
  %v2009 = vpop.xlane.xlu0 %2008
  %v2010 = vsel %vm1922, %v1919, -inf
  %2011 = vmax.xlane.f32.xlu0 %v2010
  %v2012 = vpop.xlane.xlu0 %2011
  %v2013 = vsel %vm1922, %v1920, -inf
  %2014 = vmax.xlane.f32.xlu0 %v2013
  %v2015 = vpop.xlane.xlu0 %2014
  %v2016 = vsel %vm1922, %v1921, -inf
  %2017 = vmax.xlane.f32.xlu0 %v2016
  %v2018 = vpop.xlane.xlu0 %2017
  %v2019 = vsub.f32 %v1890, %v1925
  %v2020 = vsub.f32 %v1891, %v1928
  %v2021 = vsub.f32 %v1892, %v1931
  %v2022 = vsub.f32 %v1893, %v1934
  %v2023 = vsub.f32 %v1894, %v1937
  %v2024 = vsub.f32 %v1895, %v1940
  %v2025 = vsub.f32 %v1896, %v1943
  %v2026 = vsub.f32 %v1897, %v1946
  %v2027 = vsub.f32 %v1898, %v1949
  %v2028 = vsub.f32 %v1899, %v1952
  %v2029 = vsub.f32 %v1900, %v1955
  %v2030 = vsub.f32 %v1901, %v1958
  %v2031 = vsub.f32 %v1902, %v1961
  %v2032 = vsub.f32 %v1903, %v1964
  %v2033 = vsub.f32 %v1904, %v1967
  %v2034 = vsub.f32 %v1905, %v1970
  %v2035 = vsub.f32 %v1906, %v1973
  %v2036 = vsub.f32 %v1907, %v1976
  %v2037 = vsub.f32 %v1908, %v1979
  %v2038 = vsub.f32 %v1909, %v1982
  %v2039 = vsub.f32 %v1910, %v1985
  %v2040 = vsub.f32 %v1911, %v1988
  %v2041 = vsub.f32 %v1912, %v1991
  %v2042 = vsub.f32 %v1913, %v1994
  %v2043 = vsub.f32 %v1914, %v1997
  %v2044 = vsub.f32 %v1915, %v2000
  %v2045 = vsub.f32 %v1916, %v2003
  %v2046 = vsub.f32 %v1917, %v2006
  %v2047 = vsub.f32 %v1918, %v2009
  %v2048 = vsub.f32 %v1919, %v2012
  %v2049 = vsub.f32 %v1920, %v2015
  %v2050 = vsub.f32 %v1921, %v2018
  %v2051 = vmul.f32 %v2019, 1.442695
  %v2052 = vpow.pop %v2051
  %v2053 = vmul.f32 %v2020, 1.442695
  %v2054 = vpow.pop %v2053
  %v2055 = vmul.f32 %v2021, 1.442695
  %v2056 = vpow.pop %v2055
  %v2057 = vmul.f32 %v2022, 1.442695
  %v2058 = vpow.pop %v2057
  %v2059 = vmul.f32 %v2023, 1.442695
  %v2060 = vpow.pop %v2059
  %v2061 = vmul.f32 %v2024, 1.442695
  %v2062 = vpow.pop %v2061
  %v2063 = vmul.f32 %v2025, 1.442695
  %v2064 = vpow.pop %v2063
  %v2065 = vmul.f32 %v2026, 1.442695
  %v2066 = vpow.pop %v2065
  %v2067 = vmul.f32 %v2027, 1.442695
  %v2068 = vpow.pop %v2067
  %v2069 = vmul.f32 %v2028, 1.442695
  %v2070 = vpow.pop %v2069
  %v2071 = vmul.f32 %v2029, 1.442695
  %v2072 = vpow.pop %v2071
  %v2073 = vmul.f32 %v2030, 1.442695
  %v2074 = vpow.pop %v2073
  %v2075 = vmul.f32 %v2031, 1.442695
  %v2076 = vpow.pop %v2075
  %v2077 = vmul.f32 %v2032, 1.442695
  %v2078 = vpow.pop %v2077
  %v2079 = vmul.f32 %v2033, 1.442695
  %v2080 = vpow.pop %v2079
  %v2081 = vmul.f32 %v2034, 1.442695
  %v2082 = vpow.pop %v2081
  %v2083 = vmul.f32 %v2035, 1.442695
  %v2084 = vpow.pop %v2083
  %v2085 = vmul.f32 %v2036, 1.442695
  %v2086 = vpow.pop %v2085
  %v2087 = vmul.f32 %v2037, 1.442695
  %v2088 = vpow.pop %v2087
  %v2089 = vmul.f32 %v2038, 1.442695
  %v2090 = vpow.pop %v2089
  %v2091 = vmul.f32 %v2039, 1.442695
  %v2092 = vpow.pop %v2091
  %v2093 = vmul.f32 %v2040, 1.442695
  %v2094 = vpow.pop %v2093
  %v2095 = vmul.f32 %v2041, 1.442695
  %v2096 = vpow.pop %v2095
  %v2097 = vmul.f32 %v2042, 1.442695
  %v2098 = vpow.pop %v2097
  %v2099 = vmul.f32 %v2043, 1.442695
  %v2100 = vpow.pop %v2099
  %v2101 = vmul.f32 %v2044, 1.442695
  %v2102 = vpow.pop %v2101
  %v2103 = vmul.f32 %v2045, 1.442695
  %v2104 = vpow.pop %v2103
  %v2105 = vmul.f32 %v2046, 1.442695
  %v2106 = vpow.pop %v2105
  %v2107 = vmul.f32 %v2047, 1.442695
  %v2108 = vpow.pop %v2107
  %v2109 = vmul.f32 %v2048, 1.442695
  %v2110 = vpow.pop %v2109
  %v2111 = vmul.f32 %v2049, 1.442695
  %v2112 = vpow.pop %v2111
  %v2113 = vmul.f32 %v2050, 1.442695
  %v2114 = vpow.pop %v2113
  %v2115 = vsel %vm1922, %v2052, 0.0
  %2116 = vadd.xlane.f32.xlu0 %v2115
  %v2117 = vpop.xlane.xlu0 %2116
  %v2118 = vsel %vm1922, %v2054, 0.0
  %2119 = vadd.xlane.f32.xlu0 %v2118
  %v2120 = vpop.xlane.xlu0 %2119
  %v2121 = vsel %vm1922, %v2056, 0.0
  %2122 = vadd.xlane.f32.xlu0 %v2121
  %v2123 = vpop.xlane.xlu0 %2122
  %v2124 = vsel %vm1922, %v2058, 0.0
  %2125 = vadd.xlane.f32.xlu0 %v2124
  %v2126 = vpop.xlane.xlu0 %2125
  %v2127 = vsel %vm1922, %v2060, 0.0
  %2128 = vadd.xlane.f32.xlu0 %v2127
  %v2129 = vpop.xlane.xlu0 %2128
  %v2130 = vsel %vm1922, %v2062, 0.0
  %2131 = vadd.xlane.f32.xlu0 %v2130
  %v2132 = vpop.xlane.xlu0 %2131
  %v2133 = vsel %vm1922, %v2064, 0.0
  %2134 = vadd.xlane.f32.xlu0 %v2133
  %v2135 = vpop.xlane.xlu0 %2134
  %v2136 = vsel %vm1922, %v2066, 0.0
  %2137 = vadd.xlane.f32.xlu0 %v2136
  %v2138 = vpop.xlane.xlu0 %2137
  %v2139 = vsel %vm1922, %v2068, 0.0
  %2140 = vadd.xlane.f32.xlu0 %v2139
  %v2141 = vpop.xlane.xlu0 %2140
  %v2142 = vsel %vm1922, %v2070, 0.0
  %2143 = vadd.xlane.f32.xlu0 %v2142
  %v2144 = vpop.xlane.xlu0 %2143
  %v2145 = vsel %vm1922, %v2072, 0.0
  %2146 = vadd.xlane.f32.xlu0 %v2145
  %v2147 = vpop.xlane.xlu0 %2146
  %v2148 = vsel %vm1922, %v2074, 0.0
  %2149 = vadd.xlane.f32.xlu0 %v2148
  %v2150 = vpop.xlane.xlu0 %2149
  %v2151 = vsel %vm1922, %v2076, 0.0
  %2152 = vadd.xlane.f32.xlu0 %v2151
  %v2153 = vpop.xlane.xlu0 %2152
  %v2154 = vsel %vm1922, %v2078, 0.0
  %2155 = vadd.xlane.f32.xlu0 %v2154
  %v2156 = vpop.xlane.xlu0 %2155
  %v2157 = vsel %vm1922, %v2080, 0.0
  %2158 = vadd.xlane.f32.xlu0 %v2157
  %v2159 = vpop.xlane.xlu0 %2158
  %v2160 = vsel %vm1922, %v2082, 0.0
  %2161 = vadd.xlane.f32.xlu0 %v2160
  %v2162 = vpop.xlane.xlu0 %2161
  %v2163 = vsel %vm1922, %v2084, 0.0
  %2164 = vadd.xlane.f32.xlu0 %v2163
  %v2165 = vpop.xlane.xlu0 %2164
  %v2166 = vsel %vm1922, %v2086, 0.0
  %2167 = vadd.xlane.f32.xlu0 %v2166
  %v2168 = vpop.xlane.xlu0 %2167
  %v2169 = vsel %vm1922, %v2088, 0.0
  %2170 = vadd.xlane.f32.xlu0 %v2169
  %v2171 = vpop.xlane.xlu0 %2170
  %v2172 = vsel %vm1922, %v2090, 0.0
  %2173 = vadd.xlane.f32.xlu0 %v2172
  %v2174 = vpop.xlane.xlu0 %2173
  %v2175 = vsel %vm1922, %v2092, 0.0
  %2176 = vadd.xlane.f32.xlu0 %v2175
  %v2177 = vpop.xlane.xlu0 %2176
  %v2178 = vsel %vm1922, %v2094, 0.0
  %2179 = vadd.xlane.f32.xlu0 %v2178
  %v2180 = vpop.xlane.xlu0 %2179
  %v2181 = vsel %vm1922, %v2096, 0.0
  %2182 = vadd.xlane.f32.xlu0 %v2181
  %v2183 = vpop.xlane.xlu0 %2182
  %v2184 = vsel %vm1922, %v2098, 0.0
  %2185 = vadd.xlane.f32.xlu0 %v2184
  %v2186 = vpop.xlane.xlu0 %2185
  %v2187 = vsel %vm1922, %v2100, 0.0
  %2188 = vadd.xlane.f32.xlu0 %v2187
  %v2189 = vpop.xlane.xlu0 %2188
  %v2190 = vsel %vm1922, %v2102, 0.0
  %2191 = vadd.xlane.f32.xlu0 %v2190
  %v2192 = vpop.xlane.xlu0 %2191
  %v2193 = vsel %vm1922, %v2104, 0.0
  %2194 = vadd.xlane.f32.xlu0 %v2193
  %v2195 = vpop.xlane.xlu0 %2194
  %v2196 = vsel %vm1922, %v2106, 0.0
  %2197 = vadd.xlane.f32.xlu0 %v2196
  %v2198 = vpop.xlane.xlu0 %2197
  %v2199 = vsel %vm1922, %v2108, 0.0
  %2200 = vadd.xlane.f32.xlu0 %v2199
  %v2201 = vpop.xlane.xlu0 %2200
  %v2202 = vsel %vm1922, %v2110, 0.0
  %2203 = vadd.xlane.f32.xlu0 %v2202
  %v2204 = vpop.xlane.xlu0 %2203
  %v2205 = vsel %vm1922, %v2112, 0.0
  %2206 = vadd.xlane.f32.xlu0 %v2205
  %v2207 = vpop.xlane.xlu0 %2206
  %v2208 = vsel %vm1922, %v2114, 0.0
  %2209 = vadd.xlane.f32.xlu0 %v2208
  %v2210 = vpop.xlane.xlu0 %2209
  %v2211 = vrcp.pop %v2117
  %v2212 = vrcp.pop %v2120
  %v2213 = vrcp.pop %v2123
  %v2214 = vrcp.pop %v2126
  %v2215 = vrcp.pop %v2129
  %v2216 = vrcp.pop %v2132
  %v2217 = vrcp.pop %v2135
  %v2218 = vrcp.pop %v2138
  %v2219 = vrcp.pop %v2141
  %v2220 = vrcp.pop %v2144
  %v2221 = vrcp.pop %v2147
  %v2222 = vrcp.pop %v2150
  %v2223 = vrcp.pop %v2153
  %v2224 = vrcp.pop %v2156
  %v2225 = vrcp.pop %v2159
  %v2226 = vrcp.pop %v2162
  %v2227 = vrcp.pop %v2165
  %v2228 = vrcp.pop %v2168
  %v2229 = vrcp.pop %v2171
  %v2230 = vrcp.pop %v2174
  %v2231 = vrcp.pop %v2177
  %v2232 = vrcp.pop %v2180
  %v2233 = vrcp.pop %v2183
  %v2234 = vrcp.pop %v2186
  %v2235 = vrcp.pop %v2189
  %v2236 = vrcp.pop %v2192
  %v2237 = vrcp.pop %v2195
  %v2238 = vrcp.pop %v2198
  %v2239 = vrcp.pop %v2201
  %v2240 = vrcp.pop %v2204
  %v2241 = vrcp.pop %v2207
  %v2242 = vrcp.pop %v2210
  %v2243 = vmul.f32 %v2052, %v2211
  %v2244 = vmul.f32 %v2054, %v2212
  %v2245 = vmul.f32 %v2056, %v2213
  %v2246 = vmul.f32 %v2058, %v2214
  %v2247 = vmul.f32 %v2060, %v2215
  %v2248 = vmul.f32 %v2062, %v2216
  %v2249 = vmul.f32 %v2064, %v2217
  %v2250 = vmul.f32 %v2066, %v2218
  %v2251 = vmul.f32 %v2068, %v2219
  %v2252 = vmul.f32 %v2070, %v2220
  %v2253 = vmul.f32 %v2072, %v2221
  %v2254 = vmul.f32 %v2074, %v2222
  %v2255 = vmul.f32 %v2076, %v2223
  %v2256 = vmul.f32 %v2078, %v2224
  %v2257 = vmul.f32 %v2080, %v2225
  %v2258 = vmul.f32 %v2082, %v2226
  %v2259 = vmul.f32 %v2084, %v2227
  %v2260 = vmul.f32 %v2086, %v2228
  %v2261 = vmul.f32 %v2088, %v2229
  %v2262 = vmul.f32 %v2090, %v2230
  %v2263 = vmul.f32 %v2092, %v2231
  %v2264 = vmul.f32 %v2094, %v2232
  %v2265 = vmul.f32 %v2096, %v2233
  %v2266 = vmul.f32 %v2098, %v2234
  %v2267 = vmul.f32 %v2100, %v2235
  %v2268 = vmul.f32 %v2102, %v2236
  %v2269 = vmul.f32 %v2104, %v2237
  %v2270 = vmul.f32 %v2106, %v2238
  %v2271 = vmul.f32 %v2108, %v2239
  %v2272 = vmul.f32 %v2110, %v2240
  %v2273 = vmul.f32 %v2112, %v2241
  %v2274 = vmul.f32 %v2114, %v2242
  %v2275 = vpack.c.bf16 %v2244, %v2243
  %v2276 = vpack.c.bf16 %v2246, %v2245
  %v2277 = vpack.c.bf16 %v2248, %v2247
  %v2278 = vpack.c.bf16 %v2250, %v2249
  %v2279 = vpack.c.bf16 %v2252, %v2251
  %v2280 = vpack.c.bf16 %v2254, %v2253
  %v2281 = vpack.c.bf16 %v2256, %v2255
  %v2282 = vpack.c.bf16 %v2258, %v2257
  %v2283 = vpack.c.bf16 %v2260, %v2259
  %v2284 = vpack.c.bf16 %v2262, %v2261
  %v2285 = vpack.c.bf16 %v2264, %v2263
  %v2286 = vpack.c.bf16 %v2266, %v2265
  %v2287 = vpack.c.bf16 %v2268, %v2267
  %v2288 = vpack.c.bf16 %v2270, %v2269
  %v2289 = vpack.c.bf16 %v2272, %v2271
  %v2290 = vpack.c.bf16 %v2274, %v2273
  %v2292 = vsel %vm1922, %v2275, 0
  %2294 = vmatprep.subr.bf16.mxu0 0
  %2295 = vmatpush1.bf16.msra.mxu0 %v1026
  %2296 = vmatprep.subr.bf16.mxu0 0
  %2297 = vmatpush1.bf16.msra.mxu0 0
  %2298 = vmatprep.subr.bf16.mxu0 0
  %2299 = vmatpush1.bf16.msra.mxu0 0
  %2300 = vmatprep.subr.bf16.mxu0 0
  %2301 = vmatpush1.bf16.msra.mxu0 0
  %2302 = vmatprep.subr.bf16.mxu0 0
  %2303 = vmatpush1.bf16.msra.mxu0 0
  %2304 = vmatprep.subr.bf16.mxu0 0
  %2305 = vmatpush1.bf16.msra.mxu0 0
  %2306 = vmatprep.subr.bf16.mxu0 0
  %2307 = vmatpush1.bf16.msra.mxu0 0
  %2308 = vmatprep.subr.bf16.mxu0 0
  %2309 = vmatpush1.bf16.msra.mxu0 0
  %2310 = vmatprep.subr.bf16.mxu0 0
  %2311 = vmatpush1.bf16.msra.mxu0 0
  %2312 = vmatprep.subr.bf16.mxu0 0
  %2313 = vmatpush1.bf16.msra.mxu0 0
  %2314 = vmatprep.subr.bf16.mxu0 0
  %2315 = vmatpush1.bf16.msra.mxu0 0
  %2316 = vmatprep.subr.bf16.mxu0 0
  %2317 = vmatpush1.bf16.msra.mxu0 0
  %2318 = vmatprep.subr.bf16.mxu0 0
  %2319 = vmatpush1.bf16.msra.mxu0 0
  %2320 = vmatprep.subr.bf16.mxu0 0
  %2321 = vmatpush1.bf16.msra.mxu0 0
  %2322 = vmatprep.subr.bf16.mxu0 0
  %2323 = vmatpush1.bf16.msra.mxu0 0
  %2324 = vmatprep.subr.bf16.mxu0 0
  %2325 = vmatpush1.bf16.msra.mxu0 0
  %2326 = vmatprep.mubr.bf16.mxu0 0
  %2327 = vmatmul.mubr.bf16.gmra.mrb[0].mxu0 %v2292
  %v2328 = vpop.f32.mrb[0].mxu0
  %v2329 = vadd.f32 0.0, %v2328
  %v2330 = vpop.f32.mrb[0].mxu0
  %v2331 = vpop.f32.mrb[0].mxu0
  %v2332 = vadd.f32 0.0, %v2331
  %v2333 = vpop.f32.mrb[0].mxu0
  %2334 = vdwg.mxu0
  %v2336 = vsel %vm1922, %v2276, 0
  %2338 = vmatprep.subr.bf16.mxu0 0
  %2339 = vmatpush1.bf16.msra.mxu0 %v1027
  %2340 = vmatprep.subr.bf16.mxu0 0
  %2341 = vmatpush1.bf16.msra.mxu0 0
  %2342 = vmatprep.subr.bf16.mxu0 0
  %2343 = vmatpush1.bf16.msra.mxu0 0
  %2344 = vmatprep.subr.bf16.mxu0 0
  %2345 = vmatpush1.bf16.msra.mxu0 0
  %2346 = vmatprep.subr.bf16.mxu0 0
  %2347 = vmatpush1.bf16.msra.mxu0 0
  %2348 = vmatprep.subr.bf16.mxu0 0
  %2349 = vmatpush1.bf16.msra.mxu0 0
  %2350 = vmatprep.subr.bf16.mxu0 0
  %2351 = vmatpush1.bf16.msra.mxu0 0
  %2352 = vmatprep.subr.bf16.mxu0 0
  %2353 = vmatpush1.bf16.msra.mxu0 0
  %2354 = vmatprep.subr.bf16.mxu0 0
  %2355 = vmatpush1.bf16.msra.mxu0 0
  %2356 = vmatprep.subr.bf16.mxu0 0
  %2357 = vmatpush1.bf16.msra.mxu0 0
  %2358 = vmatprep.subr.bf16.mxu0 0
  %2359 = vmatpush1.bf16.msra.mxu0 0
  %2360 = vmatprep.subr.bf16.mxu0 0
  %2361 = vmatpush1.bf16.msra.mxu0 0
  %2362 = vmatprep.subr.bf16.mxu0 0
  %2363 = vmatpush1.bf16.msra.mxu0 0
  %2364 = vmatprep.subr.bf16.mxu0 0
  %2365 = vmatpush1.bf16.msra.mxu0 0
  %2366 = vmatprep.subr.bf16.mxu0 0
  %2367 = vmatpush1.bf16.msra.mxu0 0
  %2368 = vmatprep.subr.bf16.mxu0 0
  %2369 = vmatpush1.bf16.msra.mxu0 0
  %2370 = vmatprep.mubr.bf16.mxu0 0
  %2371 = vmatmul.mubr.bf16.gmra.mrb[0].mxu0 %v2336
  %v2372 = vpop.f32.mrb[0].mxu0
  %v2373 = vadd.f32 0.0, %v2372
  %v2374 = vpop.f32.mrb[0].mxu0
  %v2375 = vpop.f32.mrb[0].mxu0
  %v2376 = vadd.f32 0.0, %v2375
  %v2377 = vpop.f32.mrb[0].mxu0
  %2378 = vdwg.mxu0
  %v2380 = vsel %vm1922, %v2277, 0
  %2382 = vmatprep.subr.bf16.mxu0 0
  %2383 = vmatpush1.bf16.msra.mxu0 %v1028
  %2384 = vmatprep.subr.bf16.mxu0 0
  %2385 = vmatpush1.bf16.msra.mxu0 0
  %2386 = vmatprep.subr.bf16.mxu0 0
  %2387 = vmatpush1.bf16.msra.mxu0 0
  %2388 = vmatprep.subr.bf16.mxu0 0
  %2389 = vmatpush1.bf16.msra.mxu0 0
  %2390 = vmatprep.subr.bf16.mxu0 0
  %2391 = vmatpush1.bf16.msra.mxu0 0
  %2392 = vmatprep.subr.bf16.mxu0 0
  %2393 = vmatpush1.bf16.msra.mxu0 0
  %2394 = vmatprep.subr.bf16.mxu0 0
  %2395 = vmatpush1.bf16.msra.mxu0 0
  %2396 = vmatprep.subr.bf16.mxu0 0
  %2397 = vmatpush1.bf16.msra.mxu0 0
  %2398 = vmatprep.subr.bf16.mxu0 0
  %2399 = vmatpush1.bf16.msra.mxu0 0
  %2400 = vmatprep.subr.bf16.mxu0 0
  %2401 = vmatpush1.bf16.msra.mxu0 0
  %2402 = vmatprep.subr.bf16.mxu0 0
  %2403 = vmatpush1.bf16.msra.mxu0 0
  %2404 = vmatprep.subr.bf16.mxu0 0
  %2405 = vmatpush1.bf16.msra.mxu0 0
  %2406 = vmatprep.subr.bf16.mxu0 0
  %2407 = vmatpush1.bf16.msra.mxu0 0
  %2408 = vmatprep.subr.bf16.mxu0 0
  %2409 = vmatpush1.bf16.msra.mxu0 0
  %2410 = vmatprep.subr.bf16.mxu0 0
  %2411 = vmatpush1.bf16.msra.mxu0 0
  %2412 = vmatprep.subr.bf16.mxu0 0
  %2413 = vmatpush1.bf16.msra.mxu0 0
  %2414 = vmatprep.mubr.bf16.mxu0 0
  %2415 = vmatmul.mubr.bf16.gmra.mrb[0].mxu0 %v2380
  %v2416 = vpop.f32.mrb[0].mxu0
  %v2417 = vadd.f32 0.0, %v2416
  %v2418 = vpop.f32.mrb[0].mxu0
  %v2419 = vpop.f32.mrb[0].mxu0
  %v2420 = vadd.f32 0.0, %v2419
  %v2421 = vpop.f32.mrb[0].mxu0
  %2422 = vdwg.mxu0
  %v2424 = vsel %vm1922, %v2278, 0
  %2426 = vmatprep.subr.bf16.mxu0 0
  %2427 = vmatpush1.bf16.msra.mxu0 %v1029
  %2428 = vmatprep.subr.bf16.mxu0 0
  %2429 = vmatpush1.bf16.msra.mxu0 0
  %2430 = vmatprep.subr.bf16.mxu0 0
  %2431 = vmatpush1.bf16.msra.mxu0 0
  %2432 = vmatprep.subr.bf16.mxu0 0
  %2433 = vmatpush1.bf16.msra.mxu0 0
  %2434 = vmatprep.subr.bf16.mxu0 0
  %2435 = vmatpush1.bf16.msra.mxu0 0
  %2436 = vmatprep.subr.bf16.mxu0 0
  %2437 = vmatpush1.bf16.msra.mxu0 0
  %2438 = vmatprep.subr.bf16.mxu0 0
  %2439 = vmatpush1.bf16.msra.mxu0 0
  %2440 = vmatprep.subr.bf16.mxu0 0
  %2441 = vmatpush1.bf16.msra.mxu0 0
  %2442 = vmatprep.subr.bf16.mxu0 0
  %2443 = vmatpush1.bf16.msra.mxu0 0
  %2444 = vmatprep.subr.bf16.mxu0 0
  %2445 = vmatpush1.bf16.msra.mxu0 0
  %2446 = vmatprep.subr.bf16.mxu0 0
  %2447 = vmatpush1.bf16.msra.mxu0 0
  %2448 = vmatprep.subr.bf16.mxu0 0
  %2449 = vmatpush1.bf16.msra.mxu0 0
  %2450 = vmatprep.subr.bf16.mxu0 0
  %2451 = vmatpush1.bf16.msra.mxu0 0
  %2452 = vmatprep.subr.bf16.mxu0 0
  %2453 = vmatpush1.bf16.msra.mxu0 0
  %2454 = vmatprep.subr.bf16.mxu0 0
  %2455 = vmatpush1.bf16.msra.mxu0 0
  %2456 = vmatprep.subr.bf16.mxu0 0
  %2457 = vmatpush1.bf16.msra.mxu0 0
  %2458 = vmatprep.mubr.bf16.mxu0 0
  %2459 = vmatmul.mubr.bf16.gmra.mrb[0].mxu0 %v2424
  %v2460 = vpop.f32.mrb[0].mxu0
  %v2461 = vadd.f32 0.0, %v2460
  %v2462 = vpop.f32.mrb[0].mxu0
  %v2463 = vpop.f32.mrb[0].mxu0
  %v2464 = vadd.f32 0.0, %v2463
  %v2465 = vpop.f32.mrb[0].mxu0
  %2466 = vdwg.mxu0
  %v2468 = vsel %vm1922, %v2279, 0
  %2470 = vmatprep.subr.bf16.mxu0 0
  %2471 = vmatpush1.bf16.msra.mxu0 %v1030
  %2472 = vmatprep.subr.bf16.mxu0 0
  %2473 = vmatpush1.bf16.msra.mxu0 0
  %2474 = vmatprep.subr.bf16.mxu0 0
  %2475 = vmatpush1.bf16.msra.mxu0 0
  %2476 = vmatprep.subr.bf16.mxu0 0
  %2477 = vmatpush1.bf16.msra.mxu0 0
  %2478 = vmatprep.subr.bf16.mxu0 0
  %2479 = vmatpush1.bf16.msra.mxu0 0
  %2480 = vmatprep.subr.bf16.mxu0 0
  %2481 = vmatpush1.bf16.msra.mxu0 0
  %2482 = vmatprep.subr.bf16.mxu0 0
  %2483 = vmatpush1.bf16.msra.mxu0 0
  %2484 = vmatprep.subr.bf16.mxu0 0
  %2485 = vmatpush1.bf16.msra.mxu0 0
  %2486 = vmatprep.subr.bf16.mxu0 0
  %2487 = vmatpush1.bf16.msra.mxu0 0
  %2488 = vmatprep.subr.bf16.mxu0 0
  %2489 = vmatpush1.bf16.msra.mxu0 0
  %2490 = vmatprep.subr.bf16.mxu0 0
  %2491 = vmatpush1.bf16.msra.mxu0 0
  %2492 = vmatprep.subr.bf16.mxu0 0
  %2493 = vmatpush1.bf16.msra.mxu0 0
  %2494 = vmatprep.subr.bf16.mxu0 0
  %2495 = vmatpush1.bf16.msra.mxu0 0
  %2496 = vmatprep.subr.bf16.mxu0 0
  %2497 = vmatpush1.bf16.msra.mxu0 0
  %2498 = vmatprep.subr.bf16.mxu0 0
  %2499 = vmatpush1.bf16.msra.mxu0 0
  %2500 = vmatprep.subr.bf16.mxu0 0
  %2501 = vmatpush1.bf16.msra.mxu0 0
  %2502 = vmatprep.mubr.bf16.mxu0 0
  %2503 = vmatmul.mubr.bf16.gmra.mrb[0].mxu0 %v2468
  %v2504 = vpop.f32.mrb[0].mxu0
  %v2505 = vadd.f32 0.0, %v2504
  %v2506 = vpop.f32.mrb[0].mxu0
  %v2507 = vpop.f32.mrb[0].mxu0
  %v2508 = vadd.f32 0.0, %v2507
  %v2509 = vpop.f32.mrb[0].mxu0
  %2510 = vdwg.mxu0
  %v2512 = vsel %vm1922, %v2280, 0
  %2514 = vmatprep.subr.bf16.mxu0 0
  %2515 = vmatpush1.bf16.msra.mxu0 %v1031
  %2516 = vmatprep.subr.bf16.mxu0 0
  %2517 = vmatpush1.bf16.msra.mxu0 0
  %2518 = vmatprep.subr.bf16.mxu0 0
  %2519 = vmatpush1.bf16.msra.mxu0 0
  %2520 = vmatprep.subr.bf16.mxu0 0
  %2521 = vmatpush1.bf16.msra.mxu0 0
  %2522 = vmatprep.subr.bf16.mxu0 0
  %2523 = vmatpush1.bf16.msra.mxu0 0
  %2524 = vmatprep.subr.bf16.mxu0 0
  %2525 = vmatpush1.bf16.msra.mxu0 0
  %2526 = vmatprep.subr.bf16.mxu0 0
  %2527 = vmatpush1.bf16.msra.mxu0 0
  %2528 = vmatprep.subr.bf16.mxu0 0
  %2529 = vmatpush1.bf16.msra.mxu0 0
  %2530 = vmatprep.subr.bf16.mxu0 0
  %2531 = vmatpush1.bf16.msra.mxu0 0
  %2532 = vmatprep.subr.bf16.mxu0 0
  %2533 = vmatpush1.bf16.msra.mxu0 0
  %2534 = vmatprep.subr.bf16.mxu0 0
  %2535 = vmatpush1.bf16.msra.mxu0 0
  %2536 = vmatprep.subr.bf16.mxu0 0
  %2537 = vmatpush1.bf16.msra.mxu0 0
  %2538 = vmatprep.subr.bf16.mxu0 0
  %2539 = vmatpush1.bf16.msra.mxu0 0
  %2540 = vmatprep.subr.bf16.mxu0 0
  %2541 = vmatpush1.bf16.msra.mxu0 0
  %2542 = vmatprep.subr.bf16.mxu0 0
  %2543 = vmatpush1.bf16.msra.mxu0 0
  %2544 = vmatprep.subr.bf16.mxu0 0
  %2545 = vmatpush1.bf16.msra.mxu0 0
  %2546 = vmatprep.mubr.bf16.mxu0 0
  %2547 = vmatmul.mubr.bf16.gmra.mrb[0].mxu0 %v2512
  %v2548 = vpop.f32.mrb[0].mxu0
  %v2549 = vadd.f32 0.0, %v2548
  %v2550 = vpop.f32.mrb[0].mxu0
  %v2551 = vpop.f32.mrb[0].mxu0
  %v2552 = vadd.f32 0.0, %v2551
  %v2553 = vpop.f32.mrb[0].mxu0
  %2554 = vdwg.mxu0
  %v2556 = vsel %vm1922, %v2281, 0
  %2558 = vmatprep.subr.bf16.mxu0 0
  %2559 = vmatpush1.bf16.msra.mxu0 %v1032
  %2560 = vmatprep.subr.bf16.mxu0 0
  %2561 = vmatpush1.bf16.msra.mxu0 0
  %2562 = vmatprep.subr.bf16.mxu0 0
  %2563 = vmatpush1.bf16.msra.mxu0 0
  %2564 = vmatprep.subr.bf16.mxu0 0
  %2565 = vmatpush1.bf16.msra.mxu0 0
  %2566 = vmatprep.subr.bf16.mxu0 0
  %2567 = vmatpush1.bf16.msra.mxu0 0
  %2568 = vmatprep.subr.bf16.mxu0 0
  %2569 = vmatpush1.bf16.msra.mxu0 0
  %2570 = vmatprep.subr.bf16.mxu0 0
  %2571 = vmatpush1.bf16.msra.mxu0 0
  %2572 = vmatprep.subr.bf16.mxu0 0
  %2573 = vmatpush1.bf16.msra.mxu0 0
  %2574 = vmatprep.subr.bf16.mxu0 0
  %2575 = vmatpush1.bf16.msra.mxu0 0
  %2576 = vmatprep.subr.bf16.mxu0 0
  %2577 = vmatpush1.bf16.msra.mxu0 0
  %2578 = vmatprep.subr.bf16.mxu0 0
  %2579 = vmatpush1.bf16.msra.mxu0 0
  %2580 = vmatprep.subr.bf16.mxu0 0
  %2581 = vmatpush1.bf16.msra.mxu0 0
  %2582 = vmatprep.subr.bf16.mxu0 0
  %2583 = vmatpush1.bf16.msra.mxu0 0
  %2584 = vmatprep.subr.bf16.mxu0 0
  %2585 = vmatpush1.bf16.msra.mxu0 0
  %2586 = vmatprep.subr.bf16.mxu0 0
  %2587 = vmatpush1.bf16.msra.mxu0 0
  %2588 = vmatprep.subr.bf16.mxu0 0
  %2589 = vmatpush1.bf16.msra.mxu0 0
  %2590 = vmatprep.mubr.bf16.mxu0 0
  %2591 = vmatmul.mubr.bf16.gmra.mrb[0].mxu0 %v2556
  %v2592 = vpop.f32.mrb[0].mxu0
  %v2593 = vadd.f32 0.0, %v2592
  %v2594 = vpop.f32.mrb[0].mxu0
  %v2595 = vpop.f32.mrb[0].mxu0
  %v2596 = vadd.f32 0.0, %v2595
  %v2597 = vpop.f32.mrb[0].mxu0
  %2598 = vdwg.mxu0
  %v2600 = vsel %vm1922, %v2282, 0
  %2602 = vmatprep.subr.bf16.mxu0 0
  %2603 = vmatpush1.bf16.msra.mxu0 %v1033
  %2604 = vmatprep.subr.bf16.mxu0 0
  %2605 = vmatpush1.bf16.msra.mxu0 0
  %2606 = vmatprep.subr.bf16.mxu0 0
  %2607 = vmatpush1.bf16.msra.mxu0 0
  %2608 = vmatprep.subr.bf16.mxu0 0
  %2609 = vmatpush1.bf16.msra.mxu0 0
  %2610 = vmatprep.subr.bf16.mxu0 0
  %2611 = vmatpush1.bf16.msra.mxu0 0
  %2612 = vmatprep.subr.bf16.mxu0 0
  %2613 = vmatpush1.bf16.msra.mxu0 0
  %2614 = vmatprep.subr.bf16.mxu0 0
  %2615 = vmatpush1.bf16.msra.mxu0 0
  %2616 = vmatprep.subr.bf16.mxu0 0
  %2617 = vmatpush1.bf16.msra.mxu0 0
  %2618 = vmatprep.subr.bf16.mxu0 0
  %2619 = vmatpush1.bf16.msra.mxu0 0
  %2620 = vmatprep.subr.bf16.mxu0 0
  %2621 = vmatpush1.bf16.msra.mxu0 0
  %2622 = vmatprep.subr.bf16.mxu0 0
  %2623 = vmatpush1.bf16.msra.mxu0 0
  %2624 = vmatprep.subr.bf16.mxu0 0
  %2625 = vmatpush1.bf16.msra.mxu0 0
  %2626 = vmatprep.subr.bf16.mxu0 0
  %2627 = vmatpush1.bf16.msra.mxu0 0
  %2628 = vmatprep.subr.bf16.mxu0 0
  %2629 = vmatpush1.bf16.msra.mxu0 0
  %2630 = vmatprep.subr.bf16.mxu0 0
  %2631 = vmatpush1.bf16.msra.mxu0 0
  %2632 = vmatprep.subr.bf16.mxu0 0
  %2633 = vmatpush1.bf16.msra.mxu0 0
  %2634 = vmatprep.mubr.bf16.mxu0 0
  %2635 = vmatmul.mubr.bf16.gmra.mrb[0].mxu0 %v2600
  %v2636 = vpop.f32.mrb[0].mxu0
  %v2637 = vadd.f32 0.0, %v2636
  %v2638 = vpop.f32.mrb[0].mxu0
  %v2639 = vpop.f32.mrb[0].mxu0
  %v2640 = vadd.f32 0.0, %v2639
  %v2641 = vpop.f32.mrb[0].mxu0
  %2642 = vdwg.mxu0
  %v2644 = vsel %vm1922, %v2283, 0
  %2646 = vmatprep.subr.bf16.mxu0 0
  %2647 = vmatpush1.bf16.msra.mxu0 %v1043
  %2648 = vmatprep.subr.bf16.mxu0 0
  %2649 = vmatpush1.bf16.msra.mxu0 0
  %2650 = vmatprep.subr.bf16.mxu0 0
  %2651 = vmatpush1.bf16.msra.mxu0 0
  %2652 = vmatprep.subr.bf16.mxu0 0
  %2653 = vmatpush1.bf16.msra.mxu0 0
  %2654 = vmatprep.subr.bf16.mxu0 0
  %2655 = vmatpush1.bf16.msra.mxu0 0
  %2656 = vmatprep.subr.bf16.mxu0 0
  %2657 = vmatpush1.bf16.msra.mxu0 0
  %2658 = vmatprep.subr.bf16.mxu0 0
  %2659 = vmatpush1.bf16.msra.mxu0 0
  %2660 = vmatprep.subr.bf16.mxu0 0
  %2661 = vmatpush1.bf16.msra.mxu0 0
  %2662 = vmatprep.subr.bf16.mxu0 0
  %2663 = vmatpush1.bf16.msra.mxu0 0
  %2664 = vmatprep.subr.bf16.mxu0 0
  %2665 = vmatpush1.bf16.msra.mxu0 0
  %2666 = vmatprep.subr.bf16.mxu0 0
  %2667 = vmatpush1.bf16.msra.mxu0 0
  %2668 = vmatprep.subr.bf16.mxu0 0
  %2669 = vmatpush1.bf16.msra.mxu0 0
  %2670 = vmatprep.subr.bf16.mxu0 0
  %2671 = vmatpush1.bf16.msra.mxu0 0
  %2672 = vmatprep.subr.bf16.mxu0 0
  %2673 = vmatpush1.bf16.msra.mxu0 0
  %2674 = vmatprep.subr.bf16.mxu0 0
  %2675 = vmatpush1.bf16.msra.mxu0 0
  %2676 = vmatprep.subr.bf16.mxu0 0
  %2677 = vmatpush1.bf16.msra.mxu0 0
  %2678 = vmatprep.mubr.bf16.mxu0 0
  %2679 = vmatmul.mubr.bf16.gmra.mrb[0].mxu0 %v2644
  %v2680 = vpop.f32.mrb[0].mxu0
  %v2681 = vadd.f32 0.0, %v2680
  %v2682 = vpop.f32.mrb[0].mxu0
  %v2683 = vpop.f32.mrb[0].mxu0
  %v2684 = vadd.f32 0.0, %v2683
  %v2685 = vpop.f32.mrb[0].mxu0
  %2686 = vdwg.mxu0
  %v2688 = vsel %vm1922, %v2284, 0
  %2690 = vmatprep.subr.bf16.mxu0 0
  %2691 = vmatpush1.bf16.msra.mxu0 %v1045
  %2692 = vmatprep.subr.bf16.mxu0 0
  %2693 = vmatpush1.bf16.msra.mxu0 0
  %2694 = vmatprep.subr.bf16.mxu0 0
  %2695 = vmatpush1.bf16.msra.mxu0 0
  %2696 = vmatprep.subr.bf16.mxu0 0
  %2697 = vmatpush1.bf16.msra.mxu0 0
  %2698 = vmatprep.subr.bf16.mxu0 0
  %2699 = vmatpush1.bf16.msra.mxu0 0
  %2700 = vmatprep.subr.bf16.mxu0 0
  %2701 = vmatpush1.bf16.msra.mxu0 0
  %2702 = vmatprep.subr.bf16.mxu0 0
  %2703 = vmatpush1.bf16.msra.mxu0 0
  %2704 = vmatprep.subr.bf16.mxu0 0
  %2705 = vmatpush1.bf16.msra.mxu0 0
  %2706 = vmatprep.subr.bf16.mxu0 0
  %2707 = vmatpush1.bf16.msra.mxu0 0
  %2708 = vmatprep.subr.bf16.mxu0 0
  %2709 = vmatpush1.bf16.msra.mxu0 0
  %2710 = vmatprep.subr.bf16.mxu0 0
  %2711 = vmatpush1.bf16.msra.mxu0 0
  %2712 = vmatprep.subr.bf16.mxu0 0
  %2713 = vmatpush1.bf16.msra.mxu0 0
  %2714 = vmatprep.subr.bf16.mxu0 0
  %2715 = vmatpush1.bf16.msra.mxu0 0
  %2716 = vmatprep.subr.bf16.mxu0 0
  %2717 = vmatpush1.bf16.msra.mxu0 0
  %2718 = vmatprep.subr.bf16.mxu0 0
  %2719 = vmatpush1.bf16.msra.mxu0 0
  %2720 = vmatprep.subr.bf16.mxu0 0
  %2721 = vmatpush1.bf16.msra.mxu0 0
  %2722 = vmatprep.mubr.bf16.mxu0 0
  %2723 = vmatmul.mubr.bf16.gmra.mrb[0].mxu0 %v2688
  %v2724 = vpop.f32.mrb[0].mxu0
  %v2725 = vadd.f32 0.0, %v2724
  %v2726 = vpop.f32.mrb[0].mxu0
  %v2727 = vpop.f32.mrb[0].mxu0
  %v2728 = vadd.f32 0.0, %v2727
  %v2729 = vpop.f32.mrb[0].mxu0
  %2730 = vdwg.mxu0
  %v2732 = vsel %vm1922, %v2285, 0
  %2734 = vmatprep.subr.bf16.mxu0 0
  %2735 = vmatpush1.bf16.msra.mxu0 %v1047
  %2736 = vmatprep.subr.bf16.mxu0 0
  %2737 = vmatpush1.bf16.msra.mxu0 0
  %2738 = vmatprep.subr.bf16.mxu0 0
  %2739 = vmatpush1.bf16.msra.mxu0 0
  %2740 = vmatprep.subr.bf16.mxu0 0
  %2741 = vmatpush1.bf16.msra.mxu0 0
  %2742 = vmatprep.subr.bf16.mxu0 0
  %2743 = vmatpush1.bf16.msra.mxu0 0
  %2744 = vmatprep.subr.bf16.mxu0 0
  %2745 = vmatpush1.bf16.msra.mxu0 0
  %2746 = vmatprep.subr.bf16.mxu0 0
  %2747 = vmatpush1.bf16.msra.mxu0 0
  %2748 = vmatprep.subr.bf16.mxu0 0
  %2749 = vmatpush1.bf16.msra.mxu0 0
  %2750 = vmatprep.subr.bf16.mxu0 0
  %2751 = vmatpush1.bf16.msra.mxu0 0
  %2752 = vmatprep.subr.bf16.mxu0 0
  %2753 = vmatpush1.bf16.msra.mxu0 0
  %2754 = vmatprep.subr.bf16.mxu0 0
  %2755 = vmatpush1.bf16.msra.mxu0 0
  %2756 = vmatprep.subr.bf16.mxu0 0
  %2757 = vmatpush1.bf16.msra.mxu0 0
  %2758 = vmatprep.subr.bf16.mxu0 0
  %2759 = vmatpush1.bf16.msra.mxu0 0
  %2760 = vmatprep.subr.bf16.mxu0 0
  %2761 = vmatpush1.bf16.msra.mxu0 0
  %2762 = vmatprep.subr.bf16.mxu0 0
  %2763 = vmatpush1.bf16.msra.mxu0 0
  %2764 = vmatprep.subr.bf16.mxu0 0
  %2765 = vmatpush1.bf16.msra.mxu0 0
  %2766 = vmatprep.mubr.bf16.mxu0 0
  %2767 = vmatmul.mubr.bf16.gmra.mrb[0].mxu0 %v2732
  %v2768 = vpop.f32.mrb[0].mxu0
  %v2769 = vadd.f32 0.0, %v2768
  %v2770 = vpop.f32.mrb[0].mxu0
  %v2771 = vpop.f32.mrb[0].mxu0
  %v2772 = vadd.f32 0.0, %v2771
  %v2773 = vpop.f32.mrb[0].mxu0
  %2774 = vdwg.mxu0
  %v2776 = vsel %vm1922, %v2286, 0
  %2778 = vmatprep.subr.bf16.mxu0 0
  %2779 = vmatpush1.bf16.msra.mxu0 %v1049
  %2780 = vmatprep.subr.bf16.mxu0 0
  %2781 = vmatpush1.bf16.msra.mxu0 0
  %2782 = vmatprep.subr.bf16.mxu0 0
  %2783 = vmatpush1.bf16.msra.mxu0 0
  %2784 = vmatprep.subr.bf16.mxu0 0
  %2785 = vmatpush1.bf16.msra.mxu0 0
  %2786 = vmatprep.subr.bf16.mxu0 0
  %2787 = vmatpush1.bf16.msra.mxu0 0
  %2788 = vmatprep.subr.bf16.mxu0 0
  %2789 = vmatpush1.bf16.msra.mxu0 0
  %2790 = vmatprep.subr.bf16.mxu0 0
  %2791 = vmatpush1.bf16.msra.mxu0 0
  %2792 = vmatprep.subr.bf16.mxu0 0
  %2793 = vmatpush1.bf16.msra.mxu0 0
  %2794 = vmatprep.subr.bf16.mxu0 0
  %2795 = vmatpush1.bf16.msra.mxu0 0
  %2796 = vmatprep.subr.bf16.mxu0 0
  %2797 = vmatpush1.bf16.msra.mxu0 0
  %2798 = vmatprep.subr.bf16.mxu0 0
  %2799 = vmatpush1.bf16.msra.mxu0 0
  %2800 = vmatprep.subr.bf16.mxu0 0
  %2801 = vmatpush1.bf16.msra.mxu0 0
  %2802 = vmatprep.subr.bf16.mxu0 0
  %2803 = vmatpush1.bf16.msra.mxu0 0
  %2804 = vmatprep.subr.bf16.mxu0 0
  %2805 = vmatpush1.bf16.msra.mxu0 0
  %2806 = vmatprep.subr.bf16.mxu0 0
  %2807 = vmatpush1.bf16.msra.mxu0 0
  %2808 = vmatprep.subr.bf16.mxu0 0
  %2809 = vmatpush1.bf16.msra.mxu0 0
  %2810 = vmatprep.mubr.bf16.mxu0 0
  %2811 = vmatmul.mubr.bf16.gmra.mrb[0].mxu0 %v2776
  %v2812 = vpop.f32.mrb[0].mxu0
  %v2813 = vadd.f32 0.0, %v2812
  %v2814 = vpop.f32.mrb[0].mxu0
  %v2815 = vpop.f32.mrb[0].mxu0
  %v2816 = vadd.f32 0.0, %v2815
  %v2817 = vpop.f32.mrb[0].mxu0
  %2818 = vdwg.mxu0
  %v2820 = vsel %vm1922, %v2287, 0
  %2822 = vmatprep.subr.bf16.mxu0 0
  %2823 = vmatpush1.bf16.msra.mxu0 %v1051
  %2824 = vmatprep.subr.bf16.mxu0 0
  %2825 = vmatpush1.bf16.msra.mxu0 0
  %2826 = vmatprep.subr.bf16.mxu0 0
  %2827 = vmatpush1.bf16.msra.mxu0 0
  %2828 = vmatprep.subr.bf16.mxu0 0
  %2829 = vmatpush1.bf16.msra.mxu0 0
  %2830 = vmatprep.subr.bf16.mxu0 0
  %2831 = vmatpush1.bf16.msra.mxu0 0
  %2832 = vmatprep.subr.bf16.mxu0 0
  %2833 = vmatpush1.bf16.msra.mxu0 0
  %2834 = vmatprep.subr.bf16.mxu0 0
  %2835 = vmatpush1.bf16.msra.mxu0 0
  %2836 = vmatprep.subr.bf16.mxu0 0
  %2837 = vmatpush1.bf16.msra.mxu0 0
  %2838 = vmatprep.subr.bf16.mxu0 0
  %2839 = vmatpush1.bf16.msra.mxu0 0
  %2840 = vmatprep.subr.bf16.mxu0 0
  %2841 = vmatpush1.bf16.msra.mxu0 0
  %2842 = vmatprep.subr.bf16.mxu0 0
  %2843 = vmatpush1.bf16.msra.mxu0 0
  %2844 = vmatprep.subr.bf16.mxu0 0
  %2845 = vmatpush1.bf16.msra.mxu0 0
  %2846 = vmatprep.subr.bf16.mxu0 0
  %2847 = vmatpush1.bf16.msra.mxu0 0
  %2848 = vmatprep.subr.bf16.mxu0 0
  %2849 = vmatpush1.bf16.msra.mxu0 0
  %2850 = vmatprep.subr.bf16.mxu0 0
  %2851 = vmatpush1.bf16.msra.mxu0 0
  %2852 = vmatprep.subr.bf16.mxu0 0
  %2853 = vmatpush1.bf16.msra.mxu0 0
  %2854 = vmatprep.mubr.bf16.mxu0 0
  %2855 = vmatmul.mubr.bf16.gmra.mrb[0].mxu0 %v2820
  %v2856 = vpop.f32.mrb[0].mxu0
  %v2857 = vadd.f32 0.0, %v2856
  %v2858 = vpop.f32.mrb[0].mxu0
  %v2859 = vpop.f32.mrb[0].mxu0
  %v2860 = vadd.f32 0.0, %v2859
  %v2861 = vpop.f32.mrb[0].mxu0
  %2862 = vdwg.mxu0
  %v2864 = vsel %vm1922, %v2288, 0
  %2866 = vmatprep.subr.bf16.mxu0 0
  %2867 = vmatpush1.bf16.msra.mxu0 %v1053
  %2868 = vmatprep.subr.bf16.mxu0 0
  %2869 = vmatpush1.bf16.msra.mxu0 0
  %2870 = vmatprep.subr.bf16.mxu0 0
  %2871 = vmatpush1.bf16.msra.mxu0 0
  %2872 = vmatprep.subr.bf16.mxu0 0
  %2873 = vmatpush1.bf16.msra.mxu0 0
  %2874 = vmatprep.subr.bf16.mxu0 0
  %2875 = vmatpush1.bf16.msra.mxu0 0
  %2876 = vmatprep.subr.bf16.mxu0 0
  %2877 = vmatpush1.bf16.msra.mxu0 0
  %2878 = vmatprep.subr.bf16.mxu0 0
  %2879 = vmatpush1.bf16.msra.mxu0 0
  %2880 = vmatprep.subr.bf16.mxu0 0
  %2881 = vmatpush1.bf16.msra.mxu0 0
  %2882 = vmatprep.subr.bf16.mxu0 0
  %2883 = vmatpush1.bf16.msra.mxu0 0
  %2884 = vmatprep.subr.bf16.mxu0 0
  %2885 = vmatpush1.bf16.msra.mxu0 0
  %2886 = vmatprep.subr.bf16.mxu0 0
  %2887 = vmatpush1.bf16.msra.mxu0 0
  %2888 = vmatprep.subr.bf16.mxu0 0
  %2889 = vmatpush1.bf16.msra.mxu0 0
  %2890 = vmatprep.subr.bf16.mxu0 0
  %2891 = vmatpush1.bf16.msra.mxu0 0
  %2892 = vmatprep.subr.bf16.mxu0 0
  %2893 = vmatpush1.bf16.msra.mxu0 0
  %2894 = vmatprep.subr.bf16.mxu0 0
  %2895 = vmatpush1.bf16.msra.mxu0 0
  %2896 = vmatprep.subr.bf16.mxu0 0
  %2897 = vmatpush1.bf16.msra.mxu0 0
  %2898 = vmatprep.mubr.bf16.mxu0 0
  %2899 = vmatmul.mubr.bf16.gmra.mrb[0].mxu0 %v2864
  %v2900 = vpop.f32.mrb[0].mxu0
  %v2901 = vadd.f32 0.0, %v2900
  %v2902 = vpop.f32.mrb[0].mxu0
  %v2903 = vpop.f32.mrb[0].mxu0
  %v2904 = vadd.f32 0.0, %v2903
  %v2905 = vpop.f32.mrb[0].mxu0
  %2906 = vdwg.mxu0
  %v2908 = vsel %vm1922, %v2289, 0
  %2910 = vmatprep.subr.bf16.mxu0 0
  %2911 = vmatpush1.bf16.msra.mxu0 %v1055
  %2912 = vmatprep.subr.bf16.mxu0 0
  %2913 = vmatpush1.bf16.msra.mxu0 0
  %2914 = vmatprep.subr.bf16.mxu0 0
  %2915 = vmatpush1.bf16.msra.mxu0 0
  %2916 = vmatprep.subr.bf16.mxu0 0
  %2917 = vmatpush1.bf16.msra.mxu0 0
  %2918 = vmatprep.subr.bf16.mxu0 0
  %2919 = vmatpush1.bf16.msra.mxu0 0
  %2920 = vmatprep.subr.bf16.mxu0 0
  %2921 = vmatpush1.bf16.msra.mxu0 0
  %2922 = vmatprep.subr.bf16.mxu0 0
  %2923 = vmatpush1.bf16.msra.mxu0 0
  %2924 = vmatprep.subr.bf16.mxu0 0
  %2925 = vmatpush1.bf16.msra.mxu0 0
  %2926 = vmatprep.subr.bf16.mxu0 0
  %2927 = vmatpush1.bf16.msra.mxu0 0
  %2928 = vmatprep.subr.bf16.mxu0 0
  %2929 = vmatpush1.bf16.msra.mxu0 0
  %2930 = vmatprep.subr.bf16.mxu0 0
  %2931 = vmatpush1.bf16.msra.mxu0 0
  %2932 = vmatprep.subr.bf16.mxu0 0
  %2933 = vmatpush1.bf16.msra.mxu0 0
  %2934 = vmatprep.subr.bf16.mxu0 0
  %2935 = vmatpush1.bf16.msra.mxu0 0
  %2936 = vmatprep.subr.bf16.mxu0 0
  %2937 = vmatpush1.bf16.msra.mxu0 0
  %2938 = vmatprep.subr.bf16.mxu0 0
  %2939 = vmatpush1.bf16.msra.mxu0 0
  %2940 = vmatprep.subr.bf16.mxu0 0
  %2941 = vmatpush1.bf16.msra.mxu0 0
  %2942 = vmatprep.mubr.bf16.mxu0 0
  %2943 = vmatmul.mubr.bf16.gmra.mrb[0].mxu0 %v2908
  %v2944 = vpop.f32.mrb[0].mxu0
  %v2945 = vadd.f32 0.0, %v2944
  %v2946 = vpop.f32.mrb[0].mxu0
  %v2947 = vpop.f32.mrb[0].mxu0
  %v2948 = vadd.f32 0.0, %v2947
  %v2949 = vpop.f32.mrb[0].mxu0
  %2950 = vdwg.mxu0
  %v2952 = vsel %vm1922, %v2290, 0
  %2954 = vmatprep.subr.bf16.mxu0 0
  %2955 = vmatpush1.bf16.msra.mxu0 %v1057
  %2956 = vmatprep.subr.bf16.mxu0 0
  %2957 = vmatpush1.bf16.msra.mxu0 0
  %2958 = vmatprep.subr.bf16.mxu0 0
  %2959 = vmatpush1.bf16.msra.mxu0 0
  %2960 = vmatprep.subr.bf16.mxu0 0
  %2961 = vmatpush1.bf16.msra.mxu0 0
  %2962 = vmatprep.subr.bf16.mxu0 0
  %2963 = vmatpush1.bf16.msra.mxu0 0
  %2964 = vmatprep.subr.bf16.mxu0 0
  %2965 = vmatpush1.bf16.msra.mxu0 0
  %2966 = vmatprep.subr.bf16.mxu0 0
  %2967 = vmatpush1.bf16.msra.mxu0 0
  %2968 = vmatprep.subr.bf16.mxu0 0
  %2969 = vmatpush1.bf16.msra.mxu0 0
  %2970 = vmatprep.subr.bf16.mxu0 0
  %2971 = vmatpush1.bf16.msra.mxu0 0
  %2972 = vmatprep.subr.bf16.mxu0 0
  %2973 = vmatpush1.bf16.msra.mxu0 0
  %2974 = vmatprep.subr.bf16.mxu0 0
  %2975 = vmatpush1.bf16.msra.mxu0 0
  %2976 = vmatprep.subr.bf16.mxu0 0
  %2977 = vmatpush1.bf16.msra.mxu0 0
  %2978 = vmatprep.subr.bf16.mxu0 0
  %2979 = vmatpush1.bf16.msra.mxu0 0
  %2980 = vmatprep.subr.bf16.mxu0 0
  %2981 = vmatpush1.bf16.msra.mxu0 0
  %2982 = vmatprep.subr.bf16.mxu0 0
  %2983 = vmatpush1.bf16.msra.mxu0 0
  %2984 = vmatprep.subr.bf16.mxu0 0
  %2985 = vmatpush1.bf16.msra.mxu0 0
  %2986 = vmatprep.mubr.bf16.mxu0 0
  %2987 = vmatmul.mubr.bf16.gmra.mrb[0].mxu0 %v2952
  %v2988 = vpop.f32.mrb[0].mxu0
  %v2989 = vadd.f32 0.0, %v2988
  %v2990 = vpop.f32.mrb[0].mxu0
  %v2991 = vpop.f32.mrb[0].mxu0
  %v2992 = vadd.f32 0.0, %v2991
  %v2993 = vpop.f32.mrb[0].mxu0
  %2994 = vdwg.mxu0
  %3011 = vrot.lane.b32.xlu0 %v2681, 64
  %v3012 = vpop.permute.xlu0 %3011
  %3013 = vrot.lane.b32.xlu0 %v2684, 64
  %v3014 = vpop.permute.xlu0 %3013
  %3015 = vrot.lane.b32.xlu0 %v2725, 64
  %v3016 = vpop.permute.xlu0 %3015
  %3017 = vrot.lane.b32.xlu0 %v2728, 64
  %v3018 = vpop.permute.xlu0 %3017
  %3019 = vrot.lane.b32.xlu0 %v2769, 64
  %v3020 = vpop.permute.xlu0 %3019
  %3021 = vrot.lane.b32.xlu0 %v2772, 64
  %v3022 = vpop.permute.xlu0 %3021
  %3023 = vrot.lane.b32.xlu0 %v2813, 64
  %v3024 = vpop.permute.xlu0 %3023
  %3025 = vrot.lane.b32.xlu0 %v2816, 64
  %v3026 = vpop.permute.xlu0 %3025
  %3027 = vrot.lane.b32.xlu0 %v2857, 64
  %v3028 = vpop.permute.xlu0 %3027
  %3029 = vrot.lane.b32.xlu0 %v2860, 64
  %v3030 = vpop.permute.xlu0 %3029
  %3031 = vrot.lane.b32.xlu0 %v2901, 64
  %v3032 = vpop.permute.xlu0 %3031
  %3033 = vrot.lane.b32.xlu0 %v2904, 64
  %v3034 = vpop.permute.xlu0 %3033
  %3035 = vrot.lane.b32.xlu0 %v2945, 64
  %v3036 = vpop.permute.xlu0 %3035
  %3037 = vrot.lane.b32.xlu0 %v2948, 64
  %v3038 = vpop.permute.xlu0 %3037
  %3039 = vrot.lane.b32.xlu0 %v2989, 64
  %v3040 = vpop.permute.xlu0 %3039
  %3041 = vrot.lane.b32.xlu0 %v2992, 64
  %v3042 = vpop.permute.xlu0 %3041
  %v3059 = vsel %vm258, %v2329, %v3012
  %v3060 = vsel %vm258, %v2332, %v3014
  %v3061 = vsel %vm258, %v2373, %v3016
  %v3062 = vsel %vm258, %v2376, %v3018
  %v3063 = vsel %vm258, %v2417, %v3020
  %v3064 = vsel %vm258, %v2420, %v3022
  %v3065 = vsel %vm258, %v2461, %v3024
  %v3066 = vsel %vm258, %v2464, %v3026
  %v3067 = vsel %vm258, %v2505, %v3028
  %v3068 = vsel %vm258, %v2508, %v3030
  %v3069 = vsel %vm258, %v2549, %v3032
  %v3070 = vsel %vm258, %v2552, %v3034
  %v3071 = vsel %vm258, %v2593, %v3036
  %v3072 = vsel %vm258, %v2596, %v3038
  %v3073 = vsel %vm258, %v2637, %v3040
  %v3074 = vsel %vm258, %v2640, %v3042
  %v3075 = vpack.c.bf16 %v3060, %v3059
  %v3076 = vpack.c.bf16 %v3062, %v3061
  %v3077 = vpack.c.bf16 %v3064, %v3063
  %v3078 = vpack.c.bf16 %v3066, %v3065
  %v3079 = vpack.c.bf16 %v3068, %v3067
  %v3080 = vpack.c.bf16 %v3070, %v3069
  %v3081 = vpack.c.bf16 %v3072, %v3071
  %v3082 = vpack.c.bf16 %v3074, %v3073
  %v3083 = vld [vmem:[%s10] sm:$0xf]
  %v3084 = vld [vmem:[%s10 + $0x4] sm:$0xf]
  %v3085 = vld [vmem:[%s10 + $0x8] sm:$0xf]
  %v3086 = vld [vmem:[%s10 + $0xc] sm:$0xf]
  %v3087 = vld [vmem:[%s10 + $0x10] sm:$0xf]
  %v3088 = vld [vmem:[%s10 + $0x14] sm:$0xf]
  %v3089 = vld [vmem:[%s10 + $0x18] sm:$0xf]
  %v3090 = vld [vmem:[%s10 + $0x1c] sm:$0xf]
  %v3091 = vld [vmem:[%s10 + $0x20] sm:$0xf]
  %v3092 = vld [vmem:[%s10 + $0x24] sm:$0xf]
  %v3093 = vld [vmem:[%s10 + $0x28] sm:$0xf]
  %v3094 = vld [vmem:[%s10 + $0x2c] sm:$0xf]
  %v3095 = vld [vmem:[%s10 + $0x30] sm:$0xf]
  %v3096 = vld [vmem:[%s10 + $0x34] sm:$0xf]
  %v3097 = vld [vmem:[%s10 + $0x38] sm:$0xf]
  %v3098 = vld [vmem:[%s10 + $0x3c] sm:$0xf]
  %v3099 = vld [vmem:[%s11] sm:$0x1]
  %v3101 = vlaneseq
  %v3102 = vshrl.u32 %v3101, 7
  %v3103 = vsub.s32 0, %v3102
  %v3104 = vrot.slane %v3099, %v3103
  %v3122 = vunpack.c.l.b16 %v3083
  %v3123 = vunpack.c.l.b16 %v3084
  %v3124 = vunpack.c.l.b16 %v3085
  %v3125 = vunpack.c.l.b16 %v3086
  %v3126 = vunpack.c.l.b16 %v3087
  %v3127 = vunpack.c.l.b16 %v3088
  %v3128 = vunpack.c.l.b16 %v3089
  %v3129 = vunpack.c.l.b16 %v3090
  %v3130 = vunpack.c.l.b16 %v3091
  %v3131 = vunpack.c.l.b16 %v3092
  %v3132 = vunpack.c.l.b16 %v3093
  %v3133 = vunpack.c.l.b16 %v3094
  %v3134 = vunpack.c.l.b16 %v3095
  %v3135 = vunpack.c.l.b16 %v3096
  %v3136 = vunpack.c.l.b16 %v3097
  %v3137 = vunpack.c.l.b16 %v3098
  %v3138 = vpack.c.b16 %v3123, %v3122
  %v3139 = vpack.c.b16 %v3125, %v3124
  %v3140 = vpack.c.b16 %v3127, %v3126
  %v3141 = vpack.c.b16 %v3129, %v3128
  %v3142 = vpack.c.b16 %v3131, %v3130
  %v3143 = vpack.c.b16 %v3133, %v3132
  %v3144 = vpack.c.b16 %v3135, %v3134
  %v3145 = vpack.c.b16 %v3137, %v3136
  %3154 = vmatprep.subr.bf16.mxu0 0
  %3155 = vmatpush1.bf16.msra.mxu0 %v3138
  %3156 = vmatprep.subr.bf16.mxu0 0
  %3157 = vmatpush1.bf16.msra.mxu0 %v3139
  %3158 = vmatprep.subr.bf16.mxu0 0
  %3159 = vmatpush1.bf16.msra.mxu0 %v3140
  %3160 = vmatprep.subr.bf16.mxu0 0
  %3161 = vmatpush1.bf16.msra.mxu0 %v3141
  %3162 = vmatprep.subr.bf16.mxu0 0
  %3163 = vmatpush1.bf16.msra.mxu0 %v3142
  %3164 = vmatprep.subr.bf16.mxu0 0
  %3165 = vmatpush1.bf16.msra.mxu0 %v3143
  %3166 = vmatprep.subr.bf16.mxu0 0
  %3167 = vmatpush1.bf16.msra.mxu0 %v3144
  %3168 = vmatprep.subr.bf16.mxu0 0
  %3169 = vmatpush1.bf16.msra.mxu0 %v3145
  %3170 = vmatprep.subr.bf16.mxu0 0
  %3171 = vmatpush1.bf16.msra.mxu0 0
  %3172 = vmatprep.subr.bf16.mxu0 0
  %3173 = vmatpush1.bf16.msra.mxu0 0
  %3174 = vmatprep.subr.bf16.mxu0 0
  %3175 = vmatpush1.bf16.msra.mxu0 0
  %3176 = vmatprep.subr.bf16.mxu0 0
  %3177 = vmatpush1.bf16.msra.mxu0 0
  %3178 = vmatprep.subr.bf16.mxu0 0
  %3179 = vmatpush1.bf16.msra.mxu0 0
  %3180 = vmatprep.subr.bf16.mxu0 0
  %3181 = vmatpush1.bf16.msra.mxu0 0
  %3182 = vmatprep.subr.bf16.mxu0 0
  %3183 = vmatpush1.bf16.msra.mxu0 0
  %3184 = vmatprep.subr.bf16.mxu0 0
  %3185 = vmatpush1.bf16.msra.mxu0 0
  %3186 = vmatprep.mubr.bf16.mxu0 0
  %3187 = vmatmul.mubr.bf16.gmra.mrb[0].mxu0 %v3075
  %v3188 = vpop.f32.mrb[0].mxu0
  %v3189 = vadd.f32 %v3104, %v3188
  %v3190 = vpop.f32.mrb[0].mxu0
  %v3191 = vpop.f32.mrb[0].mxu0
  %v3192 = vadd.f32 %v3104, %v3191
  %v3193 = vpop.f32.mrb[0].mxu0
  %3194 = vmatprep.mubr.bf16.mxu0 0
  %3195 = vmatmul.mubr.bf16.gmra.mrb[0].mxu0 %v3076
  %v3196 = vpop.f32.mrb[0].mxu0
  %v3197 = vadd.f32 %v3104, %v3196
  %v3198 = vpop.f32.mrb[0].mxu0
  %v3199 = vpop.f32.mrb[0].mxu0
  %v3200 = vadd.f32 %v3104, %v3199
  %v3201 = vpop.f32.mrb[0].mxu0
  %3202 = vmatprep.mubr.bf16.mxu0 0
  %3203 = vmatmul.mubr.bf16.gmra.mrb[0].mxu0 %v3077
  %v3204 = vpop.f32.mrb[0].mxu0
  %v3205 = vadd.f32 %v3104, %v3204
  %v3206 = vpop.f32.mrb[0].mxu0
  %v3207 = vpop.f32.mrb[0].mxu0
  %v3208 = vadd.f32 %v3104, %v3207
  %v3209 = vpop.f32.mrb[0].mxu0
  %3210 = vmatprep.mubr.bf16.mxu0 0
  %3211 = vmatmul.mubr.bf16.gmra.mrb[0].mxu0 %v3078
  %v3212 = vpop.f32.mrb[0].mxu0
  %v3213 = vadd.f32 %v3104, %v3212
  %v3214 = vpop.f32.mrb[0].mxu0
  %v3215 = vpop.f32.mrb[0].mxu0
  %v3216 = vadd.f32 %v3104, %v3215
  %v3217 = vpop.f32.mrb[0].mxu0
  %3218 = vmatprep.mubr.bf16.mxu0 0
  %3219 = vmatmul.mubr.bf16.gmra.mrb[0].mxu0 %v3079
  %v3220 = vpop.f32.mrb[0].mxu0
  %v3221 = vadd.f32 %v3104, %v3220
  %v3222 = vpop.f32.mrb[0].mxu0
  %v3223 = vpop.f32.mrb[0].mxu0
  %v3224 = vadd.f32 %v3104, %v3223
  %v3225 = vpop.f32.mrb[0].mxu0
  %3226 = vmatprep.mubr.bf16.mxu0 0
  %3227 = vmatmul.mubr.bf16.gmra.mrb[0].mxu0 %v3080
  %v3228 = vpop.f32.mrb[0].mxu0
  %v3229 = vadd.f32 %v3104, %v3228
  %v3230 = vpop.f32.mrb[0].mxu0
  %v3231 = vpop.f32.mrb[0].mxu0
  %v3232 = vadd.f32 %v3104, %v3231
  %v3233 = vpop.f32.mrb[0].mxu0
  %3234 = vmatprep.mubr.bf16.mxu0 0
  %3235 = vmatmul.mubr.bf16.gmra.mrb[0].mxu0 %v3081
  %v3236 = vpop.f32.mrb[0].mxu0
  %v3237 = vadd.f32 %v3104, %v3236
  %v3238 = vpop.f32.mrb[0].mxu0
  %v3239 = vpop.f32.mrb[0].mxu0
  %v3240 = vadd.f32 %v3104, %v3239
  %v3241 = vpop.f32.mrb[0].mxu0
  %3242 = vmatprep.mubr.bf16.mxu0 0
  %3243 = vmatmul.mubr.bf16.gmra.mrb[0].mxu0 %v3082
  %v3244 = vpop.f32.mrb[0].mxu0
  %v3245 = vadd.f32 %v3104, %v3244
  %v3246 = vpop.f32.mrb[0].mxu0
  %v3247 = vpop.f32.mrb[0].mxu0
  %v3248 = vadd.f32 %v3104, %v3247
  %v3249 = vpop.f32.mrb[0].mxu0
  %3250 = vdwg.mxu0
  %v3251 = vadd.f32 %v382, %v3189
  %v3252 = vadd.f32 %v383, %v3192
  %v3253 = vadd.f32 %v384, %v3197
  %v3254 = vadd.f32 %v385, %v3200
  %v3255 = vadd.f32 %v386, %v3205
  %v3256 = vadd.f32 %v387, %v3208
  %v3257 = vadd.f32 %v388, %v3213
  %v3258 = vadd.f32 %v389, %v3216
  %v3259 = vadd.f32 %v390, %v3221
  %v3260 = vadd.f32 %v391, %v3224
  %v3261 = vadd.f32 %v392, %v3229
  %v3262 = vadd.f32 %v393, %v3232
  %v3263 = vadd.f32 %v394, %v3237
  %v3264 = vadd.f32 %v395, %v3240
  %v3265 = vadd.f32 %v396, %v3245
  %v3266 = vadd.f32 %v397, %v3248
  %v3267 = vld [vmem:[%s12] sm:$0x1]
  %v3268 = vld [vmem:[%s13] sm:$0x1]
  %3269 = vadd.xlane.f32.xlu0 %v3251
  %v3270 = vpop.xlane.xlu0 %3269
  %3271 = vadd.xlane.f32.xlu0 %v3252
  %v3272 = vpop.xlane.xlu0 %3271
  %3273 = vadd.xlane.f32.xlu0 %v3253
  %v3274 = vpop.xlane.xlu0 %3273
  %3275 = vadd.xlane.f32.xlu0 %v3254
  %v3276 = vpop.xlane.xlu0 %3275
  %3277 = vadd.xlane.f32.xlu0 %v3255
  %v3278 = vpop.xlane.xlu0 %3277
  %3279 = vadd.xlane.f32.xlu0 %v3256
  %v3280 = vpop.xlane.xlu0 %3279
  %3281 = vadd.xlane.f32.xlu0 %v3257
  %v3282 = vpop.xlane.xlu0 %3281
  %3283 = vadd.xlane.f32.xlu0 %v3258
  %v3284 = vpop.xlane.xlu0 %3283
  %3285 = vadd.xlane.f32.xlu0 %v3259
  %v3286 = vpop.xlane.xlu0 %3285
  %3287 = vadd.xlane.f32.xlu0 %v3260
  %v3288 = vpop.xlane.xlu0 %3287
  %3289 = vadd.xlane.f32.xlu0 %v3261
  %v3290 = vpop.xlane.xlu0 %3289
  %3291 = vadd.xlane.f32.xlu0 %v3262
  %v3292 = vpop.xlane.xlu0 %3291
  %3293 = vadd.xlane.f32.xlu0 %v3263
  %v3294 = vpop.xlane.xlu0 %3293
  %3295 = vadd.xlane.f32.xlu0 %v3264
  %v3296 = vpop.xlane.xlu0 %3295
  %3297 = vadd.xlane.f32.xlu0 %v3265
  %v3298 = vpop.xlane.xlu0 %3297
  %3299 = vadd.xlane.f32.xlu0 %v3266
  %v3300 = vpop.xlane.xlu0 %3299
  %v3301 = vrcp.pop 128.0
  %v3302 = vmul.f32 %v3270, %v3301
  %v3303 = vmul.f32 %v3272, %v3301
  %v3304 = vmul.f32 %v3274, %v3301
  %v3305 = vmul.f32 %v3276, %v3301
  %v3306 = vmul.f32 %v3278, %v3301
  %v3307 = vmul.f32 %v3280, %v3301
  %v3308 = vmul.f32 %v3282, %v3301
  %v3309 = vmul.f32 %v3284, %v3301
  %v3310 = vmul.f32 %v3286, %v3301
  %v3311 = vmul.f32 %v3288, %v3301
  %v3312 = vmul.f32 %v3290, %v3301
  %v3313 = vmul.f32 %v3292, %v3301
  %v3314 = vmul.f32 %v3294, %v3301
  %v3315 = vmul.f32 %v3296, %v3301
  %v3316 = vmul.f32 %v3298, %v3301
  %v3317 = vmul.f32 %v3300, %v3301
  %v3318 = vsub.f32 %v3251, %v3302
  %v3319 = vsub.f32 %v3252, %v3303
  %v3320 = vsub.f32 %v3253, %v3304
  %v3321 = vsub.f32 %v3254, %v3305
  %v3322 = vsub.f32 %v3255, %v3306
  %v3323 = vsub.f32 %v3256, %v3307
  %v3324 = vsub.f32 %v3257, %v3308
  %v3325 = vsub.f32 %v3258, %v3309
  %v3326 = vsub.f32 %v3259, %v3310
  %v3327 = vsub.f32 %v3260, %v3311
  %v3328 = vsub.f32 %v3261, %v3312
  %v3329 = vsub.f32 %v3262, %v3313
  %v3330 = vsub.f32 %v3263, %v3314
  %v3331 = vsub.f32 %v3264, %v3315
  %v3332 = vsub.f32 %v3265, %v3316
  %v3333 = vsub.f32 %v3266, %v3317
  %v3334 = vmul.f32 %v3318, %v3318
  %v3335 = vmul.f32 %v3319, %v3319
  %v3336 = vmul.f32 %v3320, %v3320
  %v3337 = vmul.f32 %v3321, %v3321
  %v3338 = vmul.f32 %v3322, %v3322
  %v3339 = vmul.f32 %v3323, %v3323
  %v3340 = vmul.f32 %v3324, %v3324
  %v3341 = vmul.f32 %v3325, %v3325
  %v3342 = vmul.f32 %v3326, %v3326
  %v3343 = vmul.f32 %v3327, %v3327
  %v3344 = vmul.f32 %v3328, %v3328
  %v3345 = vmul.f32 %v3329, %v3329
  %v3346 = vmul.f32 %v3330, %v3330
  %v3347 = vmul.f32 %v3331, %v3331
  %v3348 = vmul.f32 %v3332, %v3332
  %v3349 = vmul.f32 %v3333, %v3333
  %3350 = vadd.xlane.f32.xlu0 %v3334
  %v3351 = vpop.xlane.xlu0 %3350
  %3352 = vadd.xlane.f32.xlu0 %v3335
  %v3353 = vpop.xlane.xlu0 %3352
  %3354 = vadd.xlane.f32.xlu0 %v3336
  %v3355 = vpop.xlane.xlu0 %3354
  %3356 = vadd.xlane.f32.xlu0 %v3337
  %v3357 = vpop.xlane.xlu0 %3356
  %3358 = vadd.xlane.f32.xlu0 %v3338
  %v3359 = vpop.xlane.xlu0 %3358
  %3360 = vadd.xlane.f32.xlu0 %v3339
  %v3361 = vpop.xlane.xlu0 %3360
  %3362 = vadd.xlane.f32.xlu0 %v3340
  %v3363 = vpop.xlane.xlu0 %3362
  %3364 = vadd.xlane.f32.xlu0 %v3341
  %v3365 = vpop.xlane.xlu0 %3364
  %3366 = vadd.xlane.f32.xlu0 %v3342
  %v3367 = vpop.xlane.xlu0 %3366
  %3368 = vadd.xlane.f32.xlu0 %v3343
  %v3369 = vpop.xlane.xlu0 %3368
  %3370 = vadd.xlane.f32.xlu0 %v3344
  %v3371 = vpop.xlane.xlu0 %3370
  %3372 = vadd.xlane.f32.xlu0 %v3345
  %v3373 = vpop.xlane.xlu0 %3372
  %3374 = vadd.xlane.f32.xlu0 %v3346
  %v3375 = vpop.xlane.xlu0 %3374
  %3376 = vadd.xlane.f32.xlu0 %v3347
  %v3377 = vpop.xlane.xlu0 %3376
  %3378 = vadd.xlane.f32.xlu0 %v3348
  %v3379 = vpop.xlane.xlu0 %3378
  %3380 = vadd.xlane.f32.xlu0 %v3349
  %v3381 = vpop.xlane.xlu0 %3380
  %v3382 = vmul.f32 %v3351, %v3301
  %v3383 = vmul.f32 %v3353, %v3301
  %v3384 = vmul.f32 %v3355, %v3301
  %v3385 = vmul.f32 %v3357, %v3301
  %v3386 = vmul.f32 %v3359, %v3301
  %v3387 = vmul.f32 %v3361, %v3301
  %v3388 = vmul.f32 %v3363, %v3301
  %v3389 = vmul.f32 %v3365, %v3301
  %v3390 = vmul.f32 %v3367, %v3301
  %v3391 = vmul.f32 %v3369, %v3301
  %v3392 = vmul.f32 %v3371, %v3301
  %v3393 = vmul.f32 %v3373, %v3301
  %v3394 = vmul.f32 %v3375, %v3301
  %v3395 = vmul.f32 %v3377, %v3301
  %v3396 = vmul.f32 %v3379, %v3301
  %v3397 = vmul.f32 %v3381, %v3301
  %v3398 = vadd.f32 %v3382, 1e-12
  %v3399 = vadd.f32 %v3383, 1e-12
  %v3400 = vadd.f32 %v3384, 1e-12
  %v3401 = vadd.f32 %v3385, 1e-12
  %v3402 = vadd.f32 %v3386, 1e-12
  %v3403 = vadd.f32 %v3387, 1e-12
  %v3404 = vadd.f32 %v3388, 1e-12
  %v3405 = vadd.f32 %v3389, 1e-12
  %v3406 = vadd.f32 %v3390, 1e-12
  %v3407 = vadd.f32 %v3391, 1e-12
  %v3408 = vadd.f32 %v3392, 1e-12
  %v3409 = vadd.f32 %v3393, 1e-12
  %v3410 = vadd.f32 %v3394, 1e-12
  %v3411 = vadd.f32 %v3395, 1e-12
  %v3412 = vadd.f32 %v3396, 1e-12
  %v3413 = vadd.f32 %v3397, 1e-12
  %v3414 = vrsqrt.pop %v3398
  %v3415 = vrsqrt.pop %v3399
  %v3416 = vrsqrt.pop %v3400
  %v3417 = vrsqrt.pop %v3401
  %v3418 = vrsqrt.pop %v3402
  %v3419 = vrsqrt.pop %v3403
  %v3420 = vrsqrt.pop %v3404
  %v3421 = vrsqrt.pop %v3405
  %v3422 = vrsqrt.pop %v3406
  %v3423 = vrsqrt.pop %v3407
  %v3424 = vrsqrt.pop %v3408
  %v3425 = vrsqrt.pop %v3409
  %v3426 = vrsqrt.pop %v3410
  %v3427 = vrsqrt.pop %v3411
  %v3428 = vrsqrt.pop %v3412
  %v3429 = vrsqrt.pop %v3413
  %v3430 = vmul.f32 %v3318, %v3414
  %v3431 = vmul.f32 %v3319, %v3415
  %v3432 = vmul.f32 %v3320, %v3416
  %v3433 = vmul.f32 %v3321, %v3417
  %v3434 = vmul.f32 %v3322, %v3418
  %v3435 = vmul.f32 %v3323, %v3419
  %v3436 = vmul.f32 %v3324, %v3420
  %v3437 = vmul.f32 %v3325, %v3421
  %v3438 = vmul.f32 %v3326, %v3422
  %v3439 = vmul.f32 %v3327, %v3423
  %v3440 = vmul.f32 %v3328, %v3424
  %v3441 = vmul.f32 %v3329, %v3425
  %v3442 = vmul.f32 %v3330, %v3426
  %v3443 = vmul.f32 %v3331, %v3427
  %v3444 = vmul.f32 %v3332, %v3428
  %v3445 = vmul.f32 %v3333, %v3429
  %v3447 = vlaneseq
  %v3448 = vshrl.u32 %v3447, 7
  %v3449 = vsub.s32 0, %v3448
  %v3450 = vrot.slane %v3267, %v3449
  %v3452 = vmul.f32 %v3430, %v3450
  %v3453 = vmul.f32 %v3431, %v3450
  %v3454 = vmul.f32 %v3432, %v3450
  %v3455 = vmul.f32 %v3433, %v3450
  %v3456 = vmul.f32 %v3434, %v3450
  %v3457 = vmul.f32 %v3435, %v3450
  %v3458 = vmul.f32 %v3436, %v3450
  %v3459 = vmul.f32 %v3437, %v3450
  %v3460 = vmul.f32 %v3438, %v3450
  %v3461 = vmul.f32 %v3439, %v3450
  %v3462 = vmul.f32 %v3440, %v3450
  %v3463 = vmul.f32 %v3441, %v3450
  %v3464 = vmul.f32 %v3442, %v3450
  %v3465 = vmul.f32 %v3443, %v3450
  %v3466 = vmul.f32 %v3444, %v3450
  %v3467 = vmul.f32 %v3445, %v3450
  %v3469 = vlaneseq
  %v3470 = vshrl.u32 %v3469, 7
  %v3471 = vsub.s32 0, %v3470
  %v3472 = vrot.slane %v3268, %v3471
  %v3474 = vadd.f32 %v3452, %v3472
  %v3475 = vadd.f32 %v3453, %v3472
  %v3476 = vadd.f32 %v3454, %v3472
  %v3477 = vadd.f32 %v3455, %v3472
  %v3478 = vadd.f32 %v3456, %v3472
  %v3479 = vadd.f32 %v3457, %v3472
  %v3480 = vadd.f32 %v3458, %v3472
  %v3481 = vadd.f32 %v3459, %v3472
  %v3482 = vadd.f32 %v3460, %v3472
  %v3483 = vadd.f32 %v3461, %v3472
  %v3484 = vadd.f32 %v3462, %v3472
  %v3485 = vadd.f32 %v3463, %v3472
  %v3486 = vadd.f32 %v3464, %v3472
  %v3487 = vadd.f32 %v3465, %v3472
  %v3488 = vadd.f32 %v3466, %v3472
  %v3489 = vadd.f32 %v3467, %v3472
  %v3490 = vpack.c.bf16 %v3475, %v3474
  %v3491 = vpack.c.bf16 %v3477, %v3476
  %v3492 = vpack.c.bf16 %v3479, %v3478
  %v3493 = vpack.c.bf16 %v3481, %v3480
  %v3494 = vpack.c.bf16 %v3483, %v3482
  %v3495 = vpack.c.bf16 %v3485, %v3484
  %v3496 = vpack.c.bf16 %v3487, %v3486
  %v3497 = vpack.c.bf16 %v3489, %v3488
  %v3498 = vld [vmem:[%s14] sm:$0xff]
  %v3499 = vld [vmem:[%s14 + $0x8] sm:$0xff]
  %v3500 = vld [vmem:[%s14 + $0x10] sm:$0xff]
  %v3501 = vld [vmem:[%s14 + $0x18] sm:$0xff]
  %v3502 = vld [vmem:[%s14 + $0x20] sm:$0xff]
  %v3503 = vld [vmem:[%s14 + $0x28] sm:$0xff]
  %v3504 = vld [vmem:[%s14 + $0x30] sm:$0xff]
  %v3505 = vld [vmem:[%s14 + $0x38] sm:$0xff]
  %v3506 = vld [vmem:[%s14 + $0x40] sm:$0xff]
  %v3507 = vld [vmem:[%s14 + $0x48] sm:$0xff]
  %v3508 = vld [vmem:[%s14 + $0x50] sm:$0xff]
  %v3509 = vld [vmem:[%s14 + $0x58] sm:$0xff]
  %v3510 = vld [vmem:[%s14 + $0x60] sm:$0xff]
  %v3511 = vld [vmem:[%s14 + $0x68] sm:$0xff]
  %v3512 = vld [vmem:[%s14 + $0x70] sm:$0xff]
  %v3513 = vld [vmem:[%s14 + $0x78] sm:$0xff]
  %v3514 = vld [vmem:[%s15] sm:$0x3]
  %v3516 = vlaneseq
  %v3517 = vshrl.u32 %v3516, 7
  %v3518 = vsub.s32 0, %v3517
  %v3519 = vrot.slane %v3514, %v3518
  %v3520 = vlaneseq
  %v3521 = vshrl.u32 %v3520, 7
  %v3522 = vsub.s32 1, %v3521
  %v3523 = vrot.slane %v3514, %v3522
  %v3542 = vunpack.c.l.b16 %v3498
  %v3543 = vunpack.c.h.b16 %v3498
  %v3544 = vunpack.c.l.b16 %v3499
  %v3545 = vunpack.c.h.b16 %v3499
  %v3546 = vunpack.c.l.b16 %v3500
  %v3547 = vunpack.c.h.b16 %v3500
  %v3548 = vunpack.c.l.b16 %v3501
  %v3549 = vunpack.c.h.b16 %v3501
  %v3550 = vunpack.c.l.b16 %v3502
  %v3551 = vunpack.c.h.b16 %v3502
  %v3552 = vunpack.c.l.b16 %v3503
  %v3553 = vunpack.c.h.b16 %v3503
  %v3554 = vunpack.c.l.b16 %v3504
  %v3555 = vunpack.c.h.b16 %v3504
  %v3556 = vunpack.c.l.b16 %v3505
  %v3557 = vunpack.c.h.b16 %v3505
  %v3558 = vunpack.c.l.b16 %v3506
  %v3559 = vunpack.c.h.b16 %v3506
  %v3560 = vunpack.c.l.b16 %v3507
  %v3561 = vunpack.c.h.b16 %v3507
  %v3562 = vunpack.c.l.b16 %v3508
  %v3563 = vunpack.c.h.b16 %v3508
  %v3564 = vunpack.c.l.b16 %v3509
  %v3565 = vunpack.c.h.b16 %v3509
  %v3566 = vunpack.c.l.b16 %v3510
  %v3567 = vunpack.c.h.b16 %v3510
  %v3568 = vunpack.c.l.b16 %v3511
  %v3569 = vunpack.c.h.b16 %v3511
  %v3570 = vunpack.c.l.b16 %v3512
  %v3571 = vunpack.c.h.b16 %v3512
  %v3572 = vunpack.c.l.b16 %v3513
  %v3573 = vunpack.c.h.b16 %v3513
  %v3574 = vpack.c.b16 %v3544, %v3542
  %v3575 = vpack.c.b16 %v3545, %v3543
  %v3576 = vpack.c.b16 %v3548, %v3546
  %v3577 = vpack.c.b16 %v3549, %v3547
  %v3578 = vpack.c.b16 %v3552, %v3550
  %v3579 = vpack.c.b16 %v3553, %v3551
  %v3580 = vpack.c.b16 %v3556, %v3554
  %v3581 = vpack.c.b16 %v3557, %v3555
  %v3582 = vpack.c.b16 %v3560, %v3558
  %v3583 = vpack.c.b16 %v3561, %v3559
  %v3584 = vpack.c.b16 %v3564, %v3562
  %v3585 = vpack.c.b16 %v3565, %v3563
  %v3586 = vpack.c.b16 %v3568, %v3566
  %v3587 = vpack.c.b16 %v3569, %v3567
  %v3588 = vpack.c.b16 %v3572, %v3570
  %v3589 = vpack.c.b16 %v3573, %v3571
  %3606 = vmatprep.subr.bf16.mxu0 %v3575
  %3607 = vmatpush1.bf16.msra.mxu0 %v3574
  %3608 = vmatprep.subr.bf16.mxu0 %v3577
  %3609 = vmatpush1.bf16.msra.mxu0 %v3576
  %3610 = vmatprep.subr.bf16.mxu0 %v3579
  %3611 = vmatpush1.bf16.msra.mxu0 %v3578
  %3612 = vmatprep.subr.bf16.mxu0 %v3581
  %3613 = vmatpush1.bf16.msra.mxu0 %v3580
  %3614 = vmatprep.subr.bf16.mxu0 %v3583
  %3615 = vmatpush1.bf16.msra.mxu0 %v3582
  %3616 = vmatprep.subr.bf16.mxu0 %v3585
  %3617 = vmatpush1.bf16.msra.mxu0 %v3584
  %3618 = vmatprep.subr.bf16.mxu0 %v3587
  %3619 = vmatpush1.bf16.msra.mxu0 %v3586
  %3620 = vmatprep.subr.bf16.mxu0 %v3589
  %3621 = vmatpush1.bf16.msra.mxu0 %v3588
  %3622 = vmatprep.subr.bf16.mxu0 0
  %3623 = vmatpush1.bf16.msra.mxu0 0
  %3624 = vmatprep.subr.bf16.mxu0 0
  %3625 = vmatpush1.bf16.msra.mxu0 0
  %3626 = vmatprep.subr.bf16.mxu0 0
  %3627 = vmatpush1.bf16.msra.mxu0 0
  %3628 = vmatprep.subr.bf16.mxu0 0
  %3629 = vmatpush1.bf16.msra.mxu0 0
  %3630 = vmatprep.subr.bf16.mxu0 0
  %3631 = vmatpush1.bf16.msra.mxu0 0
  %3632 = vmatprep.subr.bf16.mxu0 0
  %3633 = vmatpush1.bf16.msra.mxu0 0
  %3634 = vmatprep.subr.bf16.mxu0 0
  %3635 = vmatpush1.bf16.msra.mxu0 0
  %3636 = vmatprep.subr.bf16.mxu0 0
  %3637 = vmatpush1.bf16.msra.mxu0 0
  %3638 = vmatprep.mubr.bf16.mxu0 0
  %3639 = vmatmul.mubr.bf16.gmra.mrb[0].mxu0 %v3490
  %v3640 = vpop.f32.mrb[0].mxu0
  %v3641 = vadd.f32 %v3519, %v3640
  %v3642 = vpop.f32.mrb[0].mxu0
  %v3643 = vadd.f32 %v3523, %v3642
  %v3644 = vpop.f32.mrb[0].mxu0
  %v3645 = vadd.f32 %v3519, %v3644
  %v3646 = vpop.f32.mrb[0].mxu0
  %v3647 = vadd.f32 %v3523, %v3646
  %3648 = vmatprep.mubr.bf16.mxu0 0
  %3649 = vmatmul.mubr.bf16.gmra.mrb[0].mxu0 %v3491
  %v3650 = vpop.f32.mrb[0].mxu0
  %v3651 = vadd.f32 %v3519, %v3650
  %v3652 = vpop.f32.mrb[0].mxu0
  %v3653 = vadd.f32 %v3523, %v3652
  %v3654 = vpop.f32.mrb[0].mxu0
  %v3655 = vadd.f32 %v3519, %v3654
  %v3656 = vpop.f32.mrb[0].mxu0
  %v3657 = vadd.f32 %v3523, %v3656
  %3658 = vmatprep.mubr.bf16.mxu0 0
  %3659 = vmatmul.mubr.bf16.gmra.mrb[0].mxu0 %v3492
  %v3660 = vpop.f32.mrb[0].mxu0
  %v3661 = vadd.f32 %v3519, %v3660
  %v3662 = vpop.f32.mrb[0].mxu0
  %v3663 = vadd.f32 %v3523, %v3662
  %v3664 = vpop.f32.mrb[0].mxu0
  %v3665 = vadd.f32 %v3519, %v3664
  %v3666 = vpop.f32.mrb[0].mxu0
  %v3667 = vadd.f32 %v3523, %v3666
  %3668 = vmatprep.mubr.bf16.mxu0 0
  %3669 = vmatmul.mubr.bf16.gmra.mrb[0].mxu0 %v3493
  %v3670 = vpop.f32.mrb[0].mxu0
  %v3671 = vadd.f32 %v3519, %v3670
  %v3672 = vpop.f32.mrb[0].mxu0
  %v3673 = vadd.f32 %v3523, %v3672
  %v3674 = vpop.f32.mrb[0].mxu0
  %v3675 = vadd.f32 %v3519, %v3674
  %v3676 = vpop.f32.mrb[0].mxu0
  %v3677 = vadd.f32 %v3523, %v3676
  %3678 = vmatprep.mubr.bf16.mxu0 0
  %3679 = vmatmul.mubr.bf16.gmra.mrb[0].mxu0 %v3494
  %v3680 = vpop.f32.mrb[0].mxu0
  %v3681 = vadd.f32 %v3519, %v3680
  %v3682 = vpop.f32.mrb[0].mxu0
  %v3683 = vadd.f32 %v3523, %v3682
  %v3684 = vpop.f32.mrb[0].mxu0
  %v3685 = vadd.f32 %v3519, %v3684
  %v3686 = vpop.f32.mrb[0].mxu0
  %v3687 = vadd.f32 %v3523, %v3686
  %3688 = vmatprep.mubr.bf16.mxu0 0
  %3689 = vmatmul.mubr.bf16.gmra.mrb[0].mxu0 %v3495
  %v3690 = vpop.f32.mrb[0].mxu0
  %v3691 = vadd.f32 %v3519, %v3690
  %v3692 = vpop.f32.mrb[0].mxu0
  %v3693 = vadd.f32 %v3523, %v3692
  %v3694 = vpop.f32.mrb[0].mxu0
  %v3695 = vadd.f32 %v3519, %v3694
  %v3696 = vpop.f32.mrb[0].mxu0
  %v3697 = vadd.f32 %v3523, %v3696
  %3698 = vmatprep.mubr.bf16.mxu0 0
  %3699 = vmatmul.mubr.bf16.gmra.mrb[0].mxu0 %v3496
  %v3700 = vpop.f32.mrb[0].mxu0
  %v3701 = vadd.f32 %v3519, %v3700
  %v3702 = vpop.f32.mrb[0].mxu0
  %v3703 = vadd.f32 %v3523, %v3702
  %v3704 = vpop.f32.mrb[0].mxu0
  %v3705 = vadd.f32 %v3519, %v3704
  %v3706 = vpop.f32.mrb[0].mxu0
  %v3707 = vadd.f32 %v3523, %v3706
  %3708 = vmatprep.mubr.bf16.mxu0 0
  %3709 = vmatmul.mubr.bf16.gmra.mrb[0].mxu0 %v3497
  %v3710 = vpop.f32.mrb[0].mxu0
  %v3711 = vadd.f32 %v3519, %v3710
  %v3712 = vpop.f32.mrb[0].mxu0
  %v3713 = vadd.f32 %v3523, %v3712
  %v3714 = vpop.f32.mrb[0].mxu0
  %v3715 = vadd.f32 %v3519, %v3714
  %v3716 = vpop.f32.mrb[0].mxu0
  %v3717 = vadd.f32 %v3523, %v3716
  %3718 = vdwg.mxu0
  %v3719 = vmul.f32 %v3641, %v3641
  %v3720 = vmul.f32 %v3643, %v3643
  %v3721 = vmul.f32 %v3645, %v3645
  %v3722 = vmul.f32 %v3647, %v3647
  %v3723 = vmul.f32 %v3651, %v3651
  %v3724 = vmul.f32 %v3653, %v3653
  %v3725 = vmul.f32 %v3655, %v3655
  %v3726 = vmul.f32 %v3657, %v3657
  %v3727 = vmul.f32 %v3661, %v3661
  %v3728 = vmul.f32 %v3663, %v3663
  %v3729 = vmul.f32 %v3665, %v3665
  %v3730 = vmul.f32 %v3667, %v3667
  %v3731 = vmul.f32 %v3671, %v3671
  %v3732 = vmul.f32 %v3673, %v3673
  %v3733 = vmul.f32 %v3675, %v3675
  %v3734 = vmul.f32 %v3677, %v3677
  %v3735 = vmul.f32 %v3681, %v3681
  %v3736 = vmul.f32 %v3683, %v3683
  %v3737 = vmul.f32 %v3685, %v3685
  %v3738 = vmul.f32 %v3687, %v3687
  %v3739 = vmul.f32 %v3691, %v3691
  %v3740 = vmul.f32 %v3693, %v3693
  %v3741 = vmul.f32 %v3695, %v3695
  %v3742 = vmul.f32 %v3697, %v3697
  %v3743 = vmul.f32 %v3701, %v3701
  %v3744 = vmul.f32 %v3703, %v3703
  %v3745 = vmul.f32 %v3705, %v3705
  %v3746 = vmul.f32 %v3707, %v3707
  %v3747 = vmul.f32 %v3711, %v3711
  %v3748 = vmul.f32 %v3713, %v3713
  %v3749 = vmul.f32 %v3715, %v3715
  %v3750 = vmul.f32 %v3717, %v3717
  %v3751 = vmul.f32 %v3641, %v3719
  %v3752 = vmul.f32 %v3643, %v3720
  %v3753 = vmul.f32 %v3645, %v3721
  %v3754 = vmul.f32 %v3647, %v3722
  %v3755 = vmul.f32 %v3651, %v3723
  %v3756 = vmul.f32 %v3653, %v3724
  %v3757 = vmul.f32 %v3655, %v3725
  %v3758 = vmul.f32 %v3657, %v3726
  %v3759 = vmul.f32 %v3661, %v3727
  %v3760 = vmul.f32 %v3663, %v3728
  %v3761 = vmul.f32 %v3665, %v3729
  %v3762 = vmul.f32 %v3667, %v3730
  %v3763 = vmul.f32 %v3671, %v3731
  %v3764 = vmul.f32 %v3673, %v3732
  %v3765 = vmul.f32 %v3675, %v3733
  %v3766 = vmul.f32 %v3677, %v3734
  %v3767 = vmul.f32 %v3681, %v3735
  %v3768 = vmul.f32 %v3683, %v3736
  %v3769 = vmul.f32 %v3685, %v3737
  %v3770 = vmul.f32 %v3687, %v3738
  %v3771 = vmul.f32 %v3691, %v3739
  %v3772 = vmul.f32 %v3693, %v3740
  %v3773 = vmul.f32 %v3695, %v3741
  %v3774 = vmul.f32 %v3697, %v3742
  %v3775 = vmul.f32 %v3701, %v3743
  %v3776 = vmul.f32 %v3703, %v3744
  %v3777 = vmul.f32 %v3705, %v3745
  %v3778 = vmul.f32 %v3707, %v3746
  %v3779 = vmul.f32 %v3711, %v3747
  %v3780 = vmul.f32 %v3713, %v3748
  %v3781 = vmul.f32 %v3715, %v3749
  %v3782 = vmul.f32 %v3717, %v3750
  %v3783 = vmul.f32 %v3751, 0.044715
  %v3784 = vmul.f32 %v3752, 0.044715
  %v3785 = vmul.f32 %v3753, 0.044715
  %v3786 = vmul.f32 %v3754, 0.044715
  %v3787 = vmul.f32 %v3755, 0.044715
  %v3788 = vmul.f32 %v3756, 0.044715
  %v3789 = vmul.f32 %v3757, 0.044715
  %v3790 = vmul.f32 %v3758, 0.044715
  %v3791 = vmul.f32 %v3759, 0.044715
  %v3792 = vmul.f32 %v3760, 0.044715
  %v3793 = vmul.f32 %v3761, 0.044715
  %v3794 = vmul.f32 %v3762, 0.044715
  %v3795 = vmul.f32 %v3763, 0.044715
  %v3796 = vmul.f32 %v3764, 0.044715
  %v3797 = vmul.f32 %v3765, 0.044715
  %v3798 = vmul.f32 %v3766, 0.044715
  %v3799 = vmul.f32 %v3767, 0.044715
  %v3800 = vmul.f32 %v3768, 0.044715
  %v3801 = vmul.f32 %v3769, 0.044715
  %v3802 = vmul.f32 %v3770, 0.044715
  %v3803 = vmul.f32 %v3771, 0.044715
  %v3804 = vmul.f32 %v3772, 0.044715
  %v3805 = vmul.f32 %v3773, 0.044715
  %v3806 = vmul.f32 %v3774, 0.044715
  %v3807 = vmul.f32 %v3775, 0.044715
  %v3808 = vmul.f32 %v3776, 0.044715
  %v3809 = vmul.f32 %v3777, 0.044715
  %v3810 = vmul.f32 %v3778, 0.044715
  %v3811 = vmul.f32 %v3779, 0.044715
  %v3812 = vmul.f32 %v3780, 0.044715
  %v3813 = vmul.f32 %v3781, 0.044715
  %v3814 = vmul.f32 %v3782, 0.044715
  %v3815 = vadd.f32 %v3641, %v3783
  %v3816 = vadd.f32 %v3643, %v3784
  %v3817 = vadd.f32 %v3645, %v3785
  %v3818 = vadd.f32 %v3647, %v3786
  %v3819 = vadd.f32 %v3651, %v3787
  %v3820 = vadd.f32 %v3653, %v3788
  %v3821 = vadd.f32 %v3655, %v3789
  %v3822 = vadd.f32 %v3657, %v3790
  %v3823 = vadd.f32 %v3661, %v3791
  %v3824 = vadd.f32 %v3663, %v3792
  %v3825 = vadd.f32 %v3665, %v3793
  %v3826 = vadd.f32 %v3667, %v3794
  %v3827 = vadd.f32 %v3671, %v3795
  %v3828 = vadd.f32 %v3673, %v3796
  %v3829 = vadd.f32 %v3675, %v3797
  %v3830 = vadd.f32 %v3677, %v3798
  %v3831 = vadd.f32 %v3681, %v3799
  %v3832 = vadd.f32 %v3683, %v3800
  %v3833 = vadd.f32 %v3685, %v3801
  %v3834 = vadd.f32 %v3687, %v3802
  %v3835 = vadd.f32 %v3691, %v3803
  %v3836 = vadd.f32 %v3693, %v3804
  %v3837 = vadd.f32 %v3695, %v3805
  %v3838 = vadd.f32 %v3697, %v3806
  %v3839 = vadd.f32 %v3701, %v3807
  %v3840 = vadd.f32 %v3703, %v3808
  %v3841 = vadd.f32 %v3705, %v3809
  %v3842 = vadd.f32 %v3707, %v3810
  %v3843 = vadd.f32 %v3711, %v3811
  %v3844 = vadd.f32 %v3713, %v3812
  %v3845 = vadd.f32 %v3715, %v3813
  %v3846 = vadd.f32 %v3717, %v3814
  %v3847 = vmul.f32 %v3815, 0.7978846
  %v3848 = vmul.f32 %v3816, 0.7978846
  %v3849 = vmul.f32 %v3817, 0.7978846
  %v3850 = vmul.f32 %v3818, 0.7978846
  %v3851 = vmul.f32 %v3819, 0.7978846
  %v3852 = vmul.f32 %v3820, 0.7978846
  %v3853 = vmul.f32 %v3821, 0.7978846
  %v3854 = vmul.f32 %v3822, 0.7978846
  %v3855 = vmul.f32 %v3823, 0.7978846
  %v3856 = vmul.f32 %v3824, 0.7978846
  %v3857 = vmul.f32 %v3825, 0.7978846
  %v3858 = vmul.f32 %v3826, 0.7978846
  %v3859 = vmul.f32 %v3827, 0.7978846
  %v3860 = vmul.f32 %v3828, 0.7978846
  %v3861 = vmul.f32 %v3829, 0.7978846
  %v3862 = vmul.f32 %v3830, 0.7978846
  %v3863 = vmul.f32 %v3831, 0.7978846
  %v3864 = vmul.f32 %v3832, 0.7978846
  %v3865 = vmul.f32 %v3833, 0.7978846
  %v3866 = vmul.f32 %v3834, 0.7978846
  %v3867 = vmul.f32 %v3835, 0.7978846
  %v3868 = vmul.f32 %v3836, 0.7978846
  %v3869 = vmul.f32 %v3837, 0.7978846
  %v3870 = vmul.f32 %v3838, 0.7978846
  %v3871 = vmul.f32 %v3839, 0.7978846
  %v3872 = vmul.f32 %v3840, 0.7978846
  %v3873 = vmul.f32 %v3841, 0.7978846
  %v3874 = vmul.f32 %v3842, 0.7978846
  %v3875 = vmul.f32 %v3843, 0.7978846
  %v3876 = vmul.f32 %v3844, 0.7978846
  %v3877 = vmul.f32 %v3845, 0.7978846
  %v3878 = vmul.f32 %v3846, 0.7978846
  %v3879 = vtanh.pop %v3847
  %v3880 = vtanh.pop %v3848
  %v3881 = vtanh.pop %v3849
  %v3882 = vtanh.pop %v3850
  %v3883 = vtanh.pop %v3851
  %v3884 = vtanh.pop %v3852
  %v3885 = vtanh.pop %v3853
  %v3886 = vtanh.pop %v3854
  %v3887 = vtanh.pop %v3855
  %v3888 = vtanh.pop %v3856
  %v3889 = vtanh.pop %v3857
  %v3890 = vtanh.pop %v3858
  %v3891 = vtanh.pop %v3859
  %v3892 = vtanh.pop %v3860
  %v3893 = vtanh.pop %v3861
  %v3894 = vtanh.pop %v3862
  %v3895 = vtanh.pop %v3863
  %v3896 = vtanh.pop %v3864
  %v3897 = vtanh.pop %v3865
  %v3898 = vtanh.pop %v3866
  %v3899 = vtanh.pop %v3867
  %v3900 = vtanh.pop %v3868
  %v3901 = vtanh.pop %v3869
  %v3902 = vtanh.pop %v3870
  %v3903 = vtanh.pop %v3871
  %v3904 = vtanh.pop %v3872
  %v3905 = vtanh.pop %v3873
  %v3906 = vtanh.pop %v3874
  %v3907 = vtanh.pop %v3875
  %v3908 = vtanh.pop %v3876
  %v3909 = vtanh.pop %v3877
  %v3910 = vtanh.pop %v3878
  %v3911 = vadd.f32 %v3879, 1.0
  %v3912 = vadd.f32 %v3880, 1.0
  %v3913 = vadd.f32 %v3881, 1.0
  %v3914 = vadd.f32 %v3882, 1.0
  %v3915 = vadd.f32 %v3883, 1.0
  %v3916 = vadd.f32 %v3884, 1.0
  %v3917 = vadd.f32 %v3885, 1.0
  %v3918 = vadd.f32 %v3886, 1.0
  %v3919 = vadd.f32 %v3887, 1.0
  %v3920 = vadd.f32 %v3888, 1.0
  %v3921 = vadd.f32 %v3889, 1.0
  %v3922 = vadd.f32 %v3890, 1.0
  %v3923 = vadd.f32 %v3891, 1.0
  %v3924 = vadd.f32 %v3892, 1.0
  %v3925 = vadd.f32 %v3893, 1.0
  %v3926 = vadd.f32 %v3894, 1.0
  %v3927 = vadd.f32 %v3895, 1.0
  %v3928 = vadd.f32 %v3896, 1.0
  %v3929 = vadd.f32 %v3897, 1.0
  %v3930 = vadd.f32 %v3898, 1.0
  %v3931 = vadd.f32 %v3899, 1.0
  %v3932 = vadd.f32 %v3900, 1.0
  %v3933 = vadd.f32 %v3901, 1.0
  %v3934 = vadd.f32 %v3902, 1.0
  %v3935 = vadd.f32 %v3903, 1.0
  %v3936 = vadd.f32 %v3904, 1.0
  %v3937 = vadd.f32 %v3905, 1.0
  %v3938 = vadd.f32 %v3906, 1.0
  %v3939 = vadd.f32 %v3907, 1.0
  %v3940 = vadd.f32 %v3908, 1.0
  %v3941 = vadd.f32 %v3909, 1.0
  %v3942 = vadd.f32 %v3910, 1.0
  %v3943 = vmul.f32 %v3911, 0.5
  %v3944 = vmul.f32 %v3912, 0.5
  %v3945 = vmul.f32 %v3913, 0.5
  %v3946 = vmul.f32 %v3914, 0.5
  %v3947 = vmul.f32 %v3915, 0.5
  %v3948 = vmul.f32 %v3916, 0.5
  %v3949 = vmul.f32 %v3917, 0.5
  %v3950 = vmul.f32 %v3918, 0.5
  %v3951 = vmul.f32 %v3919, 0.5
  %v3952 = vmul.f32 %v3920, 0.5
  %v3953 = vmul.f32 %v3921, 0.5
  %v3954 = vmul.f32 %v3922, 0.5
  %v3955 = vmul.f32 %v3923, 0.5
  %v3956 = vmul.f32 %v3924, 0.5
  %v3957 = vmul.f32 %v3925, 0.5
  %v3958 = vmul.f32 %v3926, 0.5
  %v3959 = vmul.f32 %v3927, 0.5
  %v3960 = vmul.f32 %v3928, 0.5
  %v3961 = vmul.f32 %v3929, 0.5
  %v3962 = vmul.f32 %v3930, 0.5
  %v3963 = vmul.f32 %v3931, 0.5
  %v3964 = vmul.f32 %v3932, 0.5
  %v3965 = vmul.f32 %v3933, 0.5
  %v3966 = vmul.f32 %v3934, 0.5
  %v3967 = vmul.f32 %v3935, 0.5
  %v3968 = vmul.f32 %v3936, 0.5
  %v3969 = vmul.f32 %v3937, 0.5
  %v3970 = vmul.f32 %v3938, 0.5
  %v3971 = vmul.f32 %v3939, 0.5
  %v3972 = vmul.f32 %v3940, 0.5
  %v3973 = vmul.f32 %v3941, 0.5
  %v3974 = vmul.f32 %v3942, 0.5
  %v3975 = vmul.f32 %v3641, %v3943
  %v3976 = vmul.f32 %v3643, %v3944
  %v3977 = vmul.f32 %v3645, %v3945
  %v3978 = vmul.f32 %v3647, %v3946
  %v3979 = vmul.f32 %v3651, %v3947
  %v3980 = vmul.f32 %v3653, %v3948
  %v3981 = vmul.f32 %v3655, %v3949
  %v3982 = vmul.f32 %v3657, %v3950
  %v3983 = vmul.f32 %v3661, %v3951
  %v3984 = vmul.f32 %v3663, %v3952
  %v3985 = vmul.f32 %v3665, %v3953
  %v3986 = vmul.f32 %v3667, %v3954
  %v3987 = vmul.f32 %v3671, %v3955
  %v3988 = vmul.f32 %v3673, %v3956
  %v3989 = vmul.f32 %v3675, %v3957
  %v3990 = vmul.f32 %v3677, %v3958
  %v3991 = vmul.f32 %v3681, %v3959
  %v3992 = vmul.f32 %v3683, %v3960
  %v3993 = vmul.f32 %v3685, %v3961
  %v3994 = vmul.f32 %v3687, %v3962
  %v3995 = vmul.f32 %v3691, %v3963
  %v3996 = vmul.f32 %v3693, %v3964
  %v3997 = vmul.f32 %v3695, %v3965
  %v3998 = vmul.f32 %v3697, %v3966
  %v3999 = vmul.f32 %v3701, %v3967
  %v4000 = vmul.f32 %v3703, %v3968
  %v4001 = vmul.f32 %v3705, %v3969
  %v4002 = vmul.f32 %v3707, %v3970
  %v4003 = vmul.f32 %v3711, %v3971
  %v4004 = vmul.f32 %v3713, %v3972
  %v4005 = vmul.f32 %v3715, %v3973
  %v4006 = vmul.f32 %v3717, %v3974
  %v4007 = vpack.c.bf16 %v3977, %v3975
  %v4008 = vpack.c.bf16 %v3978, %v3976
  %v4009 = vpack.c.bf16 %v3981, %v3979
  %v4010 = vpack.c.bf16 %v3982, %v3980
  %v4011 = vpack.c.bf16 %v3985, %v3983
  %v4012 = vpack.c.bf16 %v3986, %v3984
  %v4013 = vpack.c.bf16 %v3989, %v3987
  %v4014 = vpack.c.bf16 %v3990, %v3988
  %v4015 = vpack.c.bf16 %v3993, %v3991
  %v4016 = vpack.c.bf16 %v3994, %v3992
  %v4017 = vpack.c.bf16 %v3997, %v3995
  %v4018 = vpack.c.bf16 %v3998, %v3996
  %v4019 = vpack.c.bf16 %v4001, %v3999
  %v4020 = vpack.c.bf16 %v4002, %v4000
  %v4021 = vpack.c.bf16 %v4005, %v4003
  %v4022 = vpack.c.bf16 %v4006, %v4004
  %v4023 = vld [vmem:[%s16] sm:$0xf]
  %v4024 = vld [vmem:[%s16 + $0x4] sm:$0xf]
  %v4025 = vld [vmem:[%s16 + $0x8] sm:$0xf]
  %v4026 = vld [vmem:[%s16 + $0xc] sm:$0xf]
  %v4027 = vld [vmem:[%s16 + $0x10] sm:$0xf]
  %v4028 = vld [vmem:[%s16 + $0x14] sm:$0xf]
  %v4029 = vld [vmem:[%s16 + $0x18] sm:$0xf]
  %v4030 = vld [vmem:[%s16 + $0x1c] sm:$0xf]
  %v4031 = vld [vmem:[%s16 + $0x20] sm:$0xf]
  %v4032 = vld [vmem:[%s16 + $0x24] sm:$0xf]
  %v4033 = vld [vmem:[%s16 + $0x28] sm:$0xf]
  %v4034 = vld [vmem:[%s16 + $0x2c] sm:$0xf]
  %v4035 = vld [vmem:[%s16 + $0x30] sm:$0xf]
  %v4036 = vld [vmem:[%s16 + $0x34] sm:$0xf]
  %v4037 = vld [vmem:[%s16 + $0x38] sm:$0xf]
  %v4038 = vld [vmem:[%s16 + $0x3c] sm:$0xf]
  %v4039 = vld [vmem:[%s16 + $0x40] sm:$0xf]
  %v4040 = vld [vmem:[%s16 + $0x44] sm:$0xf]
  %v4041 = vld [vmem:[%s16 + $0x48] sm:$0xf]
  %v4042 = vld [vmem:[%s16 + $0x4c] sm:$0xf]
  %v4043 = vld [vmem:[%s16 + $0x50] sm:$0xf]
  %v4044 = vld [vmem:[%s16 + $0x54] sm:$0xf]
  %v4045 = vld [vmem:[%s16 + $0x58] sm:$0xf]
  %v4046 = vld [vmem:[%s16 + $0x5c] sm:$0xf]
  %v4047 = vld [vmem:[%s16 + $0x60] sm:$0xf]
  %v4048 = vld [vmem:[%s16 + $0x64] sm:$0xf]
  %v4049 = vld [vmem:[%s16 + $0x68] sm:$0xf]
  %v4050 = vld [vmem:[%s16 + $0x6c] sm:$0xf]
  %v4051 = vld [vmem:[%s16 + $0x70] sm:$0xf]
  %v4052 = vld [vmem:[%s16 + $0x74] sm:$0xf]
  %v4053 = vld [vmem:[%s16 + $0x78] sm:$0xf]
  %v4054 = vld [vmem:[%s16 + $0x7c] sm:$0xf]
  %v4055 = vld [vmem:[%s17] sm:$0x1]
  %v4057 = vlaneseq
  %v4058 = vshrl.u32 %v4057, 7
  %v4059 = vsub.s32 0, %v4058
  %v4060 = vrot.slane %v4055, %v4059
  %v4094 = vunpack.c.l.b16 %v4023
  %v4095 = vunpack.c.l.b16 %v4024
  %v4096 = vunpack.c.l.b16 %v4025
  %v4097 = vunpack.c.l.b16 %v4026
  %v4098 = vunpack.c.l.b16 %v4027
  %v4099 = vunpack.c.l.b16 %v4028
  %v4100 = vunpack.c.l.b16 %v4029
  %v4101 = vunpack.c.l.b16 %v4030
  %v4102 = vunpack.c.l.b16 %v4031
  %v4103 = vunpack.c.l.b16 %v4032
  %v4104 = vunpack.c.l.b16 %v4033
  %v4105 = vunpack.c.l.b16 %v4034
  %v4106 = vunpack.c.l.b16 %v4035
  %v4107 = vunpack.c.l.b16 %v4036
  %v4108 = vunpack.c.l.b16 %v4037
  %v4109 = vunpack.c.l.b16 %v4038
  %v4110 = vunpack.c.l.b16 %v4039
  %v4111 = vunpack.c.l.b16 %v4040
  %v4112 = vunpack.c.l.b16 %v4041
  %v4113 = vunpack.c.l.b16 %v4042
  %v4114 = vunpack.c.l.b16 %v4043
  %v4115 = vunpack.c.l.b16 %v4044
  %v4116 = vunpack.c.l.b16 %v4045
  %v4117 = vunpack.c.l.b16 %v4046
  %v4118 = vunpack.c.l.b16 %v4047
  %v4119 = vunpack.c.l.b16 %v4048
  %v4120 = vunpack.c.l.b16 %v4049
  %v4121 = vunpack.c.l.b16 %v4050
  %v4122 = vunpack.c.l.b16 %v4051
  %v4123 = vunpack.c.l.b16 %v4052
  %v4124 = vunpack.c.l.b16 %v4053
  %v4125 = vunpack.c.l.b16 %v4054
  %v4126 = vpack.c.b16 %v4095, %v4094
  %v4127 = vpack.c.b16 %v4097, %v4096
  %v4128 = vpack.c.b16 %v4099, %v4098
  %v4129 = vpack.c.b16 %v4101, %v4100
  %v4130 = vpack.c.b16 %v4103, %v4102
  %v4131 = vpack.c.b16 %v4105, %v4104
  %v4132 = vpack.c.b16 %v4107, %v4106
  %v4133 = vpack.c.b16 %v4109, %v4108
  %v4134 = vpack.c.b16 %v4111, %v4110
  %v4135 = vpack.c.b16 %v4113, %v4112
  %v4136 = vpack.c.b16 %v4115, %v4114
  %v4137 = vpack.c.b16 %v4117, %v4116
  %v4138 = vpack.c.b16 %v4119, %v4118
  %v4139 = vpack.c.b16 %v4121, %v4120
  %v4140 = vpack.c.b16 %v4123, %v4122
  %v4141 = vpack.c.b16 %v4125, %v4124
  %4158 = vmatprep.subr.bf16.mxu0 0
  %4159 = vmatpush1.bf16.msra.mxu0 %v4126
  %4160 = vmatprep.subr.bf16.mxu0 0
  %4161 = vmatpush1.bf16.msra.mxu0 %v4127
  %4162 = vmatprep.subr.bf16.mxu0 0
  %4163 = vmatpush1.bf16.msra.mxu0 %v4128
  %4164 = vmatprep.subr.bf16.mxu0 0
  %4165 = vmatpush1.bf16.msra.mxu0 %v4129
  %4166 = vmatprep.subr.bf16.mxu0 0
  %4167 = vmatpush1.bf16.msra.mxu0 %v4130
  %4168 = vmatprep.subr.bf16.mxu0 0
  %4169 = vmatpush1.bf16.msra.mxu0 %v4131
  %4170 = vmatprep.subr.bf16.mxu0 0
  %4171 = vmatpush1.bf16.msra.mxu0 %v4132
  %4172 = vmatprep.subr.bf16.mxu0 0
  %4173 = vmatpush1.bf16.msra.mxu0 %v4133
  %4174 = vmatprep.subr.bf16.mxu0 0
  %4175 = vmatpush1.bf16.msra.mxu0 %v4134
  %4176 = vmatprep.subr.bf16.mxu0 0
  %4177 = vmatpush1.bf16.msra.mxu0 %v4135
  %4178 = vmatprep.subr.bf16.mxu0 0
  %4179 = vmatpush1.bf16.msra.mxu0 %v4136
  %4180 = vmatprep.subr.bf16.mxu0 0
  %4181 = vmatpush1.bf16.msra.mxu0 %v4137
  %4182 = vmatprep.subr.bf16.mxu0 0
  %4183 = vmatpush1.bf16.msra.mxu0 %v4138
  %4184 = vmatprep.subr.bf16.mxu0 0
  %4185 = vmatpush1.bf16.msra.mxu0 %v4139
  %4186 = vmatprep.subr.bf16.mxu0 0
  %4187 = vmatpush1.bf16.msra.mxu0 %v4140
  %4188 = vmatprep.subr.bf16.mxu0 0
  %4189 = vmatpush1.bf16.msra.mxu0 %v4141
  %4190 = vmatprep.mubr.bf16.mxu0 %v4008
  %4191 = vmatmul.mubr.bf16.gmra.mrb[0].mxu0 %v4007
  %v4192 = vpop.f32.mrb[0].mxu0
  %v4193 = vadd.f32 %v4060, %v4192
  %v4194 = vpop.f32.mrb[0].mxu0
  %v4195 = vpop.f32.mrb[0].mxu0
  %v4196 = vadd.f32 %v4060, %v4195
  %v4197 = vpop.f32.mrb[0].mxu0
  %4198 = vmatprep.mubr.bf16.mxu0 %v4010
  %4199 = vmatmul.mubr.bf16.gmra.mrb[0].mxu0 %v4009
  %v4200 = vpop.f32.mrb[0].mxu0
  %v4201 = vadd.f32 %v4060, %v4200
  %v4202 = vpop.f32.mrb[0].mxu0
  %v4203 = vpop.f32.mrb[0].mxu0
  %v4204 = vadd.f32 %v4060, %v4203
  %v4205 = vpop.f32.mrb[0].mxu0
  %4206 = vmatprep.mubr.bf16.mxu0 %v4012
  %4207 = vmatmul.mubr.bf16.gmra.mrb[0].mxu0 %v4011
  %v4208 = vpop.f32.mrb[0].mxu0
  %v4209 = vadd.f32 %v4060, %v4208
  %v4210 = vpop.f32.mrb[0].mxu0
  %v4211 = vpop.f32.mrb[0].mxu0
  %v4212 = vadd.f32 %v4060, %v4211
  %v4213 = vpop.f32.mrb[0].mxu0
  %4214 = vmatprep.mubr.bf16.mxu0 %v4014
  %4215 = vmatmul.mubr.bf16.gmra.mrb[0].mxu0 %v4013
  %v4216 = vpop.f32.mrb[0].mxu0
  %v4217 = vadd.f32 %v4060, %v4216
  %v4218 = vpop.f32.mrb[0].mxu0
  %v4219 = vpop.f32.mrb[0].mxu0
  %v4220 = vadd.f32 %v4060, %v4219
  %v4221 = vpop.f32.mrb[0].mxu0
  %4222 = vmatprep.mubr.bf16.mxu0 %v4016
  %4223 = vmatmul.mubr.bf16.gmra.mrb[0].mxu0 %v4015
  %v4224 = vpop.f32.mrb[0].mxu0
  %v4225 = vadd.f32 %v4060, %v4224
  %v4226 = vpop.f32.mrb[0].mxu0
  %v4227 = vpop.f32.mrb[0].mxu0
  %v4228 = vadd.f32 %v4060, %v4227
  %v4229 = vpop.f32.mrb[0].mxu0
  %4230 = vmatprep.mubr.bf16.mxu0 %v4018
  %4231 = vmatmul.mubr.bf16.gmra.mrb[0].mxu0 %v4017
  %v4232 = vpop.f32.mrb[0].mxu0
  %v4233 = vadd.f32 %v4060, %v4232
  %v4234 = vpop.f32.mrb[0].mxu0
  %v4235 = vpop.f32.mrb[0].mxu0
  %v4236 = vadd.f32 %v4060, %v4235
  %v4237 = vpop.f32.mrb[0].mxu0
  %4238 = vmatprep.mubr.bf16.mxu0 %v4020
  %4239 = vmatmul.mubr.bf16.gmra.mrb[0].mxu0 %v4019
  %v4240 = vpop.f32.mrb[0].mxu0
  %v4241 = vadd.f32 %v4060, %v4240
  %v4242 = vpop.f32.mrb[0].mxu0
  %v4243 = vpop.f32.mrb[0].mxu0
  %v4244 = vadd.f32 %v4060, %v4243
  %v4245 = vpop.f32.mrb[0].mxu0
  %4246 = vmatprep.mubr.bf16.mxu0 %v4022
  %4247 = vmatmul.mubr.bf16.gmra.mrb[0].mxu0 %v4021
  %v4248 = vpop.f32.mrb[0].mxu0
  %v4249 = vadd.f32 %v4060, %v4248
  %v4250 = vpop.f32.mrb[0].mxu0
  %v4251 = vpop.f32.mrb[0].mxu0
  %v4252 = vadd.f32 %v4060, %v4251
  %v4253 = vpop.f32.mrb[0].mxu0
  %4254 = vdwg.mxu0
  %v4255 = vadd.f32 %v3474, %v4193
  %v4256 = vadd.f32 %v3475, %v4196
  %v4257 = vadd.f32 %v3476, %v4201
  %v4258 = vadd.f32 %v3477, %v4204
  %v4259 = vadd.f32 %v3478, %v4209
  %v4260 = vadd.f32 %v3479, %v4212
  %v4261 = vadd.f32 %v3480, %v4217
  %v4262 = vadd.f32 %v3481, %v4220
  %v4263 = vadd.f32 %v3482, %v4225
  %v4264 = vadd.f32 %v3483, %v4228
  %v4265 = vadd.f32 %v3484, %v4233
  %v4266 = vadd.f32 %v3485, %v4236
  %v4267 = vadd.f32 %v3486, %v4241
  %v4268 = vadd.f32 %v3487, %v4244
  %v4269 = vadd.f32 %v3488, %v4249
  %v4270 = vadd.f32 %v3489, %v4252
  %v4271 = vld [vmem:[%s18] sm:$0x1]
  %v4272 = vld [vmem:[%s19] sm:$0x1]
  %4273 = vadd.xlane.f32.xlu0 %v4255
  %v4274 = vpop.xlane.xlu0 %4273
  %4275 = vadd.xlane.f32.xlu0 %v4256
  %v4276 = vpop.xlane.xlu0 %4275
  %4277 = vadd.xlane.f32.xlu0 %v4257
  %v4278 = vpop.xlane.xlu0 %4277
  %4279 = vadd.xlane.f32.xlu0 %v4258
  %v4280 = vpop.xlane.xlu0 %4279
  %4281 = vadd.xlane.f32.xlu0 %v4259
  %v4282 = vpop.xlane.xlu0 %4281
  %4283 = vadd.xlane.f32.xlu0 %v4260
  %v4284 = vpop.xlane.xlu0 %4283
  %4285 = vadd.xlane.f32.xlu0 %v4261
  %v4286 = vpop.xlane.xlu0 %4285
  %4287 = vadd.xlane.f32.xlu0 %v4262
  %v4288 = vpop.xlane.xlu0 %4287
  %4289 = vadd.xlane.f32.xlu0 %v4263
  %v4290 = vpop.xlane.xlu0 %4289
  %4291 = vadd.xlane.f32.xlu0 %v4264
  %v4292 = vpop.xlane.xlu0 %4291
  %4293 = vadd.xlane.f32.xlu0 %v4265
  %v4294 = vpop.xlane.xlu0 %4293
  %4295 = vadd.xlane.f32.xlu0 %v4266
  %v4296 = vpop.xlane.xlu0 %4295
  %4297 = vadd.xlane.f32.xlu0 %v4267
  %v4298 = vpop.xlane.xlu0 %4297
  %4299 = vadd.xlane.f32.xlu0 %v4268
  %v4300 = vpop.xlane.xlu0 %4299
  %4301 = vadd.xlane.f32.xlu0 %v4269
  %v4302 = vpop.xlane.xlu0 %4301
  %4303 = vadd.xlane.f32.xlu0 %v4270
  %v4304 = vpop.xlane.xlu0 %4303
  %v4305 = vmul.f32 %v4274, %v3301
  %v4306 = vmul.f32 %v4276, %v3301
  %v4307 = vmul.f32 %v4278, %v3301
  %v4308 = vmul.f32 %v4280, %v3301
  %v4309 = vmul.f32 %v4282, %v3301
  %v4310 = vmul.f32 %v4284, %v3301
  %v4311 = vmul.f32 %v4286, %v3301
  %v4312 = vmul.f32 %v4288, %v3301
  %v4313 = vmul.f32 %v4290, %v3301
  %v4314 = vmul.f32 %v4292, %v3301
  %v4315 = vmul.f32 %v4294, %v3301
  %v4316 = vmul.f32 %v4296, %v3301
  %v4317 = vmul.f32 %v4298, %v3301
  %v4318 = vmul.f32 %v4300, %v3301
  %v4319 = vmul.f32 %v4302, %v3301
  %v4320 = vmul.f32 %v4304, %v3301
  %v4321 = vsub.f32 %v4255, %v4305
  %v4322 = vsub.f32 %v4256, %v4306
  %v4323 = vsub.f32 %v4257, %v4307
  %v4324 = vsub.f32 %v4258, %v4308
  %v4325 = vsub.f32 %v4259, %v4309
  %v4326 = vsub.f32 %v4260, %v4310
  %v4327 = vsub.f32 %v4261, %v4311
  %v4328 = vsub.f32 %v4262, %v4312
  %v4329 = vsub.f32 %v4263, %v4313
  %v4330 = vsub.f32 %v4264, %v4314
  %v4331 = vsub.f32 %v4265, %v4315
  %v4332 = vsub.f32 %v4266, %v4316
  %v4333 = vsub.f32 %v4267, %v4317
  %v4334 = vsub.f32 %v4268, %v4318
  %v4335 = vsub.f32 %v4269, %v4319
  %v4336 = vsub.f32 %v4270, %v4320
  %v4337 = vmul.f32 %v4321, %v4321
  %v4338 = vmul.f32 %v4322, %v4322
  %v4339 = vmul.f32 %v4323, %v4323
  %v4340 = vmul.f32 %v4324, %v4324
  %v4341 = vmul.f32 %v4325, %v4325
  %v4342 = vmul.f32 %v4326, %v4326
  %v4343 = vmul.f32 %v4327, %v4327
  %v4344 = vmul.f32 %v4328, %v4328
  %v4345 = vmul.f32 %v4329, %v4329
  %v4346 = vmul.f32 %v4330, %v4330
  %v4347 = vmul.f32 %v4331, %v4331
  %v4348 = vmul.f32 %v4332, %v4332
  %v4349 = vmul.f32 %v4333, %v4333
  %v4350 = vmul.f32 %v4334, %v4334
  %v4351 = vmul.f32 %v4335, %v4335
  %v4352 = vmul.f32 %v4336, %v4336
  %4353 = vadd.xlane.f32.xlu0 %v4337
  %v4354 = vpop.xlane.xlu0 %4353
  %4355 = vadd.xlane.f32.xlu0 %v4338
  %v4356 = vpop.xlane.xlu0 %4355
  %4357 = vadd.xlane.f32.xlu0 %v4339
  %v4358 = vpop.xlane.xlu0 %4357
  %4359 = vadd.xlane.f32.xlu0 %v4340
  %v4360 = vpop.xlane.xlu0 %4359
  %4361 = vadd.xlane.f32.xlu0 %v4341
  %v4362 = vpop.xlane.xlu0 %4361
  %4363 = vadd.xlane.f32.xlu0 %v4342
  %v4364 = vpop.xlane.xlu0 %4363
  %4365 = vadd.xlane.f32.xlu0 %v4343
  %v4366 = vpop.xlane.xlu0 %4365
  %4367 = vadd.xlane.f32.xlu0 %v4344
  %v4368 = vpop.xlane.xlu0 %4367
  %4369 = vadd.xlane.f32.xlu0 %v4345
  %v4370 = vpop.xlane.xlu0 %4369
  %4371 = vadd.xlane.f32.xlu0 %v4346
  %v4372 = vpop.xlane.xlu0 %4371
  %4373 = vadd.xlane.f32.xlu0 %v4347
  %v4374 = vpop.xlane.xlu0 %4373
  %4375 = vadd.xlane.f32.xlu0 %v4348
  %v4376 = vpop.xlane.xlu0 %4375
  %4377 = vadd.xlane.f32.xlu0 %v4349
  %v4378 = vpop.xlane.xlu0 %4377
  %4379 = vadd.xlane.f32.xlu0 %v4350
  %v4380 = vpop.xlane.xlu0 %4379
  %4381 = vadd.xlane.f32.xlu0 %v4351
  %v4382 = vpop.xlane.xlu0 %4381
  %4383 = vadd.xlane.f32.xlu0 %v4352
  %v4384 = vpop.xlane.xlu0 %4383
  %v4385 = vmul.f32 %v4354, %v3301
  %v4386 = vmul.f32 %v4356, %v3301
  %v4387 = vmul.f32 %v4358, %v3301
  %v4388 = vmul.f32 %v4360, %v3301
  %v4389 = vmul.f32 %v4362, %v3301
  %v4390 = vmul.f32 %v4364, %v3301
  %v4391 = vmul.f32 %v4366, %v3301
  %v4392 = vmul.f32 %v4368, %v3301
  %v4393 = vmul.f32 %v4370, %v3301
  %v4394 = vmul.f32 %v4372, %v3301
  %v4395 = vmul.f32 %v4374, %v3301
  %v4396 = vmul.f32 %v4376, %v3301
  %v4397 = vmul.f32 %v4378, %v3301
  %v4398 = vmul.f32 %v4380, %v3301
  %v4399 = vmul.f32 %v4382, %v3301
  %v4400 = vmul.f32 %v4384, %v3301
  %v4401 = vadd.f32 %v4385, 1e-12
  %v4402 = vadd.f32 %v4386, 1e-12
  %v4403 = vadd.f32 %v4387, 1e-12
  %v4404 = vadd.f32 %v4388, 1e-12
  %v4405 = vadd.f32 %v4389, 1e-12
  %v4406 = vadd.f32 %v4390, 1e-12
  %v4407 = vadd.f32 %v4391, 1e-12
  %v4408 = vadd.f32 %v4392, 1e-12
  %v4409 = vadd.f32 %v4393, 1e-12
  %v4410 = vadd.f32 %v4394, 1e-12
  %v4411 = vadd.f32 %v4395, 1e-12
  %v4412 = vadd.f32 %v4396, 1e-12
  %v4413 = vadd.f32 %v4397, 1e-12
  %v4414 = vadd.f32 %v4398, 1e-12
  %v4415 = vadd.f32 %v4399, 1e-12
  %v4416 = vadd.f32 %v4400, 1e-12
  %v4417 = vrsqrt.pop %v4401
  %v4418 = vrsqrt.pop %v4402
  %v4419 = vrsqrt.pop %v4403
  %v4420 = vrsqrt.pop %v4404
  %v4421 = vrsqrt.pop %v4405
  %v4422 = vrsqrt.pop %v4406
  %v4423 = vrsqrt.pop %v4407
  %v4424 = vrsqrt.pop %v4408
  %v4425 = vrsqrt.pop %v4409
  %v4426 = vrsqrt.pop %v4410
  %v4427 = vrsqrt.pop %v4411
  %v4428 = vrsqrt.pop %v4412
  %v4429 = vrsqrt.pop %v4413
  %v4430 = vrsqrt.pop %v4414
  %v4431 = vrsqrt.pop %v4415
  %v4432 = vrsqrt.pop %v4416
  %v4433 = vmul.f32 %v4321, %v4417
  %v4434 = vmul.f32 %v4322, %v4418
  %v4435 = vmul.f32 %v4323, %v4419
  %v4436 = vmul.f32 %v4324, %v4420
  %v4437 = vmul.f32 %v4325, %v4421
  %v4438 = vmul.f32 %v4326, %v4422
  %v4439 = vmul.f32 %v4327, %v4423
  %v4440 = vmul.f32 %v4328, %v4424
  %v4441 = vmul.f32 %v4329, %v4425
  %v4442 = vmul.f32 %v4330, %v4426
  %v4443 = vmul.f32 %v4331, %v4427
  %v4444 = vmul.f32 %v4332, %v4428
  %v4445 = vmul.f32 %v4333, %v4429
  %v4446 = vmul.f32 %v4334, %v4430
  %v4447 = vmul.f32 %v4335, %v4431
  %v4448 = vmul.f32 %v4336, %v4432
  %v4450 = vlaneseq
  %v4451 = vshrl.u32 %v4450, 7
  %v4452 = vsub.s32 0, %v4451
  %v4453 = vrot.slane %v4271, %v4452
  %v4455 = vmul.f32 %v4433, %v4453
  %v4456 = vmul.f32 %v4434, %v4453
  %v4457 = vmul.f32 %v4435, %v4453
  %v4458 = vmul.f32 %v4436, %v4453
  %v4459 = vmul.f32 %v4437, %v4453
  %v4460 = vmul.f32 %v4438, %v4453
  %v4461 = vmul.f32 %v4439, %v4453
  %v4462 = vmul.f32 %v4440, %v4453
  %v4463 = vmul.f32 %v4441, %v4453
  %v4464 = vmul.f32 %v4442, %v4453
  %v4465 = vmul.f32 %v4443, %v4453
  %v4466 = vmul.f32 %v4444, %v4453
  %v4467 = vmul.f32 %v4445, %v4453
  %v4468 = vmul.f32 %v4446, %v4453
  %v4469 = vmul.f32 %v4447, %v4453
  %v4470 = vmul.f32 %v4448, %v4453
  %v4472 = vlaneseq
  %v4473 = vshrl.u32 %v4472, 7
  %v4474 = vsub.s32 0, %v4473
  %v4475 = vrot.slane %v4272, %v4474
  %v4477 = vadd.f32 %v4455, %v4475
  %v4478 = vadd.f32 %v4456, %v4475
  %v4479 = vadd.f32 %v4457, %v4475
  %v4480 = vadd.f32 %v4458, %v4475
  %v4481 = vadd.f32 %v4459, %v4475
  %v4482 = vadd.f32 %v4460, %v4475
  %v4483 = vadd.f32 %v4461, %v4475
  %v4484 = vadd.f32 %v4462, %v4475
  %v4485 = vadd.f32 %v4463, %v4475
  %v4486 = vadd.f32 %v4464, %v4475
  %v4487 = vadd.f32 %v4465, %v4475
  %v4488 = vadd.f32 %v4466, %v4475
  %v4489 = vadd.f32 %v4467, %v4475
  %v4490 = vadd.f32 %v4468, %v4475
  %v4491 = vadd.f32 %v4469, %v4475
  %v4492 = vadd.f32 %v4470, %v4475
  %v4493 = vpack.c.bf16 %v4478, %v4477
  %v4494 = vpack.c.bf16 %v4480, %v4479
  %v4495 = vpack.c.bf16 %v4482, %v4481
  %v4496 = vpack.c.bf16 %v4484, %v4483
  %v4497 = vpack.c.bf16 %v4486, %v4485
  %v4498 = vpack.c.bf16 %v4488, %v4487
  %v4499 = vpack.c.bf16 %v4490, %v4489
  %v4500 = vpack.c.bf16 %v4492, %v4491
  %s4501 = scalar_lea.vmem %s4, 64
  %v4502 = vld [vmem:[%s4501] sm:$0xf]
  %v4503 = vld [vmem:[%s4501 + $0x4] sm:$0xf]
  %v4504 = vld [vmem:[%s4501 + $0x8] sm:$0xf]
  %v4505 = vld [vmem:[%s4501 + $0xc] sm:$0xf]
  %v4506 = vld [vmem:[%s4501 + $0x10] sm:$0xf]
  %v4507 = vld [vmem:[%s4501 + $0x14] sm:$0xf]
  %v4508 = vld [vmem:[%s4501 + $0x18] sm:$0xf]
  %v4509 = vld [vmem:[%s4501 + $0x1c] sm:$0xf]
  %v4510 = vld [vmem:[%s4501 + $0x20] sm:$0xf]
  %v4511 = vld [vmem:[%s4501 + $0x24] sm:$0xf]
  %v4512 = vld [vmem:[%s4501 + $0x28] sm:$0xf]
  %v4513 = vld [vmem:[%s4501 + $0x2c] sm:$0xf]
  %v4514 = vld [vmem:[%s4501 + $0x30] sm:$0xf]
  %v4515 = vld [vmem:[%s4501 + $0x34] sm:$0xf]
  %v4516 = vld [vmem:[%s4501 + $0x38] sm:$0xf]
  %v4517 = vld [vmem:[%s4501 + $0x3c] sm:$0xf]
  %s4518 = scalar_lea.vmem %s5, 1
  %v4519 = vld [vmem:[%s4518] sm:$0x1]
  %v4521 = vlaneseq
  %v4522 = vshrl.u32 %v4521, 7
  %v4523 = vsub.s32 0, %v4522
  %v4524 = vrot.slane %v4519, %v4523
  %v4542 = vunpack.c.l.b16 %v4502
  %v4543 = vunpack.c.l.b16 %v4503
  %v4544 = vunpack.c.l.b16 %v4504
  %v4545 = vunpack.c.l.b16 %v4505
  %v4546 = vunpack.c.l.b16 %v4506
  %v4547 = vunpack.c.l.b16 %v4507
  %v4548 = vunpack.c.l.b16 %v4508
  %v4549 = vunpack.c.l.b16 %v4509
  %v4550 = vunpack.c.l.b16 %v4510
  %v4551 = vunpack.c.l.b16 %v4511
  %v4552 = vunpack.c.l.b16 %v4512
  %v4553 = vunpack.c.l.b16 %v4513
  %v4554 = vunpack.c.l.b16 %v4514
  %v4555 = vunpack.c.l.b16 %v4515
  %v4556 = vunpack.c.l.b16 %v4516
  %v4557 = vunpack.c.l.b16 %v4517
  %v4558 = vpack.c.b16 %v4543, %v4542
  %v4559 = vpack.c.b16 %v4545, %v4544
  %v4560 = vpack.c.b16 %v4547, %v4546
  %v4561 = vpack.c.b16 %v4549, %v4548
  %v4562 = vpack.c.b16 %v4551, %v4550
  %v4563 = vpack.c.b16 %v4553, %v4552
  %v4564 = vpack.c.b16 %v4555, %v4554
  %v4565 = vpack.c.b16 %v4557, %v4556
  %4574 = vmatprep.subr.bf16.mxu0 0
  %4575 = vmatpush1.bf16.msra.mxu0 %v4558
  %4576 = vmatprep.subr.bf16.mxu0 0
  %4577 = vmatpush1.bf16.msra.mxu0 %v4559
  %4578 = vmatprep.subr.bf16.mxu0 0
  %4579 = vmatpush1.bf16.msra.mxu0 %v4560
  %4580 = vmatprep.subr.bf16.mxu0 0
  %4581 = vmatpush1.bf16.msra.mxu0 %v4561
  %4582 = vmatprep.subr.bf16.mxu0 0
  %4583 = vmatpush1.bf16.msra.mxu0 %v4562
  %4584 = vmatprep.subr.bf16.mxu0 0
  %4585 = vmatpush1.bf16.msra.mxu0 %v4563
  %4586 = vmatprep.subr.bf16.mxu0 0
  %4587 = vmatpush1.bf16.msra.mxu0 %v4564
  %4588 = vmatprep.subr.bf16.mxu0 0
  %4589 = vmatpush1.bf16.msra.mxu0 %v4565
  %4590 = vmatprep.subr.bf16.mxu0 0
  %4591 = vmatpush1.bf16.msra.mxu0 0
  %4592 = vmatprep.subr.bf16.mxu0 0
  %4593 = vmatpush1.bf16.msra.mxu0 0
  %4594 = vmatprep.subr.bf16.mxu0 0
  %4595 = vmatpush1.bf16.msra.mxu0 0
  %4596 = vmatprep.subr.bf16.mxu0 0
  %4597 = vmatpush1.bf16.msra.mxu0 0
  %4598 = vmatprep.subr.bf16.mxu0 0
  %4599 = vmatpush1.bf16.msra.mxu0 0
  %4600 = vmatprep.subr.bf16.mxu0 0
  %4601 = vmatpush1.bf16.msra.mxu0 0
  %4602 = vmatprep.subr.bf16.mxu0 0
  %4603 = vmatpush1.bf16.msra.mxu0 0
  %4604 = vmatprep.subr.bf16.mxu0 0
  %4605 = vmatpush1.bf16.msra.mxu0 0
  %4606 = vmatprep.mubr.bf16.mxu0 0
  %4607 = vmatmul.mubr.bf16.gmra.mrb[0].mxu0 %v4493
  %v4608 = vpop.f32.mrb[0].mxu0
  %v4609 = vadd.f32 %v4524, %v4608
  %v4610 = vpop.f32.mrb[0].mxu0
  %v4611 = vpop.f32.mrb[0].mxu0
  %v4612 = vadd.f32 %v4524, %v4611
  %v4613 = vpop.f32.mrb[0].mxu0
  %4614 = vmatprep.mubr.bf16.mxu0 0
  %4615 = vmatmul.mubr.bf16.gmra.mrb[0].mxu0 %v4494
  %v4616 = vpop.f32.mrb[0].mxu0
  %v4617 = vadd.f32 %v4524, %v4616
  %v4618 = vpop.f32.mrb[0].mxu0
  %v4619 = vpop.f32.mrb[0].mxu0
  %v4620 = vadd.f32 %v4524, %v4619
  %v4621 = vpop.f32.mrb[0].mxu0
  %4622 = vmatprep.mubr.bf16.mxu0 0
  %4623 = vmatmul.mubr.bf16.gmra.mrb[0].mxu0 %v4495
  %v4624 = vpop.f32.mrb[0].mxu0
  %v4625 = vadd.f32 %v4524, %v4624
  %v4626 = vpop.f32.mrb[0].mxu0
  %v4627 = vpop.f32.mrb[0].mxu0
  %v4628 = vadd.f32 %v4524, %v4627
  %v4629 = vpop.f32.mrb[0].mxu0
  %4630 = vmatprep.mubr.bf16.mxu0 0
  %4631 = vmatmul.mubr.bf16.gmra.mrb[0].mxu0 %v4496
  %v4632 = vpop.f32.mrb[0].mxu0
  %v4633 = vadd.f32 %v4524, %v4632
  %v4634 = vpop.f32.mrb[0].mxu0
  %v4635 = vpop.f32.mrb[0].mxu0
  %v4636 = vadd.f32 %v4524, %v4635
  %v4637 = vpop.f32.mrb[0].mxu0
  %4638 = vmatprep.mubr.bf16.mxu0 0
  %4639 = vmatmul.mubr.bf16.gmra.mrb[0].mxu0 %v4497
  %v4640 = vpop.f32.mrb[0].mxu0
  %v4641 = vadd.f32 %v4524, %v4640
  %v4642 = vpop.f32.mrb[0].mxu0
  %v4643 = vpop.f32.mrb[0].mxu0
  %v4644 = vadd.f32 %v4524, %v4643
  %v4645 = vpop.f32.mrb[0].mxu0
  %4646 = vmatprep.mubr.bf16.mxu0 0
  %4647 = vmatmul.mubr.bf16.gmra.mrb[0].mxu0 %v4498
  %v4648 = vpop.f32.mrb[0].mxu0
  %v4649 = vadd.f32 %v4524, %v4648
  %v4650 = vpop.f32.mrb[0].mxu0
  %v4651 = vpop.f32.mrb[0].mxu0
  %v4652 = vadd.f32 %v4524, %v4651
  %v4653 = vpop.f32.mrb[0].mxu0
  %4654 = vmatprep.mubr.bf16.mxu0 0
  %4655 = vmatmul.mubr.bf16.gmra.mrb[0].mxu0 %v4499
  %v4656 = vpop.f32.mrb[0].mxu0
  %v4657 = vadd.f32 %v4524, %v4656
  %v4658 = vpop.f32.mrb[0].mxu0
  %v4659 = vpop.f32.mrb[0].mxu0
  %v4660 = vadd.f32 %v4524, %v4659
  %v4661 = vpop.f32.mrb[0].mxu0
  %4662 = vmatprep.mubr.bf16.mxu0 0
  %4663 = vmatmul.mubr.bf16.gmra.mrb[0].mxu0 %v4500
  %v4664 = vpop.f32.mrb[0].mxu0
  %v4665 = vadd.f32 %v4524, %v4664
  %v4666 = vpop.f32.mrb[0].mxu0
  %v4667 = vpop.f32.mrb[0].mxu0
  %v4668 = vadd.f32 %v4524, %v4667
  %v4669 = vpop.f32.mrb[0].mxu0
  %4670 = vdwg.mxu0
  %s4671 = scalar_lea.vmem %s6, 64
  %v4672 = vld [vmem:[%s4671] sm:$0xf]
  %v4673 = vld [vmem:[%s4671 + $0x4] sm:$0xf]
  %v4674 = vld [vmem:[%s4671 + $0x8] sm:$0xf]
  %v4675 = vld [vmem:[%s4671 + $0xc] sm:$0xf]
  %v4676 = vld [vmem:[%s4671 + $0x10] sm:$0xf]
  %v4677 = vld [vmem:[%s4671 + $0x14] sm:$0xf]
  %v4678 = vld [vmem:[%s4671 + $0x18] sm:$0xf]
  %v4679 = vld [vmem:[%s4671 + $0x1c] sm:$0xf]
  %v4680 = vld [vmem:[%s4671 + $0x20] sm:$0xf]
  %v4681 = vld [vmem:[%s4671 + $0x24] sm:$0xf]
  %v4682 = vld [vmem:[%s4671 + $0x28] sm:$0xf]
  %v4683 = vld [vmem:[%s4671 + $0x2c] sm:$0xf]
  %v4684 = vld [vmem:[%s4671 + $0x30] sm:$0xf]
  %v4685 = vld [vmem:[%s4671 + $0x34] sm:$0xf]
  %v4686 = vld [vmem:[%s4671 + $0x38] sm:$0xf]
  %v4687 = vld [vmem:[%s4671 + $0x3c] sm:$0xf]
  %s4688 = scalar_lea.vmem %s7, 1
  %v4689 = vld [vmem:[%s4688] sm:$0x1]
  %v4691 = vlaneseq
  %v4692 = vshrl.u32 %v4691, 7
  %v4693 = vsub.s32 0, %v4692
  %v4694 = vrot.slane %v4689, %v4693
  %v4712 = vunpack.c.l.b16 %v4672
  %v4713 = vunpack.c.l.b16 %v4673
  %v4714 = vunpack.c.l.b16 %v4674
  %v4715 = vunpack.c.l.b16 %v4675
  %v4716 = vunpack.c.l.b16 %v4676
  %v4717 = vunpack.c.l.b16 %v4677
  %v4718 = vunpack.c.l.b16 %v4678
  %v4719 = vunpack.c.l.b16 %v4679
  %v4720 = vunpack.c.l.b16 %v4680
  %v4721 = vunpack.c.l.b16 %v4681
  %v4722 = vunpack.c.l.b16 %v4682
  %v4723 = vunpack.c.l.b16 %v4683
  %v4724 = vunpack.c.l.b16 %v4684
  %v4725 = vunpack.c.l.b16 %v4685
  %v4726 = vunpack.c.l.b16 %v4686
  %v4727 = vunpack.c.l.b16 %v4687
  %v4728 = vpack.c.b16 %v4713, %v4712
  %v4729 = vpack.c.b16 %v4715, %v4714
  %v4730 = vpack.c.b16 %v4717, %v4716
  %v4731 = vpack.c.b16 %v4719, %v4718
  %v4732 = vpack.c.b16 %v4721, %v4720
  %v4733 = vpack.c.b16 %v4723, %v4722
  %v4734 = vpack.c.b16 %v4725, %v4724
  %v4735 = vpack.c.b16 %v4727, %v4726
  %4744 = vmatprep.subr.bf16.mxu0 0
  %4745 = vmatpush1.bf16.msra.mxu0 %v4728
  %4746 = vmatprep.subr.bf16.mxu0 0
  %4747 = vmatpush1.bf16.msra.mxu0 %v4729
  %4748 = vmatprep.subr.bf16.mxu0 0
  %4749 = vmatpush1.bf16.msra.mxu0 %v4730
  %4750 = vmatprep.subr.bf16.mxu0 0
  %4751 = vmatpush1.bf16.msra.mxu0 %v4731
  %4752 = vmatprep.subr.bf16.mxu0 0
  %4753 = vmatpush1.bf16.msra.mxu0 %v4732
  %4754 = vmatprep.subr.bf16.mxu0 0
  %4755 = vmatpush1.bf16.msra.mxu0 %v4733
  %4756 = vmatprep.subr.bf16.mxu0 0
  %4757 = vmatpush1.bf16.msra.mxu0 %v4734
  %4758 = vmatprep.subr.bf16.mxu0 0
  %4759 = vmatpush1.bf16.msra.mxu0 %v4735
  %4760 = vmatprep.subr.bf16.mxu0 0
  %4761 = vmatpush1.bf16.msra.mxu0 0
  %4762 = vmatprep.subr.bf16.mxu0 0
  %4763 = vmatpush1.bf16.msra.mxu0 0
  %4764 = vmatprep.subr.bf16.mxu0 0
  %4765 = vmatpush1.bf16.msra.mxu0 0
  %4766 = vmatprep.subr.bf16.mxu0 0
  %4767 = vmatpush1.bf16.msra.mxu0 0
  %4768 = vmatprep.subr.bf16.mxu0 0
  %4769 = vmatpush1.bf16.msra.mxu0 0
  %4770 = vmatprep.subr.bf16.mxu0 0
  %4771 = vmatpush1.bf16.msra.mxu0 0
  %4772 = vmatprep.subr.bf16.mxu0 0
  %4773 = vmatpush1.bf16.msra.mxu0 0
  %4774 = vmatprep.subr.bf16.mxu0 0
  %4775 = vmatpush1.bf16.msra.mxu0 0
  %4776 = vmatprep.mubr.bf16.mxu0 0
  %4777 = vmatmul.mubr.bf16.gmra.mrb[0].mxu0 %v4493
  %v4778 = vpop.f32.mrb[0].mxu0
  %v4779 = vadd.f32 %v4694, %v4778
  %v4780 = vpop.f32.mrb[0].mxu0
  %v4781 = vpop.f32.mrb[0].mxu0
  %v4782 = vadd.f32 %v4694, %v4781
  %v4783 = vpop.f32.mrb[0].mxu0
  %4784 = vmatprep.mubr.bf16.mxu0 0
  %4785 = vmatmul.mubr.bf16.gmra.mrb[0].mxu0 %v4494
  %v4786 = vpop.f32.mrb[0].mxu0
  %v4787 = vadd.f32 %v4694, %v4786
  %v4788 = vpop.f32.mrb[0].mxu0
  %v4789 = vpop.f32.mrb[0].mxu0
  %v4790 = vadd.f32 %v4694, %v4789
  %v4791 = vpop.f32.mrb[0].mxu0
  %4792 = vmatprep.mubr.bf16.mxu0 0
  %4793 = vmatmul.mubr.bf16.gmra.mrb[0].mxu0 %v4495
  %v4794 = vpop.f32.mrb[0].mxu0
  %v4795 = vadd.f32 %v4694, %v4794
  %v4796 = vpop.f32.mrb[0].mxu0
  %v4797 = vpop.f32.mrb[0].mxu0
  %v4798 = vadd.f32 %v4694, %v4797
  %v4799 = vpop.f32.mrb[0].mxu0
  %4800 = vmatprep.mubr.bf16.mxu0 0
  %4801 = vmatmul.mubr.bf16.gmra.mrb[0].mxu0 %v4496
  %v4802 = vpop.f32.mrb[0].mxu0
  %v4803 = vadd.f32 %v4694, %v4802
  %v4804 = vpop.f32.mrb[0].mxu0
  %v4805 = vpop.f32.mrb[0].mxu0
  %v4806 = vadd.f32 %v4694, %v4805
  %v4807 = vpop.f32.mrb[0].mxu0
  %4808 = vmatprep.mubr.bf16.mxu0 0
  %4809 = vmatmul.mubr.bf16.gmra.mrb[0].mxu0 %v4497
  %v4810 = vpop.f32.mrb[0].mxu0
  %v4811 = vadd.f32 %v4694, %v4810
  %v4812 = vpop.f32.mrb[0].mxu0
  %v4813 = vpop.f32.mrb[0].mxu0
  %v4814 = vadd.f32 %v4694, %v4813
  %v4815 = vpop.f32.mrb[0].mxu0
  %4816 = vmatprep.mubr.bf16.mxu0 0
  %4817 = vmatmul.mubr.bf16.gmra.mrb[0].mxu0 %v4498
  %v4818 = vpop.f32.mrb[0].mxu0
  %v4819 = vadd.f32 %v4694, %v4818
  %v4820 = vpop.f32.mrb[0].mxu0
  %v4821 = vpop.f32.mrb[0].mxu0
  %v4822 = vadd.f32 %v4694, %v4821
  %v4823 = vpop.f32.mrb[0].mxu0
  %4824 = vmatprep.mubr.bf16.mxu0 0
  %4825 = vmatmul.mubr.bf16.gmra.mrb[0].mxu0 %v4499
  %v4826 = vpop.f32.mrb[0].mxu0
  %v4827 = vadd.f32 %v4694, %v4826
  %v4828 = vpop.f32.mrb[0].mxu0
  %v4829 = vpop.f32.mrb[0].mxu0
  %v4830 = vadd.f32 %v4694, %v4829
  %v4831 = vpop.f32.mrb[0].mxu0
  %4832 = vmatprep.mubr.bf16.mxu0 0
  %4833 = vmatmul.mubr.bf16.gmra.mrb[0].mxu0 %v4500
  %v4834 = vpop.f32.mrb[0].mxu0
  %v4835 = vadd.f32 %v4694, %v4834
  %v4836 = vpop.f32.mrb[0].mxu0
  %v4837 = vpop.f32.mrb[0].mxu0
  %v4838 = vadd.f32 %v4694, %v4837
  %v4839 = vpop.f32.mrb[0].mxu0
  %4840 = vdwg.mxu0
  %s4841 = scalar_lea.vmem %s8, 64
  %v4842 = vld [vmem:[%s4841] sm:$0xf]
  %v4843 = vld [vmem:[%s4841 + $0x4] sm:$0xf]
  %v4844 = vld [vmem:[%s4841 + $0x8] sm:$0xf]
  %v4845 = vld [vmem:[%s4841 + $0xc] sm:$0xf]
  %v4846 = vld [vmem:[%s4841 + $0x10] sm:$0xf]
  %v4847 = vld [vmem:[%s4841 + $0x14] sm:$0xf]
  %v4848 = vld [vmem:[%s4841 + $0x18] sm:$0xf]
  %v4849 = vld [vmem:[%s4841 + $0x1c] sm:$0xf]
  %v4850 = vld [vmem:[%s4841 + $0x20] sm:$0xf]
  %v4851 = vld [vmem:[%s4841 + $0x24] sm:$0xf]
  %v4852 = vld [vmem:[%s4841 + $0x28] sm:$0xf]
  %v4853 = vld [vmem:[%s4841 + $0x2c] sm:$0xf]
  %v4854 = vld [vmem:[%s4841 + $0x30] sm:$0xf]
  %v4855 = vld [vmem:[%s4841 + $0x34] sm:$0xf]
  %v4856 = vld [vmem:[%s4841 + $0x38] sm:$0xf]
  %v4857 = vld [vmem:[%s4841 + $0x3c] sm:$0xf]
  %s4858 = scalar_lea.vmem %s9, 1
  %v4859 = vld [vmem:[%s4858] sm:$0x1]
  %v4861 = vlaneseq
  %v4862 = vshrl.u32 %v4861, 7
  %v4863 = vsub.s32 0, %v4862
  %v4864 = vrot.slane %v4859, %v4863
  %v4882 = vunpack.c.l.b16 %v4842
  %v4883 = vunpack.c.l.b16 %v4843
  %v4884 = vunpack.c.l.b16 %v4844
  %v4885 = vunpack.c.l.b16 %v4845
  %v4886 = vunpack.c.l.b16 %v4846
  %v4887 = vunpack.c.l.b16 %v4847
  %v4888 = vunpack.c.l.b16 %v4848
  %v4889 = vunpack.c.l.b16 %v4849
  %v4890 = vunpack.c.l.b16 %v4850
  %v4891 = vunpack.c.l.b16 %v4851
  %v4892 = vunpack.c.l.b16 %v4852
  %v4893 = vunpack.c.l.b16 %v4853
  %v4894 = vunpack.c.l.b16 %v4854
  %v4895 = vunpack.c.l.b16 %v4855
  %v4896 = vunpack.c.l.b16 %v4856
  %v4897 = vunpack.c.l.b16 %v4857
  %v4898 = vpack.c.b16 %v4883, %v4882
  %v4899 = vpack.c.b16 %v4885, %v4884
  %v4900 = vpack.c.b16 %v4887, %v4886
  %v4901 = vpack.c.b16 %v4889, %v4888
  %v4902 = vpack.c.b16 %v4891, %v4890
  %v4903 = vpack.c.b16 %v4893, %v4892
  %v4904 = vpack.c.b16 %v4895, %v4894
  %v4905 = vpack.c.b16 %v4897, %v4896
  %4914 = vmatprep.subr.bf16.mxu0 0
  %4915 = vmatpush1.bf16.msra.mxu0 %v4898
  %4916 = vmatprep.subr.bf16.mxu0 0
  %4917 = vmatpush1.bf16.msra.mxu0 %v4899
  %4918 = vmatprep.subr.bf16.mxu0 0
  %4919 = vmatpush1.bf16.msra.mxu0 %v4900
  %4920 = vmatprep.subr.bf16.mxu0 0
  %4921 = vmatpush1.bf16.msra.mxu0 %v4901
  %4922 = vmatprep.subr.bf16.mxu0 0
  %4923 = vmatpush1.bf16.msra.mxu0 %v4902
  %4924 = vmatprep.subr.bf16.mxu0 0
  %4925 = vmatpush1.bf16.msra.mxu0 %v4903
  %4926 = vmatprep.subr.bf16.mxu0 0
  %4927 = vmatpush1.bf16.msra.mxu0 %v4904
  %4928 = vmatprep.subr.bf16.mxu0 0
  %4929 = vmatpush1.bf16.msra.mxu0 %v4905
  %4930 = vmatprep.subr.bf16.mxu0 0
  %4931 = vmatpush1.bf16.msra.mxu0 0
  %4932 = vmatprep.subr.bf16.mxu0 0
  %4933 = vmatpush1.bf16.msra.mxu0 0
  %4934 = vmatprep.subr.bf16.mxu0 0
  %4935 = vmatpush1.bf16.msra.mxu0 0
  %4936 = vmatprep.subr.bf16.mxu0 0
  %4937 = vmatpush1.bf16.msra.mxu0 0
  %4938 = vmatprep.subr.bf16.mxu0 0
  %4939 = vmatpush1.bf16.msra.mxu0 0
  %4940 = vmatprep.subr.bf16.mxu0 0
  %4941 = vmatpush1.bf16.msra.mxu0 0
  %4942 = vmatprep.subr.bf16.mxu0 0
  %4943 = vmatpush1.bf16.msra.mxu0 0
  %4944 = vmatprep.subr.bf16.mxu0 0
  %4945 = vmatpush1.bf16.msra.mxu0 0
  %4946 = vmatprep.mubr.bf16.mxu0 0
  %4947 = vmatmul.mubr.bf16.gmra.mrb[0].mxu0 %v4493
  %v4948 = vpop.f32.mrb[0].mxu0
  %v4949 = vadd.f32 %v4864, %v4948
  %v4950 = vpop.f32.mrb[0].mxu0
  %v4951 = vpop.f32.mrb[0].mxu0
  %v4952 = vadd.f32 %v4864, %v4951
  %v4953 = vpop.f32.mrb[0].mxu0
  %4954 = vmatprep.mubr.bf16.mxu0 0
  %4955 = vmatmul.mubr.bf16.gmra.mrb[0].mxu0 %v4494
  %v4956 = vpop.f32.mrb[0].mxu0
  %v4957 = vadd.f32 %v4864, %v4956
  %v4958 = vpop.f32.mrb[0].mxu0
  %v4959 = vpop.f32.mrb[0].mxu0
  %v4960 = vadd.f32 %v4864, %v4959
  %v4961 = vpop.f32.mrb[0].mxu0
  %4962 = vmatprep.mubr.bf16.mxu0 0
  %4963 = vmatmul.mubr.bf16.gmra.mrb[0].mxu0 %v4495
  %v4964 = vpop.f32.mrb[0].mxu0
  %v4965 = vadd.f32 %v4864, %v4964
  %v4966 = vpop.f32.mrb[0].mxu0
  %v4967 = vpop.f32.mrb[0].mxu0
  %v4968 = vadd.f32 %v4864, %v4967
  %v4969 = vpop.f32.mrb[0].mxu0
  %4970 = vmatprep.mubr.bf16.mxu0 0
  %4971 = vmatmul.mubr.bf16.gmra.mrb[0].mxu0 %v4496
  %v4972 = vpop.f32.mrb[0].mxu0
  %v4973 = vadd.f32 %v4864, %v4972
  %v4974 = vpop.f32.mrb[0].mxu0
  %v4975 = vpop.f32.mrb[0].mxu0
  %v4976 = vadd.f32 %v4864, %v4975
  %v4977 = vpop.f32.mrb[0].mxu0
  %4978 = vmatprep.mubr.bf16.mxu0 0
  %4979 = vmatmul.mubr.bf16.gmra.mrb[0].mxu0 %v4497
  %v4980 = vpop.f32.mrb[0].mxu0
  %v4981 = vadd.f32 %v4864, %v4980
  %v4982 = vpop.f32.mrb[0].mxu0
  %v4983 = vpop.f32.mrb[0].mxu0
  %v4984 = vadd.f32 %v4864, %v4983
  %v4985 = vpop.f32.mrb[0].mxu0
  %4986 = vmatprep.mubr.bf16.mxu0 0
  %4987 = vmatmul.mubr.bf16.gmra.mrb[0].mxu0 %v4498
  %v4988 = vpop.f32.mrb[0].mxu0
  %v4989 = vadd.f32 %v4864, %v4988
  %v4990 = vpop.f32.mrb[0].mxu0
  %v4991 = vpop.f32.mrb[0].mxu0
  %v4992 = vadd.f32 %v4864, %v4991
  %v4993 = vpop.f32.mrb[0].mxu0
  %4994 = vmatprep.mubr.bf16.mxu0 0
  %4995 = vmatmul.mubr.bf16.gmra.mrb[0].mxu0 %v4499
  %v4996 = vpop.f32.mrb[0].mxu0
  %v4997 = vadd.f32 %v4864, %v4996
  %v4998 = vpop.f32.mrb[0].mxu0
  %v4999 = vpop.f32.mrb[0].mxu0
  %v5000 = vadd.f32 %v4864, %v4999
  %v5001 = vpop.f32.mrb[0].mxu0
  %5002 = vmatprep.mubr.bf16.mxu0 0
  %5003 = vmatmul.mubr.bf16.gmra.mrb[0].mxu0 %v4500
  %v5004 = vpop.f32.mrb[0].mxu0
  %v5005 = vadd.f32 %v4864, %v5004
  %v5006 = vpop.f32.mrb[0].mxu0
  %v5007 = vpop.f32.mrb[0].mxu0
  %v5008 = vadd.f32 %v4864, %v5007
  %v5009 = vpop.f32.mrb[0].mxu0
  %5010 = vdwg.mxu0
  %v5011 = vpack.c.bf16 %v4612, %v4609
  %v5012 = vpack.c.bf16 %v4620, %v4617
  %v5013 = vpack.c.bf16 %v4628, %v4625
  %v5014 = vpack.c.bf16 %v4636, %v4633
  %v5015 = vpack.c.bf16 %v4644, %v4641
  %v5016 = vpack.c.bf16 %v4652, %v4649
  %v5017 = vpack.c.bf16 %v4660, %v4657
  %v5018 = vpack.c.bf16 %v4668, %v4665
  %5027 = vrot.lane.b32.xlu0 %v5011, 64
  %v5028 = vpop.permute.xlu0 %5027
  %5029 = vrot.lane.b32.xlu0 %v5012, 64
  %v5030 = vpop.permute.xlu0 %5029
  %5031 = vrot.lane.b32.xlu0 %v5013, 64
  %v5032 = vpop.permute.xlu0 %5031
  %5033 = vrot.lane.b32.xlu0 %v5014, 64
  %v5034 = vpop.permute.xlu0 %5033
  %5035 = vrot.lane.b32.xlu0 %v5015, 64
  %v5036 = vpop.permute.xlu0 %5035
  %5037 = vrot.lane.b32.xlu0 %v5016, 64
  %v5038 = vpop.permute.xlu0 %5037
  %5039 = vrot.lane.b32.xlu0 %v5017, 64
  %v5040 = vpop.permute.xlu0 %5039
  %5041 = vrot.lane.b32.xlu0 %v5018, 64
  %v5042 = vpop.permute.xlu0 %5041
  %v5043 = vpack.c.bf16 %v4782, %v4779
  %v5044 = vpack.c.bf16 %v4790, %v4787
  %v5045 = vpack.c.bf16 %v4798, %v4795
  %v5046 = vpack.c.bf16 %v4806, %v4803
  %v5047 = vpack.c.bf16 %v4814, %v4811
  %v5048 = vpack.c.bf16 %v4822, %v4819
  %v5049 = vpack.c.bf16 %v4830, %v4827
  %v5050 = vpack.c.bf16 %v4838, %v4835
  %5059 = vrot.lane.b32.xlu0 %v5043, 64
  %v5060 = vpop.permute.xlu0 %5059
  %5061 = vrot.lane.b32.xlu0 %v5044, 64
  %v5062 = vpop.permute.xlu0 %5061
  %5063 = vrot.lane.b32.xlu0 %v5045, 64
  %v5064 = vpop.permute.xlu0 %5063
  %5065 = vrot.lane.b32.xlu0 %v5046, 64
  %v5066 = vpop.permute.xlu0 %5065
  %5067 = vrot.lane.b32.xlu0 %v5047, 64
  %v5068 = vpop.permute.xlu0 %5067
  %5069 = vrot.lane.b32.xlu0 %v5048, 64
  %v5070 = vpop.permute.xlu0 %5069
  %5071 = vrot.lane.b32.xlu0 %v5049, 64
  %v5072 = vpop.permute.xlu0 %5071
  %5073 = vrot.lane.b32.xlu0 %v5050, 64
  %v5074 = vpop.permute.xlu0 %5073
  %v5075 = vpack.c.bf16 %v4952, %v4949
  %v5076 = vpack.c.bf16 %v4960, %v4957
  %v5077 = vpack.c.bf16 %v4968, %v4965
  %v5078 = vpack.c.bf16 %v4976, %v4973
  %v5079 = vpack.c.bf16 %v4984, %v4981
  %v5080 = vpack.c.bf16 %v4992, %v4989
  %v5081 = vpack.c.bf16 %v5000, %v4997
  %v5082 = vpack.c.bf16 %v5008, %v5005
  %5091 = vrot.lane.b32.xlu0 %v5075, 64
  %v5092 = vpop.permute.xlu0 %5091
  %5093 = vrot.lane.b32.xlu0 %v5076, 64
  %v5094 = vpop.permute.xlu0 %5093
  %5095 = vrot.lane.b32.xlu0 %v5077, 64
  %v5096 = vpop.permute.xlu0 %5095
  %5097 = vrot.lane.b32.xlu0 %v5078, 64
  %v5098 = vpop.permute.xlu0 %5097
  %5099 = vrot.lane.b32.xlu0 %v5079, 64
  %v5100 = vpop.permute.xlu0 %5099
  %5101 = vrot.lane.b32.xlu0 %v5080, 64
  %v5102 = vpop.permute.xlu0 %5101
  %5103 = vrot.lane.b32.xlu0 %v5081, 64
  %v5104 = vpop.permute.xlu0 %5103
  %5105 = vrot.lane.b32.xlu0 %v5082, 64
  %v5106 = vpop.permute.xlu0 %5105
  %v5116 = vsel %vm258, %v5011, 0
  %v5119 = vsel %vm258, %v5043, 0
  %5121 = vmatprep.subr.bf16.mxu0 0
  %5122 = vmatpush1.bf16.xpose.msra.mxu0 %v5119
  %5123 = vmatprep.subr.bf16.mxu0 0
  %5124 = vmatpush1.bf16.xpose.msra.mxu0 0
  %5125 = vmatprep.subr.bf16.mxu0 0
  %5126 = vmatpush1.bf16.xpose.msra.mxu0 0
  %5127 = vmatprep.subr.bf16.mxu0 0
  %5128 = vmatpush1.bf16.xpose.msra.mxu0 0
  %5129 = vmatprep.subr.bf16.mxu0 0
  %5130 = vmatpush1.bf16.xpose.msra.mxu0 0
  %5131 = vmatprep.subr.bf16.mxu0 0
  %5132 = vmatpush1.bf16.xpose.msra.mxu0 0
  %5133 = vmatprep.subr.bf16.mxu0 0
  %5134 = vmatpush1.bf16.xpose.msra.mxu0 0
  %5135 = vmatprep.subr.bf16.mxu0 0
  %5136 = vmatpush1.bf16.xpose.msra.mxu0 0
  %5137 = vmatprep.subr.bf16.mxu0 0
  %5138 = vmatpush1.bf16.xpose.msra.mxu0 0
  %5139 = vmatprep.subr.bf16.mxu0 0
  %5140 = vmatpush1.bf16.xpose.msra.mxu0 0
  %5141 = vmatprep.subr.bf16.mxu0 0
  %5142 = vmatpush1.bf16.xpose.msra.mxu0 0
  %5143 = vmatprep.subr.bf16.mxu0 0
  %5144 = vmatpush1.bf16.xpose.msra.mxu0 0
  %5145 = vmatprep.subr.bf16.mxu0 0
  %5146 = vmatpush1.bf16.xpose.msra.mxu0 0
  %5147 = vmatprep.subr.bf16.mxu0 0
  %5148 = vmatpush1.bf16.xpose.msra.mxu0 0
  %5149 = vmatprep.subr.bf16.mxu0 0
  %5150 = vmatpush1.bf16.xpose.msra.mxu0 0
  %5151 = vmatprep.subr.bf16.mxu0 0
  %5152 = vmatpush1.bf16.xpose.msra.mxu0 0
  %5153 = vmatprep.mubr.bf16.mxu0 0
  %5154 = vmatmul.mubr.bf16.gmra.mrb[0].mxu0 %v5116
  %v5155 = vpop.f32.mrb[0].mxu0
  %v5156 = vadd.f32 0.0, %v5155
  %v5157 = vpop.f32.mrb[0].mxu0
  %v5158 = vpop.f32.mrb[0].mxu0
  %v5159 = vadd.f32 0.0, %v5158
  %v5160 = vpop.f32.mrb[0].mxu0
  %5161 = vdwg.mxu0
  %v5163 = vsel %vm258, %v5012, 0
  %v5166 = vsel %vm258, %v5044, 0
  %5168 = vmatprep.subr.bf16.mxu0 0
  %5169 = vmatpush1.bf16.xpose.msra.mxu0 %v5166
  %5170 = vmatprep.subr.bf16.mxu0 0
  %5171 = vmatpush1.bf16.xpose.msra.mxu0 0
  %5172 = vmatprep.subr.bf16.mxu0 0
  %5173 = vmatpush1.bf16.xpose.msra.mxu0 0
  %5174 = vmatprep.subr.bf16.mxu0 0
  %5175 = vmatpush1.bf16.xpose.msra.mxu0 0
  %5176 = vmatprep.subr.bf16.mxu0 0
  %5177 = vmatpush1.bf16.xpose.msra.mxu0 0
  %5178 = vmatprep.subr.bf16.mxu0 0
  %5179 = vmatpush1.bf16.xpose.msra.mxu0 0
  %5180 = vmatprep.subr.bf16.mxu0 0
  %5181 = vmatpush1.bf16.xpose.msra.mxu0 0
  %5182 = vmatprep.subr.bf16.mxu0 0
  %5183 = vmatpush1.bf16.xpose.msra.mxu0 0
  %5184 = vmatprep.subr.bf16.mxu0 0
  %5185 = vmatpush1.bf16.xpose.msra.mxu0 0
  %5186 = vmatprep.subr.bf16.mxu0 0
  %5187 = vmatpush1.bf16.xpose.msra.mxu0 0
  %5188 = vmatprep.subr.bf16.mxu0 0
  %5189 = vmatpush1.bf16.xpose.msra.mxu0 0
  %5190 = vmatprep.subr.bf16.mxu0 0
  %5191 = vmatpush1.bf16.xpose.msra.mxu0 0
  %5192 = vmatprep.subr.bf16.mxu0 0
  %5193 = vmatpush1.bf16.xpose.msra.mxu0 0
  %5194 = vmatprep.subr.bf16.mxu0 0
  %5195 = vmatpush1.bf16.xpose.msra.mxu0 0
  %5196 = vmatprep.subr.bf16.mxu0 0
  %5197 = vmatpush1.bf16.xpose.msra.mxu0 0
  %5198 = vmatprep.subr.bf16.mxu0 0
  %5199 = vmatpush1.bf16.xpose.msra.mxu0 0
  %5200 = vmatprep.mubr.bf16.mxu0 0
  %5201 = vmatmul.mubr.bf16.gmra.mrb[0].mxu0 %v5163
  %v5202 = vpop.f32.mrb[0].mxu0
  %v5203 = vadd.f32 0.0, %v5202
  %v5204 = vpop.f32.mrb[0].mxu0
  %v5205 = vpop.f32.mrb[0].mxu0
  %v5206 = vadd.f32 0.0, %v5205
  %v5207 = vpop.f32.mrb[0].mxu0
  %5208 = vdwg.mxu0
  %v5210 = vsel %vm258, %v5013, 0
  %v5213 = vsel %vm258, %v5045, 0
  %5215 = vmatprep.subr.bf16.mxu0 0
  %5216 = vmatpush1.bf16.xpose.msra.mxu0 %v5213
  %5217 = vmatprep.subr.bf16.mxu0 0
  %5218 = vmatpush1.bf16.xpose.msra.mxu0 0
  %5219 = vmatprep.subr.bf16.mxu0 0
  %5220 = vmatpush1.bf16.xpose.msra.mxu0 0
  %5221 = vmatprep.subr.bf16.mxu0 0
  %5222 = vmatpush1.bf16.xpose.msra.mxu0 0
  %5223 = vmatprep.subr.bf16.mxu0 0
  %5224 = vmatpush1.bf16.xpose.msra.mxu0 0
  %5225 = vmatprep.subr.bf16.mxu0 0
  %5226 = vmatpush1.bf16.xpose.msra.mxu0 0
  %5227 = vmatprep.subr.bf16.mxu0 0
  %5228 = vmatpush1.bf16.xpose.msra.mxu0 0
  %5229 = vmatprep.subr.bf16.mxu0 0
  %5230 = vmatpush1.bf16.xpose.msra.mxu0 0
  %5231 = vmatprep.subr.bf16.mxu0 0
  %5232 = vmatpush1.bf16.xpose.msra.mxu0 0
  %5233 = vmatprep.subr.bf16.mxu0 0
  %5234 = vmatpush1.bf16.xpose.msra.mxu0 0
  %5235 = vmatprep.subr.bf16.mxu0 0
  %5236 = vmatpush1.bf16.xpose.msra.mxu0 0
  %5237 = vmatprep.subr.bf16.mxu0 0
  %5238 = vmatpush1.bf16.xpose.msra.mxu0 0
  %5239 = vmatprep.subr.bf16.mxu0 0
  %5240 = vmatpush1.bf16.xpose.msra.mxu0 0
  %5241 = vmatprep.subr.bf16.mxu0 0
  %5242 = vmatpush1.bf16.xpose.msra.mxu0 0
  %5243 = vmatprep.subr.bf16.mxu0 0
  %5244 = vmatpush1.bf16.xpose.msra.mxu0 0
  %5245 = vmatprep.subr.bf16.mxu0 0
  %5246 = vmatpush1.bf16.xpose.msra.mxu0 0
  %5247 = vmatprep.mubr.bf16.mxu0 0
  %5248 = vmatmul.mubr.bf16.gmra.mrb[0].mxu0 %v5210
  %v5249 = vpop.f32.mrb[0].mxu0
  %v5250 = vadd.f32 0.0, %v5249
  %v5251 = vpop.f32.mrb[0].mxu0
  %v5252 = vpop.f32.mrb[0].mxu0
  %v5253 = vadd.f32 0.0, %v5252
  %v5254 = vpop.f32.mrb[0].mxu0
  %5255 = vdwg.mxu0
  %v5257 = vsel %vm258, %v5014, 0
  %v5260 = vsel %vm258, %v5046, 0
  %5262 = vmatprep.subr.bf16.mxu0 0
  %5263 = vmatpush1.bf16.xpose.msra.mxu0 %v5260
  %5264 = vmatprep.subr.bf16.mxu0 0
  %5265 = vmatpush1.bf16.xpose.msra.mxu0 0
  %5266 = vmatprep.subr.bf16.mxu0 0
  %5267 = vmatpush1.bf16.xpose.msra.mxu0 0
  %5268 = vmatprep.subr.bf16.mxu0 0
  %5269 = vmatpush1.bf16.xpose.msra.mxu0 0
  %5270 = vmatprep.subr.bf16.mxu0 0
  %5271 = vmatpush1.bf16.xpose.msra.mxu0 0
  %5272 = vmatprep.subr.bf16.mxu0 0
  %5273 = vmatpush1.bf16.xpose.msra.mxu0 0
  %5274 = vmatprep.subr.bf16.mxu0 0
  %5275 = vmatpush1.bf16.xpose.msra.mxu0 0
  %5276 = vmatprep.subr.bf16.mxu0 0
  %5277 = vmatpush1.bf16.xpose.msra.mxu0 0
  %5278 = vmatprep.subr.bf16.mxu0 0
  %5279 = vmatpush1.bf16.xpose.msra.mxu0 0
  %5280 = vmatprep.subr.bf16.mxu0 0
  %5281 = vmatpush1.bf16.xpose.msra.mxu0 0
  %5282 = vmatprep.subr.bf16.mxu0 0
  %5283 = vmatpush1.bf16.xpose.msra.mxu0 0
  %5284 = vmatprep.subr.bf16.mxu0 0
  %5285 = vmatpush1.bf16.xpose.msra.mxu0 0
  %5286 = vmatprep.subr.bf16.mxu0 0
  %5287 = vmatpush1.bf16.xpose.msra.mxu0 0
  %5288 = vmatprep.subr.bf16.mxu0 0
  %5289 = vmatpush1.bf16.xpose.msra.mxu0 0
  %5290 = vmatprep.subr.bf16.mxu0 0
  %5291 = vmatpush1.bf16.xpose.msra.mxu0 0
  %5292 = vmatprep.subr.bf16.mxu0 0
  %5293 = vmatpush1.bf16.xpose.msra.mxu0 0
  %5294 = vmatprep.mubr.bf16.mxu0 0
  %5295 = vmatmul.mubr.bf16.gmra.mrb[0].mxu0 %v5257
  %v5296 = vpop.f32.mrb[0].mxu0
  %v5297 = vadd.f32 0.0, %v5296
  %v5298 = vpop.f32.mrb[0].mxu0
  %v5299 = vpop.f32.mrb[0].mxu0
  %v5300 = vadd.f32 0.0, %v5299
  %v5301 = vpop.f32.mrb[0].mxu0
  %5302 = vdwg.mxu0
  %v5304 = vsel %vm258, %v5015, 0
  %v5307 = vsel %vm258, %v5047, 0
  %5309 = vmatprep.subr.bf16.mxu0 0
  %5310 = vmatpush1.bf16.xpose.msra.mxu0 %v5307
  %5311 = vmatprep.subr.bf16.mxu0 0
  %5312 = vmatpush1.bf16.xpose.msra.mxu0 0
  %5313 = vmatprep.subr.bf16.mxu0 0
  %5314 = vmatpush1.bf16.xpose.msra.mxu0 0
  %5315 = vmatprep.subr.bf16.mxu0 0
  %5316 = vmatpush1.bf16.xpose.msra.mxu0 0
  %5317 = vmatprep.subr.bf16.mxu0 0
  %5318 = vmatpush1.bf16.xpose.msra.mxu0 0
  %5319 = vmatprep.subr.bf16.mxu0 0
  %5320 = vmatpush1.bf16.xpose.msra.mxu0 0
  %5321 = vmatprep.subr.bf16.mxu0 0
  %5322 = vmatpush1.bf16.xpose.msra.mxu0 0
  %5323 = vmatprep.subr.bf16.mxu0 0
  %5324 = vmatpush1.bf16.xpose.msra.mxu0 0
  %5325 = vmatprep.subr.bf16.mxu0 0
  %5326 = vmatpush1.bf16.xpose.msra.mxu0 0
  %5327 = vmatprep.subr.bf16.mxu0 0
  %5328 = vmatpush1.bf16.xpose.msra.mxu0 0
  %5329 = vmatprep.subr.bf16.mxu0 0
  %5330 = vmatpush1.bf16.xpose.msra.mxu0 0
  %5331 = vmatprep.subr.bf16.mxu0 0
  %5332 = vmatpush1.bf16.xpose.msra.mxu0 0
  %5333 = vmatprep.subr.bf16.mxu0 0
  %5334 = vmatpush1.bf16.xpose.msra.mxu0 0
  %5335 = vmatprep.subr.bf16.mxu0 0
  %5336 = vmatpush1.bf16.xpose.msra.mxu0 0
  %5337 = vmatprep.subr.bf16.mxu0 0
  %5338 = vmatpush1.bf16.xpose.msra.mxu0 0
  %5339 = vmatprep.subr.bf16.mxu0 0
  %5340 = vmatpush1.bf16.xpose.msra.mxu0 0
  %5341 = vmatprep.mubr.bf16.mxu0 0
  %5342 = vmatmul.mubr.bf16.gmra.mrb[0].mxu0 %v5304
  %v5343 = vpop.f32.mrb[0].mxu0
  %v5344 = vadd.f32 0.0, %v5343
  %v5345 = vpop.f32.mrb[0].mxu0
  %v5346 = vpop.f32.mrb[0].mxu0
  %v5347 = vadd.f32 0.0, %v5346
  %v5348 = vpop.f32.mrb[0].mxu0
  %5349 = vdwg.mxu0
  %v5351 = vsel %vm258, %v5016, 0
  %v5354 = vsel %vm258, %v5048, 0
  %5356 = vmatprep.subr.bf16.mxu0 0
  %5357 = vmatpush1.bf16.xpose.msra.mxu0 %v5354
  %5358 = vmatprep.subr.bf16.mxu0 0
  %5359 = vmatpush1.bf16.xpose.msra.mxu0 0
  %5360 = vmatprep.subr.bf16.mxu0 0
  %5361 = vmatpush1.bf16.xpose.msra.mxu0 0
  %5362 = vmatprep.subr.bf16.mxu0 0
  %5363 = vmatpush1.bf16.xpose.msra.mxu0 0
  %5364 = vmatprep.subr.bf16.mxu0 0
  %5365 = vmatpush1.bf16.xpose.msra.mxu0 0
  %5366 = vmatprep.subr.bf16.mxu0 0
  %5367 = vmatpush1.bf16.xpose.msra.mxu0 0
  %5368 = vmatprep.subr.bf16.mxu0 0
  %5369 = vmatpush1.bf16.xpose.msra.mxu0 0
  %5370 = vmatprep.subr.bf16.mxu0 0
  %5371 = vmatpush1.bf16.xpose.msra.mxu0 0
  %5372 = vmatprep.subr.bf16.mxu0 0
  %5373 = vmatpush1.bf16.xpose.msra.mxu0 0
  %5374 = vmatprep.subr.bf16.mxu0 0
  %5375 = vmatpush1.bf16.xpose.msra.mxu0 0
  %5376 = vmatprep.subr.bf16.mxu0 0
  %5377 = vmatpush1.bf16.xpose.msra.mxu0 0
  %5378 = vmatprep.subr.bf16.mxu0 0
  %5379 = vmatpush1.bf16.xpose.msra.mxu0 0
  %5380 = vmatprep.subr.bf16.mxu0 0
  %5381 = vmatpush1.bf16.xpose.msra.mxu0 0
  %5382 = vmatprep.subr.bf16.mxu0 0
  %5383 = vmatpush1.bf16.xpose.msra.mxu0 0
  %5384 = vmatprep.subr.bf16.mxu0 0
  %5385 = vmatpush1.bf16.xpose.msra.mxu0 0
  %5386 = vmatprep.subr.bf16.mxu0 0
  %5387 = vmatpush1.bf16.xpose.msra.mxu0 0
  %5388 = vmatprep.mubr.bf16.mxu0 0
  %5389 = vmatmul.mubr.bf16.gmra.mrb[0].mxu0 %v5351
  %v5390 = vpop.f32.mrb[0].mxu0
  %v5391 = vadd.f32 0.0, %v5390
  %v5392 = vpop.f32.mrb[0].mxu0
  %v5393 = vpop.f32.mrb[0].mxu0
  %v5394 = vadd.f32 0.0, %v5393
  %v5395 = vpop.f32.mrb[0].mxu0
  %5396 = vdwg.mxu0
  %v5398 = vsel %vm258, %v5017, 0
  %v5401 = vsel %vm258, %v5049, 0
  %5403 = vmatprep.subr.bf16.mxu0 0
  %5404 = vmatpush1.bf16.xpose.msra.mxu0 %v5401
  %5405 = vmatprep.subr.bf16.mxu0 0
  %5406 = vmatpush1.bf16.xpose.msra.mxu0 0
  %5407 = vmatprep.subr.bf16.mxu0 0
  %5408 = vmatpush1.bf16.xpose.msra.mxu0 0
  %5409 = vmatprep.subr.bf16.mxu0 0
  %5410 = vmatpush1.bf16.xpose.msra.mxu0 0
  %5411 = vmatprep.subr.bf16.mxu0 0
  %5412 = vmatpush1.bf16.xpose.msra.mxu0 0
  %5413 = vmatprep.subr.bf16.mxu0 0
  %5414 = vmatpush1.bf16.xpose.msra.mxu0 0
  %5415 = vmatprep.subr.bf16.mxu0 0
  %5416 = vmatpush1.bf16.xpose.msra.mxu0 0
  %5417 = vmatprep.subr.bf16.mxu0 0
  %5418 = vmatpush1.bf16.xpose.msra.mxu0 0
  %5419 = vmatprep.subr.bf16.mxu0 0
  %5420 = vmatpush1.bf16.xpose.msra.mxu0 0
  %5421 = vmatprep.subr.bf16.mxu0 0
  %5422 = vmatpush1.bf16.xpose.msra.mxu0 0
  %5423 = vmatprep.subr.bf16.mxu0 0
  %5424 = vmatpush1.bf16.xpose.msra.mxu0 0
  %5425 = vmatprep.subr.bf16.mxu0 0
  %5426 = vmatpush1.bf16.xpose.msra.mxu0 0
  %5427 = vmatprep.subr.bf16.mxu0 0
  %5428 = vmatpush1.bf16.xpose.msra.mxu0 0
  %5429 = vmatprep.subr.bf16.mxu0 0
  %5430 = vmatpush1.bf16.xpose.msra.mxu0 0
  %5431 = vmatprep.subr.bf16.mxu0 0
  %5432 = vmatpush1.bf16.xpose.msra.mxu0 0
  %5433 = vmatprep.subr.bf16.mxu0 0
  %5434 = vmatpush1.bf16.xpose.msra.mxu0 0
  %5435 = vmatprep.mubr.bf16.mxu0 0
  %5436 = vmatmul.mubr.bf16.gmra.mrb[0].mxu0 %v5398
  %v5437 = vpop.f32.mrb[0].mxu0
  %v5438 = vadd.f32 0.0, %v5437
  %v5439 = vpop.f32.mrb[0].mxu0
  %v5440 = vpop.f32.mrb[0].mxu0
  %v5441 = vadd.f32 0.0, %v5440
  %v5442 = vpop.f32.mrb[0].mxu0
  %5443 = vdwg.mxu0
  %v5445 = vsel %vm258, %v5018, 0
  %v5448 = vsel %vm258, %v5050, 0
  %5450 = vmatprep.subr.bf16.mxu0 0
  %5451 = vmatpush1.bf16.xpose.msra.mxu0 %v5448
  %5452 = vmatprep.subr.bf16.mxu0 0
  %5453 = vmatpush1.bf16.xpose.msra.mxu0 0
  %5454 = vmatprep.subr.bf16.mxu0 0
  %5455 = vmatpush1.bf16.xpose.msra.mxu0 0
  %5456 = vmatprep.subr.bf16.mxu0 0
  %5457 = vmatpush1.bf16.xpose.msra.mxu0 0
  %5458 = vmatprep.subr.bf16.mxu0 0
  %5459 = vmatpush1.bf16.xpose.msra.mxu0 0
  %5460 = vmatprep.subr.bf16.mxu0 0
  %5461 = vmatpush1.bf16.xpose.msra.mxu0 0
  %5462 = vmatprep.subr.bf16.mxu0 0
  %5463 = vmatpush1.bf16.xpose.msra.mxu0 0
  %5464 = vmatprep.subr.bf16.mxu0 0
  %5465 = vmatpush1.bf16.xpose.msra.mxu0 0
  %5466 = vmatprep.subr.bf16.mxu0 0
  %5467 = vmatpush1.bf16.xpose.msra.mxu0 0
  %5468 = vmatprep.subr.bf16.mxu0 0
  %5469 = vmatpush1.bf16.xpose.msra.mxu0 0
  %5470 = vmatprep.subr.bf16.mxu0 0
  %5471 = vmatpush1.bf16.xpose.msra.mxu0 0
  %5472 = vmatprep.subr.bf16.mxu0 0
  %5473 = vmatpush1.bf16.xpose.msra.mxu0 0
  %5474 = vmatprep.subr.bf16.mxu0 0
  %5475 = vmatpush1.bf16.xpose.msra.mxu0 0
  %5476 = vmatprep.subr.bf16.mxu0 0
  %5477 = vmatpush1.bf16.xpose.msra.mxu0 0
  %5478 = vmatprep.subr.bf16.mxu0 0
  %5479 = vmatpush1.bf16.xpose.msra.mxu0 0
  %5480 = vmatprep.subr.bf16.mxu0 0
  %5481 = vmatpush1.bf16.xpose.msra.mxu0 0
  %5482 = vmatprep.mubr.bf16.mxu0 0
  %5483 = vmatmul.mubr.bf16.gmra.mrb[0].mxu0 %v5445
  %v5484 = vpop.f32.mrb[0].mxu0
  %v5485 = vadd.f32 0.0, %v5484
  %v5486 = vpop.f32.mrb[0].mxu0
  %v5487 = vpop.f32.mrb[0].mxu0
  %v5488 = vadd.f32 0.0, %v5487
  %v5489 = vpop.f32.mrb[0].mxu0
  %5490 = vdwg.mxu0
  %v5492 = vsel %vm258, %v5028, 0
  %v5495 = vsel %vm258, %v5060, 0
  %5497 = vmatprep.subr.bf16.mxu0 0
  %5498 = vmatpush1.bf16.xpose.msra.mxu0 %v5495
  %5499 = vmatprep.subr.bf16.mxu0 0
  %5500 = vmatpush1.bf16.xpose.msra.mxu0 0
  %5501 = vmatprep.subr.bf16.mxu0 0
  %5502 = vmatpush1.bf16.xpose.msra.mxu0 0
  %5503 = vmatprep.subr.bf16.mxu0 0
  %5504 = vmatpush1.bf16.xpose.msra.mxu0 0
  %5505 = vmatprep.subr.bf16.mxu0 0
  %5506 = vmatpush1.bf16.xpose.msra.mxu0 0
  %5507 = vmatprep.subr.bf16.mxu0 0
  %5508 = vmatpush1.bf16.xpose.msra.mxu0 0
  %5509 = vmatprep.subr.bf16.mxu0 0
  %5510 = vmatpush1.bf16.xpose.msra.mxu0 0
  %5511 = vmatprep.subr.bf16.mxu0 0
  %5512 = vmatpush1.bf16.xpose.msra.mxu0 0
  %5513 = vmatprep.subr.bf16.mxu0 0
  %5514 = vmatpush1.bf16.xpose.msra.mxu0 0
  %5515 = vmatprep.subr.bf16.mxu0 0
  %5516 = vmatpush1.bf16.xpose.msra.mxu0 0
  %5517 = vmatprep.subr.bf16.mxu0 0
  %5518 = vmatpush1.bf16.xpose.msra.mxu0 0
  %5519 = vmatprep.subr.bf16.mxu0 0
  %5520 = vmatpush1.bf16.xpose.msra.mxu0 0
  %5521 = vmatprep.subr.bf16.mxu0 0
  %5522 = vmatpush1.bf16.xpose.msra.mxu0 0
  %5523 = vmatprep.subr.bf16.mxu0 0
  %5524 = vmatpush1.bf16.xpose.msra.mxu0 0
  %5525 = vmatprep.subr.bf16.mxu0 0
  %5526 = vmatpush1.bf16.xpose.msra.mxu0 0
  %5527 = vmatprep.subr.bf16.mxu0 0
  %5528 = vmatpush1.bf16.xpose.msra.mxu0 0
  %5529 = vmatprep.mubr.bf16.mxu0 0
  %5530 = vmatmul.mubr.bf16.gmra.mrb[0].mxu0 %v5492
  %v5531 = vpop.f32.mrb[0].mxu0
  %v5532 = vadd.f32 0.0, %v5531
  %v5533 = vpop.f32.mrb[0].mxu0
  %v5534 = vpop.f32.mrb[0].mxu0
  %v5535 = vadd.f32 0.0, %v5534
  %v5536 = vpop.f32.mrb[0].mxu0
  %5537 = vdwg.mxu0
  %v5539 = vsel %vm258, %v5030, 0
  %v5542 = vsel %vm258, %v5062, 0
  %5544 = vmatprep.subr.bf16.mxu0 0
  %5545 = vmatpush1.bf16.xpose.msra.mxu0 %v5542
  %5546 = vmatprep.subr.bf16.mxu0 0
  %5547 = vmatpush1.bf16.xpose.msra.mxu0 0
  %5548 = vmatprep.subr.bf16.mxu0 0
  %5549 = vmatpush1.bf16.xpose.msra.mxu0 0
  %5550 = vmatprep.subr.bf16.mxu0 0
  %5551 = vmatpush1.bf16.xpose.msra.mxu0 0
  %5552 = vmatprep.subr.bf16.mxu0 0
  %5553 = vmatpush1.bf16.xpose.msra.mxu0 0
  %5554 = vmatprep.subr.bf16.mxu0 0
  %5555 = vmatpush1.bf16.xpose.msra.mxu0 0
  %5556 = vmatprep.subr.bf16.mxu0 0
  %5557 = vmatpush1.bf16.xpose.msra.mxu0 0
  %5558 = vmatprep.subr.bf16.mxu0 0
  %5559 = vmatpush1.bf16.xpose.msra.mxu0 0
  %5560 = vmatprep.subr.bf16.mxu0 0
  %5561 = vmatpush1.bf16.xpose.msra.mxu0 0
  %5562 = vmatprep.subr.bf16.mxu0 0
  %5563 = vmatpush1.bf16.xpose.msra.mxu0 0
  %5564 = vmatprep.subr.bf16.mxu0 0
  %5565 = vmatpush1.bf16.xpose.msra.mxu0 0
  %5566 = vmatprep.subr.bf16.mxu0 0
  %5567 = vmatpush1.bf16.xpose.msra.mxu0 0
  %5568 = vmatprep.subr.bf16.mxu0 0
  %5569 = vmatpush1.bf16.xpose.msra.mxu0 0
  %5570 = vmatprep.subr.bf16.mxu0 0
  %5571 = vmatpush1.bf16.xpose.msra.mxu0 0
  %5572 = vmatprep.subr.bf16.mxu0 0
  %5573 = vmatpush1.bf16.xpose.msra.mxu0 0
  %5574 = vmatprep.subr.bf16.mxu0 0
  %5575 = vmatpush1.bf16.xpose.msra.mxu0 0
  %5576 = vmatprep.mubr.bf16.mxu0 0
  %5577 = vmatmul.mubr.bf16.gmra.mrb[0].mxu0 %v5539
  %v5578 = vpop.f32.mrb[0].mxu0
  %v5579 = vadd.f32 0.0, %v5578
  %v5580 = vpop.f32.mrb[0].mxu0
  %v5581 = vpop.f32.mrb[0].mxu0
  %v5582 = vadd.f32 0.0, %v5581
  %v5583 = vpop.f32.mrb[0].mxu0
  %5584 = vdwg.mxu0
  %v5586 = vsel %vm258, %v5032, 0
  %v5589 = vsel %vm258, %v5064, 0
  %5591 = vmatprep.subr.bf16.mxu0 0
  %5592 = vmatpush1.bf16.xpose.msra.mxu0 %v5589
  %5593 = vmatprep.subr.bf16.mxu0 0
  %5594 = vmatpush1.bf16.xpose.msra.mxu0 0
  %5595 = vmatprep.subr.bf16.mxu0 0
  %5596 = vmatpush1.bf16.xpose.msra.mxu0 0
  %5597 = vmatprep.subr.bf16.mxu0 0
  %5598 = vmatpush1.bf16.xpose.msra.mxu0 0
  %5599 = vmatprep.subr.bf16.mxu0 0
  %5600 = vmatpush1.bf16.xpose.msra.mxu0 0
  %5601 = vmatprep.subr.bf16.mxu0 0
  %5602 = vmatpush1.bf16.xpose.msra.mxu0 0
  %5603 = vmatprep.subr.bf16.mxu0 0
  %5604 = vmatpush1.bf16.xpose.msra.mxu0 0
  %5605 = vmatprep.subr.bf16.mxu0 0
  %5606 = vmatpush1.bf16.xpose.msra.mxu0 0
  %5607 = vmatprep.subr.bf16.mxu0 0
  %5608 = vmatpush1.bf16.xpose.msra.mxu0 0
  %5609 = vmatprep.subr.bf16.mxu0 0
  %5610 = vmatpush1.bf16.xpose.msra.mxu0 0
  %5611 = vmatprep.subr.bf16.mxu0 0
  %5612 = vmatpush1.bf16.xpose.msra.mxu0 0
  %5613 = vmatprep.subr.bf16.mxu0 0
  %5614 = vmatpush1.bf16.xpose.msra.mxu0 0
  %5615 = vmatprep.subr.bf16.mxu0 0
  %5616 = vmatpush1.bf16.xpose.msra.mxu0 0
  %5617 = vmatprep.subr.bf16.mxu0 0
  %5618 = vmatpush1.bf16.xpose.msra.mxu0 0
  %5619 = vmatprep.subr.bf16.mxu0 0
  %5620 = vmatpush1.bf16.xpose.msra.mxu0 0
  %5621 = vmatprep.subr.bf16.mxu0 0
  %5622 = vmatpush1.bf16.xpose.msra.mxu0 0
  %5623 = vmatprep.mubr.bf16.mxu0 0
  %5624 = vmatmul.mubr.bf16.gmra.mrb[0].mxu0 %v5586
  %v5625 = vpop.f32.mrb[0].mxu0
  %v5626 = vadd.f32 0.0, %v5625
  %v5627 = vpop.f32.mrb[0].mxu0
  %v5628 = vpop.f32.mrb[0].mxu0
  %v5629 = vadd.f32 0.0, %v5628
  %v5630 = vpop.f32.mrb[0].mxu0
  %5631 = vdwg.mxu0
  %v5633 = vsel %vm258, %v5034, 0
  %v5636 = vsel %vm258, %v5066, 0
  %5638 = vmatprep.subr.bf16.mxu0 0
  %5639 = vmatpush1.bf16.xpose.msra.mxu0 %v5636
  %5640 = vmatprep.subr.bf16.mxu0 0
  %5641 = vmatpush1.bf16.xpose.msra.mxu0 0
  %5642 = vmatprep.subr.bf16.mxu0 0
  %5643 = vmatpush1.bf16.xpose.msra.mxu0 0
  %5644 = vmatprep.subr.bf16.mxu0 0
  %5645 = vmatpush1.bf16.xpose.msra.mxu0 0
  %5646 = vmatprep.subr.bf16.mxu0 0
  %5647 = vmatpush1.bf16.xpose.msra.mxu0 0
  %5648 = vmatprep.subr.bf16.mxu0 0
  %5649 = vmatpush1.bf16.xpose.msra.mxu0 0
  %5650 = vmatprep.subr.bf16.mxu0 0
  %5651 = vmatpush1.bf16.xpose.msra.mxu0 0
  %5652 = vmatprep.subr.bf16.mxu0 0
  %5653 = vmatpush1.bf16.xpose.msra.mxu0 0
  %5654 = vmatprep.subr.bf16.mxu0 0
  %5655 = vmatpush1.bf16.xpose.msra.mxu0 0
  %5656 = vmatprep.subr.bf16.mxu0 0
  %5657 = vmatpush1.bf16.xpose.msra.mxu0 0
  %5658 = vmatprep.subr.bf16.mxu0 0
  %5659 = vmatpush1.bf16.xpose.msra.mxu0 0
  %5660 = vmatprep.subr.bf16.mxu0 0
  %5661 = vmatpush1.bf16.xpose.msra.mxu0 0
  %5662 = vmatprep.subr.bf16.mxu0 0
  %5663 = vmatpush1.bf16.xpose.msra.mxu0 0
  %5664 = vmatprep.subr.bf16.mxu0 0
  %5665 = vmatpush1.bf16.xpose.msra.mxu0 0
  %5666 = vmatprep.subr.bf16.mxu0 0
  %5667 = vmatpush1.bf16.xpose.msra.mxu0 0
  %5668 = vmatprep.subr.bf16.mxu0 0
  %5669 = vmatpush1.bf16.xpose.msra.mxu0 0
  %5670 = vmatprep.mubr.bf16.mxu0 0
  %5671 = vmatmul.mubr.bf16.gmra.mrb[0].mxu0 %v5633
  %v5672 = vpop.f32.mrb[0].mxu0
  %v5673 = vadd.f32 0.0, %v5672
  %v5674 = vpop.f32.mrb[0].mxu0
  %v5675 = vpop.f32.mrb[0].mxu0
  %v5676 = vadd.f32 0.0, %v5675
  %v5677 = vpop.f32.mrb[0].mxu0
  %5678 = vdwg.mxu0
  %v5680 = vsel %vm258, %v5036, 0
  %v5683 = vsel %vm258, %v5068, 0
  %5685 = vmatprep.subr.bf16.mxu0 0
  %5686 = vmatpush1.bf16.xpose.msra.mxu0 %v5683
  %5687 = vmatprep.subr.bf16.mxu0 0
  %5688 = vmatpush1.bf16.xpose.msra.mxu0 0
  %5689 = vmatprep.subr.bf16.mxu0 0
  %5690 = vmatpush1.bf16.xpose.msra.mxu0 0
  %5691 = vmatprep.subr.bf16.mxu0 0
  %5692 = vmatpush1.bf16.xpose.msra.mxu0 0
  %5693 = vmatprep.subr.bf16.mxu0 0
  %5694 = vmatpush1.bf16.xpose.msra.mxu0 0
  %5695 = vmatprep.subr.bf16.mxu0 0
  %5696 = vmatpush1.bf16.xpose.msra.mxu0 0
  %5697 = vmatprep.subr.bf16.mxu0 0
  %5698 = vmatpush1.bf16.xpose.msra.mxu0 0
  %5699 = vmatprep.subr.bf16.mxu0 0
  %5700 = vmatpush1.bf16.xpose.msra.mxu0 0
  %5701 = vmatprep.subr.bf16.mxu0 0
  %5702 = vmatpush1.bf16.xpose.msra.mxu0 0
  %5703 = vmatprep.subr.bf16.mxu0 0
  %5704 = vmatpush1.bf16.xpose.msra.mxu0 0
  %5705 = vmatprep.subr.bf16.mxu0 0
  %5706 = vmatpush1.bf16.xpose.msra.mxu0 0
  %5707 = vmatprep.subr.bf16.mxu0 0
  %5708 = vmatpush1.bf16.xpose.msra.mxu0 0
  %5709 = vmatprep.subr.bf16.mxu0 0
  %5710 = vmatpush1.bf16.xpose.msra.mxu0 0
  %5711 = vmatprep.subr.bf16.mxu0 0
  %5712 = vmatpush1.bf16.xpose.msra.mxu0 0
  %5713 = vmatprep.subr.bf16.mxu0 0
  %5714 = vmatpush1.bf16.xpose.msra.mxu0 0
  %5715 = vmatprep.subr.bf16.mxu0 0
  %5716 = vmatpush1.bf16.xpose.msra.mxu0 0
  %5717 = vmatprep.mubr.bf16.mxu0 0
  %5718 = vmatmul.mubr.bf16.gmra.mrb[0].mxu0 %v5680
  %v5719 = vpop.f32.mrb[0].mxu0
  %v5720 = vadd.f32 0.0, %v5719
  %v5721 = vpop.f32.mrb[0].mxu0
  %v5722 = vpop.f32.mrb[0].mxu0
  %v5723 = vadd.f32 0.0, %v5722
  %v5724 = vpop.f32.mrb[0].mxu0
  %5725 = vdwg.mxu0
  %v5727 = vsel %vm258, %v5038, 0
  %v5730 = vsel %vm258, %v5070, 0
  %5732 = vmatprep.subr.bf16.mxu0 0
  %5733 = vmatpush1.bf16.xpose.msra.mxu0 %v5730
  %5734 = vmatprep.subr.bf16.mxu0 0
  %5735 = vmatpush1.bf16.xpose.msra.mxu0 0
  %5736 = vmatprep.subr.bf16.mxu0 0
  %5737 = vmatpush1.bf16.xpose.msra.mxu0 0
  %5738 = vmatprep.subr.bf16.mxu0 0
  %5739 = vmatpush1.bf16.xpose.msra.mxu0 0
  %5740 = vmatprep.subr.bf16.mxu0 0
  %5741 = vmatpush1.bf16.xpose.msra.mxu0 0
  %5742 = vmatprep.subr.bf16.mxu0 0
  %5743 = vmatpush1.bf16.xpose.msra.mxu0 0
  %5744 = vmatprep.subr.bf16.mxu0 0
  %5745 = vmatpush1.bf16.xpose.msra.mxu0 0
  %5746 = vmatprep.subr.bf16.mxu0 0
  %5747 = vmatpush1.bf16.xpose.msra.mxu0 0
  %5748 = vmatprep.subr.bf16.mxu0 0
  %5749 = vmatpush1.bf16.xpose.msra.mxu0 0
  %5750 = vmatprep.subr.bf16.mxu0 0
  %5751 = vmatpush1.bf16.xpose.msra.mxu0 0
  %5752 = vmatprep.subr.bf16.mxu0 0
  %5753 = vmatpush1.bf16.xpose.msra.mxu0 0
  %5754 = vmatprep.subr.bf16.mxu0 0
  %5755 = vmatpush1.bf16.xpose.msra.mxu0 0
  %5756 = vmatprep.subr.bf16.mxu0 0
  %5757 = vmatpush1.bf16.xpose.msra.mxu0 0
  %5758 = vmatprep.subr.bf16.mxu0 0
  %5759 = vmatpush1.bf16.xpose.msra.mxu0 0
  %5760 = vmatprep.subr.bf16.mxu0 0
  %5761 = vmatpush1.bf16.xpose.msra.mxu0 0
  %5762 = vmatprep.subr.bf16.mxu0 0
  %5763 = vmatpush1.bf16.xpose.msra.mxu0 0
  %5764 = vmatprep.mubr.bf16.mxu0 0
  %5765 = vmatmul.mubr.bf16.gmra.mrb[0].mxu0 %v5727
  %v5766 = vpop.f32.mrb[0].mxu0
  %v5767 = vadd.f32 0.0, %v5766
  %v5768 = vpop.f32.mrb[0].mxu0
  %v5769 = vpop.f32.mrb[0].mxu0
  %v5770 = vadd.f32 0.0, %v5769
  %v5771 = vpop.f32.mrb[0].mxu0
  %5772 = vdwg.mxu0
  %v5774 = vsel %vm258, %v5040, 0
  %v5777 = vsel %vm258, %v5072, 0
  %5779 = vmatprep.subr.bf16.mxu0 0
  %5780 = vmatpush1.bf16.xpose.msra.mxu0 %v5777
  %5781 = vmatprep.subr.bf16.mxu0 0
  %5782 = vmatpush1.bf16.xpose.msra.mxu0 0
  %5783 = vmatprep.subr.bf16.mxu0 0
  %5784 = vmatpush1.bf16.xpose.msra.mxu0 0
  %5785 = vmatprep.subr.bf16.mxu0 0
  %5786 = vmatpush1.bf16.xpose.msra.mxu0 0
  %5787 = vmatprep.subr.bf16.mxu0 0
  %5788 = vmatpush1.bf16.xpose.msra.mxu0 0
  %5789 = vmatprep.subr.bf16.mxu0 0
  %5790 = vmatpush1.bf16.xpose.msra.mxu0 0
  %5791 = vmatprep.subr.bf16.mxu0 0
  %5792 = vmatpush1.bf16.xpose.msra.mxu0 0
  %5793 = vmatprep.subr.bf16.mxu0 0
  %5794 = vmatpush1.bf16.xpose.msra.mxu0 0
  %5795 = vmatprep.subr.bf16.mxu0 0
  %5796 = vmatpush1.bf16.xpose.msra.mxu0 0
  %5797 = vmatprep.subr.bf16.mxu0 0
  %5798 = vmatpush1.bf16.xpose.msra.mxu0 0
  %5799 = vmatprep.subr.bf16.mxu0 0
  %5800 = vmatpush1.bf16.xpose.msra.mxu0 0
  %5801 = vmatprep.subr.bf16.mxu0 0
  %5802 = vmatpush1.bf16.xpose.msra.mxu0 0
  %5803 = vmatprep.subr.bf16.mxu0 0
  %5804 = vmatpush1.bf16.xpose.msra.mxu0 0
  %5805 = vmatprep.subr.bf16.mxu0 0
  %5806 = vmatpush1.bf16.xpose.msra.mxu0 0
  %5807 = vmatprep.subr.bf16.mxu0 0
  %5808 = vmatpush1.bf16.xpose.msra.mxu0 0
  %5809 = vmatprep.subr.bf16.mxu0 0
  %5810 = vmatpush1.bf16.xpose.msra.mxu0 0
  %5811 = vmatprep.mubr.bf16.mxu0 0
  %5812 = vmatmul.mubr.bf16.gmra.mrb[0].mxu0 %v5774
  %v5813 = vpop.f32.mrb[0].mxu0
  %v5814 = vadd.f32 0.0, %v5813
  %v5815 = vpop.f32.mrb[0].mxu0
  %v5816 = vpop.f32.mrb[0].mxu0
  %v5817 = vadd.f32 0.0, %v5816
  %v5818 = vpop.f32.mrb[0].mxu0
  %5819 = vdwg.mxu0
  %v5821 = vsel %vm258, %v5042, 0
  %v5824 = vsel %vm258, %v5074, 0
  %5826 = vmatprep.subr.bf16.mxu0 0
  %5827 = vmatpush1.bf16.xpose.msra.mxu0 %v5824
  %5828 = vmatprep.subr.bf16.mxu0 0
  %5829 = vmatpush1.bf16.xpose.msra.mxu0 0
  %5830 = vmatprep.subr.bf16.mxu0 0
  %5831 = vmatpush1.bf16.xpose.msra.mxu0 0
  %5832 = vmatprep.subr.bf16.mxu0 0
  %5833 = vmatpush1.bf16.xpose.msra.mxu0 0
  %5834 = vmatprep.subr.bf16.mxu0 0
  %5835 = vmatpush1.bf16.xpose.msra.mxu0 0
  %5836 = vmatprep.subr.bf16.mxu0 0
  %5837 = vmatpush1.bf16.xpose.msra.mxu0 0
  %5838 = vmatprep.subr.bf16.mxu0 0
  %5839 = vmatpush1.bf16.xpose.msra.mxu0 0
  %5840 = vmatprep.subr.bf16.mxu0 0
  %5841 = vmatpush1.bf16.xpose.msra.mxu0 0
  %5842 = vmatprep.subr.bf16.mxu0 0
  %5843 = vmatpush1.bf16.xpose.msra.mxu0 0
  %5844 = vmatprep.subr.bf16.mxu0 0
  %5845 = vmatpush1.bf16.xpose.msra.mxu0 0
  %5846 = vmatprep.subr.bf16.mxu0 0
  %5847 = vmatpush1.bf16.xpose.msra.mxu0 0
  %5848 = vmatprep.subr.bf16.mxu0 0
  %5849 = vmatpush1.bf16.xpose.msra.mxu0 0
  %5850 = vmatprep.subr.bf16.mxu0 0
  %5851 = vmatpush1.bf16.xpose.msra.mxu0 0
  %5852 = vmatprep.subr.bf16.mxu0 0
  %5853 = vmatpush1.bf16.xpose.msra.mxu0 0
  %5854 = vmatprep.subr.bf16.mxu0 0
  %5855 = vmatpush1.bf16.xpose.msra.mxu0 0
  %5856 = vmatprep.subr.bf16.mxu0 0
  %5857 = vmatpush1.bf16.xpose.msra.mxu0 0
  %5858 = vmatprep.mubr.bf16.mxu0 0
  %5859 = vmatmul.mubr.bf16.gmra.mrb[0].mxu0 %v5821
  %v5860 = vpop.f32.mrb[0].mxu0
  %v5861 = vadd.f32 0.0, %v5860
  %v5862 = vpop.f32.mrb[0].mxu0
  %v5863 = vpop.f32.mrb[0].mxu0
  %v5864 = vadd.f32 0.0, %v5863
  %v5865 = vpop.f32.mrb[0].mxu0
  %5866 = vdwg.mxu0
  %v5867 = vmul.f32 %v5156, 0.125
  %v5868 = vmul.f32 %v5159, 0.125
  %v5869 = vmul.f32 %v5203, 0.125
  %v5870 = vmul.f32 %v5206, 0.125
  %v5871 = vmul.f32 %v5250, 0.125
  %v5872 = vmul.f32 %v5253, 0.125
  %v5873 = vmul.f32 %v5297, 0.125
  %v5874 = vmul.f32 %v5300, 0.125
  %v5875 = vmul.f32 %v5344, 0.125
  %v5876 = vmul.f32 %v5347, 0.125
  %v5877 = vmul.f32 %v5391, 0.125
  %v5878 = vmul.f32 %v5394, 0.125
  %v5879 = vmul.f32 %v5438, 0.125
  %v5880 = vmul.f32 %v5441, 0.125
  %v5881 = vmul.f32 %v5485, 0.125
  %v5882 = vmul.f32 %v5488, 0.125
  %v5883 = vmul.f32 %v5532, 0.125
  %v5884 = vmul.f32 %v5535, 0.125
  %v5885 = vmul.f32 %v5579, 0.125
  %v5886 = vmul.f32 %v5582, 0.125
  %v5887 = vmul.f32 %v5626, 0.125
  %v5888 = vmul.f32 %v5629, 0.125
  %v5889 = vmul.f32 %v5673, 0.125
  %v5890 = vmul.f32 %v5676, 0.125
  %v5891 = vmul.f32 %v5720, 0.125
  %v5892 = vmul.f32 %v5723, 0.125
  %v5893 = vmul.f32 %v5767, 0.125
  %v5894 = vmul.f32 %v5770, 0.125
  %v5895 = vmul.f32 %v5814, 0.125
  %v5896 = vmul.f32 %v5817, 0.125
  %v5897 = vmul.f32 %v5861, 0.125
  %v5898 = vmul.f32 %v5864, 0.125
  %v5899 = vadd.f32 %v5867, %v1853
  %v5900 = vadd.f32 %v5868, %v1853
  %v5901 = vadd.f32 %v5869, %v1857
  %v5902 = vadd.f32 %v5870, %v1857
  %v5903 = vadd.f32 %v5871, %v1861
  %v5904 = vadd.f32 %v5872, %v1861
  %v5905 = vadd.f32 %v5873, %v1865
  %v5906 = vadd.f32 %v5874, %v1865
  %v5907 = vadd.f32 %v5875, %v1869
  %v5908 = vadd.f32 %v5876, %v1869
  %v5909 = vadd.f32 %v5877, %v1873
  %v5910 = vadd.f32 %v5878, %v1873
  %v5911 = vadd.f32 %v5879, %v1877
  %v5912 = vadd.f32 %v5880, %v1877
  %v5913 = vadd.f32 %v5881, %v1881
  %v5914 = vadd.f32 %v5882, %v1881
  %v5915 = vadd.f32 %v5883, %v1853
  %v5916 = vadd.f32 %v5884, %v1853
  %v5917 = vadd.f32 %v5885, %v1857
  %v5918 = vadd.f32 %v5886, %v1857
  %v5919 = vadd.f32 %v5887, %v1861
  %v5920 = vadd.f32 %v5888, %v1861
  %v5921 = vadd.f32 %v5889, %v1865
  %v5922 = vadd.f32 %v5890, %v1865
  %v5923 = vadd.f32 %v5891, %v1869
  %v5924 = vadd.f32 %v5892, %v1869
  %v5925 = vadd.f32 %v5893, %v1873
  %v5926 = vadd.f32 %v5894, %v1873
  %v5927 = vadd.f32 %v5895, %v1877
  %v5928 = vadd.f32 %v5896, %v1877
  %v5929 = vadd.f32 %v5897, %v1881
  %v5930 = vadd.f32 %v5898, %v1881
  %v5931 = vsel %vm1922, %v5899, -inf
  %5932 = vmax.xlane.f32.xlu0 %v5931
  %v5933 = vpop.xlane.xlu0 %5932
  %v5934 = vsel %vm1922, %v5900, -inf
  %5935 = vmax.xlane.f32.xlu0 %v5934
  %v5936 = vpop.xlane.xlu0 %5935
  %v5937 = vsel %vm1922, %v5901, -inf
  %5938 = vmax.xlane.f32.xlu0 %v5937
  %v5939 = vpop.xlane.xlu0 %5938
  %v5940 = vsel %vm1922, %v5902, -inf
  %5941 = vmax.xlane.f32.xlu0 %v5940
  %v5942 = vpop.xlane.xlu0 %5941
  %v5943 = vsel %vm1922, %v5903, -inf
  %5944 = vmax.xlane.f32.xlu0 %v5943
  %v5945 = vpop.xlane.xlu0 %5944
  %v5946 = vsel %vm1922, %v5904, -inf
  %5947 = vmax.xlane.f32.xlu0 %v5946
  %v5948 = vpop.xlane.xlu0 %5947
  %v5949 = vsel %vm1922, %v5905, -inf
  %5950 = vmax.xlane.f32.xlu0 %v5949
  %v5951 = vpop.xlane.xlu0 %5950
  %v5952 = vsel %vm1922, %v5906, -inf
  %5953 = vmax.xlane.f32.xlu0 %v5952
  %v5954 = vpop.xlane.xlu0 %5953
  %v5955 = vsel %vm1922, %v5907, -inf
  %5956 = vmax.xlane.f32.xlu0 %v5955
  %v5957 = vpop.xlane.xlu0 %5956
  %v5958 = vsel %vm1922, %v5908, -inf
  %5959 = vmax.xlane.f32.xlu0 %v5958
  %v5960 = vpop.xlane.xlu0 %5959
  %v5961 = vsel %vm1922, %v5909, -inf
  %5962 = vmax.xlane.f32.xlu0 %v5961
  %v5963 = vpop.xlane.xlu0 %5962
  %v5964 = vsel %vm1922, %v5910, -inf
  %5965 = vmax.xlane.f32.xlu0 %v5964
  %v5966 = vpop.xlane.xlu0 %5965
  %v5967 = vsel %vm1922, %v5911, -inf
  %5968 = vmax.xlane.f32.xlu0 %v5967
  %v5969 = vpop.xlane.xlu0 %5968
  %v5970 = vsel %vm1922, %v5912, -inf
  %5971 = vmax.xlane.f32.xlu0 %v5970
  %v5972 = vpop.xlane.xlu0 %5971
  %v5973 = vsel %vm1922, %v5913, -inf
  %5974 = vmax.xlane.f32.xlu0 %v5973
  %v5975 = vpop.xlane.xlu0 %5974
  %v5976 = vsel %vm1922, %v5914, -inf
  %5977 = vmax.xlane.f32.xlu0 %v5976
  %v5978 = vpop.xlane.xlu0 %5977
  %v5979 = vsel %vm1922, %v5915, -inf
  %5980 = vmax.xlane.f32.xlu0 %v5979
  %v5981 = vpop.xlane.xlu0 %5980
  %v5982 = vsel %vm1922, %v5916, -inf
  %5983 = vmax.xlane.f32.xlu0 %v5982
  %v5984 = vpop.xlane.xlu0 %5983
  %v5985 = vsel %vm1922, %v5917, -inf
  %5986 = vmax.xlane.f32.xlu0 %v5985
  %v5987 = vpop.xlane.xlu0 %5986
  %v5988 = vsel %vm1922, %v5918, -inf
  %5989 = vmax.xlane.f32.xlu0 %v5988
  %v5990 = vpop.xlane.xlu0 %5989
  %v5991 = vsel %vm1922, %v5919, -inf
  %5992 = vmax.xlane.f32.xlu0 %v5991
  %v5993 = vpop.xlane.xlu0 %5992
  %v5994 = vsel %vm1922, %v5920, -inf
  %5995 = vmax.xlane.f32.xlu0 %v5994
  %v5996 = vpop.xlane.xlu0 %5995
  %v5997 = vsel %vm1922, %v5921, -inf
  %5998 = vmax.xlane.f32.xlu0 %v5997
  %v5999 = vpop.xlane.xlu0 %5998
  %v6000 = vsel %vm1922, %v5922, -inf
  %6001 = vmax.xlane.f32.xlu0 %v6000
  %v6002 = vpop.xlane.xlu0 %6001
  %v6003 = vsel %vm1922, %v5923, -inf
  %6004 = vmax.xlane.f32.xlu0 %v6003
  %v6005 = vpop.xlane.xlu0 %6004
  %v6006 = vsel %vm1922, %v5924, -inf
  %6007 = vmax.xlane.f32.xlu0 %v6006
  %v6008 = vpop.xlane.xlu0 %6007
  %v6009 = vsel %vm1922, %v5925, -inf
  %6010 = vmax.xlane.f32.xlu0 %v6009
  %v6011 = vpop.xlane.xlu0 %6010
  %v6012 = vsel %vm1922, %v5926, -inf
  %6013 = vmax.xlane.f32.xlu0 %v6012
  %v6014 = vpop.xlane.xlu0 %6013
  %v6015 = vsel %vm1922, %v5927, -inf
  %6016 = vmax.xlane.f32.xlu0 %v6015
  %v6017 = vpop.xlane.xlu0 %6016
  %v6018 = vsel %vm1922, %v5928, -inf
  %6019 = vmax.xlane.f32.xlu0 %v6018
  %v6020 = vpop.xlane.xlu0 %6019
  %v6021 = vsel %vm1922, %v5929, -inf
  %6022 = vmax.xlane.f32.xlu0 %v6021
  %v6023 = vpop.xlane.xlu0 %6022
  %v6024 = vsel %vm1922, %v5930, -inf
  %6025 = vmax.xlane.f32.xlu0 %v6024
  %v6026 = vpop.xlane.xlu0 %6025
  %v6027 = vsub.f32 %v5899, %v5933
  %v6028 = vsub.f32 %v5900, %v5936
  %v6029 = vsub.f32 %v5901, %v5939
  %v6030 = vsub.f32 %v5902, %v5942
  %v6031 = vsub.f32 %v5903, %v5945
  %v6032 = vsub.f32 %v5904, %v5948
  %v6033 = vsub.f32 %v5905, %v5951
  %v6034 = vsub.f32 %v5906, %v5954
  %v6035 = vsub.f32 %v5907, %v5957
  %v6036 = vsub.f32 %v5908, %v5960
  %v6037 = vsub.f32 %v5909, %v5963
  %v6038 = vsub.f32 %v5910, %v5966
  %v6039 = vsub.f32 %v5911, %v5969
  %v6040 = vsub.f32 %v5912, %v5972
  %v6041 = vsub.f32 %v5913, %v5975
  %v6042 = vsub.f32 %v5914, %v5978
  %v6043 = vsub.f32 %v5915, %v5981
  %v6044 = vsub.f32 %v5916, %v5984
  %v6045 = vsub.f32 %v5917, %v5987
  %v6046 = vsub.f32 %v5918, %v5990
  %v6047 = vsub.f32 %v5919, %v5993
  %v6048 = vsub.f32 %v5920, %v5996
  %v6049 = vsub.f32 %v5921, %v5999
  %v6050 = vsub.f32 %v5922, %v6002
  %v6051 = vsub.f32 %v5923, %v6005
  %v6052 = vsub.f32 %v5924, %v6008
  %v6053 = vsub.f32 %v5925, %v6011
  %v6054 = vsub.f32 %v5926, %v6014
  %v6055 = vsub.f32 %v5927, %v6017
  %v6056 = vsub.f32 %v5928, %v6020
  %v6057 = vsub.f32 %v5929, %v6023
  %v6058 = vsub.f32 %v5930, %v6026
  %v6059 = vmul.f32 %v6027, 1.442695
  %v6060 = vpow.pop %v6059
  %v6061 = vmul.f32 %v6028, 1.442695
  %v6062 = vpow.pop %v6061
  %v6063 = vmul.f32 %v6029, 1.442695
  %v6064 = vpow.pop %v6063
  %v6065 = vmul.f32 %v6030, 1.442695
  %v6066 = vpow.pop %v6065
  %v6067 = vmul.f32 %v6031, 1.442695
  %v6068 = vpow.pop %v6067
  %v6069 = vmul.f32 %v6032, 1.442695
  %v6070 = vpow.pop %v6069
  %v6071 = vmul.f32 %v6033, 1.442695
  %v6072 = vpow.pop %v6071
  %v6073 = vmul.f32 %v6034, 1.442695
  %v6074 = vpow.pop %v6073
  %v6075 = vmul.f32 %v6035, 1.442695
  %v6076 = vpow.pop %v6075
  %v6077 = vmul.f32 %v6036, 1.442695
  %v6078 = vpow.pop %v6077
  %v6079 = vmul.f32 %v6037, 1.442695
  %v6080 = vpow.pop %v6079
  %v6081 = vmul.f32 %v6038, 1.442695
  %v6082 = vpow.pop %v6081
  %v6083 = vmul.f32 %v6039, 1.442695
  %v6084 = vpow.pop %v6083
  %v6085 = vmul.f32 %v6040, 1.442695
  %v6086 = vpow.pop %v6085
  %v6087 = vmul.f32 %v6041, 1.442695
  %v6088 = vpow.pop %v6087
  %v6089 = vmul.f32 %v6042, 1.442695
  %v6090 = vpow.pop %v6089
  %v6091 = vmul.f32 %v6043, 1.442695
  %v6092 = vpow.pop %v6091
  %v6093 = vmul.f32 %v6044, 1.442695
  %v6094 = vpow.pop %v6093
  %v6095 = vmul.f32 %v6045, 1.442695
  %v6096 = vpow.pop %v6095
  %v6097 = vmul.f32 %v6046, 1.442695
  %v6098 = vpow.pop %v6097
  %v6099 = vmul.f32 %v6047, 1.442695
  %v6100 = vpow.pop %v6099
  %v6101 = vmul.f32 %v6048, 1.442695
  %v6102 = vpow.pop %v6101
  %v6103 = vmul.f32 %v6049, 1.442695
  %v6104 = vpow.pop %v6103
  %v6105 = vmul.f32 %v6050, 1.442695
  %v6106 = vpow.pop %v6105
  %v6107 = vmul.f32 %v6051, 1.442695
  %v6108 = vpow.pop %v6107
  %v6109 = vmul.f32 %v6052, 1.442695
  %v6110 = vpow.pop %v6109
  %v6111 = vmul.f32 %v6053, 1.442695
  %v6112 = vpow.pop %v6111
  %v6113 = vmul.f32 %v6054, 1.442695
  %v6114 = vpow.pop %v6113
  %v6115 = vmul.f32 %v6055, 1.442695
  %v6116 = vpow.pop %v6115
  %v6117 = vmul.f32 %v6056, 1.442695
  %v6118 = vpow.pop %v6117
  %v6119 = vmul.f32 %v6057, 1.442695
  %v6120 = vpow.pop %v6119
  %v6121 = vmul.f32 %v6058, 1.442695
  %v6122 = vpow.pop %v6121
  %v6123 = vsel %vm1922, %v6060, 0.0
  %6124 = vadd.xlane.f32.xlu0 %v6123
  %v6125 = vpop.xlane.xlu0 %6124
  %v6126 = vsel %vm1922, %v6062, 0.0
  %6127 = vadd.xlane.f32.xlu0 %v6126
  %v6128 = vpop.xlane.xlu0 %6127
  %v6129 = vsel %vm1922, %v6064, 0.0
  %6130 = vadd.xlane.f32.xlu0 %v6129
  %v6131 = vpop.xlane.xlu0 %6130
  %v6132 = vsel %vm1922, %v6066, 0.0
  %6133 = vadd.xlane.f32.xlu0 %v6132
  %v6134 = vpop.xlane.xlu0 %6133
  %v6135 = vsel %vm1922, %v6068, 0.0
  %6136 = vadd.xlane.f32.xlu0 %v6135
  %v6137 = vpop.xlane.xlu0 %6136
  %v6138 = vsel %vm1922, %v6070, 0.0
  %6139 = vadd.xlane.f32.xlu0 %v6138
  %v6140 = vpop.xlane.xlu0 %6139
  %v6141 = vsel %vm1922, %v6072, 0.0
  %6142 = vadd.xlane.f32.xlu0 %v6141
  %v6143 = vpop.xlane.xlu0 %6142
  %v6144 = vsel %vm1922, %v6074, 0.0
  %6145 = vadd.xlane.f32.xlu0 %v6144
  %v6146 = vpop.xlane.xlu0 %6145
  %v6147 = vsel %vm1922, %v6076, 0.0
  %6148 = vadd.xlane.f32.xlu0 %v6147
  %v6149 = vpop.xlane.xlu0 %6148
  %v6150 = vsel %vm1922, %v6078, 0.0
  %6151 = vadd.xlane.f32.xlu0 %v6150
  %v6152 = vpop.xlane.xlu0 %6151
  %v6153 = vsel %vm1922, %v6080, 0.0
  %6154 = vadd.xlane.f32.xlu0 %v6153
  %v6155 = vpop.xlane.xlu0 %6154
  %v6156 = vsel %vm1922, %v6082, 0.0
  %6157 = vadd.xlane.f32.xlu0 %v6156
  %v6158 = vpop.xlane.xlu0 %6157
  %v6159 = vsel %vm1922, %v6084, 0.0
  %6160 = vadd.xlane.f32.xlu0 %v6159
  %v6161 = vpop.xlane.xlu0 %6160
  %v6162 = vsel %vm1922, %v6086, 0.0
  %6163 = vadd.xlane.f32.xlu0 %v6162
  %v6164 = vpop.xlane.xlu0 %6163
  %v6165 = vsel %vm1922, %v6088, 0.0
  %6166 = vadd.xlane.f32.xlu0 %v6165
  %v6167 = vpop.xlane.xlu0 %6166
  %v6168 = vsel %vm1922, %v6090, 0.0
  %6169 = vadd.xlane.f32.xlu0 %v6168
  %v6170 = vpop.xlane.xlu0 %6169
  %v6171 = vsel %vm1922, %v6092, 0.0
  %6172 = vadd.xlane.f32.xlu0 %v6171
  %v6173 = vpop.xlane.xlu0 %6172
  %v6174 = vsel %vm1922, %v6094, 0.0
  %6175 = vadd.xlane.f32.xlu0 %v6174
  %v6176 = vpop.xlane.xlu0 %6175
  %v6177 = vsel %vm1922, %v6096, 0.0
  %6178 = vadd.xlane.f32.xlu0 %v6177
  %v6179 = vpop.xlane.xlu0 %6178
  %v6180 = vsel %vm1922, %v6098, 0.0
  %6181 = vadd.xlane.f32.xlu0 %v6180
  %v6182 = vpop.xlane.xlu0 %6181
  %v6183 = vsel %vm1922, %v6100, 0.0
  %6184 = vadd.xlane.f32.xlu0 %v6183
  %v6185 = vpop.xlane.xlu0 %6184
  %v6186 = vsel %vm1922, %v6102, 0.0
  %6187 = vadd.xlane.f32.xlu0 %v6186
  %v6188 = vpop.xlane.xlu0 %6187
  %v6189 = vsel %vm1922, %v6104, 0.0
  %6190 = vadd.xlane.f32.xlu0 %v6189
  %v6191 = vpop.xlane.xlu0 %6190
  %v6192 = vsel %vm1922, %v6106, 0.0
  %6193 = vadd.xlane.f32.xlu0 %v6192
  %v6194 = vpop.xlane.xlu0 %6193
  %v6195 = vsel %vm1922, %v6108, 0.0
  %6196 = vadd.xlane.f32.xlu0 %v6195
  %v6197 = vpop.xlane.xlu0 %6196
  %v6198 = vsel %vm1922, %v6110, 0.0
  %6199 = vadd.xlane.f32.xlu0 %v6198
  %v6200 = vpop.xlane.xlu0 %6199
  %v6201 = vsel %vm1922, %v6112, 0.0
  %6202 = vadd.xlane.f32.xlu0 %v6201
  %v6203 = vpop.xlane.xlu0 %6202
  %v6204 = vsel %vm1922, %v6114, 0.0
  %6205 = vadd.xlane.f32.xlu0 %v6204
  %v6206 = vpop.xlane.xlu0 %6205
  %v6207 = vsel %vm1922, %v6116, 0.0
  %6208 = vadd.xlane.f32.xlu0 %v6207
  %v6209 = vpop.xlane.xlu0 %6208
  %v6210 = vsel %vm1922, %v6118, 0.0
  %6211 = vadd.xlane.f32.xlu0 %v6210
  %v6212 = vpop.xlane.xlu0 %6211
  %v6213 = vsel %vm1922, %v6120, 0.0
  %6214 = vadd.xlane.f32.xlu0 %v6213
  %v6215 = vpop.xlane.xlu0 %6214
  %v6216 = vsel %vm1922, %v6122, 0.0
  %6217 = vadd.xlane.f32.xlu0 %v6216
  %v6218 = vpop.xlane.xlu0 %6217
  %v6219 = vrcp.pop %v6125
  %v6220 = vrcp.pop %v6128
  %v6221 = vrcp.pop %v6131
  %v6222 = vrcp.pop %v6134
  %v6223 = vrcp.pop %v6137
  %v6224 = vrcp.pop %v6140
  %v6225 = vrcp.pop %v6143
  %v6226 = vrcp.pop %v6146
  %v6227 = vrcp.pop %v6149
  %v6228 = vrcp.pop %v6152
  %v6229 = vrcp.pop %v6155
  %v6230 = vrcp.pop %v6158
  %v6231 = vrcp.pop %v6161
  %v6232 = vrcp.pop %v6164
  %v6233 = vrcp.pop %v6167
  %v6234 = vrcp.pop %v6170
  %v6235 = vrcp.pop %v6173
  %v6236 = vrcp.pop %v6176
  %v6237 = vrcp.pop %v6179
  %v6238 = vrcp.pop %v6182
  %v6239 = vrcp.pop %v6185
  %v6240 = vrcp.pop %v6188
  %v6241 = vrcp.pop %v6191
  %v6242 = vrcp.pop %v6194
  %v6243 = vrcp.pop %v6197
  %v6244 = vrcp.pop %v6200
  %v6245 = vrcp.pop %v6203
  %v6246 = vrcp.pop %v6206
  %v6247 = vrcp.pop %v6209
  %v6248 = vrcp.pop %v6212
  %v6249 = vrcp.pop %v6215
  %v6250 = vrcp.pop %v6218
  %v6251 = vmul.f32 %v6060, %v6219
  %v6252 = vmul.f32 %v6062, %v6220
  %v6253 = vmul.f32 %v6064, %v6221
  %v6254 = vmul.f32 %v6066, %v6222
  %v6255 = vmul.f32 %v6068, %v6223
  %v6256 = vmul.f32 %v6070, %v6224
  %v6257 = vmul.f32 %v6072, %v6225
  %v6258 = vmul.f32 %v6074, %v6226
  %v6259 = vmul.f32 %v6076, %v6227
  %v6260 = vmul.f32 %v6078, %v6228
  %v6261 = vmul.f32 %v6080, %v6229
  %v6262 = vmul.f32 %v6082, %v6230
  %v6263 = vmul.f32 %v6084, %v6231
  %v6264 = vmul.f32 %v6086, %v6232
  %v6265 = vmul.f32 %v6088, %v6233
  %v6266 = vmul.f32 %v6090, %v6234
  %v6267 = vmul.f32 %v6092, %v6235
  %v6268 = vmul.f32 %v6094, %v6236
  %v6269 = vmul.f32 %v6096, %v6237
  %v6270 = vmul.f32 %v6098, %v6238
  %v6271 = vmul.f32 %v6100, %v6239
  %v6272 = vmul.f32 %v6102, %v6240
  %v6273 = vmul.f32 %v6104, %v6241
  %v6274 = vmul.f32 %v6106, %v6242
  %v6275 = vmul.f32 %v6108, %v6243
  %v6276 = vmul.f32 %v6110, %v6244
  %v6277 = vmul.f32 %v6112, %v6245
  %v6278 = vmul.f32 %v6114, %v6246
  %v6279 = vmul.f32 %v6116, %v6247
  %v6280 = vmul.f32 %v6118, %v6248
  %v6281 = vmul.f32 %v6120, %v6249
  %v6282 = vmul.f32 %v6122, %v6250
  %v6283 = vpack.c.bf16 %v6252, %v6251
  %v6284 = vpack.c.bf16 %v6254, %v6253
  %v6285 = vpack.c.bf16 %v6256, %v6255
  %v6286 = vpack.c.bf16 %v6258, %v6257
  %v6287 = vpack.c.bf16 %v6260, %v6259
  %v6288 = vpack.c.bf16 %v6262, %v6261
  %v6289 = vpack.c.bf16 %v6264, %v6263
  %v6290 = vpack.c.bf16 %v6266, %v6265
  %v6291 = vpack.c.bf16 %v6268, %v6267
  %v6292 = vpack.c.bf16 %v6270, %v6269
  %v6293 = vpack.c.bf16 %v6272, %v6271
  %v6294 = vpack.c.bf16 %v6274, %v6273
  %v6295 = vpack.c.bf16 %v6276, %v6275
  %v6296 = vpack.c.bf16 %v6278, %v6277
  %v6297 = vpack.c.bf16 %v6280, %v6279
  %v6298 = vpack.c.bf16 %v6282, %v6281
  %v6300 = vsel %vm1922, %v6283, 0
  %6302 = vmatprep.subr.bf16.mxu0 0
  %6303 = vmatpush1.bf16.msra.mxu0 %v5075
  %6304 = vmatprep.subr.bf16.mxu0 0
  %6305 = vmatpush1.bf16.msra.mxu0 0
  %6306 = vmatprep.subr.bf16.mxu0 0
  %6307 = vmatpush1.bf16.msra.mxu0 0
  %6308 = vmatprep.subr.bf16.mxu0 0
  %6309 = vmatpush1.bf16.msra.mxu0 0
  %6310 = vmatprep.subr.bf16.mxu0 0
  %6311 = vmatpush1.bf16.msra.mxu0 0
  %6312 = vmatprep.subr.bf16.mxu0 0
  %6313 = vmatpush1.bf16.msra.mxu0 0
  %6314 = vmatprep.subr.bf16.mxu0 0
  %6315 = vmatpush1.bf16.msra.mxu0 0
  %6316 = vmatprep.subr.bf16.mxu0 0
  %6317 = vmatpush1.bf16.msra.mxu0 0
  %6318 = vmatprep.subr.bf16.mxu0 0
  %6319 = vmatpush1.bf16.msra.mxu0 0
  %6320 = vmatprep.subr.bf16.mxu0 0
  %6321 = vmatpush1.bf16.msra.mxu0 0
  %6322 = vmatprep.subr.bf16.mxu0 0
  %6323 = vmatpush1.bf16.msra.mxu0 0
  %6324 = vmatprep.subr.bf16.mxu0 0
  %6325 = vmatpush1.bf16.msra.mxu0 0
  %6326 = vmatprep.subr.bf16.mxu0 0
  %6327 = vmatpush1.bf16.msra.mxu0 0
  %6328 = vmatprep.subr.bf16.mxu0 0
  %6329 = vmatpush1.bf16.msra.mxu0 0
  %6330 = vmatprep.subr.bf16.mxu0 0
  %6331 = vmatpush1.bf16.msra.mxu0 0
  %6332 = vmatprep.subr.bf16.mxu0 0
  %6333 = vmatpush1.bf16.msra.mxu0 0
  %6334 = vmatprep.mubr.bf16.mxu0 0
  %6335 = vmatmul.mubr.bf16.gmra.mrb[0].mxu0 %v6300
  %v6336 = vpop.f32.mrb[0].mxu0
  %v6337 = vadd.f32 0.0, %v6336
  %v6338 = vpop.f32.mrb[0].mxu0
  %v6339 = vpop.f32.mrb[0].mxu0
  %v6340 = vadd.f32 0.0, %v6339
  %v6341 = vpop.f32.mrb[0].mxu0
  %6342 = vdwg.mxu0
  %v6344 = vsel %vm1922, %v6284, 0
  %6346 = vmatprep.subr.bf16.mxu0 0
  %6347 = vmatpush1.bf16.msra.mxu0 %v5076
  %6348 = vmatprep.subr.bf16.mxu0 0
  %6349 = vmatpush1.bf16.msra.mxu0 0
  %6350 = vmatprep.subr.bf16.mxu0 0
  %6351 = vmatpush1.bf16.msra.mxu0 0
  %6352 = vmatprep.subr.bf16.mxu0 0
  %6353 = vmatpush1.bf16.msra.mxu0 0
  %6354 = vmatprep.subr.bf16.mxu0 0
  %6355 = vmatpush1.bf16.msra.mxu0 0
  %6356 = vmatprep.subr.bf16.mxu0 0
  %6357 = vmatpush1.bf16.msra.mxu0 0
  %6358 = vmatprep.subr.bf16.mxu0 0
  %6359 = vmatpush1.bf16.msra.mxu0 0
  %6360 = vmatprep.subr.bf16.mxu0 0
  %6361 = vmatpush1.bf16.msra.mxu0 0
  %6362 = vmatprep.subr.bf16.mxu0 0
  %6363 = vmatpush1.bf16.msra.mxu0 0
  %6364 = vmatprep.subr.bf16.mxu0 0
  %6365 = vmatpush1.bf16.msra.mxu0 0
  %6366 = vmatprep.subr.bf16.mxu0 0
  %6367 = vmatpush1.bf16.msra.mxu0 0
  %6368 = vmatprep.subr.bf16.mxu0 0
  %6369 = vmatpush1.bf16.msra.mxu0 0
  %6370 = vmatprep.subr.bf16.mxu0 0
  %6371 = vmatpush1.bf16.msra.mxu0 0
  %6372 = vmatprep.subr.bf16.mxu0 0
  %6373 = vmatpush1.bf16.msra.mxu0 0
  %6374 = vmatprep.subr.bf16.mxu0 0
  %6375 = vmatpush1.bf16.msra.mxu0 0
  %6376 = vmatprep.subr.bf16.mxu0 0
  %6377 = vmatpush1.bf16.msra.mxu0 0
  %6378 = vmatprep.mubr.bf16.mxu0 0
  %6379 = vmatmul.mubr.bf16.gmra.mrb[0].mxu0 %v6344
  %v6380 = vpop.f32.mrb[0].mxu0
  %v6381 = vadd.f32 0.0, %v6380
  %v6382 = vpop.f32.mrb[0].mxu0
  %v6383 = vpop.f32.mrb[0].mxu0
  %v6384 = vadd.f32 0.0, %v6383
  %v6385 = vpop.f32.mrb[0].mxu0
  %6386 = vdwg.mxu0
  %v6388 = vsel %vm1922, %v6285, 0
  %6390 = vmatprep.subr.bf16.mxu0 0
  %6391 = vmatpush1.bf16.msra.mxu0 %v5077
  %6392 = vmatprep.subr.bf16.mxu0 0
  %6393 = vmatpush1.bf16.msra.mxu0 0
  %6394 = vmatprep.subr.bf16.mxu0 0
  %6395 = vmatpush1.bf16.msra.mxu0 0
  %6396 = vmatprep.subr.bf16.mxu0 0
  %6397 = vmatpush1.bf16.msra.mxu0 0
  %6398 = vmatprep.subr.bf16.mxu0 0
  %6399 = vmatpush1.bf16.msra.mxu0 0
  %6400 = vmatprep.subr.bf16.mxu0 0
  %6401 = vmatpush1.bf16.msra.mxu0 0
  %6402 = vmatprep.subr.bf16.mxu0 0
  %6403 = vmatpush1.bf16.msra.mxu0 0
  %6404 = vmatprep.subr.bf16.mxu0 0
  %6405 = vmatpush1.bf16.msra.mxu0 0
  %6406 = vmatprep.subr.bf16.mxu0 0
  %6407 = vmatpush1.bf16.msra.mxu0 0
  %6408 = vmatprep.subr.bf16.mxu0 0
  %6409 = vmatpush1.bf16.msra.mxu0 0
  %6410 = vmatprep.subr.bf16.mxu0 0
  %6411 = vmatpush1.bf16.msra.mxu0 0
  %6412 = vmatprep.subr.bf16.mxu0 0
  %6413 = vmatpush1.bf16.msra.mxu0 0
  %6414 = vmatprep.subr.bf16.mxu0 0
  %6415 = vmatpush1.bf16.msra.mxu0 0
  %6416 = vmatprep.subr.bf16.mxu0 0
  %6417 = vmatpush1.bf16.msra.mxu0 0
  %6418 = vmatprep.subr.bf16.mxu0 0
  %6419 = vmatpush1.bf16.msra.mxu0 0
  %6420 = vmatprep.subr.bf16.mxu0 0
  %6421 = vmatpush1.bf16.msra.mxu0 0
  %6422 = vmatprep.mubr.bf16.mxu0 0
  %6423 = vmatmul.mubr.bf16.gmra.mrb[0].mxu0 %v6388
  %v6424 = vpop.f32.mrb[0].mxu0
  %v6425 = vadd.f32 0.0, %v6424
  %v6426 = vpop.f32.mrb[0].mxu0
  %v6427 = vpop.f32.mrb[0].mxu0
  %v6428 = vadd.f32 0.0, %v6427
  %v6429 = vpop.f32.mrb[0].mxu0
  %6430 = vdwg.mxu0
  %v6432 = vsel %vm1922, %v6286, 0
  %6434 = vmatprep.subr.bf16.mxu0 0
  %6435 = vmatpush1.bf16.msra.mxu0 %v5078
  %6436 = vmatprep.subr.bf16.mxu0 0
  %6437 = vmatpush1.bf16.msra.mxu0 0
  %6438 = vmatprep.subr.bf16.mxu0 0
  %6439 = vmatpush1.bf16.msra.mxu0 0
  %6440 = vmatprep.subr.bf16.mxu0 0
  %6441 = vmatpush1.bf16.msra.mxu0 0
  %6442 = vmatprep.subr.bf16.mxu0 0
  %6443 = vmatpush1.bf16.msra.mxu0 0
  %6444 = vmatprep.subr.bf16.mxu0 0
  %6445 = vmatpush1.bf16.msra.mxu0 0
  %6446 = vmatprep.subr.bf16.mxu0 0
  %6447 = vmatpush1.bf16.msra.mxu0 0
  %6448 = vmatprep.subr.bf16.mxu0 0
  %6449 = vmatpush1.bf16.msra.mxu0 0
  %6450 = vmatprep.subr.bf16.mxu0 0
  %6451 = vmatpush1.bf16.msra.mxu0 0
  %6452 = vmatprep.subr.bf16.mxu0 0
  %6453 = vmatpush1.bf16.msra.mxu0 0
  %6454 = vmatprep.subr.bf16.mxu0 0
  %6455 = vmatpush1.bf16.msra.mxu0 0
  %6456 = vmatprep.subr.bf16.mxu0 0
  %6457 = vmatpush1.bf16.msra.mxu0 0
  %6458 = vmatprep.subr.bf16.mxu0 0
  %6459 = vmatpush1.bf16.msra.mxu0 0
  %6460 = vmatprep.subr.bf16.mxu0 0
  %6461 = vmatpush1.bf16.msra.mxu0 0
  %6462 = vmatprep.subr.bf16.mxu0 0
  %6463 = vmatpush1.bf16.msra.mxu0 0
  %6464 = vmatprep.subr.bf16.mxu0 0
  %6465 = vmatpush1.bf16.msra.mxu0 0
  %6466 = vmatprep.mubr.bf16.mxu0 0
  %6467 = vmatmul.mubr.bf16.gmra.mrb[0].mxu0 %v6432
  %v6468 = vpop.f32.mrb[0].mxu0
  %v6469 = vadd.f32 0.0, %v6468
  %v6470 = vpop.f32.mrb[0].mxu0
  %v6471 = vpop.f32.mrb[0].mxu0
  %v6472 = vadd.f32 0.0, %v6471
  %v6473 = vpop.f32.mrb[0].mxu0
  %6474 = vdwg.mxu0
  %v6476 = vsel %vm1922, %v6287, 0
  %6478 = vmatprep.subr.bf16.mxu0 0
  %6479 = vmatpush1.bf16.msra.mxu0 %v5079
  %6480 = vmatprep.subr.bf16.mxu0 0
  %6481 = vmatpush1.bf16.msra.mxu0 0
  %6482 = vmatprep.subr.bf16.mxu0 0
  %6483 = vmatpush1.bf16.msra.mxu0 0
  %6484 = vmatprep.subr.bf16.mxu0 0
  %6485 = vmatpush1.bf16.msra.mxu0 0
  %6486 = vmatprep.subr.bf16.mxu0 0
  %6487 = vmatpush1.bf16.msra.mxu0 0
  %6488 = vmatprep.subr.bf16.mxu0 0
  %6489 = vmatpush1.bf16.msra.mxu0 0
  %6490 = vmatprep.subr.bf16.mxu0 0
  %6491 = vmatpush1.bf16.msra.mxu0 0
  %6492 = vmatprep.subr.bf16.mxu0 0
  %6493 = vmatpush1.bf16.msra.mxu0 0
  %6494 = vmatprep.subr.bf16.mxu0 0
  %6495 = vmatpush1.bf16.msra.mxu0 0
  %6496 = vmatprep.subr.bf16.mxu0 0
  %6497 = vmatpush1.bf16.msra.mxu0 0
  %6498 = vmatprep.subr.bf16.mxu0 0
  %6499 = vmatpush1.bf16.msra.mxu0 0
  %6500 = vmatprep.subr.bf16.mxu0 0
  %6501 = vmatpush1.bf16.msra.mxu0 0
  %6502 = vmatprep.subr.bf16.mxu0 0
  %6503 = vmatpush1.bf16.msra.mxu0 0
  %6504 = vmatprep.subr.bf16.mxu0 0
  %6505 = vmatpush1.bf16.msra.mxu0 0
  %6506 = vmatprep.subr.bf16.mxu0 0
  %6507 = vmatpush1.bf16.msra.mxu0 0
  %6508 = vmatprep.subr.bf16.mxu0 0
  %6509 = vmatpush1.bf16.msra.mxu0 0
  %6510 = vmatprep.mubr.bf16.mxu0 0
  %6511 = vmatmul.mubr.bf16.gmra.mrb[0].mxu0 %v6476
  %v6512 = vpop.f32.mrb[0].mxu0
  %v6513 = vadd.f32 0.0, %v6512
  %v6514 = vpop.f32.mrb[0].mxu0
  %v6515 = vpop.f32.mrb[0].mxu0
  %v6516 = vadd.f32 0.0, %v6515
  %v6517 = vpop.f32.mrb[0].mxu0
  %6518 = vdwg.mxu0
  %v6520 = vsel %vm1922, %v6288, 0
  %6522 = vmatprep.subr.bf16.mxu0 0
  %6523 = vmatpush1.bf16.msra.mxu0 %v5080
  %6524 = vmatprep.subr.bf16.mxu0 0
  %6525 = vmatpush1.bf16.msra.mxu0 0
  %6526 = vmatprep.subr.bf16.mxu0 0
  %6527 = vmatpush1.bf16.msra.mxu0 0
  %6528 = vmatprep.subr.bf16.mxu0 0
  %6529 = vmatpush1.bf16.msra.mxu0 0
  %6530 = vmatprep.subr.bf16.mxu0 0
  %6531 = vmatpush1.bf16.msra.mxu0 0
  %6532 = vmatprep.subr.bf16.mxu0 0
  %6533 = vmatpush1.bf16.msra.mxu0 0
  %6534 = vmatprep.subr.bf16.mxu0 0
  %6535 = vmatpush1.bf16.msra.mxu0 0
  %6536 = vmatprep.subr.bf16.mxu0 0
  %6537 = vmatpush1.bf16.msra.mxu0 0
  %6538 = vmatprep.subr.bf16.mxu0 0
  %6539 = vmatpush1.bf16.msra.mxu0 0
  %6540 = vmatprep.subr.bf16.mxu0 0
  %6541 = vmatpush1.bf16.msra.mxu0 0
  %6542 = vmatprep.subr.bf16.mxu0 0
  %6543 = vmatpush1.bf16.msra.mxu0 0
  %6544 = vmatprep.subr.bf16.mxu0 0
  %6545 = vmatpush1.bf16.msra.mxu0 0
  %6546 = vmatprep.subr.bf16.mxu0 0
  %6547 = vmatpush1.bf16.msra.mxu0 0
  %6548 = vmatprep.subr.bf16.mxu0 0
  %6549 = vmatpush1.bf16.msra.mxu0 0
  %6550 = vmatprep.subr.bf16.mxu0 0
  %6551 = vmatpush1.bf16.msra.mxu0 0
  %6552 = vmatprep.subr.bf16.mxu0 0
  %6553 = vmatpush1.bf16.msra.mxu0 0
  %6554 = vmatprep.mubr.bf16.mxu0 0
  %6555 = vmatmul.mubr.bf16.gmra.mrb[0].mxu0 %v6520
  %v6556 = vpop.f32.mrb[0].mxu0
  %v6557 = vadd.f32 0.0, %v6556
  %v6558 = vpop.f32.mrb[0].mxu0
  %v6559 = vpop.f32.mrb[0].mxu0
  %v6560 = vadd.f32 0.0, %v6559
  %v6561 = vpop.f32.mrb[0].mxu0
  %6562 = vdwg.mxu0
  %v6564 = vsel %vm1922, %v6289, 0
  %6566 = vmatprep.subr.bf16.mxu0 0
  %6567 = vmatpush1.bf16.msra.mxu0 %v5081
  %6568 = vmatprep.subr.bf16.mxu0 0
  %6569 = vmatpush1.bf16.msra.mxu0 0
  %6570 = vmatprep.subr.bf16.mxu0 0
  %6571 = vmatpush1.bf16.msra.mxu0 0
  %6572 = vmatprep.subr.bf16.mxu0 0
  %6573 = vmatpush1.bf16.msra.mxu0 0
  %6574 = vmatprep.subr.bf16.mxu0 0
  %6575 = vmatpush1.bf16.msra.mxu0 0
  %6576 = vmatprep.subr.bf16.mxu0 0
  %6577 = vmatpush1.bf16.msra.mxu0 0
  %6578 = vmatprep.subr.bf16.mxu0 0
  %6579 = vmatpush1.bf16.msra.mxu0 0
  %6580 = vmatprep.subr.bf16.mxu0 0
  %6581 = vmatpush1.bf16.msra.mxu0 0
  %6582 = vmatprep.subr.bf16.mxu0 0
  %6583 = vmatpush1.bf16.msra.mxu0 0
  %6584 = vmatprep.subr.bf16.mxu0 0
  %6585 = vmatpush1.bf16.msra.mxu0 0
  %6586 = vmatprep.subr.bf16.mxu0 0
  %6587 = vmatpush1.bf16.msra.mxu0 0
  %6588 = vmatprep.subr.bf16.mxu0 0
  %6589 = vmatpush1.bf16.msra.mxu0 0
  %6590 = vmatprep.subr.bf16.mxu0 0
  %6591 = vmatpush1.bf16.msra.mxu0 0
  %6592 = vmatprep.subr.bf16.mxu0 0
  %6593 = vmatpush1.bf16.msra.mxu0 0
  %6594 = vmatprep.subr.bf16.mxu0 0
  %6595 = vmatpush1.bf16.msra.mxu0 0
  %6596 = vmatprep.subr.bf16.mxu0 0
  %6597 = vmatpush1.bf16.msra.mxu0 0
  %6598 = vmatprep.mubr.bf16.mxu0 0
  %6599 = vmatmul.mubr.bf16.gmra.mrb[0].mxu0 %v6564
  %v6600 = vpop.f32.mrb[0].mxu0
  %v6601 = vadd.f32 0.0, %v6600
  %v6602 = vpop.f32.mrb[0].mxu0
  %v6603 = vpop.f32.mrb[0].mxu0
  %v6604 = vadd.f32 0.0, %v6603
  %v6605 = vpop.f32.mrb[0].mxu0
  %6606 = vdwg.mxu0
  %v6608 = vsel %vm1922, %v6290, 0
  %6610 = vmatprep.subr.bf16.mxu0 0
  %6611 = vmatpush1.bf16.msra.mxu0 %v5082
  %6612 = vmatprep.subr.bf16.mxu0 0
  %6613 = vmatpush1.bf16.msra.mxu0 0
  %6614 = vmatprep.subr.bf16.mxu0 0
  %6615 = vmatpush1.bf16.msra.mxu0 0
  %6616 = vmatprep.subr.bf16.mxu0 0
  %6617 = vmatpush1.bf16.msra.mxu0 0
  %6618 = vmatprep.subr.bf16.mxu0 0
  %6619 = vmatpush1.bf16.msra.mxu0 0
  %6620 = vmatprep.subr.bf16.mxu0 0
  %6621 = vmatpush1.bf16.msra.mxu0 0
  %6622 = vmatprep.subr.bf16.mxu0 0
  %6623 = vmatpush1.bf16.msra.mxu0 0
  %6624 = vmatprep.subr.bf16.mxu0 0
  %6625 = vmatpush1.bf16.msra.mxu0 0
  %6626 = vmatprep.subr.bf16.mxu0 0
  %6627 = vmatpush1.bf16.msra.mxu0 0
  %6628 = vmatprep.subr.bf16.mxu0 0
  %6629 = vmatpush1.bf16.msra.mxu0 0
  %6630 = vmatprep.subr.bf16.mxu0 0
  %6631 = vmatpush1.bf16.msra.mxu0 0
  %6632 = vmatprep.subr.bf16.mxu0 0
  %6633 = vmatpush1.bf16.msra.mxu0 0
  %6634 = vmatprep.subr.bf16.mxu0 0
  %6635 = vmatpush1.bf16.msra.mxu0 0
  %6636 = vmatprep.subr.bf16.mxu0 0
  %6637 = vmatpush1.bf16.msra.mxu0 0
  %6638 = vmatprep.subr.bf16.mxu0 0
  %6639 = vmatpush1.bf16.msra.mxu0 0
  %6640 = vmatprep.subr.bf16.mxu0 0
  %6641 = vmatpush1.bf16.msra.mxu0 0
  %6642 = vmatprep.mubr.bf16.mxu0 0
  %6643 = vmatmul.mubr.bf16.gmra.mrb[0].mxu0 %v6608
  %v6644 = vpop.f32.mrb[0].mxu0
  %v6645 = vadd.f32 0.0, %v6644
  %v6646 = vpop.f32.mrb[0].mxu0
  %v6647 = vpop.f32.mrb[0].mxu0
  %v6648 = vadd.f32 0.0, %v6647
  %v6649 = vpop.f32.mrb[0].mxu0
  %6650 = vdwg.mxu0
  %v6652 = vsel %vm1922, %v6291, 0
  %6654 = vmatprep.subr.bf16.mxu0 0
  %6655 = vmatpush1.bf16.msra.mxu0 %v5092
  %6656 = vmatprep.subr.bf16.mxu0 0
  %6657 = vmatpush1.bf16.msra.mxu0 0
  %6658 = vmatprep.subr.bf16.mxu0 0
  %6659 = vmatpush1.bf16.msra.mxu0 0
  %6660 = vmatprep.subr.bf16.mxu0 0
  %6661 = vmatpush1.bf16.msra.mxu0 0
  %6662 = vmatprep.subr.bf16.mxu0 0
  %6663 = vmatpush1.bf16.msra.mxu0 0
  %6664 = vmatprep.subr.bf16.mxu0 0
  %6665 = vmatpush1.bf16.msra.mxu0 0
  %6666 = vmatprep.subr.bf16.mxu0 0
  %6667 = vmatpush1.bf16.msra.mxu0 0
  %6668 = vmatprep.subr.bf16.mxu0 0
  %6669 = vmatpush1.bf16.msra.mxu0 0
  %6670 = vmatprep.subr.bf16.mxu0 0
  %6671 = vmatpush1.bf16.msra.mxu0 0
  %6672 = vmatprep.subr.bf16.mxu0 0
  %6673 = vmatpush1.bf16.msra.mxu0 0
  %6674 = vmatprep.subr.bf16.mxu0 0
  %6675 = vmatpush1.bf16.msra.mxu0 0
  %6676 = vmatprep.subr.bf16.mxu0 0
  %6677 = vmatpush1.bf16.msra.mxu0 0
  %6678 = vmatprep.subr.bf16.mxu0 0
  %6679 = vmatpush1.bf16.msra.mxu0 0
  %6680 = vmatprep.subr.bf16.mxu0 0
  %6681 = vmatpush1.bf16.msra.mxu0 0
  %6682 = vmatprep.subr.bf16.mxu0 0
  %6683 = vmatpush1.bf16.msra.mxu0 0
  %6684 = vmatprep.subr.bf16.mxu0 0
  %6685 = vmatpush1.bf16.msra.mxu0 0
  %6686 = vmatprep.mubr.bf16.mxu0 0
  %6687 = vmatmul.mubr.bf16.gmra.mrb[0].mxu0 %v6652
  %v6688 = vpop.f32.mrb[0].mxu0
  %v6689 = vadd.f32 0.0, %v6688
  %v6690 = vpop.f32.mrb[0].mxu0
  %v6691 = vpop.f32.mrb[0].mxu0
  %v6692 = vadd.f32 0.0, %v6691
  %v6693 = vpop.f32.mrb[0].mxu0
  %6694 = vdwg.mxu0
  %v6696 = vsel %vm1922, %v6292, 0
  %6698 = vmatprep.subr.bf16.mxu0 0
  %6699 = vmatpush1.bf16.msra.mxu0 %v5094
  %6700 = vmatprep.subr.bf16.mxu0 0
  %6701 = vmatpush1.bf16.msra.mxu0 0
  %6702 = vmatprep.subr.bf16.mxu0 0
  %6703 = vmatpush1.bf16.msra.mxu0 0
  %6704 = vmatprep.subr.bf16.mxu0 0
  %6705 = vmatpush1.bf16.msra.mxu0 0
  %6706 = vmatprep.subr.bf16.mxu0 0
  %6707 = vmatpush1.bf16.msra.mxu0 0
  %6708 = vmatprep.subr.bf16.mxu0 0
  %6709 = vmatpush1.bf16.msra.mxu0 0
  %6710 = vmatprep.subr.bf16.mxu0 0
  %6711 = vmatpush1.bf16.msra.mxu0 0
  %6712 = vmatprep.subr.bf16.mxu0 0
  %6713 = vmatpush1.bf16.msra.mxu0 0
  %6714 = vmatprep.subr.bf16.mxu0 0
  %6715 = vmatpush1.bf16.msra.mxu0 0
  %6716 = vmatprep.subr.bf16.mxu0 0
  %6717 = vmatpush1.bf16.msra.mxu0 0
  %6718 = vmatprep.subr.bf16.mxu0 0
  %6719 = vmatpush1.bf16.msra.mxu0 0
  %6720 = vmatprep.subr.bf16.mxu0 0
  %6721 = vmatpush1.bf16.msra.mxu0 0
  %6722 = vmatprep.subr.bf16.mxu0 0
  %6723 = vmatpush1.bf16.msra.mxu0 0
  %6724 = vmatprep.subr.bf16.mxu0 0
  %6725 = vmatpush1.bf16.msra.mxu0 0
  %6726 = vmatprep.subr.bf16.mxu0 0
  %6727 = vmatpush1.bf16.msra.mxu0 0
  %6728 = vmatprep.subr.bf16.mxu0 0
  %6729 = vmatpush1.bf16.msra.mxu0 0
  %6730 = vmatprep.mubr.bf16.mxu0 0
  %6731 = vmatmul.mubr.bf16.gmra.mrb[0].mxu0 %v6696
  %v6732 = vpop.f32.mrb[0].mxu0
  %v6733 = vadd.f32 0.0, %v6732
  %v6734 = vpop.f32.mrb[0].mxu0
  %v6735 = vpop.f32.mrb[0].mxu0
  %v6736 = vadd.f32 0.0, %v6735
  %v6737 = vpop.f32.mrb[0].mxu0
  %6738 = vdwg.mxu0
  %v6740 = vsel %vm1922, %v6293, 0
  %6742 = vmatprep.subr.bf16.mxu0 0
  %6743 = vmatpush1.bf16.msra.mxu0 %v5096
  %6744 = vmatprep.subr.bf16.mxu0 0
  %6745 = vmatpush1.bf16.msra.mxu0 0
  %6746 = vmatprep.subr.bf16.mxu0 0
  %6747 = vmatpush1.bf16.msra.mxu0 0
  %6748 = vmatprep.subr.bf16.mxu0 0
  %6749 = vmatpush1.bf16.msra.mxu0 0
  %6750 = vmatprep.subr.bf16.mxu0 0
  %6751 = vmatpush1.bf16.msra.mxu0 0
  %6752 = vmatprep.subr.bf16.mxu0 0
  %6753 = vmatpush1.bf16.msra.mxu0 0
  %6754 = vmatprep.subr.bf16.mxu0 0
  %6755 = vmatpush1.bf16.msra.mxu0 0
  %6756 = vmatprep.subr.bf16.mxu0 0
  %6757 = vmatpush1.bf16.msra.mxu0 0
  %6758 = vmatprep.subr.bf16.mxu0 0
  %6759 = vmatpush1.bf16.msra.mxu0 0
  %6760 = vmatprep.subr.bf16.mxu0 0
  %6761 = vmatpush1.bf16.msra.mxu0 0
  %6762 = vmatprep.subr.bf16.mxu0 0
  %6763 = vmatpush1.bf16.msra.mxu0 0
  %6764 = vmatprep.subr.bf16.mxu0 0
  %6765 = vmatpush1.bf16.msra.mxu0 0
  %6766 = vmatprep.subr.bf16.mxu0 0
  %6767 = vmatpush1.bf16.msra.mxu0 0
  %6768 = vmatprep.subr.bf16.mxu0 0
  %6769 = vmatpush1.bf16.msra.mxu0 0
  %6770 = vmatprep.subr.bf16.mxu0 0
  %6771 = vmatpush1.bf16.msra.mxu0 0
  %6772 = vmatprep.subr.bf16.mxu0 0
  %6773 = vmatpush1.bf16.msra.mxu0 0
  %6774 = vmatprep.mubr.bf16.mxu0 0
  %6775 = vmatmul.mubr.bf16.gmra.mrb[0].mxu0 %v6740
  %v6776 = vpop.f32.mrb[0].mxu0
  %v6777 = vadd.f32 0.0, %v6776
  %v6778 = vpop.f32.mrb[0].mxu0
  %v6779 = vpop.f32.mrb[0].mxu0
  %v6780 = vadd.f32 0.0, %v6779
  %v6781 = vpop.f32.mrb[0].mxu0
  %6782 = vdwg.mxu0
  %v6784 = vsel %vm1922, %v6294, 0
  %6786 = vmatprep.subr.bf16.mxu0 0
  %6787 = vmatpush1.bf16.msra.mxu0 %v5098
  %6788 = vmatprep.subr.bf16.mxu0 0
  %6789 = vmatpush1.bf16.msra.mxu0 0
  %6790 = vmatprep.subr.bf16.mxu0 0
  %6791 = vmatpush1.bf16.msra.mxu0 0
  %6792 = vmatprep.subr.bf16.mxu0 0
  %6793 = vmatpush1.bf16.msra.mxu0 0
  %6794 = vmatprep.subr.bf16.mxu0 0
  %6795 = vmatpush1.bf16.msra.mxu0 0
  %6796 = vmatprep.subr.bf16.mxu0 0
  %6797 = vmatpush1.bf16.msra.mxu0 0
  %6798 = vmatprep.subr.bf16.mxu0 0
  %6799 = vmatpush1.bf16.msra.mxu0 0
  %6800 = vmatprep.subr.bf16.mxu0 0
  %6801 = vmatpush1.bf16.msra.mxu0 0
  %6802 = vmatprep.subr.bf16.mxu0 0
  %6803 = vmatpush1.bf16.msra.mxu0 0
  %6804 = vmatprep.subr.bf16.mxu0 0
  %6805 = vmatpush1.bf16.msra.mxu0 0
  %6806 = vmatprep.subr.bf16.mxu0 0
  %6807 = vmatpush1.bf16.msra.mxu0 0
  %6808 = vmatprep.subr.bf16.mxu0 0
  %6809 = vmatpush1.bf16.msra.mxu0 0
  %6810 = vmatprep.subr.bf16.mxu0 0
  %6811 = vmatpush1.bf16.msra.mxu0 0
  %6812 = vmatprep.subr.bf16.mxu0 0
  %6813 = vmatpush1.bf16.msra.mxu0 0
  %6814 = vmatprep.subr.bf16.mxu0 0
  %6815 = vmatpush1.bf16.msra.mxu0 0
  %6816 = vmatprep.subr.bf16.mxu0 0
  %6817 = vmatpush1.bf16.msra.mxu0 0
  %6818 = vmatprep.mubr.bf16.mxu0 0
  %6819 = vmatmul.mubr.bf16.gmra.mrb[0].mxu0 %v6784
  %v6820 = vpop.f32.mrb[0].mxu0
  %v6821 = vadd.f32 0.0, %v6820
  %v6822 = vpop.f32.mrb[0].mxu0
  %v6823 = vpop.f32.mrb[0].mxu0
  %v6824 = vadd.f32 0.0, %v6823
  %v6825 = vpop.f32.mrb[0].mxu0
  %6826 = vdwg.mxu0
  %v6828 = vsel %vm1922, %v6295, 0
  %6830 = vmatprep.subr.bf16.mxu0 0
  %6831 = vmatpush1.bf16.msra.mxu0 %v5100
  %6832 = vmatprep.subr.bf16.mxu0 0
  %6833 = vmatpush1.bf16.msra.mxu0 0
  %6834 = vmatprep.subr.bf16.mxu0 0
  %6835 = vmatpush1.bf16.msra.mxu0 0
  %6836 = vmatprep.subr.bf16.mxu0 0
  %6837 = vmatpush1.bf16.msra.mxu0 0
  %6838 = vmatprep.subr.bf16.mxu0 0
  %6839 = vmatpush1.bf16.msra.mxu0 0
  %6840 = vmatprep.subr.bf16.mxu0 0
  %6841 = vmatpush1.bf16.msra.mxu0 0
  %6842 = vmatprep.subr.bf16.mxu0 0
  %6843 = vmatpush1.bf16.msra.mxu0 0
  %6844 = vmatprep.subr.bf16.mxu0 0
  %6845 = vmatpush1.bf16.msra.mxu0 0
  %6846 = vmatprep.subr.bf16.mxu0 0
  %6847 = vmatpush1.bf16.msra.mxu0 0
  %6848 = vmatprep.subr.bf16.mxu0 0
  %6849 = vmatpush1.bf16.msra.mxu0 0
  %6850 = vmatprep.subr.bf16.mxu0 0
  %6851 = vmatpush1.bf16.msra.mxu0 0
  %6852 = vmatprep.subr.bf16.mxu0 0
  %6853 = vmatpush1.bf16.msra.mxu0 0
  %6854 = vmatprep.subr.bf16.mxu0 0
  %6855 = vmatpush1.bf16.msra.mxu0 0
  %6856 = vmatprep.subr.bf16.mxu0 0
  %6857 = vmatpush1.bf16.msra.mxu0 0
  %6858 = vmatprep.subr.bf16.mxu0 0
  %6859 = vmatpush1.bf16.msra.mxu0 0
  %6860 = vmatprep.subr.bf16.mxu0 0
  %6861 = vmatpush1.bf16.msra.mxu0 0
  %6862 = vmatprep.mubr.bf16.mxu0 0
  %6863 = vmatmul.mubr.bf16.gmra.mrb[0].mxu0 %v6828
  %v6864 = vpop.f32.mrb[0].mxu0
  %v6865 = vadd.f32 0.0, %v6864
  %v6866 = vpop.f32.mrb[0].mxu0
  %v6867 = vpop.f32.mrb[0].mxu0
  %v6868 = vadd.f32 0.0, %v6867
  %v6869 = vpop.f32.mrb[0].mxu0
  %6870 = vdwg.mxu0
  %v6872 = vsel %vm1922, %v6296, 0
  %6874 = vmatprep.subr.bf16.mxu0 0
  %6875 = vmatpush1.bf16.msra.mxu0 %v5102
  %6876 = vmatprep.subr.bf16.mxu0 0
  %6877 = vmatpush1.bf16.msra.mxu0 0
  %6878 = vmatprep.subr.bf16.mxu0 0
  %6879 = vmatpush1.bf16.msra.mxu0 0
  %6880 = vmatprep.subr.bf16.mxu0 0
  %6881 = vmatpush1.bf16.msra.mxu0 0
  %6882 = vmatprep.subr.bf16.mxu0 0
  %6883 = vmatpush1.bf16.msra.mxu0 0
  %6884 = vmatprep.subr.bf16.mxu0 0
  %6885 = vmatpush1.bf16.msra.mxu0 0
  %6886 = vmatprep.subr.bf16.mxu0 0
  %6887 = vmatpush1.bf16.msra.mxu0 0
  %6888 = vmatprep.subr.bf16.mxu0 0
  %6889 = vmatpush1.bf16.msra.mxu0 0
  %6890 = vmatprep.subr.bf16.mxu0 0
  %6891 = vmatpush1.bf16.msra.mxu0 0
  %6892 = vmatprep.subr.bf16.mxu0 0
  %6893 = vmatpush1.bf16.msra.mxu0 0
  %6894 = vmatprep.subr.bf16.mxu0 0
  %6895 = vmatpush1.bf16.msra.mxu0 0
  %6896 = vmatprep.subr.bf16.mxu0 0
  %6897 = vmatpush1.bf16.msra.mxu0 0
  %6898 = vmatprep.subr.bf16.mxu0 0
  %6899 = vmatpush1.bf16.msra.mxu0 0
  %6900 = vmatprep.subr.bf16.mxu0 0
  %6901 = vmatpush1.bf16.msra.mxu0 0
  %6902 = vmatprep.subr.bf16.mxu0 0
  %6903 = vmatpush1.bf16.msra.mxu0 0
  %6904 = vmatprep.subr.bf16.mxu0 0
  %6905 = vmatpush1.bf16.msra.mxu0 0
  %6906 = vmatprep.mubr.bf16.mxu0 0
  %6907 = vmatmul.mubr.bf16.gmra.mrb[0].mxu0 %v6872
  %v6908 = vpop.f32.mrb[0].mxu0
  %v6909 = vadd.f32 0.0, %v6908
  %v6910 = vpop.f32.mrb[0].mxu0
  %v6911 = vpop.f32.mrb[0].mxu0
  %v6912 = vadd.f32 0.0, %v6911
  %v6913 = vpop.f32.mrb[0].mxu0
  %6914 = vdwg.mxu0
  %v6916 = vsel %vm1922, %v6297, 0
  %6918 = vmatprep.subr.bf16.mxu0 0
  %6919 = vmatpush1.bf16.msra.mxu0 %v5104
  %6920 = vmatprep.subr.bf16.mxu0 0
  %6921 = vmatpush1.bf16.msra.mxu0 0
  %6922 = vmatprep.subr.bf16.mxu0 0
  %6923 = vmatpush1.bf16.msra.mxu0 0
  %6924 = vmatprep.subr.bf16.mxu0 0
  %6925 = vmatpush1.bf16.msra.mxu0 0
  %6926 = vmatprep.subr.bf16.mxu0 0
  %6927 = vmatpush1.bf16.msra.mxu0 0
  %6928 = vmatprep.subr.bf16.mxu0 0
  %6929 = vmatpush1.bf16.msra.mxu0 0
  %6930 = vmatprep.subr.bf16.mxu0 0
  %6931 = vmatpush1.bf16.msra.mxu0 0
  %6932 = vmatprep.subr.bf16.mxu0 0
  %6933 = vmatpush1.bf16.msra.mxu0 0
  %6934 = vmatprep.subr.bf16.mxu0 0
  %6935 = vmatpush1.bf16.msra.mxu0 0
  %6936 = vmatprep.subr.bf16.mxu0 0
  %6937 = vmatpush1.bf16.msra.mxu0 0
  %6938 = vmatprep.subr.bf16.mxu0 0
  %6939 = vmatpush1.bf16.msra.mxu0 0
  %6940 = vmatprep.subr.bf16.mxu0 0
  %6941 = vmatpush1.bf16.msra.mxu0 0
  %6942 = vmatprep.subr.bf16.mxu0 0
  %6943 = vmatpush1.bf16.msra.mxu0 0
  %6944 = vmatprep.subr.bf16.mxu0 0
  %6945 = vmatpush1.bf16.msra.mxu0 0
  %6946 = vmatprep.subr.bf16.mxu0 0
  %6947 = vmatpush1.bf16.msra.mxu0 0
  %6948 = vmatprep.subr.bf16.mxu0 0
  %6949 = vmatpush1.bf16.msra.mxu0 0
  %6950 = vmatprep.mubr.bf16.mxu0 0
  %6951 = vmatmul.mubr.bf16.gmra.mrb[0].mxu0 %v6916
  %v6952 = vpop.f32.mrb[0].mxu0
  %v6953 = vadd.f32 0.0, %v6952
  %v6954 = vpop.f32.mrb[0].mxu0
  %v6955 = vpop.f32.mrb[0].mxu0
  %v6956 = vadd.f32 0.0, %v6955
  %v6957 = vpop.f32.mrb[0].mxu0
  %6958 = vdwg.mxu0
  %v6960 = vsel %vm1922, %v6298, 0
  %6962 = vmatprep.subr.bf16.mxu0 0
  %6963 = vmatpush1.bf16.msra.mxu0 %v5106
  %6964 = vmatprep.subr.bf16.mxu0 0
  %6965 = vmatpush1.bf16.msra.mxu0 0
  %6966 = vmatprep.subr.bf16.mxu0 0
  %6967 = vmatpush1.bf16.msra.mxu0 0
  %6968 = vmatprep.subr.bf16.mxu0 0
  %6969 = vmatpush1.bf16.msra.mxu0 0
  %6970 = vmatprep.subr.bf16.mxu0 0
  %6971 = vmatpush1.bf16.msra.mxu0 0
  %6972 = vmatprep.subr.bf16.mxu0 0
  %6973 = vmatpush1.bf16.msra.mxu0 0
  %6974 = vmatprep.subr.bf16.mxu0 0
  %6975 = vmatpush1.bf16.msra.mxu0 0
  %6976 = vmatprep.subr.bf16.mxu0 0
  %6977 = vmatpush1.bf16.msra.mxu0 0
  %6978 = vmatprep.subr.bf16.mxu0 0
  %6979 = vmatpush1.bf16.msra.mxu0 0
  %6980 = vmatprep.subr.bf16.mxu0 0
  %6981 = vmatpush1.bf16.msra.mxu0 0
  %6982 = vmatprep.subr.bf16.mxu0 0
  %6983 = vmatpush1.bf16.msra.mxu0 0
  %6984 = vmatprep.subr.bf16.mxu0 0
  %6985 = vmatpush1.bf16.msra.mxu0 0
  %6986 = vmatprep.subr.bf16.mxu0 0
  %6987 = vmatpush1.bf16.msra.mxu0 0
  %6988 = vmatprep.subr.bf16.mxu0 0
  %6989 = vmatpush1.bf16.msra.mxu0 0
  %6990 = vmatprep.subr.bf16.mxu0 0
  %6991 = vmatpush1.bf16.msra.mxu0 0
  %6992 = vmatprep.subr.bf16.mxu0 0
  %6993 = vmatpush1.bf16.msra.mxu0 0
  %6994 = vmatprep.mubr.bf16.mxu0 0
  %6995 = vmatmul.mubr.bf16.gmra.mrb[0].mxu0 %v6960
  %v6996 = vpop.f32.mrb[0].mxu0
  %v6997 = vadd.f32 0.0, %v6996
  %v6998 = vpop.f32.mrb[0].mxu0
  %v6999 = vpop.f32.mrb[0].mxu0
  %v7000 = vadd.f32 0.0, %v6999
  %v7001 = vpop.f32.mrb[0].mxu0
  %7002 = vdwg.mxu0
  %7019 = vrot.lane.b32.xlu0 %v6689, 64
  %v7020 = vpop.permute.xlu0 %7019
  %7021 = vrot.lane.b32.xlu0 %v6692, 64
  %v7022 = vpop.permute.xlu0 %7021
  %7023 = vrot.lane.b32.xlu0 %v6733, 64
  %v7024 = vpop.permute.xlu0 %7023
  %7025 = vrot.lane.b32.xlu0 %v6736, 64
  %v7026 = vpop.permute.xlu0 %7025
  %7027 = vrot.lane.b32.xlu0 %v6777, 64
  %v7028 = vpop.permute.xlu0 %7027
  %7029 = vrot.lane.b32.xlu0 %v6780, 64
  %v7030 = vpop.permute.xlu0 %7029
  %7031 = vrot.lane.b32.xlu0 %v6821, 64
  %v7032 = vpop.permute.xlu0 %7031
  %7033 = vrot.lane.b32.xlu0 %v6824, 64
  %v7034 = vpop.permute.xlu0 %7033
  %7035 = vrot.lane.b32.xlu0 %v6865, 64
  %v7036 = vpop.permute.xlu0 %7035
  %7037 = vrot.lane.b32.xlu0 %v6868, 64
  %v7038 = vpop.permute.xlu0 %7037
  %7039 = vrot.lane.b32.xlu0 %v6909, 64
  %v7040 = vpop.permute.xlu0 %7039
  %7041 = vrot.lane.b32.xlu0 %v6912, 64
  %v7042 = vpop.permute.xlu0 %7041
  %7043 = vrot.lane.b32.xlu0 %v6953, 64
  %v7044 = vpop.permute.xlu0 %7043
  %7045 = vrot.lane.b32.xlu0 %v6956, 64
  %v7046 = vpop.permute.xlu0 %7045
  %7047 = vrot.lane.b32.xlu0 %v6997, 64
  %v7048 = vpop.permute.xlu0 %7047
  %7049 = vrot.lane.b32.xlu0 %v7000, 64
  %v7050 = vpop.permute.xlu0 %7049
  %v7067 = vsel %vm258, %v6337, %v7020
  %v7068 = vsel %vm258, %v6340, %v7022
  %v7069 = vsel %vm258, %v6381, %v7024
  %v7070 = vsel %vm258, %v6384, %v7026
  %v7071 = vsel %vm258, %v6425, %v7028
  %v7072 = vsel %vm258, %v6428, %v7030
  %v7073 = vsel %vm258, %v6469, %v7032
  %v7074 = vsel %vm258, %v6472, %v7034
  %v7075 = vsel %vm258, %v6513, %v7036
  %v7076 = vsel %vm258, %v6516, %v7038
  %v7077 = vsel %vm258, %v6557, %v7040
  %v7078 = vsel %vm258, %v6560, %v7042
  %v7079 = vsel %vm258, %v6601, %v7044
  %v7080 = vsel %vm258, %v6604, %v7046
  %v7081 = vsel %vm258, %v6645, %v7048
  %v7082 = vsel %vm258, %v6648, %v7050
  %v7083 = vpack.c.bf16 %v7068, %v7067
  %v7084 = vpack.c.bf16 %v7070, %v7069
  %v7085 = vpack.c.bf16 %v7072, %v7071
  %v7086 = vpack.c.bf16 %v7074, %v7073
  %v7087 = vpack.c.bf16 %v7076, %v7075
  %v7088 = vpack.c.bf16 %v7078, %v7077
  %v7089 = vpack.c.bf16 %v7080, %v7079
  %v7090 = vpack.c.bf16 %v7082, %v7081
  %s7091 = scalar_lea.vmem %s10, 64
  %v7092 = vld [vmem:[%s7091] sm:$0xf]
  %v7093 = vld [vmem:[%s7091 + $0x4] sm:$0xf]
  %v7094 = vld [vmem:[%s7091 + $0x8] sm:$0xf]
  %v7095 = vld [vmem:[%s7091 + $0xc] sm:$0xf]
  %v7096 = vld [vmem:[%s7091 + $0x10] sm:$0xf]
  %v7097 = vld [vmem:[%s7091 + $0x14] sm:$0xf]
  %v7098 = vld [vmem:[%s7091 + $0x18] sm:$0xf]
  %v7099 = vld [vmem:[%s7091 + $0x1c] sm:$0xf]
  %v7100 = vld [vmem:[%s7091 + $0x20] sm:$0xf]
  %v7101 = vld [vmem:[%s7091 + $0x24] sm:$0xf]
  %v7102 = vld [vmem:[%s7091 + $0x28] sm:$0xf]
  %v7103 = vld [vmem:[%s7091 + $0x2c] sm:$0xf]
  %v7104 = vld [vmem:[%s7091 + $0x30] sm:$0xf]
  %v7105 = vld [vmem:[%s7091 + $0x34] sm:$0xf]
  %v7106 = vld [vmem:[%s7091 + $0x38] sm:$0xf]
  %v7107 = vld [vmem:[%s7091 + $0x3c] sm:$0xf]
  %s7108 = scalar_lea.vmem %s11, 1
  %v7109 = vld [vmem:[%s7108] sm:$0x1]
  %v7111 = vlaneseq
  %v7112 = vshrl.u32 %v7111, 7
  %v7113 = vsub.s32 0, %v7112
  %v7114 = vrot.slane %v7109, %v7113
  %v7132 = vunpack.c.l.b16 %v7092
  %v7133 = vunpack.c.l.b16 %v7093
  %v7134 = vunpack.c.l.b16 %v7094
  %v7135 = vunpack.c.l.b16 %v7095
  %v7136 = vunpack.c.l.b16 %v7096
  %v7137 = vunpack.c.l.b16 %v7097
  %v7138 = vunpack.c.l.b16 %v7098
  %v7139 = vunpack.c.l.b16 %v7099
  %v7140 = vunpack.c.l.b16 %v7100
  %v7141 = vunpack.c.l.b16 %v7101
  %v7142 = vunpack.c.l.b16 %v7102
  %v7143 = vunpack.c.l.b16 %v7103
  %v7144 = vunpack.c.l.b16 %v7104
  %v7145 = vunpack.c.l.b16 %v7105
  %v7146 = vunpack.c.l.b16 %v7106
  %v7147 = vunpack.c.l.b16 %v7107
  %v7148 = vpack.c.b16 %v7133, %v7132
  %v7149 = vpack.c.b16 %v7135, %v7134
  %v7150 = vpack.c.b16 %v7137, %v7136
  %v7151 = vpack.c.b16 %v7139, %v7138
  %v7152 = vpack.c.b16 %v7141, %v7140
  %v7153 = vpack.c.b16 %v7143, %v7142
  %v7154 = vpack.c.b16 %v7145, %v7144
  %v7155 = vpack.c.b16 %v7147, %v7146
  %7164 = vmatprep.subr.bf16.mxu0 0
  %7165 = vmatpush1.bf16.msra.mxu0 %v7148
  %7166 = vmatprep.subr.bf16.mxu0 0
  %7167 = vmatpush1.bf16.msra.mxu0 %v7149
  %7168 = vmatprep.subr.bf16.mxu0 0
  %7169 = vmatpush1.bf16.msra.mxu0 %v7150
  %7170 = vmatprep.subr.bf16.mxu0 0
  %7171 = vmatpush1.bf16.msra.mxu0 %v7151
  %7172 = vmatprep.subr.bf16.mxu0 0
  %7173 = vmatpush1.bf16.msra.mxu0 %v7152
  %7174 = vmatprep.subr.bf16.mxu0 0
  %7175 = vmatpush1.bf16.msra.mxu0 %v7153
  %7176 = vmatprep.subr.bf16.mxu0 0
  %7177 = vmatpush1.bf16.msra.mxu0 %v7154
  %7178 = vmatprep.subr.bf16.mxu0 0
  %7179 = vmatpush1.bf16.msra.mxu0 %v7155
  %7180 = vmatprep.subr.bf16.mxu0 0
  %7181 = vmatpush1.bf16.msra.mxu0 0
  %7182 = vmatprep.subr.bf16.mxu0 0
  %7183 = vmatpush1.bf16.msra.mxu0 0
  %7184 = vmatprep.subr.bf16.mxu0 0
  %7185 = vmatpush1.bf16.msra.mxu0 0
  %7186 = vmatprep.subr.bf16.mxu0 0
  %7187 = vmatpush1.bf16.msra.mxu0 0
  %7188 = vmatprep.subr.bf16.mxu0 0
  %7189 = vmatpush1.bf16.msra.mxu0 0
  %7190 = vmatprep.subr.bf16.mxu0 0
  %7191 = vmatpush1.bf16.msra.mxu0 0
  %7192 = vmatprep.subr.bf16.mxu0 0
  %7193 = vmatpush1.bf16.msra.mxu0 0
  %7194 = vmatprep.subr.bf16.mxu0 0
  %7195 = vmatpush1.bf16.msra.mxu0 0
  %7196 = vmatprep.mubr.bf16.mxu0 0
  %7197 = vmatmul.mubr.bf16.gmra.mrb[0].mxu0 %v7083
  %v7198 = vpop.f32.mrb[0].mxu0
  %v7199 = vadd.f32 %v7114, %v7198
  %v7200 = vpop.f32.mrb[0].mxu0
  %v7201 = vpop.f32.mrb[0].mxu0
  %v7202 = vadd.f32 %v7114, %v7201
  %v7203 = vpop.f32.mrb[0].mxu0
  %7204 = vmatprep.mubr.bf16.mxu0 0
  %7205 = vmatmul.mubr.bf16.gmra.mrb[0].mxu0 %v7084
  %v7206 = vpop.f32.mrb[0].mxu0
  %v7207 = vadd.f32 %v7114, %v7206
  %v7208 = vpop.f32.mrb[0].mxu0
  %v7209 = vpop.f32.mrb[0].mxu0
  %v7210 = vadd.f32 %v7114, %v7209
  %v7211 = vpop.f32.mrb[0].mxu0
  %7212 = vmatprep.mubr.bf16.mxu0 0
  %7213 = vmatmul.mubr.bf16.gmra.mrb[0].mxu0 %v7085
  %v7214 = vpop.f32.mrb[0].mxu0
  %v7215 = vadd.f32 %v7114, %v7214
  %v7216 = vpop.f32.mrb[0].mxu0
  %v7217 = vpop.f32.mrb[0].mxu0
  %v7218 = vadd.f32 %v7114, %v7217
  %v7219 = vpop.f32.mrb[0].mxu0
  %7220 = vmatprep.mubr.bf16.mxu0 0
  %7221 = vmatmul.mubr.bf16.gmra.mrb[0].mxu0 %v7086
  %v7222 = vpop.f32.mrb[0].mxu0
  %v7223 = vadd.f32 %v7114, %v7222
  %v7224 = vpop.f32.mrb[0].mxu0
  %v7225 = vpop.f32.mrb[0].mxu0
  %v7226 = vadd.f32 %v7114, %v7225
  %v7227 = vpop.f32.mrb[0].mxu0
  %7228 = vmatprep.mubr.bf16.mxu0 0
  %7229 = vmatmul.mubr.bf16.gmra.mrb[0].mxu0 %v7087
  %v7230 = vpop.f32.mrb[0].mxu0
  %v7231 = vadd.f32 %v7114, %v7230
  %v7232 = vpop.f32.mrb[0].mxu0
  %v7233 = vpop.f32.mrb[0].mxu0
  %v7234 = vadd.f32 %v7114, %v7233
  %v7235 = vpop.f32.mrb[0].mxu0
  %7236 = vmatprep.mubr.bf16.mxu0 0
  %7237 = vmatmul.mubr.bf16.gmra.mrb[0].mxu0 %v7088
  %v7238 = vpop.f32.mrb[0].mxu0
  %v7239 = vadd.f32 %v7114, %v7238
  %v7240 = vpop.f32.mrb[0].mxu0
  %v7241 = vpop.f32.mrb[0].mxu0
  %v7242 = vadd.f32 %v7114, %v7241
  %v7243 = vpop.f32.mrb[0].mxu0
  %7244 = vmatprep.mubr.bf16.mxu0 0
  %7245 = vmatmul.mubr.bf16.gmra.mrb[0].mxu0 %v7089
  %v7246 = vpop.f32.mrb[0].mxu0
  %v7247 = vadd.f32 %v7114, %v7246
  %v7248 = vpop.f32.mrb[0].mxu0
  %v7249 = vpop.f32.mrb[0].mxu0
  %v7250 = vadd.f32 %v7114, %v7249
  %v7251 = vpop.f32.mrb[0].mxu0
  %7252 = vmatprep.mubr.bf16.mxu0 0
  %7253 = vmatmul.mubr.bf16.gmra.mrb[0].mxu0 %v7090
  %v7254 = vpop.f32.mrb[0].mxu0
  %v7255 = vadd.f32 %v7114, %v7254
  %v7256 = vpop.f32.mrb[0].mxu0
  %v7257 = vpop.f32.mrb[0].mxu0
  %v7258 = vadd.f32 %v7114, %v7257
  %v7259 = vpop.f32.mrb[0].mxu0
  %7260 = vdwg.mxu0
  %v7261 = vadd.f32 %v4477, %v7199
  %v7262 = vadd.f32 %v4478, %v7202
  %v7263 = vadd.f32 %v4479, %v7207
  %v7264 = vadd.f32 %v4480, %v7210
  %v7265 = vadd.f32 %v4481, %v7215
  %v7266 = vadd.f32 %v4482, %v7218
  %v7267 = vadd.f32 %v4483, %v7223
  %v7268 = vadd.f32 %v4484, %v7226
  %v7269 = vadd.f32 %v4485, %v7231
  %v7270 = vadd.f32 %v4486, %v7234
  %v7271 = vadd.f32 %v4487, %v7239
  %v7272 = vadd.f32 %v4488, %v7242
  %v7273 = vadd.f32 %v4489, %v7247
  %v7274 = vadd.f32 %v4490, %v7250
  %v7275 = vadd.f32 %v4491, %v7255
  %v7276 = vadd.f32 %v4492, %v7258
  %s7277 = scalar_lea.vmem %s12, 1
  %v7278 = vld [vmem:[%s7277] sm:$0x1]
  %s7279 = scalar_lea.vmem %s13, 1
  %v7280 = vld [vmem:[%s7279] sm:$0x1]
  %7281 = vadd.xlane.f32.xlu0 %v7261
  %v7282 = vpop.xlane.xlu0 %7281
  %7283 = vadd.xlane.f32.xlu0 %v7262
  %v7284 = vpop.xlane.xlu0 %7283
  %7285 = vadd.xlane.f32.xlu0 %v7263
  %v7286 = vpop.xlane.xlu0 %7285
  %7287 = vadd.xlane.f32.xlu0 %v7264
  %v7288 = vpop.xlane.xlu0 %7287
  %7289 = vadd.xlane.f32.xlu0 %v7265
  %v7290 = vpop.xlane.xlu0 %7289
  %7291 = vadd.xlane.f32.xlu0 %v7266
  %v7292 = vpop.xlane.xlu0 %7291
  %7293 = vadd.xlane.f32.xlu0 %v7267
  %v7294 = vpop.xlane.xlu0 %7293
  %7295 = vadd.xlane.f32.xlu0 %v7268
  %v7296 = vpop.xlane.xlu0 %7295
  %7297 = vadd.xlane.f32.xlu0 %v7269
  %v7298 = vpop.xlane.xlu0 %7297
  %7299 = vadd.xlane.f32.xlu0 %v7270
  %v7300 = vpop.xlane.xlu0 %7299
  %7301 = vadd.xlane.f32.xlu0 %v7271
  %v7302 = vpop.xlane.xlu0 %7301
  %7303 = vadd.xlane.f32.xlu0 %v7272
  %v7304 = vpop.xlane.xlu0 %7303
  %7305 = vadd.xlane.f32.xlu0 %v7273
  %v7306 = vpop.xlane.xlu0 %7305
  %7307 = vadd.xlane.f32.xlu0 %v7274
  %v7308 = vpop.xlane.xlu0 %7307
  %7309 = vadd.xlane.f32.xlu0 %v7275
  %v7310 = vpop.xlane.xlu0 %7309
  %7311 = vadd.xlane.f32.xlu0 %v7276
  %v7312 = vpop.xlane.xlu0 %7311
  %v7313 = vmul.f32 %v7282, %v3301
  %v7314 = vmul.f32 %v7284, %v3301
  %v7315 = vmul.f32 %v7286, %v3301
  %v7316 = vmul.f32 %v7288, %v3301
  %v7317 = vmul.f32 %v7290, %v3301
  %v7318 = vmul.f32 %v7292, %v3301
  %v7319 = vmul.f32 %v7294, %v3301
  %v7320 = vmul.f32 %v7296, %v3301
  %v7321 = vmul.f32 %v7298, %v3301
  %v7322 = vmul.f32 %v7300, %v3301
  %v7323 = vmul.f32 %v7302, %v3301
  %v7324 = vmul.f32 %v7304, %v3301
  %v7325 = vmul.f32 %v7306, %v3301
  %v7326 = vmul.f32 %v7308, %v3301
  %v7327 = vmul.f32 %v7310, %v3301
  %v7328 = vmul.f32 %v7312, %v3301
  %v7329 = vsub.f32 %v7261, %v7313
  %v7330 = vsub.f32 %v7262, %v7314
  %v7331 = vsub.f32 %v7263, %v7315
  %v7332 = vsub.f32 %v7264, %v7316
  %v7333 = vsub.f32 %v7265, %v7317
  %v7334 = vsub.f32 %v7266, %v7318
  %v7335 = vsub.f32 %v7267, %v7319
  %v7336 = vsub.f32 %v7268, %v7320
  %v7337 = vsub.f32 %v7269, %v7321
  %v7338 = vsub.f32 %v7270, %v7322
  %v7339 = vsub.f32 %v7271, %v7323
  %v7340 = vsub.f32 %v7272, %v7324
  %v7341 = vsub.f32 %v7273, %v7325
  %v7342 = vsub.f32 %v7274, %v7326
  %v7343 = vsub.f32 %v7275, %v7327
  %v7344 = vsub.f32 %v7276, %v7328
  %v7345 = vmul.f32 %v7329, %v7329
  %v7346 = vmul.f32 %v7330, %v7330
  %v7347 = vmul.f32 %v7331, %v7331
  %v7348 = vmul.f32 %v7332, %v7332
  %v7349 = vmul.f32 %v7333, %v7333
  %v7350 = vmul.f32 %v7334, %v7334
  %v7351 = vmul.f32 %v7335, %v7335
  %v7352 = vmul.f32 %v7336, %v7336
  %v7353 = vmul.f32 %v7337, %v7337
  %v7354 = vmul.f32 %v7338, %v7338
  %v7355 = vmul.f32 %v7339, %v7339
  %v7356 = vmul.f32 %v7340, %v7340
  %v7357 = vmul.f32 %v7341, %v7341
  %v7358 = vmul.f32 %v7342, %v7342
  %v7359 = vmul.f32 %v7343, %v7343
  %v7360 = vmul.f32 %v7344, %v7344
  %7361 = vadd.xlane.f32.xlu0 %v7345
  %v7362 = vpop.xlane.xlu0 %7361
  %7363 = vadd.xlane.f32.xlu0 %v7346
  %v7364 = vpop.xlane.xlu0 %7363
  %7365 = vadd.xlane.f32.xlu0 %v7347
  %v7366 = vpop.xlane.xlu0 %7365
  %7367 = vadd.xlane.f32.xlu0 %v7348
  %v7368 = vpop.xlane.xlu0 %7367
  %7369 = vadd.xlane.f32.xlu0 %v7349
  %v7370 = vpop.xlane.xlu0 %7369
  %7371 = vadd.xlane.f32.xlu0 %v7350
  %v7372 = vpop.xlane.xlu0 %7371
  %7373 = vadd.xlane.f32.xlu0 %v7351
  %v7374 = vpop.xlane.xlu0 %7373
  %7375 = vadd.xlane.f32.xlu0 %v7352
  %v7376 = vpop.xlane.xlu0 %7375
  %7377 = vadd.xlane.f32.xlu0 %v7353
  %v7378 = vpop.xlane.xlu0 %7377
  %7379 = vadd.xlane.f32.xlu0 %v7354
  %v7380 = vpop.xlane.xlu0 %7379
  %7381 = vadd.xlane.f32.xlu0 %v7355
  %v7382 = vpop.xlane.xlu0 %7381
  %7383 = vadd.xlane.f32.xlu0 %v7356
  %v7384 = vpop.xlane.xlu0 %7383
  %7385 = vadd.xlane.f32.xlu0 %v7357
  %v7386 = vpop.xlane.xlu0 %7385
  %7387 = vadd.xlane.f32.xlu0 %v7358
  %v7388 = vpop.xlane.xlu0 %7387
  %7389 = vadd.xlane.f32.xlu0 %v7359
  %v7390 = vpop.xlane.xlu0 %7389
  %7391 = vadd.xlane.f32.xlu0 %v7360
  %v7392 = vpop.xlane.xlu0 %7391
  %v7393 = vmul.f32 %v7362, %v3301
  %v7394 = vmul.f32 %v7364, %v3301
  %v7395 = vmul.f32 %v7366, %v3301
  %v7396 = vmul.f32 %v7368, %v3301
  %v7397 = vmul.f32 %v7370, %v3301
  %v7398 = vmul.f32 %v7372, %v3301
  %v7399 = vmul.f32 %v7374, %v3301
  %v7400 = vmul.f32 %v7376, %v3301
  %v7401 = vmul.f32 %v7378, %v3301
  %v7402 = vmul.f32 %v7380, %v3301
  %v7403 = vmul.f32 %v7382, %v3301
  %v7404 = vmul.f32 %v7384, %v3301
  %v7405 = vmul.f32 %v7386, %v3301
  %v7406 = vmul.f32 %v7388, %v3301
  %v7407 = vmul.f32 %v7390, %v3301
  %v7408 = vmul.f32 %v7392, %v3301
  %v7409 = vadd.f32 %v7393, 1e-12
  %v7410 = vadd.f32 %v7394, 1e-12
  %v7411 = vadd.f32 %v7395, 1e-12
  %v7412 = vadd.f32 %v7396, 1e-12
  %v7413 = vadd.f32 %v7397, 1e-12
  %v7414 = vadd.f32 %v7398, 1e-12
  %v7415 = vadd.f32 %v7399, 1e-12
  %v7416 = vadd.f32 %v7400, 1e-12
  %v7417 = vadd.f32 %v7401, 1e-12
  %v7418 = vadd.f32 %v7402, 1e-12
  %v7419 = vadd.f32 %v7403, 1e-12
  %v7420 = vadd.f32 %v7404, 1e-12
  %v7421 = vadd.f32 %v7405, 1e-12
  %v7422 = vadd.f32 %v7406, 1e-12
  %v7423 = vadd.f32 %v7407, 1e-12
  %v7424 = vadd.f32 %v7408, 1e-12
  %v7425 = vrsqrt.pop %v7409
  %v7426 = vrsqrt.pop %v7410
  %v7427 = vrsqrt.pop %v7411
  %v7428 = vrsqrt.pop %v7412
  %v7429 = vrsqrt.pop %v7413
  %v7430 = vrsqrt.pop %v7414
  %v7431 = vrsqrt.pop %v7415
  %v7432 = vrsqrt.pop %v7416
  %v7433 = vrsqrt.pop %v7417
  %v7434 = vrsqrt.pop %v7418
  %v7435 = vrsqrt.pop %v7419
  %v7436 = vrsqrt.pop %v7420
  %v7437 = vrsqrt.pop %v7421
  %v7438 = vrsqrt.pop %v7422
  %v7439 = vrsqrt.pop %v7423
  %v7440 = vrsqrt.pop %v7424
  %v7441 = vmul.f32 %v7329, %v7425
  %v7442 = vmul.f32 %v7330, %v7426
  %v7443 = vmul.f32 %v7331, %v7427
  %v7444 = vmul.f32 %v7332, %v7428
  %v7445 = vmul.f32 %v7333, %v7429
  %v7446 = vmul.f32 %v7334, %v7430
  %v7447 = vmul.f32 %v7335, %v7431
  %v7448 = vmul.f32 %v7336, %v7432
  %v7449 = vmul.f32 %v7337, %v7433
  %v7450 = vmul.f32 %v7338, %v7434
  %v7451 = vmul.f32 %v7339, %v7435
  %v7452 = vmul.f32 %v7340, %v7436
  %v7453 = vmul.f32 %v7341, %v7437
  %v7454 = vmul.f32 %v7342, %v7438
  %v7455 = vmul.f32 %v7343, %v7439
  %v7456 = vmul.f32 %v7344, %v7440
  %v7458 = vlaneseq
  %v7459 = vshrl.u32 %v7458, 7
  %v7460 = vsub.s32 0, %v7459
  %v7461 = vrot.slane %v7278, %v7460
  %v7463 = vmul.f32 %v7441, %v7461
  %v7464 = vmul.f32 %v7442, %v7461
  %v7465 = vmul.f32 %v7443, %v7461
  %v7466 = vmul.f32 %v7444, %v7461
  %v7467 = vmul.f32 %v7445, %v7461
  %v7468 = vmul.f32 %v7446, %v7461
  %v7469 = vmul.f32 %v7447, %v7461
  %v7470 = vmul.f32 %v7448, %v7461
  %v7471 = vmul.f32 %v7449, %v7461
  %v7472 = vmul.f32 %v7450, %v7461
  %v7473 = vmul.f32 %v7451, %v7461
  %v7474 = vmul.f32 %v7452, %v7461
  %v7475 = vmul.f32 %v7453, %v7461
  %v7476 = vmul.f32 %v7454, %v7461
  %v7477 = vmul.f32 %v7455, %v7461
  %v7478 = vmul.f32 %v7456, %v7461
  %v7480 = vlaneseq
  %v7481 = vshrl.u32 %v7480, 7
  %v7482 = vsub.s32 0, %v7481
  %v7483 = vrot.slane %v7280, %v7482
  %v7485 = vadd.f32 %v7463, %v7483
  %v7486 = vadd.f32 %v7464, %v7483
  %v7487 = vadd.f32 %v7465, %v7483
  %v7488 = vadd.f32 %v7466, %v7483
  %v7489 = vadd.f32 %v7467, %v7483
  %v7490 = vadd.f32 %v7468, %v7483
  %v7491 = vadd.f32 %v7469, %v7483
  %v7492 = vadd.f32 %v7470, %v7483
  %v7493 = vadd.f32 %v7471, %v7483
  %v7494 = vadd.f32 %v7472, %v7483
  %v7495 = vadd.f32 %v7473, %v7483
  %v7496 = vadd.f32 %v7474, %v7483
  %v7497 = vadd.f32 %v7475, %v7483
  %v7498 = vadd.f32 %v7476, %v7483
  %v7499 = vadd.f32 %v7477, %v7483
  %v7500 = vadd.f32 %v7478, %v7483
  %v7501 = vpack.c.bf16 %v7486, %v7485
  %v7502 = vpack.c.bf16 %v7488, %v7487
  %v7503 = vpack.c.bf16 %v7490, %v7489
  %v7504 = vpack.c.bf16 %v7492, %v7491
  %v7505 = vpack.c.bf16 %v7494, %v7493
  %v7506 = vpack.c.bf16 %v7496, %v7495
  %v7507 = vpack.c.bf16 %v7498, %v7497
  %v7508 = vpack.c.bf16 %v7500, %v7499
  %s7509 = scalar_lea.vmem %s14, 128
  %v7510 = vld [vmem:[%s7509] sm:$0xff]
  %v7511 = vld [vmem:[%s7509 + $0x8] sm:$0xff]
  %v7512 = vld [vmem:[%s7509 + $0x10] sm:$0xff]
  %v7513 = vld [vmem:[%s7509 + $0x18] sm:$0xff]
  %v7514 = vld [vmem:[%s7509 + $0x20] sm:$0xff]
  %v7515 = vld [vmem:[%s7509 + $0x28] sm:$0xff]
  %v7516 = vld [vmem:[%s7509 + $0x30] sm:$0xff]
  %v7517 = vld [vmem:[%s7509 + $0x38] sm:$0xff]
  %v7518 = vld [vmem:[%s7509 + $0x40] sm:$0xff]
  %v7519 = vld [vmem:[%s7509 + $0x48] sm:$0xff]
  %v7520 = vld [vmem:[%s7509 + $0x50] sm:$0xff]
  %v7521 = vld [vmem:[%s7509 + $0x58] sm:$0xff]
  %v7522 = vld [vmem:[%s7509 + $0x60] sm:$0xff]
  %v7523 = vld [vmem:[%s7509 + $0x68] sm:$0xff]
  %v7524 = vld [vmem:[%s7509 + $0x70] sm:$0xff]
  %v7525 = vld [vmem:[%s7509 + $0x78] sm:$0xff]
  %s7526 = scalar_lea.vmem %s15, 2
  %v7527 = vld [vmem:[%s7526] sm:$0x3]
  %v7529 = vlaneseq
  %v7530 = vshrl.u32 %v7529, 7
  %v7531 = vsub.s32 0, %v7530
  %v7532 = vrot.slane %v7527, %v7531
  %v7533 = vlaneseq
  %v7534 = vshrl.u32 %v7533, 7
  %v7535 = vsub.s32 1, %v7534
  %v7536 = vrot.slane %v7527, %v7535
  %v7555 = vunpack.c.l.b16 %v7510
  %v7556 = vunpack.c.h.b16 %v7510
  %v7557 = vunpack.c.l.b16 %v7511
  %v7558 = vunpack.c.h.b16 %v7511
  %v7559 = vunpack.c.l.b16 %v7512
  %v7560 = vunpack.c.h.b16 %v7512
  %v7561 = vunpack.c.l.b16 %v7513
  %v7562 = vunpack.c.h.b16 %v7513
  %v7563 = vunpack.c.l.b16 %v7514
  %v7564 = vunpack.c.h.b16 %v7514
  %v7565 = vunpack.c.l.b16 %v7515
  %v7566 = vunpack.c.h.b16 %v7515
  %v7567 = vunpack.c.l.b16 %v7516
  %v7568 = vunpack.c.h.b16 %v7516
  %v7569 = vunpack.c.l.b16 %v7517
  %v7570 = vunpack.c.h.b16 %v7517
  %v7571 = vunpack.c.l.b16 %v7518
  %v7572 = vunpack.c.h.b16 %v7518
  %v7573 = vunpack.c.l.b16 %v7519
  %v7574 = vunpack.c.h.b16 %v7519
  %v7575 = vunpack.c.l.b16 %v7520
  %v7576 = vunpack.c.h.b16 %v7520
  %v7577 = vunpack.c.l.b16 %v7521
  %v7578 = vunpack.c.h.b16 %v7521
  %v7579 = vunpack.c.l.b16 %v7522
  %v7580 = vunpack.c.h.b16 %v7522
  %v7581 = vunpack.c.l.b16 %v7523
  %v7582 = vunpack.c.h.b16 %v7523
  %v7583 = vunpack.c.l.b16 %v7524
  %v7584 = vunpack.c.h.b16 %v7524
  %v7585 = vunpack.c.l.b16 %v7525
  %v7586 = vunpack.c.h.b16 %v7525
  %v7587 = vpack.c.b16 %v7557, %v7555
  %v7588 = vpack.c.b16 %v7558, %v7556
  %v7589 = vpack.c.b16 %v7561, %v7559
  %v7590 = vpack.c.b16 %v7562, %v7560
  %v7591 = vpack.c.b16 %v7565, %v7563
  %v7592 = vpack.c.b16 %v7566, %v7564
  %v7593 = vpack.c.b16 %v7569, %v7567
  %v7594 = vpack.c.b16 %v7570, %v7568
  %v7595 = vpack.c.b16 %v7573, %v7571
  %v7596 = vpack.c.b16 %v7574, %v7572
  %v7597 = vpack.c.b16 %v7577, %v7575
  %v7598 = vpack.c.b16 %v7578, %v7576
  %v7599 = vpack.c.b16 %v7581, %v7579
  %v7600 = vpack.c.b16 %v7582, %v7580
  %v7601 = vpack.c.b16 %v7585, %v7583
  %v7602 = vpack.c.b16 %v7586, %v7584
  %7619 = vmatprep.subr.bf16.mxu0 %v7588
  %7620 = vmatpush1.bf16.msra.mxu0 %v7587
  %7621 = vmatprep.subr.bf16.mxu0 %v7590
  %7622 = vmatpush1.bf16.msra.mxu0 %v7589
  %7623 = vmatprep.subr.bf16.mxu0 %v7592
  %7624 = vmatpush1.bf16.msra.mxu0 %v7591
  %7625 = vmatprep.subr.bf16.mxu0 %v7594
  %7626 = vmatpush1.bf16.msra.mxu0 %v7593
  %7627 = vmatprep.subr.bf16.mxu0 %v7596
  %7628 = vmatpush1.bf16.msra.mxu0 %v7595
  %7629 = vmatprep.subr.bf16.mxu0 %v7598
  %7630 = vmatpush1.bf16.msra.mxu0 %v7597
  %7631 = vmatprep.subr.bf16.mxu0 %v7600
  %7632 = vmatpush1.bf16.msra.mxu0 %v7599
  %7633 = vmatprep.subr.bf16.mxu0 %v7602
  %7634 = vmatpush1.bf16.msra.mxu0 %v7601
  %7635 = vmatprep.subr.bf16.mxu0 0
  %7636 = vmatpush1.bf16.msra.mxu0 0
  %7637 = vmatprep.subr.bf16.mxu0 0
  %7638 = vmatpush1.bf16.msra.mxu0 0
  %7639 = vmatprep.subr.bf16.mxu0 0
  %7640 = vmatpush1.bf16.msra.mxu0 0
  %7641 = vmatprep.subr.bf16.mxu0 0
  %7642 = vmatpush1.bf16.msra.mxu0 0
  %7643 = vmatprep.subr.bf16.mxu0 0
  %7644 = vmatpush1.bf16.msra.mxu0 0
  %7645 = vmatprep.subr.bf16.mxu0 0
  %7646 = vmatpush1.bf16.msra.mxu0 0
  %7647 = vmatprep.subr.bf16.mxu0 0
  %7648 = vmatpush1.bf16.msra.mxu0 0
  %7649 = vmatprep.subr.bf16.mxu0 0
  %7650 = vmatpush1.bf16.msra.mxu0 0
  %7651 = vmatprep.mubr.bf16.mxu0 0
  %7652 = vmatmul.mubr.bf16.gmra.mrb[0].mxu0 %v7501
  %v7653 = vpop.f32.mrb[0].mxu0
  %v7654 = vadd.f32 %v7532, %v7653
  %v7655 = vpop.f32.mrb[0].mxu0
  %v7656 = vadd.f32 %v7536, %v7655
  %v7657 = vpop.f32.mrb[0].mxu0
  %v7658 = vadd.f32 %v7532, %v7657
  %v7659 = vpop.f32.mrb[0].mxu0
  %v7660 = vadd.f32 %v7536, %v7659
  %7661 = vmatprep.mubr.bf16.mxu0 0
  %7662 = vmatmul.mubr.bf16.gmra.mrb[0].mxu0 %v7502
  %v7663 = vpop.f32.mrb[0].mxu0
  %v7664 = vadd.f32 %v7532, %v7663
  %v7665 = vpop.f32.mrb[0].mxu0
  %v7666 = vadd.f32 %v7536, %v7665
  %v7667 = vpop.f32.mrb[0].mxu0
  %v7668 = vadd.f32 %v7532, %v7667
  %v7669 = vpop.f32.mrb[0].mxu0
  %v7670 = vadd.f32 %v7536, %v7669
  %7671 = vmatprep.mubr.bf16.mxu0 0
  %7672 = vmatmul.mubr.bf16.gmra.mrb[0].mxu0 %v7503
  %v7673 = vpop.f32.mrb[0].mxu0
  %v7674 = vadd.f32 %v7532, %v7673
  %v7675 = vpop.f32.mrb[0].mxu0
  %v7676 = vadd.f32 %v7536, %v7675
  %v7677 = vpop.f32.mrb[0].mxu0
  %v7678 = vadd.f32 %v7532, %v7677
  %v7679 = vpop.f32.mrb[0].mxu0
  %v7680 = vadd.f32 %v7536, %v7679
  %7681 = vmatprep.mubr.bf16.mxu0 0
  %7682 = vmatmul.mubr.bf16.gmra.mrb[0].mxu0 %v7504
  %v7683 = vpop.f32.mrb[0].mxu0
  %v7684 = vadd.f32 %v7532, %v7683
  %v7685 = vpop.f32.mrb[0].mxu0
  %v7686 = vadd.f32 %v7536, %v7685
  %v7687 = vpop.f32.mrb[0].mxu0
  %v7688 = vadd.f32 %v7532, %v7687
  %v7689 = vpop.f32.mrb[0].mxu0
  %v7690 = vadd.f32 %v7536, %v7689
  %7691 = vmatprep.mubr.bf16.mxu0 0
  %7692 = vmatmul.mubr.bf16.gmra.mrb[0].mxu0 %v7505
  %v7693 = vpop.f32.mrb[0].mxu0
  %v7694 = vadd.f32 %v7532, %v7693
  %v7695 = vpop.f32.mrb[0].mxu0
  %v7696 = vadd.f32 %v7536, %v7695
  %v7697 = vpop.f32.mrb[0].mxu0
  %v7698 = vadd.f32 %v7532, %v7697
  %v7699 = vpop.f32.mrb[0].mxu0
  %v7700 = vadd.f32 %v7536, %v7699
  %7701 = vmatprep.mubr.bf16.mxu0 0
  %7702 = vmatmul.mubr.bf16.gmra.mrb[0].mxu0 %v7506
  %v7703 = vpop.f32.mrb[0].mxu0
  %v7704 = vadd.f32 %v7532, %v7703
  %v7705 = vpop.f32.mrb[0].mxu0
  %v7706 = vadd.f32 %v7536, %v7705
  %v7707 = vpop.f32.mrb[0].mxu0
  %v7708 = vadd.f32 %v7532, %v7707
  %v7709 = vpop.f32.mrb[0].mxu0
  %v7710 = vadd.f32 %v7536, %v7709
  %7711 = vmatprep.mubr.bf16.mxu0 0
  %7712 = vmatmul.mubr.bf16.gmra.mrb[0].mxu0 %v7507
  %v7713 = vpop.f32.mrb[0].mxu0
  %v7714 = vadd.f32 %v7532, %v7713
  %v7715 = vpop.f32.mrb[0].mxu0
  %v7716 = vadd.f32 %v7536, %v7715
  %v7717 = vpop.f32.mrb[0].mxu0
  %v7718 = vadd.f32 %v7532, %v7717
  %v7719 = vpop.f32.mrb[0].mxu0
  %v7720 = vadd.f32 %v7536, %v7719
  %7721 = vmatprep.mubr.bf16.mxu0 0
  %7722 = vmatmul.mubr.bf16.gmra.mrb[0].mxu0 %v7508
  %v7723 = vpop.f32.mrb[0].mxu0
  %v7724 = vadd.f32 %v7532, %v7723
  %v7725 = vpop.f32.mrb[0].mxu0
  %v7726 = vadd.f32 %v7536, %v7725
  %v7727 = vpop.f32.mrb[0].mxu0
  %v7728 = vadd.f32 %v7532, %v7727
  %v7729 = vpop.f32.mrb[0].mxu0
  %v7730 = vadd.f32 %v7536, %v7729
  %7731 = vdwg.mxu0
  %v7732 = vmul.f32 %v7654, %v7654
  %v7733 = vmul.f32 %v7656, %v7656
  %v7734 = vmul.f32 %v7658, %v7658
  %v7735 = vmul.f32 %v7660, %v7660
  %v7736 = vmul.f32 %v7664, %v7664
  %v7737 = vmul.f32 %v7666, %v7666
  %v7738 = vmul.f32 %v7668, %v7668
  %v7739 = vmul.f32 %v7670, %v7670
  %v7740 = vmul.f32 %v7674, %v7674
  %v7741 = vmul.f32 %v7676, %v7676
  %v7742 = vmul.f32 %v7678, %v7678
  %v7743 = vmul.f32 %v7680, %v7680
  %v7744 = vmul.f32 %v7684, %v7684
  %v7745 = vmul.f32 %v7686, %v7686
  %v7746 = vmul.f32 %v7688, %v7688
  %v7747 = vmul.f32 %v7690, %v7690
  %v7748 = vmul.f32 %v7694, %v7694
  %v7749 = vmul.f32 %v7696, %v7696
  %v7750 = vmul.f32 %v7698, %v7698
  %v7751 = vmul.f32 %v7700, %v7700
  %v7752 = vmul.f32 %v7704, %v7704
  %v7753 = vmul.f32 %v7706, %v7706
  %v7754 = vmul.f32 %v7708, %v7708
  %v7755 = vmul.f32 %v7710, %v7710
  %v7756 = vmul.f32 %v7714, %v7714
  %v7757 = vmul.f32 %v7716, %v7716
  %v7758 = vmul.f32 %v7718, %v7718
  %v7759 = vmul.f32 %v7720, %v7720
  %v7760 = vmul.f32 %v7724, %v7724
  %v7761 = vmul.f32 %v7726, %v7726
  %v7762 = vmul.f32 %v7728, %v7728
  %v7763 = vmul.f32 %v7730, %v7730
  %v7764 = vmul.f32 %v7654, %v7732
  %v7765 = vmul.f32 %v7656, %v7733
  %v7766 = vmul.f32 %v7658, %v7734
  %v7767 = vmul.f32 %v7660, %v7735
  %v7768 = vmul.f32 %v7664, %v7736
  %v7769 = vmul.f32 %v7666, %v7737
  %v7770 = vmul.f32 %v7668, %v7738
  %v7771 = vmul.f32 %v7670, %v7739
  %v7772 = vmul.f32 %v7674, %v7740
  %v7773 = vmul.f32 %v7676, %v7741
  %v7774 = vmul.f32 %v7678, %v7742
  %v7775 = vmul.f32 %v7680, %v7743
  %v7776 = vmul.f32 %v7684, %v7744
  %v7777 = vmul.f32 %v7686, %v7745
  %v7778 = vmul.f32 %v7688, %v7746
  %v7779 = vmul.f32 %v7690, %v7747
  %v7780 = vmul.f32 %v7694, %v7748
  %v7781 = vmul.f32 %v7696, %v7749
  %v7782 = vmul.f32 %v7698, %v7750
  %v7783 = vmul.f32 %v7700, %v7751
  %v7784 = vmul.f32 %v7704, %v7752
  %v7785 = vmul.f32 %v7706, %v7753
  %v7786 = vmul.f32 %v7708, %v7754
  %v7787 = vmul.f32 %v7710, %v7755
  %v7788 = vmul.f32 %v7714, %v7756
  %v7789 = vmul.f32 %v7716, %v7757
  %v7790 = vmul.f32 %v7718, %v7758
  %v7791 = vmul.f32 %v7720, %v7759
  %v7792 = vmul.f32 %v7724, %v7760
  %v7793 = vmul.f32 %v7726, %v7761
  %v7794 = vmul.f32 %v7728, %v7762
  %v7795 = vmul.f32 %v7730, %v7763
  %v7796 = vmul.f32 %v7764, 0.044715
  %v7797 = vmul.f32 %v7765, 0.044715
  %v7798 = vmul.f32 %v7766, 0.044715
  %v7799 = vmul.f32 %v7767, 0.044715
  %v7800 = vmul.f32 %v7768, 0.044715
  %v7801 = vmul.f32 %v7769, 0.044715
  %v7802 = vmul.f32 %v7770, 0.044715
  %v7803 = vmul.f32 %v7771, 0.044715
  %v7804 = vmul.f32 %v7772, 0.044715
  %v7805 = vmul.f32 %v7773, 0.044715
  %v7806 = vmul.f32 %v7774, 0.044715
  %v7807 = vmul.f32 %v7775, 0.044715
  %v7808 = vmul.f32 %v7776, 0.044715
  %v7809 = vmul.f32 %v7777, 0.044715
  %v7810 = vmul.f32 %v7778, 0.044715
  %v7811 = vmul.f32 %v7779, 0.044715
  %v7812 = vmul.f32 %v7780, 0.044715
  %v7813 = vmul.f32 %v7781, 0.044715
  %v7814 = vmul.f32 %v7782, 0.044715
  %v7815 = vmul.f32 %v7783, 0.044715
  %v7816 = vmul.f32 %v7784, 0.044715
  %v7817 = vmul.f32 %v7785, 0.044715
  %v7818 = vmul.f32 %v7786, 0.044715
  %v7819 = vmul.f32 %v7787, 0.044715
  %v7820 = vmul.f32 %v7788, 0.044715
  %v7821 = vmul.f32 %v7789, 0.044715
  %v7822 = vmul.f32 %v7790, 0.044715
  %v7823 = vmul.f32 %v7791, 0.044715
  %v7824 = vmul.f32 %v7792, 0.044715
  %v7825 = vmul.f32 %v7793, 0.044715
  %v7826 = vmul.f32 %v7794, 0.044715
  %v7827 = vmul.f32 %v7795, 0.044715
  %v7828 = vadd.f32 %v7654, %v7796
  %v7829 = vadd.f32 %v7656, %v7797
  %v7830 = vadd.f32 %v7658, %v7798
  %v7831 = vadd.f32 %v7660, %v7799
  %v7832 = vadd.f32 %v7664, %v7800
  %v7833 = vadd.f32 %v7666, %v7801
  %v7834 = vadd.f32 %v7668, %v7802
  %v7835 = vadd.f32 %v7670, %v7803
  %v7836 = vadd.f32 %v7674, %v7804
  %v7837 = vadd.f32 %v7676, %v7805
  %v7838 = vadd.f32 %v7678, %v7806
  %v7839 = vadd.f32 %v7680, %v7807
  %v7840 = vadd.f32 %v7684, %v7808
  %v7841 = vadd.f32 %v7686, %v7809
  %v7842 = vadd.f32 %v7688, %v7810
  %v7843 = vadd.f32 %v7690, %v7811
  %v7844 = vadd.f32 %v7694, %v7812
  %v7845 = vadd.f32 %v7696, %v7813
  %v7846 = vadd.f32 %v7698, %v7814
  %v7847 = vadd.f32 %v7700, %v7815
  %v7848 = vadd.f32 %v7704, %v7816
  %v7849 = vadd.f32 %v7706, %v7817
  %v7850 = vadd.f32 %v7708, %v7818
  %v7851 = vadd.f32 %v7710, %v7819
  %v7852 = vadd.f32 %v7714, %v7820
  %v7853 = vadd.f32 %v7716, %v7821
  %v7854 = vadd.f32 %v7718, %v7822
  %v7855 = vadd.f32 %v7720, %v7823
  %v7856 = vadd.f32 %v7724, %v7824
  %v7857 = vadd.f32 %v7726, %v7825
  %v7858 = vadd.f32 %v7728, %v7826
  %v7859 = vadd.f32 %v7730, %v7827
  %v7860 = vmul.f32 %v7828, 0.7978846
  %v7861 = vmul.f32 %v7829, 0.7978846
  %v7862 = vmul.f32 %v7830, 0.7978846
  %v7863 = vmul.f32 %v7831, 0.7978846
  %v7864 = vmul.f32 %v7832, 0.7978846
  %v7865 = vmul.f32 %v7833, 0.7978846
  %v7866 = vmul.f32 %v7834, 0.7978846
  %v7867 = vmul.f32 %v7835, 0.7978846
  %v7868 = vmul.f32 %v7836, 0.7978846
  %v7869 = vmul.f32 %v7837, 0.7978846
  %v7870 = vmul.f32 %v7838, 0.7978846
  %v7871 = vmul.f32 %v7839, 0.7978846
  %v7872 = vmul.f32 %v7840, 0.7978846
  %v7873 = vmul.f32 %v7841, 0.7978846
  %v7874 = vmul.f32 %v7842, 0.7978846
  %v7875 = vmul.f32 %v7843, 0.7978846
  %v7876 = vmul.f32 %v7844, 0.7978846
  %v7877 = vmul.f32 %v7845, 0.7978846
  %v7878 = vmul.f32 %v7846, 0.7978846
  %v7879 = vmul.f32 %v7847, 0.7978846
  %v7880 = vmul.f32 %v7848, 0.7978846
  %v7881 = vmul.f32 %v7849, 0.7978846
  %v7882 = vmul.f32 %v7850, 0.7978846
  %v7883 = vmul.f32 %v7851, 0.7978846
  %v7884 = vmul.f32 %v7852, 0.7978846
  %v7885 = vmul.f32 %v7853, 0.7978846
  %v7886 = vmul.f32 %v7854, 0.7978846
  %v7887 = vmul.f32 %v7855, 0.7978846
  %v7888 = vmul.f32 %v7856, 0.7978846
  %v7889 = vmul.f32 %v7857, 0.7978846
  %v7890 = vmul.f32 %v7858, 0.7978846
  %v7891 = vmul.f32 %v7859, 0.7978846
  %v7892 = vtanh.pop %v7860
  %v7893 = vtanh.pop %v7861
  %v7894 = vtanh.pop %v7862
  %v7895 = vtanh.pop %v7863
  %v7896 = vtanh.pop %v7864
  %v7897 = vtanh.pop %v7865
  %v7898 = vtanh.pop %v7866
  %v7899 = vtanh.pop %v7867
  %v7900 = vtanh.pop %v7868
  %v7901 = vtanh.pop %v7869
  %v7902 = vtanh.pop %v7870
  %v7903 = vtanh.pop %v7871
  %v7904 = vtanh.pop %v7872
  %v7905 = vtanh.pop %v7873
  %v7906 = vtanh.pop %v7874
  %v7907 = vtanh.pop %v7875
  %v7908 = vtanh.pop %v7876
  %v7909 = vtanh.pop %v7877
  %v7910 = vtanh.pop %v7878
  %v7911 = vtanh.pop %v7879
  %v7912 = vtanh.pop %v7880
  %v7913 = vtanh.pop %v7881
  %v7914 = vtanh.pop %v7882
  %v7915 = vtanh.pop %v7883
  %v7916 = vtanh.pop %v7884
  %v7917 = vtanh.pop %v7885
  %v7918 = vtanh.pop %v7886
  %v7919 = vtanh.pop %v7887
  %v7920 = vtanh.pop %v7888
  %v7921 = vtanh.pop %v7889
  %v7922 = vtanh.pop %v7890
  %v7923 = vtanh.pop %v7891
  %v7924 = vadd.f32 %v7892, 1.0
  %v7925 = vadd.f32 %v7893, 1.0
  %v7926 = vadd.f32 %v7894, 1.0
  %v7927 = vadd.f32 %v7895, 1.0
  %v7928 = vadd.f32 %v7896, 1.0
  %v7929 = vadd.f32 %v7897, 1.0
  %v7930 = vadd.f32 %v7898, 1.0
  %v7931 = vadd.f32 %v7899, 1.0
  %v7932 = vadd.f32 %v7900, 1.0
  %v7933 = vadd.f32 %v7901, 1.0
  %v7934 = vadd.f32 %v7902, 1.0
  %v7935 = vadd.f32 %v7903, 1.0
  %v7936 = vadd.f32 %v7904, 1.0
  %v7937 = vadd.f32 %v7905, 1.0
  %v7938 = vadd.f32 %v7906, 1.0
  %v7939 = vadd.f32 %v7907, 1.0
  %v7940 = vadd.f32 %v7908, 1.0
  %v7941 = vadd.f32 %v7909, 1.0
  %v7942 = vadd.f32 %v7910, 1.0
  %v7943 = vadd.f32 %v7911, 1.0
  %v7944 = vadd.f32 %v7912, 1.0
  %v7945 = vadd.f32 %v7913, 1.0
  %v7946 = vadd.f32 %v7914, 1.0
  %v7947 = vadd.f32 %v7915, 1.0
  %v7948 = vadd.f32 %v7916, 1.0
  %v7949 = vadd.f32 %v7917, 1.0
  %v7950 = vadd.f32 %v7918, 1.0
  %v7951 = vadd.f32 %v7919, 1.0
  %v7952 = vadd.f32 %v7920, 1.0
  %v7953 = vadd.f32 %v7921, 1.0
  %v7954 = vadd.f32 %v7922, 1.0
  %v7955 = vadd.f32 %v7923, 1.0
  %v7956 = vmul.f32 %v7924, 0.5
  %v7957 = vmul.f32 %v7925, 0.5
  %v7958 = vmul.f32 %v7926, 0.5
  %v7959 = vmul.f32 %v7927, 0.5
  %v7960 = vmul.f32 %v7928, 0.5
  %v7961 = vmul.f32 %v7929, 0.5
  %v7962 = vmul.f32 %v7930, 0.5
  %v7963 = vmul.f32 %v7931, 0.5
  %v7964 = vmul.f32 %v7932, 0.5
  %v7965 = vmul.f32 %v7933, 0.5
  %v7966 = vmul.f32 %v7934, 0.5
  %v7967 = vmul.f32 %v7935, 0.5
  %v7968 = vmul.f32 %v7936, 0.5
  %v7969 = vmul.f32 %v7937, 0.5
  %v7970 = vmul.f32 %v7938, 0.5
  %v7971 = vmul.f32 %v7939, 0.5
  %v7972 = vmul.f32 %v7940, 0.5
  %v7973 = vmul.f32 %v7941, 0.5
  %v7974 = vmul.f32 %v7942, 0.5
  %v7975 = vmul.f32 %v7943, 0.5
  %v7976 = vmul.f32 %v7944, 0.5
  %v7977 = vmul.f32 %v7945, 0.5
  %v7978 = vmul.f32 %v7946, 0.5
  %v7979 = vmul.f32 %v7947, 0.5
  %v7980 = vmul.f32 %v7948, 0.5
  %v7981 = vmul.f32 %v7949, 0.5
  %v7982 = vmul.f32 %v7950, 0.5
  %v7983 = vmul.f32 %v7951, 0.5
  %v7984 = vmul.f32 %v7952, 0.5
  %v7985 = vmul.f32 %v7953, 0.5
  %v7986 = vmul.f32 %v7954, 0.5
  %v7987 = vmul.f32 %v7955, 0.5
  %v7988 = vmul.f32 %v7654, %v7956
  %v7989 = vmul.f32 %v7656, %v7957
  %v7990 = vmul.f32 %v7658, %v7958
  %v7991 = vmul.f32 %v7660, %v7959
  %v7992 = vmul.f32 %v7664, %v7960
  %v7993 = vmul.f32 %v7666, %v7961
  %v7994 = vmul.f32 %v7668, %v7962
  %v7995 = vmul.f32 %v7670, %v7963
  %v7996 = vmul.f32 %v7674, %v7964
  %v7997 = vmul.f32 %v7676, %v7965
  %v7998 = vmul.f32 %v7678, %v7966
  %v7999 = vmul.f32 %v7680, %v7967
  %v8000 = vmul.f32 %v7684, %v7968
  %v8001 = vmul.f32 %v7686, %v7969
  %v8002 = vmul.f32 %v7688, %v7970
  %v8003 = vmul.f32 %v7690, %v7971
  %v8004 = vmul.f32 %v7694, %v7972
  %v8005 = vmul.f32 %v7696, %v7973
  %v8006 = vmul.f32 %v7698, %v7974
  %v8007 = vmul.f32 %v7700, %v7975
  %v8008 = vmul.f32 %v7704, %v7976
  %v8009 = vmul.f32 %v7706, %v7977
  %v8010 = vmul.f32 %v7708, %v7978
  %v8011 = vmul.f32 %v7710, %v7979
  %v8012 = vmul.f32 %v7714, %v7980
  %v8013 = vmul.f32 %v7716, %v7981
  %v8014 = vmul.f32 %v7718, %v7982
  %v8015 = vmul.f32 %v7720, %v7983
  %v8016 = vmul.f32 %v7724, %v7984
  %v8017 = vmul.f32 %v7726, %v7985
  %v8018 = vmul.f32 %v7728, %v7986
  %v8019 = vmul.f32 %v7730, %v7987
  %v8020 = vpack.c.bf16 %v7990, %v7988
  %v8021 = vpack.c.bf16 %v7991, %v7989
  %v8022 = vpack.c.bf16 %v7994, %v7992
  %v8023 = vpack.c.bf16 %v7995, %v7993
  %v8024 = vpack.c.bf16 %v7998, %v7996
  %v8025 = vpack.c.bf16 %v7999, %v7997
  %v8026 = vpack.c.bf16 %v8002, %v8000
  %v8027 = vpack.c.bf16 %v8003, %v8001
  %v8028 = vpack.c.bf16 %v8006, %v8004
  %v8029 = vpack.c.bf16 %v8007, %v8005
  %v8030 = vpack.c.bf16 %v8010, %v8008
  %v8031 = vpack.c.bf16 %v8011, %v8009
  %v8032 = vpack.c.bf16 %v8014, %v8012
  %v8033 = vpack.c.bf16 %v8015, %v8013
  %v8034 = vpack.c.bf16 %v8018, %v8016
  %v8035 = vpack.c.bf16 %v8019, %v8017
  %s8036 = scalar_lea.vmem %s16, 128
  %v8037 = vld [vmem:[%s8036] sm:$0xf]
  %v8038 = vld [vmem:[%s8036 + $0x4] sm:$0xf]
  %v8039 = vld [vmem:[%s8036 + $0x8] sm:$0xf]
  %v8040 = vld [vmem:[%s8036 + $0xc] sm:$0xf]
  %v8041 = vld [vmem:[%s8036 + $0x10] sm:$0xf]
  %v8042 = vld [vmem:[%s8036 + $0x14] sm:$0xf]
  %v8043 = vld [vmem:[%s8036 + $0x18] sm:$0xf]
  %v8044 = vld [vmem:[%s8036 + $0x1c] sm:$0xf]
  %v8045 = vld [vmem:[%s8036 + $0x20] sm:$0xf]
  %v8046 = vld [vmem:[%s8036 + $0x24] sm:$0xf]
  %v8047 = vld [vmem:[%s8036 + $0x28] sm:$0xf]
  %v8048 = vld [vmem:[%s8036 + $0x2c] sm:$0xf]
  %v8049 = vld [vmem:[%s8036 + $0x30] sm:$0xf]
  %v8050 = vld [vmem:[%s8036 + $0x34] sm:$0xf]
  %v8051 = vld [vmem:[%s8036 + $0x38] sm:$0xf]
  %v8052 = vld [vmem:[%s8036 + $0x3c] sm:$0xf]
  %v8053 = vld [vmem:[%s8036 + $0x40] sm:$0xf]
  %v8054 = vld [vmem:[%s8036 + $0x44] sm:$0xf]
  %v8055 = vld [vmem:[%s8036 + $0x48] sm:$0xf]
  %v8056 = vld [vmem:[%s8036 + $0x4c] sm:$0xf]
  %v8057 = vld [vmem:[%s8036 + $0x50] sm:$0xf]
  %v8058 = vld [vmem:[%s8036 + $0x54] sm:$0xf]
  %v8059 = vld [vmem:[%s8036 + $0x58] sm:$0xf]
  %v8060 = vld [vmem:[%s8036 + $0x5c] sm:$0xf]
  %v8061 = vld [vmem:[%s8036 + $0x60] sm:$0xf]
  %v8062 = vld [vmem:[%s8036 + $0x64] sm:$0xf]
  %v8063 = vld [vmem:[%s8036 + $0x68] sm:$0xf]
  %v8064 = vld [vmem:[%s8036 + $0x6c] sm:$0xf]
  %v8065 = vld [vmem:[%s8036 + $0x70] sm:$0xf]
  %v8066 = vld [vmem:[%s8036 + $0x74] sm:$0xf]
  %v8067 = vld [vmem:[%s8036 + $0x78] sm:$0xf]
  %v8068 = vld [vmem:[%s8036 + $0x7c] sm:$0xf]
  %s8069 = scalar_lea.vmem %s17, 1
  %v8070 = vld [vmem:[%s8069] sm:$0x1]
  %v8072 = vlaneseq
  %v8073 = vshrl.u32 %v8072, 7
  %v8074 = vsub.s32 0, %v8073
  %v8075 = vrot.slane %v8070, %v8074
  %v8109 = vunpack.c.l.b16 %v8037
  %v8110 = vunpack.c.l.b16 %v8038
  %v8111 = vunpack.c.l.b16 %v8039
  %v8112 = vunpack.c.l.b16 %v8040
  %v8113 = vunpack.c.l.b16 %v8041
  %v8114 = vunpack.c.l.b16 %v8042
  %v8115 = vunpack.c.l.b16 %v8043
  %v8116 = vunpack.c.l.b16 %v8044
  %v8117 = vunpack.c.l.b16 %v8045
  %v8118 = vunpack.c.l.b16 %v8046
  %v8119 = vunpack.c.l.b16 %v8047
  %v8120 = vunpack.c.l.b16 %v8048
  %v8121 = vunpack.c.l.b16 %v8049
  %v8122 = vunpack.c.l.b16 %v8050
  %v8123 = vunpack.c.l.b16 %v8051
  %v8124 = vunpack.c.l.b16 %v8052
  %v8125 = vunpack.c.l.b16 %v8053
  %v8126 = vunpack.c.l.b16 %v8054
  %v8127 = vunpack.c.l.b16 %v8055
  %v8128 = vunpack.c.l.b16 %v8056
  %v8129 = vunpack.c.l.b16 %v8057
  %v8130 = vunpack.c.l.b16 %v8058
  %v8131 = vunpack.c.l.b16 %v8059
  %v8132 = vunpack.c.l.b16 %v8060
  %v8133 = vunpack.c.l.b16 %v8061
  %v8134 = vunpack.c.l.b16 %v8062
  %v8135 = vunpack.c.l.b16 %v8063
  %v8136 = vunpack.c.l.b16 %v8064
  %v8137 = vunpack.c.l.b16 %v8065
  %v8138 = vunpack.c.l.b16 %v8066
  %v8139 = vunpack.c.l.b16 %v8067
  %v8140 = vunpack.c.l.b16 %v8068
  %v8141 = vpack.c.b16 %v8110, %v8109
  %v8142 = vpack.c.b16 %v8112, %v8111
  %v8143 = vpack.c.b16 %v8114, %v8113
  %v8144 = vpack.c.b16 %v8116, %v8115
  %v8145 = vpack.c.b16 %v8118, %v8117
  %v8146 = vpack.c.b16 %v8120, %v8119
  %v8147 = vpack.c.b16 %v8122, %v8121
  %v8148 = vpack.c.b16 %v8124, %v8123
  %v8149 = vpack.c.b16 %v8126, %v8125
  %v8150 = vpack.c.b16 %v8128, %v8127
  %v8151 = vpack.c.b16 %v8130, %v8129
  %v8152 = vpack.c.b16 %v8132, %v8131
  %v8153 = vpack.c.b16 %v8134, %v8133
  %v8154 = vpack.c.b16 %v8136, %v8135
  %v8155 = vpack.c.b16 %v8138, %v8137
  %v8156 = vpack.c.b16 %v8140, %v8139
  %8173 = vmatprep.subr.bf16.mxu0 0
  %8174 = vmatpush1.bf16.msra.mxu0 %v8141
  %8175 = vmatprep.subr.bf16.mxu0 0
  %8176 = vmatpush1.bf16.msra.mxu0 %v8142
  %8177 = vmatprep.subr.bf16.mxu0 0
  %8178 = vmatpush1.bf16.msra.mxu0 %v8143
  %8179 = vmatprep.subr.bf16.mxu0 0
  %8180 = vmatpush1.bf16.msra.mxu0 %v8144
  %8181 = vmatprep.subr.bf16.mxu0 0
  %8182 = vmatpush1.bf16.msra.mxu0 %v8145
  %8183 = vmatprep.subr.bf16.mxu0 0
  %8184 = vmatpush1.bf16.msra.mxu0 %v8146
  %8185 = vmatprep.subr.bf16.mxu0 0
  %8186 = vmatpush1.bf16.msra.mxu0 %v8147
  %8187 = vmatprep.subr.bf16.mxu0 0
  %8188 = vmatpush1.bf16.msra.mxu0 %v8148
  %8189 = vmatprep.subr.bf16.mxu0 0
  %8190 = vmatpush1.bf16.msra.mxu0 %v8149
  %8191 = vmatprep.subr.bf16.mxu0 0
  %8192 = vmatpush1.bf16.msra.mxu0 %v8150
  %8193 = vmatprep.subr.bf16.mxu0 0
  %8194 = vmatpush1.bf16.msra.mxu0 %v8151
  %8195 = vmatprep.subr.bf16.mxu0 0
  %8196 = vmatpush1.bf16.msra.mxu0 %v8152
  %8197 = vmatprep.subr.bf16.mxu0 0
  %8198 = vmatpush1.bf16.msra.mxu0 %v8153
  %8199 = vmatprep.subr.bf16.mxu0 0
  %8200 = vmatpush1.bf16.msra.mxu0 %v8154
  %8201 = vmatprep.subr.bf16.mxu0 0
  %8202 = vmatpush1.bf16.msra.mxu0 %v8155
  %8203 = vmatprep.subr.bf16.mxu0 0
  %8204 = vmatpush1.bf16.msra.mxu0 %v8156
  %8205 = vmatprep.mubr.bf16.mxu0 %v8021
  %8206 = vmatmul.mubr.bf16.gmra.mrb[0].mxu0 %v8020
  %v8207 = vpop.f32.mrb[0].mxu0
  %v8208 = vadd.f32 %v8075, %v8207
  %v8209 = vpop.f32.mrb[0].mxu0
  %v8210 = vpop.f32.mrb[0].mxu0
  %v8211 = vpop.f32.mrb[0].mxu0
  %8212 = vmatprep.mubr.bf16.mxu0 %v8023
  %8213 = vmatmul.mubr.bf16.gmra.mrb[0].mxu0 %v8022
  %v8214 = vpop.f32.mrb[0].mxu0
  %v8215 = vadd.f32 %v8075, %v8214
  %v8216 = vpop.f32.mrb[0].mxu0
  %v8217 = vpop.f32.mrb[0].mxu0
  %v8218 = vpop.f32.mrb[0].mxu0
  %8219 = vmatprep.mubr.bf16.mxu0 %v8025
  %8220 = vmatmul.mubr.bf16.gmra.mrb[0].mxu0 %v8024
  %v8221 = vpop.f32.mrb[0].mxu0
  %v8222 = vadd.f32 %v8075, %v8221
  %v8223 = vpop.f32.mrb[0].mxu0
  %v8224 = vpop.f32.mrb[0].mxu0
  %v8225 = vpop.f32.mrb[0].mxu0
  %8226 = vmatprep.mubr.bf16.mxu0 %v8027
  %8227 = vmatmul.mubr.bf16.gmra.mrb[0].mxu0 %v8026
  %v8228 = vpop.f32.mrb[0].mxu0
  %v8229 = vadd.f32 %v8075, %v8228
  %v8230 = vpop.f32.mrb[0].mxu0
  %v8231 = vpop.f32.mrb[0].mxu0
  %v8232 = vpop.f32.mrb[0].mxu0
  %8233 = vmatprep.mubr.bf16.mxu0 %v8029
  %8234 = vmatmul.mubr.bf16.gmra.mrb[0].mxu0 %v8028
  %v8235 = vpop.f32.mrb[0].mxu0
  %v8236 = vadd.f32 %v8075, %v8235
  %v8237 = vpop.f32.mrb[0].mxu0
  %v8238 = vpop.f32.mrb[0].mxu0
  %v8239 = vpop.f32.mrb[0].mxu0
  %8240 = vmatprep.mubr.bf16.mxu0 %v8031
  %8241 = vmatmul.mubr.bf16.gmra.mrb[0].mxu0 %v8030
  %v8242 = vpop.f32.mrb[0].mxu0
  %v8243 = vadd.f32 %v8075, %v8242
  %v8244 = vpop.f32.mrb[0].mxu0
  %v8245 = vpop.f32.mrb[0].mxu0
  %v8246 = vpop.f32.mrb[0].mxu0
  %8247 = vmatprep.mubr.bf16.mxu0 %v8033
  %8248 = vmatmul.mubr.bf16.gmra.mrb[0].mxu0 %v8032
  %v8249 = vpop.f32.mrb[0].mxu0
  %v8250 = vadd.f32 %v8075, %v8249
  %v8251 = vpop.f32.mrb[0].mxu0
  %v8252 = vpop.f32.mrb[0].mxu0
  %v8253 = vpop.f32.mrb[0].mxu0
  %8254 = vmatprep.mubr.bf16.mxu0 %v8035
  %8255 = vmatmul.mubr.bf16.gmra.mrb[0].mxu0 %v8034
  %v8256 = vpop.f32.mrb[0].mxu0
  %v8257 = vadd.f32 %v8075, %v8256
  %v8258 = vpop.f32.mrb[0].mxu0
  %v8259 = vpop.f32.mrb[0].mxu0
  %v8260 = vpop.f32.mrb[0].mxu0
  %8261 = vdwg.mxu0
  %v8262 = vadd.f32 %v7485, %v8208
  %v8263 = vadd.f32 %v7487, %v8215
  %v8264 = vadd.f32 %v7489, %v8222
  %v8265 = vadd.f32 %v7491, %v8229
  %v8266 = vadd.f32 %v7493, %v8236
  %v8267 = vadd.f32 %v7495, %v8243
  %v8268 = vadd.f32 %v7497, %v8250
  %v8269 = vadd.f32 %v7499, %v8257
  %s8270 = scalar_lea.vmem %s18, 1
  %v8271 = vld [vmem:[%s8270] sm:$0x1]
  %s8272 = scalar_lea.vmem %s19, 1
  %v8273 = vld [vmem:[%s8272] sm:$0x1]
  %8274 = vadd.xlane.f32.xlu0 %v8262
  %v8275 = vpop.xlane.xlu0 %8274
  %8276 = vadd.xlane.f32.xlu0 %v8263
  %v8277 = vpop.xlane.xlu0 %8276
  %8278 = vadd.xlane.f32.xlu0 %v8264
  %v8279 = vpop.xlane.xlu0 %8278
  %8280 = vadd.xlane.f32.xlu0 %v8265
  %v8281 = vpop.xlane.xlu0 %8280
  %8282 = vadd.xlane.f32.xlu0 %v8266
  %v8283 = vpop.xlane.xlu0 %8282
  %8284 = vadd.xlane.f32.xlu0 %v8267
  %v8285 = vpop.xlane.xlu0 %8284
  %8286 = vadd.xlane.f32.xlu0 %v8268
  %v8287 = vpop.xlane.xlu0 %8286
  %8288 = vadd.xlane.f32.xlu0 %v8269
  %v8289 = vpop.xlane.xlu0 %8288
  %v8290 = vmul.f32 %v8275, %v3301
  %v8291 = vmul.f32 %v8277, %v3301
  %v8292 = vmul.f32 %v8279, %v3301
  %v8293 = vmul.f32 %v8281, %v3301
  %v8294 = vmul.f32 %v8283, %v3301
  %v8295 = vmul.f32 %v8285, %v3301
  %v8296 = vmul.f32 %v8287, %v3301
  %v8297 = vmul.f32 %v8289, %v3301
  %v8298 = vsub.f32 %v8262, %v8290
  %v8299 = vsub.f32 %v8263, %v8291
  %v8300 = vsub.f32 %v8264, %v8292
  %v8301 = vsub.f32 %v8265, %v8293
  %v8302 = vsub.f32 %v8266, %v8294
  %v8303 = vsub.f32 %v8267, %v8295
  %v8304 = vsub.f32 %v8268, %v8296
  %v8305 = vsub.f32 %v8269, %v8297
  %v8306 = vmul.f32 %v8298, %v8298
  %v8307 = vmul.f32 %v8299, %v8299
  %v8308 = vmul.f32 %v8300, %v8300
  %v8309 = vmul.f32 %v8301, %v8301
  %v8310 = vmul.f32 %v8302, %v8302
  %v8311 = vmul.f32 %v8303, %v8303
  %v8312 = vmul.f32 %v8304, %v8304
  %v8313 = vmul.f32 %v8305, %v8305
  %8314 = vadd.xlane.f32.xlu0 %v8306
  %v8315 = vpop.xlane.xlu0 %8314
  %8316 = vadd.xlane.f32.xlu0 %v8307
  %v8317 = vpop.xlane.xlu0 %8316
  %8318 = vadd.xlane.f32.xlu0 %v8308
  %v8319 = vpop.xlane.xlu0 %8318
  %8320 = vadd.xlane.f32.xlu0 %v8309
  %v8321 = vpop.xlane.xlu0 %8320
  %8322 = vadd.xlane.f32.xlu0 %v8310
  %v8323 = vpop.xlane.xlu0 %8322
  %8324 = vadd.xlane.f32.xlu0 %v8311
  %v8325 = vpop.xlane.xlu0 %8324
  %8326 = vadd.xlane.f32.xlu0 %v8312
  %v8327 = vpop.xlane.xlu0 %8326
  %8328 = vadd.xlane.f32.xlu0 %v8313
  %v8329 = vpop.xlane.xlu0 %8328
  %v8330 = vmul.f32 %v8315, %v3301
  %v8331 = vmul.f32 %v8317, %v3301
  %v8332 = vmul.f32 %v8319, %v3301
  %v8333 = vmul.f32 %v8321, %v3301
  %v8334 = vmul.f32 %v8323, %v3301
  %v8335 = vmul.f32 %v8325, %v3301
  %v8336 = vmul.f32 %v8327, %v3301
  %v8337 = vmul.f32 %v8329, %v3301
  %v8338 = vadd.f32 %v8330, 1e-12
  %v8339 = vadd.f32 %v8331, 1e-12
  %v8340 = vadd.f32 %v8332, 1e-12
  %v8341 = vadd.f32 %v8333, 1e-12
  %v8342 = vadd.f32 %v8334, 1e-12
  %v8343 = vadd.f32 %v8335, 1e-12
  %v8344 = vadd.f32 %v8336, 1e-12
  %v8345 = vadd.f32 %v8337, 1e-12
  %v8346 = vrsqrt.pop %v8338
  %v8347 = vrsqrt.pop %v8339
  %v8348 = vrsqrt.pop %v8340
  %v8349 = vrsqrt.pop %v8341
  %v8350 = vrsqrt.pop %v8342
  %v8351 = vrsqrt.pop %v8343
  %v8352 = vrsqrt.pop %v8344
  %v8353 = vrsqrt.pop %v8345
  %v8354 = vmul.f32 %v8298, %v8346
  %v8355 = vmul.f32 %v8299, %v8347
  %v8356 = vmul.f32 %v8300, %v8348
  %v8357 = vmul.f32 %v8301, %v8349
  %v8358 = vmul.f32 %v8302, %v8350
  %v8359 = vmul.f32 %v8303, %v8351
  %v8360 = vmul.f32 %v8304, %v8352
  %v8361 = vmul.f32 %v8305, %v8353
  %v8363 = vlaneseq
  %v8364 = vshrl.u32 %v8363, 7
  %v8365 = vsub.s32 0, %v8364
  %v8366 = vrot.slane %v8271, %v8365
  %v8368 = vmul.f32 %v8354, %v8366
  %v8369 = vmul.f32 %v8355, %v8366
  %v8370 = vmul.f32 %v8356, %v8366
  %v8371 = vmul.f32 %v8357, %v8366
  %v8372 = vmul.f32 %v8358, %v8366
  %v8373 = vmul.f32 %v8359, %v8366
  %v8374 = vmul.f32 %v8360, %v8366
  %v8375 = vmul.f32 %v8361, %v8366
  %v8377 = vlaneseq
  %v8378 = vshrl.u32 %v8377, 7
  %v8379 = vsub.s32 0, %v8378
  %v8380 = vrot.slane %v8273, %v8379
  %v8382 = vadd.f32 %v8368, %v8380
  %v8383 = vadd.f32 %v8369, %v8380
  %v8384 = vadd.f32 %v8370, %v8380
  %v8385 = vadd.f32 %v8371, %v8380
  %v8386 = vadd.f32 %v8372, %v8380
  %v8387 = vadd.f32 %v8373, %v8380
  %v8388 = vadd.f32 %v8374, %v8380
  %v8389 = vadd.f32 %v8375, %v8380
  %v8390 = vpack.c.bf16 %v8382, %v8382
  %v8391 = vpack.c.bf16 %v8383, %v8383
  %v8392 = vpack.c.bf16 %v8384, %v8384
  %v8393 = vpack.c.bf16 %v8385, %v8385
  %v8394 = vpack.c.bf16 %v8386, %v8386
  %v8395 = vpack.c.bf16 %v8387, %v8387
  %v8396 = vpack.c.bf16 %v8388, %v8388
  %v8397 = vpack.c.bf16 %v8389, %v8389
  %v8398 = vld [vmem:[%s20] sm:$0xf]
  %v8399 = vld [vmem:[%s20 + $0x4] sm:$0xf]
  %v8400 = vld [vmem:[%s20 + $0x8] sm:$0xf]
  %v8401 = vld [vmem:[%s20 + $0xc] sm:$0xf]
  %v8402 = vld [vmem:[%s20 + $0x10] sm:$0xf]
  %v8403 = vld [vmem:[%s20 + $0x14] sm:$0xf]
  %v8404 = vld [vmem:[%s20 + $0x18] sm:$0xf]
  %v8405 = vld [vmem:[%s20 + $0x1c] sm:$0xf]
  %v8406 = vld [vmem:[%s20 + $0x20] sm:$0xf]
  %v8407 = vld [vmem:[%s20 + $0x24] sm:$0xf]
  %v8408 = vld [vmem:[%s20 + $0x28] sm:$0xf]
  %v8409 = vld [vmem:[%s20 + $0x2c] sm:$0xf]
  %v8410 = vld [vmem:[%s20 + $0x30] sm:$0xf]
  %v8411 = vld [vmem:[%s20 + $0x34] sm:$0xf]
  %v8412 = vld [vmem:[%s20 + $0x38] sm:$0xf]
  %v8413 = vld [vmem:[%s20 + $0x3c] sm:$0xf]
  %v8414 = vld [vmem:[%s21] sm:$0x1]
  %v8416 = vlaneseq
  %v8417 = vshrl.u32 %v8416, 7
  %v8418 = vsub.s32 0, %v8417
  %v8419 = vrot.slane %v8414, %v8418
  %v8429 = vunpack.c.l.b16 %v8390
  %v8430 = vunpack.c.l.b16 %v8391
  %v8431 = vunpack.c.l.b16 %v8392
  %v8432 = vunpack.c.l.b16 %v8393
  %v8433 = vunpack.c.l.b16 %v8394
  %v8434 = vunpack.c.l.b16 %v8395
  %v8435 = vunpack.c.l.b16 %v8396
  %v8436 = vunpack.c.l.b16 %v8397
  %v8437 = vrot.slane %v8430, 7
  %vm8438 = vcmask 1041409
  %v8439 = vsel %vm8438, %v8437, %v8429
  %v8440 = vrot.slane %v8431, 6
  %vm8441 = vcmask 1042434
  %v8442 = vsel %vm8441, %v8440, %v8439
  %v8443 = vrot.slane %v8432, 5
  %vm8444 = vcmask 1043459
  %v8445 = vsel %vm8444, %v8443, %v8442
  %v8446 = vrot.slane %v8433, 4
  %vm8447 = vcmask 1044484
  %v8448 = vsel %vm8447, %v8446, %v8445
  %v8449 = vrot.slane %v8434, 3
  %vm8450 = vcmask 1045509
  %v8451 = vsel %vm8450, %v8449, %v8448
  %v8452 = vrot.slane %v8435, 2
  %vm8453 = vcmask 1046534
  %v8454 = vsel %vm8453, %v8452, %v8451
  %v8455 = vrot.slane %v8436, 1
  %vm8456 = vcmask 1047559
  %v8457 = vsel %vm8456, %v8455, %v8454
  %v8458 = vpack.c.b16 %v8457, %v8457
  %v8476 = vunpack.c.l.b16 %v8398
  %v8477 = vunpack.c.l.b16 %v8399
  %v8478 = vunpack.c.l.b16 %v8400
  %v8479 = vunpack.c.l.b16 %v8401
  %v8480 = vunpack.c.l.b16 %v8402
  %v8481 = vunpack.c.l.b16 %v8403
  %v8482 = vunpack.c.l.b16 %v8404
  %v8483 = vunpack.c.l.b16 %v8405
  %v8484 = vunpack.c.l.b16 %v8406
  %v8485 = vunpack.c.l.b16 %v8407
  %v8486 = vunpack.c.l.b16 %v8408
  %v8487 = vunpack.c.l.b16 %v8409
  %v8488 = vunpack.c.l.b16 %v8410
  %v8489 = vunpack.c.l.b16 %v8411
  %v8490 = vunpack.c.l.b16 %v8412
  %v8491 = vunpack.c.l.b16 %v8413
  %v8492 = vpack.c.b16 %v8477, %v8476
  %v8493 = vpack.c.b16 %v8479, %v8478
  %v8494 = vpack.c.b16 %v8481, %v8480
  %v8495 = vpack.c.b16 %v8483, %v8482
  %v8496 = vpack.c.b16 %v8485, %v8484
  %v8497 = vpack.c.b16 %v8487, %v8486
  %v8498 = vpack.c.b16 %v8489, %v8488
  %v8499 = vpack.c.b16 %v8491, %v8490
  %8508 = vmatprep.subr.bf16.mxu0 0
  %8509 = vmatpush1.bf16.msra.mxu0 %v8492
  %8510 = vmatprep.subr.bf16.mxu0 0
  %8511 = vmatpush1.bf16.msra.mxu0 %v8493
  %8512 = vmatprep.subr.bf16.mxu0 0
  %8513 = vmatpush1.bf16.msra.mxu0 %v8494
  %8514 = vmatprep.subr.bf16.mxu0 0
  %8515 = vmatpush1.bf16.msra.mxu0 %v8495
  %8516 = vmatprep.subr.bf16.mxu0 0
  %8517 = vmatpush1.bf16.msra.mxu0 %v8496
  %8518 = vmatprep.subr.bf16.mxu0 0
  %8519 = vmatpush1.bf16.msra.mxu0 %v8497
  %8520 = vmatprep.subr.bf16.mxu0 0
  %8521 = vmatpush1.bf16.msra.mxu0 %v8498
  %8522 = vmatprep.subr.bf16.mxu0 0
  %8523 = vmatpush1.bf16.msra.mxu0 %v8499
  %8524 = vmatprep.subr.bf16.mxu0 0
  %8525 = vmatpush1.bf16.msra.mxu0 0
  %8526 = vmatprep.subr.bf16.mxu0 0
  %8527 = vmatpush1.bf16.msra.mxu0 0
  %8528 = vmatprep.subr.bf16.mxu0 0
  %8529 = vmatpush1.bf16.msra.mxu0 0
  %8530 = vmatprep.subr.bf16.mxu0 0
  %8531 = vmatpush1.bf16.msra.mxu0 0
  %8532 = vmatprep.subr.bf16.mxu0 0
  %8533 = vmatpush1.bf16.msra.mxu0 0
  %8534 = vmatprep.subr.bf16.mxu0 0
  %8535 = vmatpush1.bf16.msra.mxu0 0
  %8536 = vmatprep.subr.bf16.mxu0 0
  %8537 = vmatpush1.bf16.msra.mxu0 0
  %8538 = vmatprep.subr.bf16.mxu0 0
  %8539 = vmatpush1.bf16.msra.mxu0 0
  %8540 = vmatprep.mubr.bf16.mxu0 0
  %8541 = vmatmul.mubr.bf16.gmra.mrb[0].mxu0 %v8458
  %v8542 = vpop.f32.mrb[0].mxu0
  %v8543 = vadd.f32 %v8419, %v8542
  %v8544 = vpop.f32.mrb[0].mxu0
  %v8545 = vpop.f32.mrb[0].mxu0
  %v8546 = vpop.f32.mrb[0].mxu0
  %8547 = vdwg.mxu0
  %v8548 = vtanh.pop %v8543
  %v8549 = vpack.c.bf16 %v8548, %v8548
  %v8550 = vld [vmem:[%s22] sm:$0xf]
  %v8551 = vld [vmem:[%s22 + $0x4] sm:$0xf]
  %v8552 = vld [vmem:[%s22 + $0x8] sm:$0xf]
  %v8553 = vld [vmem:[%s22 + $0xc] sm:$0xf]
  %v8554 = vld [vmem:[%s22 + $0x10] sm:$0xf]
  %v8555 = vld [vmem:[%s22 + $0x14] sm:$0xf]
  %v8556 = vld [vmem:[%s22 + $0x18] sm:$0xf]
  %v8557 = vld [vmem:[%s22 + $0x1c] sm:$0xf]
  %v8558 = vld [vmem:[%s22 + $0x20] sm:$0xf]
  %v8559 = vld [vmem:[%s22 + $0x24] sm:$0xf]
  %v8560 = vld [vmem:[%s22 + $0x28] sm:$0xf]
  %v8561 = vld [vmem:[%s22 + $0x2c] sm:$0xf]
  %v8562 = vld [vmem:[%s22 + $0x30] sm:$0xf]
  %v8563 = vld [vmem:[%s22 + $0x34] sm:$0xf]
  %v8564 = vld [vmem:[%s22 + $0x38] sm:$0xf]
  %v8565 = vld [vmem:[%s22 + $0x3c] sm:$0xf]
  %v8566 = vld [vmem:[%s23] sm:$0x1]
  %v8568 = vlaneseq
  %v8569 = vshrl.u32 %v8568, 7
  %v8570 = vsub.s32 0, %v8569
  %v8571 = vrot.slane %v8566, %v8570
  %v8589 = vunpack.c.l.b16 %v8550
  %v8590 = vunpack.c.l.b16 %v8551
  %v8591 = vunpack.c.l.b16 %v8552
  %v8592 = vunpack.c.l.b16 %v8553
  %v8593 = vunpack.c.l.b16 %v8554
  %v8594 = vunpack.c.l.b16 %v8555
  %v8595 = vunpack.c.l.b16 %v8556
  %v8596 = vunpack.c.l.b16 %v8557
  %v8597 = vunpack.c.l.b16 %v8558
  %v8598 = vunpack.c.l.b16 %v8559
  %v8599 = vunpack.c.l.b16 %v8560
  %v8600 = vunpack.c.l.b16 %v8561
  %v8601 = vunpack.c.l.b16 %v8562
  %v8602 = vunpack.c.l.b16 %v8563
  %v8603 = vunpack.c.l.b16 %v8564
  %v8604 = vunpack.c.l.b16 %v8565
  %v8605 = vpack.c.b16 %v8590, %v8589
  %v8606 = vpack.c.b16 %v8592, %v8591
  %v8607 = vpack.c.b16 %v8594, %v8593
  %v8608 = vpack.c.b16 %v8596, %v8595
  %v8609 = vpack.c.b16 %v8598, %v8597
  %v8610 = vpack.c.b16 %v8600, %v8599
  %v8611 = vpack.c.b16 %v8602, %v8601
  %v8612 = vpack.c.b16 %v8604, %v8603
  %8621 = vmatprep.subr.bf16.mxu0 0
  %8622 = vmatpush1.bf16.msra.mxu0 %v8605
  %8623 = vmatprep.subr.bf16.mxu0 0
  %8624 = vmatpush1.bf16.msra.mxu0 %v8606
  %8625 = vmatprep.subr.bf16.mxu0 0
  %8626 = vmatpush1.bf16.msra.mxu0 %v8607
  %8627 = vmatprep.subr.bf16.mxu0 0
  %8628 = vmatpush1.bf16.msra.mxu0 %v8608
  %8629 = vmatprep.subr.bf16.mxu0 0
  %8630 = vmatpush1.bf16.msra.mxu0 %v8609
  %8631 = vmatprep.subr.bf16.mxu0 0
  %8632 = vmatpush1.bf16.msra.mxu0 %v8610
  %8633 = vmatprep.subr.bf16.mxu0 0
  %8634 = vmatpush1.bf16.msra.mxu0 %v8611
  %8635 = vmatprep.subr.bf16.mxu0 0
  %8636 = vmatpush1.bf16.msra.mxu0 %v8612
  %8637 = vmatprep.subr.bf16.mxu0 0
  %8638 = vmatpush1.bf16.msra.mxu0 0
  %8639 = vmatprep.subr.bf16.mxu0 0
  %8640 = vmatpush1.bf16.msra.mxu0 0
  %8641 = vmatprep.subr.bf16.mxu0 0
  %8642 = vmatpush1.bf16.msra.mxu0 0
  %8643 = vmatprep.subr.bf16.mxu0 0
  %8644 = vmatpush1.bf16.msra.mxu0 0
  %8645 = vmatprep.subr.bf16.mxu0 0
  %8646 = vmatpush1.bf16.msra.mxu0 0
  %8647 = vmatprep.subr.bf16.mxu0 0
  %8648 = vmatpush1.bf16.msra.mxu0 0
  %8649 = vmatprep.subr.bf16.mxu0 0
  %8650 = vmatpush1.bf16.msra.mxu0 0
  %8651 = vmatprep.subr.bf16.mxu0 0
  %8652 = vmatpush1.bf16.msra.mxu0 0
  %8653 = vmatprep.mubr.bf16.mxu0 0
  %8654 = vmatmul.mubr.bf16.gmra.mrb[0].mxu0 %v8549
  %v8655 = vpop.f32.mrb[0].mxu0
  %v8656 = vadd.f32 %v8571, %v8655
  %v8657 = vpop.f32.mrb[0].mxu0
  %v8658 = vpop.f32.mrb[0].mxu0
  %v8659 = vpop.f32.mrb[0].mxu0
  %8660 = vdwg.mxu0
  %8661 = vst [vmem:[%s24] sm:$0xff] %v8656
  // Predicated region
  $region98: #{cross_encoder_forward.1} parent=0 // pred_check
    _
  $region99: #{cross_encoder_forward.1} parent=0 // pred_check_branch
    %8663 = sbr.rel (0) target = $region101
  $region100: #{cross_encoder_forward.1} parent=0 // pred_region
    _
  $region101: #{cross_encoder_forward.1} parent=0 // pred_fallthru
    _
  // Predicated region
  $region102: #{cross_encoder_forward.1} parent=0 // pred_check
    _
  $region103: #{cross_encoder_forward.1} parent=0 // pred_check_branch
    %8665 = sbr.rel (0) target = $region105
  $region104: #{cross_encoder_forward.1} parent=0 // pred_region
    _
  $region105: #{cross_encoder_forward.1} parent=0 // pred_fallthru
    _

</llo_original>
